<compile_context>
chip_gen: v7x
topology: tpu7x:2x2x1
jax: 0.10.0
libtpu: 0.0.40
codegen_flags: <defaults>
</compile_context>

<pallas_src>
import functools

import jax
import jax.numpy as jnp
from jax import lax
from jax.experimental import pallas as pl
from jax.experimental.pallas import tpu as pltpu


# ----------------------------------------------------------------------------
# Fused kernel:
#   [optional per-input-channel affine+ReLU (= previous layer's folded BN+ReLU)]
#   -> 3x3 conv, stride 1, SAME (zero halo rows / W borders built in VMEM)
#   -> conv-output tile + per-tile BN partial stats (sum, sum-of-squares).
# ----------------------------------------------------------------------------
def _fused_conv3x3_kernel(xt_ref, xm_ref, xb_ref, w_ref, s_ref, t_ref,
                          y_ref, stats_ref, *, apply_input_bnrelu):
    tile_h = xm_ref.shape[1]
    W = xm_ref.shape[2]
    cin = xm_ref.shape[3]
    cout = y_ref.shape[3]
    cdt = w_ref.dtype                                 # MXU input dtype

    def act(v):                                       # (rows, W, cin) -> f32
        v = v.astype(jnp.float32)
        if apply_input_bnrelu:                        # previous layer's BN+ReLU
            v = jnp.maximum(v * s_ref[0][None, None, :]
                            + t_ref[0][None, None, :], 0.0)
        return v

    h = pl.program_id(1)
    keep_top = jnp.where(h > 0, 1.0, 0.0)                        # SAME zero row
    keep_bot = jnp.where(h < pl.num_programs(1) - 1, 1.0, 0.0)   # SAME zero row

    top = act(xt_ref[0]) * keep_top                   # (1, W, cin)
    mid = act(xm_ref[0])                              # (tile_h, W, cin)
    bot = act(xb_ref[0]) * keep_bot                   # (1, W, cin)
    rows = jnp.concatenate([top, mid, bot], axis=0)   # (tile_h+2, W, cin)

    # SAME zero padding along W with sublane-aligned 8-wide blocks; the three
    # kx-shifted slabs are built once per tile and reused by every ky tap.
    zcols = jnp.zeros((tile_h + 2, 8, cin), jnp.float32)
    xpad = jnp.concatenate([zcols, rows, zcols], axis=1)   # (th+2, W+16, cin)
    shifted = [xpad[:, 7 + kx:7 + kx + W, :].astype(cdt) for kx in range(3)]

    # 9 accumulating MXU taps; no im2col patches materialization.
    M = tile_h * W
    acc = jnp.zeros((M, cout), jnp.float32)
    for ky in range(3):
        for kx in range(3):
            lhs = shifted[kx][ky:ky + tile_h].reshape(M, cin)
            acc = acc + jnp.dot(lhs, w_ref[ky * 3 + kx],
                                preferred_element_type=jnp.float32)

    y_ref[0] = acc.reshape(tile_h, W, cout).astype(y_ref.dtype)

    # Per-tile BN partial statistics: row 0 = sum, row 1 = sum of squares.
    psum = jnp.sum(acc, axis=0, keepdims=True)        # (1, cout)
    psq = jnp.sum(acc * acc, axis=0, keepdims=True)   # (1, cout)
    rowidx = lax.broadcasted_iota(jnp.int32, (2, cout), 0)
    stats_ref[0] = jnp.where(rowidx == 0, psum, psq)


def fused_conv3x3(x, w_packed, in_scale, in_shift, *, apply_input_bnrelu,
                  tile_h, out_dtype=jnp.float32):
    """x: (N, H, W, Cin) NHWC, channels unpadded.  w_packed: (9, Cin, Cout)."""
    N, H, W, cin = x.shape
    taps, wc, cout = w_packed.shape
    assert taps == 9 and wc == cin and H % tile_h == 0
    n_h = H // tile_h

    kernel = functools.partial(_fused_conv3x3_kernel,
                               apply_input_bnrelu=apply_input_bnrelu)
    y, stats = pl.pallas_call(
        kernel,
        out_shape=(
            jax.ShapeDtypeStruct((N, H, W, cout), out_dtype),
            jax.ShapeDtypeStruct((N * n_h, 2, cout), jnp.float32),
        ),
        grid=(N, n_h),
        in_specs=[
            # 1-row top halo (clamped at the image border; zeroed in-kernel).
            pl.BlockSpec((1, 1, W, cin),
                         lambda n, h: (n, jnp.maximum(h * tile_h - 1, 0), 0, 0)),
            # body rows
            pl.BlockSpec((1, tile_h, W, cin), lambda n, h: (n, h, 0, 0)),
            # 1-row bottom halo (clamped at the image border; zeroed in-kernel).
            pl.BlockSpec((1, 1, W, cin),
                         lambda n, h: (n, jnp.minimum(h * tile_h + tile_h, H - 1),
                                       0, 0)),
            # grid-constant operands, resident in VMEM across the whole grid.
            pl.BlockSpec((9, cin, cout), lambda n, h: (0, 0, 0)),
            pl.BlockSpec((1, cin), lambda n, h: (0, 0)),
            pl.BlockSpec((1, cin), lambda n, h: (0, 0)),
        ],
        out_specs=(
            pl.BlockSpec((1, tile_h, W, cout), lambda n, h: (n, h, 0, 0)),
            pl.BlockSpec((1, 2, cout), lambda n, h: (n * n_h + h, 0, 0)),
        ),
        compiler_params=pltpu.CompilerParams(
            dimension_semantics=("parallel", "parallel"),
            vmem_limit_bytes=48 * 1024 * 1024),
    )(x, x, x, w_packed,
      in_scale.reshape(1, cin).astype(jnp.float32),
      in_shift.reshape(1, cin).astype(jnp.float32))
    return y, stats


# ----------------------------------------------------------------------------
# Final BN + ReLU as a lane-dense 2-D elementwise kernel over (rows, W*C).
# ----------------------------------------------------------------------------
def _affine_relu_kernel(y_ref, s_ref, t_ref, o_ref):
    o_ref[...] = jnp.maximum(
        y_ref[...].astype(jnp.float32) * s_ref[0][None, :] + t_ref[0][None, :],
        0.0)


def affine_relu_2d(y2d, scale_row, shift_row, *, tile_rows):
    R, C = y2d.shape
    assert R % tile_rows == 0
    return pl.pallas_call(
        _affine_relu_kernel,
        out_shape=jax.ShapeDtypeStruct((R, C), jnp.float32),
        grid=(R // tile_rows,),
        in_specs=[
            pl.BlockSpec((tile_rows, C), lambda i: (i, 0)),
            pl.BlockSpec((1, C), lambda i: (0, 0)),
            pl.BlockSpec((1, C), lambda i: (0, 0)),
        ],
        out_specs=pl.BlockSpec((tile_rows, C), lambda i: (i, 0)),
        compiler_params=pltpu.CompilerParams(
            dimension_semantics=("parallel",),
            vmem_limit_bytes=32 * 1024 * 1024),
    )(y2d, scale_row.reshape(1, C).astype(jnp.float32),
      shift_row.reshape(1, C).astype(jnp.float32))


# ----------------------------------------------------------------------------
# Host-side helpers (tiny, O(C) work).
# ----------------------------------------------------------------------------
def _pack_weight(w_hwio):
    """(3, 3, Cin, Cout) -> (9, Cin, Cout); tap index = ky*3 + kx."""
    kh, kw, cin, cout = w_hwio.shape
    return w_hwio.reshape(kh * kw, cin, cout)


def _bn_affine_from_stats(stats, gamma, beta, count, eps):
    """Fold train-mode BN (batch stats, biased variance) into a per-channel affine."""
    s = jnp.sum(stats[:, 0, :], axis=0)
    ss = jnp.sum(stats[:, 1, :], axis=0)
    mean = s / count
    # TODO(synk): single-pass E[x^2]-mean^2 is fine in f32; subtract a per-tile
    # shift in-kernel before accumulating if this ever feeds bf16-scale stats.
    var = jnp.maximum(ss / count - mean * mean, 0.0)
    scale = gamma * lax.rsqrt(var + eps)
    shift = beta - mean * scale
    return scale, shift


def _pick_tile_h(H, W, cin, cout, itemsize, vmem_budget=20 * 1024 * 1024):
    """Largest divisor of H whose per-grid-step VMEM footprint fits the budget
    (bigger tiles -> less halo refetch, fuller MXU M; ~20 MiB stays safe under
    v7x's 64 MiB physical VMEM with pipeline headroom)."""
    best = 1
    for th in range(1, H + 1):
        if H % th:
            continue
        step = (2 * (th + 4) * W * cin * itemsize        # in body+halos, 2 buffers
                + 2 * th * W * cout * itemsize           # out tile, 2 buffers
                + (th + 2) * (W + 16) * cin * 4          # padded slab (f32)
                + 3 * (th + 2) * W * cin * 4             # 3 kx-shifted slabs
                + th * W * cout * 4                      # f32 accumulator
                + 2 * 9 * cin * cout * itemsize)         # packed weights, 2 buffers
        if step <= vmem_budget:
            best = th
    return best


def _pick_row_tile(R, C, itemsize=4, target_steps=8, vmem_budget=8 * 1024 * 1024):
    """Row tile for the elementwise pass: a multiple of 8 dividing R, capped so
    2 in + 2 out buffers fit the budget (v5e's small default scoped VMEM),
    preferring ~target_steps grid steps and never one degenerate step."""
    cap_rows = max(8, vmem_budget // (4 * C * max(itemsize, 4)))
    want = max(8, -(-R // target_steps))
    best = None
    t = 8
    while t <= R and t <= cap_rows:
        if R % t == 0 and (t < R or R <= 8):
            if best is None or abs(t - want) <= abs(best - want):
                best = t
        t += 8
    return best if best is not None else R


# ----------------------------------------------------------------------------
# conv_block1 forward: NCHW in -> NCHW out (matching the PyTorch module).
# ----------------------------------------------------------------------------
def conv_block1_forward(x_nchw, params, eps=1e-5, tile_h=None,
                        compute_dtype=jnp.float32):
    x = jnp.transpose(x_nchw, (0, 2, 3, 1)).astype(compute_dtype)  # NCHW -> NHWC
    N, H, W, in_c = x.shape
    o_c = params["w1"].shape[3]
    itemsize = jnp.dtype(compute_dtype).itemsize
    if tile_h is None:
        tile_h = _pick_tile_h(H, W, max(in_c, o_c), o_c, itemsize)

    w1_p = _pack_weight(params["w1"]).astype(compute_dtype)
    w2_p = _pack_weight(params["w2"]).astype(compute_dtype)
    count = N * H * W

    # conv1 (bias dropped: cancelled exactly by train-mode BN) + BN1 partial stats.
    y1, st1 = fused_conv3x3(
        x, w1_p, jnp.ones((in_c,), jnp.float32), jnp.zeros((in_c,), jnp.float32),
        apply_input_bnrelu=False, tile_h=tile_h, out_dtype=compute_dtype)
    sc1, sh1 = _bn_affine_from_stats(st1, params["g1"], params["be1"], count, eps)

    # BN1+ReLU fused into conv2's input path; conv2 emits BN2 partial stats.
    y2, st2 = fused_conv3x3(y1, w2_p, sc1, sh1,
                            apply_input_bnrelu=True, tile_h=tile_h,
                            out_dtype=compute_dtype)
    sc2, sh2 = _bn_affine_from_stats(st2, params["g2"], params["be2"], count, eps)

    # Final BN2 + ReLU on a lane-dense (N*H, W*o_c) view (no channel padding).
    R, C = N * H, W * o_c
    out2d = affine_relu_2d(y2.reshape(R, C), jnp.tile(sc2, W), jnp.tile(sh2, W),
                           tile_rows=_pick_row_tile(R, C, itemsize))
    out = out2d.reshape(N, H, W, o_c)
    return jnp.transpose(out, (0, 3, 1, 2))                         # NHWC -> NCHW


def init_params(key, in_c, o_c):
    k1, k2, k3, k4 = jax.random.split(key, 4)
    # Weights stored HWIO (3, 3, Cin, Cout) for the NHWC kernels.
    w1 = 0.1 * jax.random.normal(k1, (3, 3, in_c, o_c), jnp.float32)
    b1 = 0.01 * jax.random.normal(k2, (o_c,), jnp.float32)
    w2 = 0.1 * jax.random.normal(k3, (3, 3, o_c, o_c), jnp.float32)
    b2 = 0.01 * jax.random.normal(k4, (o_c,), jnp.float32)
    g1 = 1.0 + 0.1 * jnp.arange(o_c, dtype=jnp.float32)
    be1 = 0.05 * jnp.arange(o_c, dtype=jnp.float32)
    g2 = 1.0 - 0.05 * jnp.arange(o_c, dtype=jnp.float32)
    be2 = -0.02 * jnp.arange(o_c, dtype=jnp.float32)
    return dict(w1=w1, b1=b1, w2=w2, b2=b2, g1=g1, be1=be1, g2=g2, be2=be2)


# Pure-JAX reference (same semantics as the PyTorch module, bias included).
def _reference(x_nchw, p, eps=1e-5):
    x = jnp.transpose(x_nchw, (0, 2, 3, 1))
    dn = jax.lax.conv_dimension_numbers(x.shape, p["w1"].shape,
                                        ("NHWC", "HWIO", "NHWC"))

    def block(x, w, b, g, be):
        y = jax.lax.conv_general_dilated(x, w, (1, 1), "SAME",
                                         dimension_numbers=dn) + b
        m = jnp.mean(y, axis=(0, 1, 2))
        v = jnp.var(y, axis=(0, 1, 2))
        return jnp.maximum((y - m) / jnp.sqrt(v + eps) * g + be, 0.0)

    y = block(x, p["w1"], p["b1"], p["g1"], p["be1"])
    y = block(y, p["w2"], p["b2"], p["g2"], p["be2"])
    return jnp.transpose(y, (0, 3, 1, 2))


if __name__ == "__main__":
    key = jax.random.PRNGKey(0)
    kx_, kp = jax.random.split(key)

    N, in_c, o_c, H, W = 2, 4, 8, 16, 16
    x = jax.random.normal(kx_, (N, in_c, H, W), jnp.float32)      # NCHW
    params = init_params(kp, in_c, o_c)

    fwd = jax.jit(conv_block1_forward)
    out = jax.block_until_ready(fwd(x, params))

    ref = jax.block_until_ready(_reference(x, params))
    assert out.shape == (N, o_c, H, W)
    err = float(jnp.max(jnp.abs(out - ref)))
    assert err < 2e-4, f"max abs err {err}"

    print("KERNEL_OK")
</pallas_src>

<mosaic_0001>
module attributes {stable_mosaic.version = 11 : i64} {
  func.func @_fused_conv3x3_kernel(%arg0: i32, %arg1: i32, %arg2: memref<1x1x16x4xf32, #tpu.memory_space<vmem>>, %arg3: memref<1x16x16x4xf32, #tpu.memory_space<vmem>>, %arg4: memref<1x1x16x4xf32, #tpu.memory_space<vmem>>, %arg5: memref<9x4x8xf32, #tpu.memory_space<vmem>>, %arg6: memref<1x4xf32, #tpu.memory_space<vmem>>, %arg7: memref<1x4xf32, #tpu.memory_space<vmem>>, %arg8: memref<1x16x16x8xf32, #tpu.memory_space<vmem>>, %arg9: memref<1x2x8xf32, #tpu.memory_space<vmem>>) attributes {dimension_semantics = [#tpu.dimension_semantics<parallel>, #tpu.dimension_semantics<parallel>], iteration_bounds = array<i64: 2, 1>, scalar_prefetch = 0 : i64, scratch_operands = 0 : i64, tpu.core_type = #tpu.core_type<tc>, window_params = [{transform_indices = @transform_0, window_bounds = array<i64: 1, 1, 16, 4>}, {transform_indices = @transform_1, window_bounds = array<i64: 1, 16, 16, 4>}, {transform_indices = @transform_2, window_bounds = array<i64: 1, 1, 16, 4>}, {pipeline_mode = #tpu.pipeline_mode<synchronous>, transform_indices = @transform_3, window_bounds = array<i64: 9, 4, 8>}, {pipeline_mode = #tpu.pipeline_mode<synchronous>, transform_indices = @transform_4, window_bounds = array<i64: 1, 4>}, {pipeline_mode = #tpu.pipeline_mode<synchronous>, transform_indices = @transform_5, window_bounds = array<i64: 1, 4>}, {transform_indices = @transform_6, window_bounds = array<i64: 1, 16, 16, 8>}, {transform_indices = @transform_7, window_bounds = array<i64: 1, 2, 8>}]} {
    %c0_i32 = arith.constant 0 : i32
    %0 = arith.cmpi sgt, %arg1, %c0_i32 : i32
    %cst = arith.constant 1.000000e+00 : f32
    %cst_0 = arith.constant 0.000000e+00 : f32
    %1 = arith.select %0, %cst, %cst_0 : f32
    %c0_i32_1 = arith.constant 0 : i32
    %2 = arith.cmpi slt, %arg1, %c0_i32_1 : i32
    %cst_2 = arith.constant 1.000000e+00 : f32
    %cst_3 = arith.constant 0.000000e+00 : f32
    %3 = arith.select %2, %cst_2, %cst_3 : f32
    %c0 = arith.constant 0 : index
    %c0_4 = arith.constant 0 : index
    %c0_5 = arith.constant 0 : index
    %c0_6 = arith.constant 0 : index
    %4 = vector.load %arg2[%c0, %c0_4, %c0_5, %c0_6] : memref<1x1x16x4xf32, #tpu.memory_space<vmem>>, vector<1x1x16x4xf32>
    %5 = vector.shape_cast %4 : vector<1x1x16x4xf32> to vector<1x16x4xf32>
    %6 = vector.broadcast %1 : f32 to vector<1x16x4xf32>
    %7 = arith.mulf %5, %6 : vector<1x16x4xf32>
    %c0_7 = arith.constant 0 : index
    %c0_8 = arith.constant 0 : index
    %c0_9 = arith.constant 0 : index
    %c0_10 = arith.constant 0 : index
    %8 = vector.load %arg3[%c0_7, %c0_8, %c0_9, %c0_10] : memref<1x16x16x4xf32, #tpu.memory_space<vmem>>, vector<1x16x16x4xf32>
    %9 = vector.shape_cast %8 : vector<1x16x16x4xf32> to vector<16x16x4xf32>
    %c0_11 = arith.constant 0 : index
    %c0_12 = arith.constant 0 : index
    %c0_13 = arith.constant 0 : index
    %c0_14 = arith.constant 0 : index
    %10 = vector.load %arg4[%c0_11, %c0_12, %c0_13, %c0_14] : memref<1x1x16x4xf32, #tpu.memory_space<vmem>>, vector<1x1x16x4xf32>
    %11 = vector.shape_cast %10 : vector<1x1x16x4xf32> to vector<1x16x4xf32>
    %12 = vector.broadcast %3 : f32 to vector<1x16x4xf32>
    %13 = arith.mulf %11, %12 : vector<1x16x4xf32>
    %14 = tpu.concatenate %7, %9, %13 in 0 : vector<1x16x4xf32>, vector<16x16x4xf32>, vector<1x16x4xf32> -> vector<18x16x4xf32>
    %cst_15 = arith.constant 0.000000e+00 : f32
    %15 = vector.broadcast %cst_15 : f32 to vector<18x8x4xf32>
    %16 = tpu.concatenate %15, %14, %15 in 1 : vector<18x8x4xf32>, vector<18x16x4xf32>, vector<18x8x4xf32> -> vector<18x32x4xf32>
    %17 = vector.extract_strided_slice %16 {offsets = [0, 7, 0], sizes = [18, 16, 4], strides = [1, 1, 1]} : vector<18x32x4xf32> to vector<18x16x4xf32>
    %18 = vector.extract_strided_slice %16 {offsets = [0, 8, 0], sizes = [18, 16, 4], strides = [1, 1, 1]} : vector<18x32x4xf32> to vector<18x16x4xf32>
    %19 = vector.extract_strided_slice %16 {offsets = [0, 9, 0], sizes = [18, 16, 4], strides = [1, 1, 1]} : vector<18x32x4xf32> to vector<18x16x4xf32>
    %cst_16 = arith.constant 0.000000e+00 : f32
    %20 = vector.broadcast %cst_16 : f32 to vector<256x8xf32>
    %21 = vector.extract_strided_slice %17 {offsets = [0, 0, 0], sizes = [16, 16, 4], strides = [1, 1, 1]} : vector<18x16x4xf32> to vector<16x16x4xf32>
    %22 = vector.shape_cast %21 : vector<16x16x4xf32> to vector<256x4xf32>
    %c0_17 = arith.constant 0 : index
    %c0_18 = arith.constant 0 : index
    %c0_19 = arith.constant 0 : index
    %23 = vector.load %arg5[%c0_17, %c0_18, %c0_19] : memref<9x4x8xf32, #tpu.memory_space<vmem>>, vector<1x4x8xf32>
    %24 = vector.shape_cast %23 : vector<1x4x8xf32> to vector<4x8xf32>
    %cst_20 = arith.constant dense<0.000000e+00> : vector<256x8xf32>
    %25 = tpu.matmul %22, %24, %cst_20 {dimension_numbers = #tpu.dot_dimension_numbers<[1], [0], [0], [1], [0, 0, 1, 1], [], []>} : vector<256x4xf32>, vector<4x8xf32>, vector<256x8xf32> -> vector<256x8xf32>
    %26 = arith.addf %20, %25 : vector<256x8xf32>
    %27 = vector.extract_strided_slice %18 {offsets = [0, 0, 0], sizes = [16, 16, 4], strides = [1, 1, 1]} : vector<18x16x4xf32> to vector<16x16x4xf32>
    %28 = vector.shape_cast %27 : vector<16x16x4xf32> to vector<256x4xf32>
    %c1 = arith.constant 1 : index
    %c0_21 = arith.constant 0 : index
    %c0_22 = arith.constant 0 : index
    %29 = vector.load %arg5[%c1, %c0_21, %c0_22] : memref<9x4x8xf32, #tpu.memory_space<vmem>>, vector<1x4x8xf32>
    %30 = vector.shape_cast %29 : vector<1x4x8xf32> to vector<4x8xf32>
    %cst_23 = arith.constant dense<0.000000e+00> : vector<256x8xf32>
    %31 = tpu.matmul %28, %30, %cst_23 {dimension_numbers = #tpu.dot_dimension_numbers<[1], [0], [0], [1], [0, 0, 1, 1], [], []>} : vector<256x4xf32>, vector<4x8xf32>, vector<256x8xf32> -> vector<256x8xf32>
    %32 = arith.addf %26, %31 : vector<256x8xf32>
    %33 = vector.extract_strided_slice %19 {offsets = [0, 0, 0], sizes = [16, 16, 4], strides = [1, 1, 1]} : vector<18x16x4xf32> to vector<16x16x4xf32>
    %34 = vector.shape_cast %33 : vector<16x16x4xf32> to vector<256x4xf32>
    %c2 = arith.constant 2 : index
    %c0_24 = arith.constant 0 : index
    %c0_25 = arith.constant 0 : index
    %35 = vector.load %arg5[%c2, %c0_24, %c0_25] : memref<9x4x8xf32, #tpu.memory_space<vmem>>, vector<1x4x8xf32>
    %36 = vector.shape_cast %35 : vector<1x4x8xf32> to vector<4x8xf32>
    %cst_26 = arith.constant dense<0.000000e+00> : vector<256x8xf32>
    %37 = tpu.matmul %34, %36, %cst_26 {dimension_numbers = #tpu.dot_dimension_numbers<[1], [0], [0], [1], [0, 0, 1, 1], [], []>} : vector<256x4xf32>, vector<4x8xf32>, vector<256x8xf32> -> vector<256x8xf32>
    %38 = arith.addf %32, %37 : vector<256x8xf32>
    %39 = vector.extract_strided_slice %17 {offsets = [1, 0, 0], sizes = [16, 16, 4], strides = [1, 1, 1]} : vector<18x16x4xf32> to vector<16x16x4xf32>
    %40 = vector.shape_cast %39 : vector<16x16x4xf32> to vector<256x4xf32>
    %c3 = arith.constant 3 : index
    %c0_27 = arith.constant 0 : index
    %c0_28 = arith.constant 0 : index
    %41 = vector.load %arg5[%c3, %c0_27, %c0_28] : memref<9x4x8xf32, #tpu.memory_space<vmem>>, vector<1x4x8xf32>
    %42 = vector.shape_cast %41 : vector<1x4x8xf32> to vector<4x8xf32>
    %cst_29 = arith.constant dense<0.000000e+00> : vector<256x8xf32>
    %43 = tpu.matmul %40, %42, %cst_29 {dimension_numbers = #tpu.dot_dimension_numbers<[1], [0], [0], [1], [0, 0, 1, 1], [], []>} : vector<256x4xf32>, vector<4x8xf32>, vector<256x8xf32> -> vector<256x8xf32>
    %44 = arith.addf %38, %43 : vector<256x8xf32>
    %45 = vector.extract_strided_slice %18 {offsets = [1, 0, 0], sizes = [16, 16, 4], strides = [1, 1, 1]} : vector<18x16x4xf32> to vector<16x16x4xf32>
    %46 = vector.shape_cast %45 : vector<16x16x4xf32> to vector<256x4xf32>
    %c4 = arith.constant 4 : index
    %c0_30 = arith.constant 0 : index
    %c0_31 = arith.constant 0 : index
    %47 = vector.load %arg5[%c4, %c0_30, %c0_31] : memref<9x4x8xf32, #tpu.memory_space<vmem>>, vector<1x4x8xf32>
    %48 = vector.shape_cast %47 : vector<1x4x8xf32> to vector<4x8xf32>
    %cst_32 = arith.constant dense<0.000000e+00> : vector<256x8xf32>
    %49 = tpu.matmul %46, %48, %cst_32 {dimension_numbers = #tpu.dot_dimension_numbers<[1], [0], [0], [1], [0, 0, 1, 1], [], []>} : vector<256x4xf32>, vector<4x8xf32>, vector<256x8xf32> -> vector<256x8xf32>
    %50 = arith.addf %44, %49 : vector<256x8xf32>
    %51 = vector.extract_strided_slice %19 {offsets = [1, 0, 0], sizes = [16, 16, 4], strides = [1, 1, 1]} : vector<18x16x4xf32> to vector<16x16x4xf32>
    %52 = vector.shape_cast %51 : vector<16x16x4xf32> to vector<256x4xf32>
    %c5 = arith.constant 5 : index
    %c0_33 = arith.constant 0 : index
    %c0_34 = arith.constant 0 : index
    %53 = vector.load %arg5[%c5, %c0_33, %c0_34] : memref<9x4x8xf32, #tpu.memory_space<vmem>>, vector<1x4x8xf32>
    %54 = vector.shape_cast %53 : vector<1x4x8xf32> to vector<4x8xf32>
    %cst_35 = arith.constant dense<0.000000e+00> : vector<256x8xf32>
    %55 = tpu.matmul %52, %54, %cst_35 {dimension_numbers = #tpu.dot_dimension_numbers<[1], [0], [0], [1], [0, 0, 1, 1], [], []>} : vector<256x4xf32>, vector<4x8xf32>, vector<256x8xf32> -> vector<256x8xf32>
    %56 = arith.addf %50, %55 : vector<256x8xf32>
    %57 = vector.extract_strided_slice %17 {offsets = [2, 0, 0], sizes = [16, 16, 4], strides = [1, 1, 1]} : vector<18x16x4xf32> to vector<16x16x4xf32>
    %58 = vector.shape_cast %57 : vector<16x16x4xf32> to vector<256x4xf32>
    %c6 = arith.constant 6 : index
    %c0_36 = arith.constant 0 : index
    %c0_37 = arith.constant 0 : index
    %59 = vector.load %arg5[%c6, %c0_36, %c0_37] : memref<9x4x8xf32, #tpu.memory_space<vmem>>, vector<1x4x8xf32>
    %60 = vector.shape_cast %59 : vector<1x4x8xf32> to vector<4x8xf32>
    %cst_38 = arith.constant dense<0.000000e+00> : vector<256x8xf32>
    %61 = tpu.matmul %58, %60, %cst_38 {dimension_numbers = #tpu.dot_dimension_numbers<[1], [0], [0], [1], [0, 0, 1, 1], [], []>} : vector<256x4xf32>, vector<4x8xf32>, vector<256x8xf32> -> vector<256x8xf32>
    %62 = arith.addf %56, %61 : vector<256x8xf32>
    %63 = vector.extract_strided_slice %18 {offsets = [2, 0, 0], sizes = [16, 16, 4], strides = [1, 1, 1]} : vector<18x16x4xf32> to vector<16x16x4xf32>
    %64 = vector.shape_cast %63 : vector<16x16x4xf32> to vector<256x4xf32>
    %c7 = arith.constant 7 : index
    %c0_39 = arith.constant 0 : index
    %c0_40 = arith.constant 0 : index
    %65 = vector.load %arg5[%c7, %c0_39, %c0_40] : memref<9x4x8xf32, #tpu.memory_space<vmem>>, vector<1x4x8xf32>
    %66 = vector.shape_cast %65 : vector<1x4x8xf32> to vector<4x8xf32>
    %cst_41 = arith.constant dense<0.000000e+00> : vector<256x8xf32>
    %67 = tpu.matmul %64, %66, %cst_41 {dimension_numbers = #tpu.dot_dimension_numbers<[1], [0], [0], [1], [0, 0, 1, 1], [], []>} : vector<256x4xf32>, vector<4x8xf32>, vector<256x8xf32> -> vector<256x8xf32>
    %68 = arith.addf %62, %67 : vector<256x8xf32>
    %69 = vector.extract_strided_slice %19 {offsets = [2, 0, 0], sizes = [16, 16, 4], strides = [1, 1, 1]} : vector<18x16x4xf32> to vector<16x16x4xf32>
    %70 = vector.shape_cast %69 : vector<16x16x4xf32> to vector<256x4xf32>
    %c8 = arith.constant 8 : index
    %c0_42 = arith.constant 0 : index
    %c0_43 = arith.constant 0 : index
    %71 = vector.load %arg5[%c8, %c0_42, %c0_43] : memref<9x4x8xf32, #tpu.memory_space<vmem>>, vector<1x4x8xf32>
    %72 = vector.shape_cast %71 : vector<1x4x8xf32> to vector<4x8xf32>
    %cst_44 = arith.constant dense<0.000000e+00> : vector<256x8xf32>
    %73 = tpu.matmul %70, %72, %cst_44 {dimension_numbers = #tpu.dot_dimension_numbers<[1], [0], [0], [1], [0, 0, 1, 1], [], []>} : vector<256x4xf32>, vector<4x8xf32>, vector<256x8xf32> -> vector<256x8xf32>
    %74 = arith.addf %68, %73 : vector<256x8xf32>
    %75 = vector.shape_cast %74 : vector<256x8xf32> to vector<16x16x8xf32>
    %c0_45 = arith.constant 0 : index
    %c0_46 = arith.constant 0 : index
    %c0_47 = arith.constant 0 : index
    %c0_48 = arith.constant 0 : index
    %76 = vector.load %arg8[%c0_45, %c0_46, %c0_47, %c0_48] : memref<1x16x16x8xf32, #tpu.memory_space<vmem>>, vector<1x16x16x8xf32>
    %77 = vector.shape_cast %76 : vector<1x16x16x8xf32> to vector<16x16x8xf32>
    %78 = vector.shape_cast %75 : vector<16x16x8xf32> to vector<1x16x16x8xf32>
    tpu.vector_store %arg8[%c0_45, %c0_46, %c0_47, %c0_48], %78 {strides = array<i32>} : memref<1x16x16x8xf32, #tpu.memory_space<vmem>>, vector<1x16x16x8xf32>,
    %cst_49 = arith.constant dense<0.000000e+00> : vector<8xf32>
    %79 = vector.multi_reduction <add>, %74, %cst_49 [0] : vector<256x8xf32> to vector<8xf32>
    %80 = vector.shape_cast %79 : vector<8xf32> to vector<1x8xf32>
    %81 = arith.mulf %74, %74 : vector<256x8xf32>
    %cst_50 = arith.constant dense<0.000000e+00> : vector<8xf32>
    %82 = vector.multi_reduction <add>, %81, %cst_50 [0] : vector<256x8xf32> to vector<8xf32>
    %83 = vector.shape_cast %82 : vector<8xf32> to vector<1x8xf32>
    %84 = tpu.iota {dimensions = array<i32: 0>} : vector<2x8xi32>
    %c0_i32_51 = arith.constant 0 : i32
    %85 = vector.broadcast %c0_i32_51 : i32 to vector<2x8xi32>
    %86 = arith.cmpi eq, %84, %85 : vector<2x8xi32>
    %87 = vector.shape_cast %80 : vector<1x8xf32> to vector<1x8xf32>
    %88 = vector.broadcast %87 : vector<1x8xf32> to vector<2x8xf32>
    %89 = vector.shape_cast %83 : vector<1x8xf32> to vector<1x8xf32>
    %90 = vector.broadcast %89 : vector<1x8xf32> to vector<2x8xf32>
    %91 = arith.select %86, %88, %90 : vector<2x8xi1>, vector<2x8xf32>
    %c0_52 = arith.constant 0 : index
    %c0_53 = arith.constant 0 : index
    %c0_54 = arith.constant 0 : index
    %92 = vector.load %arg9[%c0_52, %c0_53, %c0_54] : memref<1x2x8xf32, #tpu.memory_space<vmem>>, vector<1x2x8xf32>
    %93 = vector.shape_cast %92 : vector<1x2x8xf32> to vector<2x8xf32>
    %94 = vector.shape_cast %91 : vector<2x8xf32> to vector<1x2x8xf32>
    tpu.vector_store %arg9[%c0_52, %c0_53, %c0_54], %94 {strides = array<i32>} : memref<1x2x8xf32, #tpu.memory_space<vmem>>, vector<1x2x8xf32>,
    return
  }
  func.func @transform_0(%arg0: i32, %arg1: i32) -> (i32, i32, i32, i32) {
    %c16_i32 = arith.constant 16 : i32
    %0 = arith.muli %arg1, %c16_i32 : i32
    %c1_i32 = arith.constant 1 : i32
    %1 = arith.subi %0, %c1_i32 : i32
    %c0_i32 = arith.constant 0 : i32
    %2 = arith.maxsi %1, %c0_i32 : i32
    %c0_i32_0 = arith.constant 0 : i32
    %c0_i32_1 = arith.constant 0 : i32
    %c0_i32_2 = arith.constant 0 : i32
    return %arg0, %2, %c0_i32_0, %c0_i32_1 : i32, i32, i32, i32
  }
  func.func @transform_1(%arg0: i32, %arg1: i32) -> (i32, i32, i32, i32) {
    %c0_i32 = arith.constant 0 : i32
    %c0_i32_0 = arith.constant 0 : i32
    %c0_i32_1 = arith.constant 0 : i32
    return %arg0, %arg1, %c0_i32, %c0_i32_0 : i32, i32, i32, i32
  }
  func.func @transform_2(%arg0: i32, %arg1: i32) -> (i32, i32, i32, i32) {
    %c16_i32 = arith.constant 16 : i32
    %0 = arith.muli %arg1, %c16_i32 : i32
    %c16_i32_0 = arith.constant 16 : i32
    %1 = arith.addi %0, %c16_i32_0 : i32
    %c15_i32 = arith.constant 15 : i32
    %2 = arith.minsi %1, %c15_i32 : i32
    %c0_i32 = arith.constant 0 : i32
    %c0_i32_1 = arith.constant 0 : i32
    %c0_i32_2 = arith.constant 0 : i32
    return %arg0, %2, %c0_i32, %c0_i32_1 : i32, i32, i32, i32
  }
  func.func @transform_3(%arg0: i32, %arg1: i32) -> (i32, i32, i32) {
    %c0_i32 = arith.constant 0 : i32
    %c0_i32_0 = arith.constant 0 : i32
    %c0_i32_1 = arith.constant 0 : i32
    %c0_i32_2 = arith.constant 0 : i32
    return %c0_i32, %c0_i32_0, %c0_i32_1 : i32, i32, i32
  }
  func.func @transform_4(%arg0: i32, %arg1: i32) -> (i32, i32) {
    %c0_i32 = arith.constant 0 : i32
    %c0_i32_0 = arith.constant 0 : i32
    %c0_i32_1 = arith.constant 0 : i32
    return %c0_i32, %c0_i32_0 : i32, i32
  }
  func.func @transform_5(%arg0: i32, %arg1: i32) -> (i32, i32) {
    %c0_i32 = arith.constant 0 : i32
    %c0_i32_0 = arith.constant 0 : i32
    %c0_i32_1 = arith.constant 0 : i32
    return %c0_i32, %c0_i32_0 : i32, i32
  }
  func.func @transform_6(%arg0: i32, %arg1: i32) -> (i32, i32, i32, i32) {
    %c0_i32 = arith.constant 0 : i32
    %c0_i32_0 = arith.constant 0 : i32
    %c0_i32_1 = arith.constant 0 : i32
    return %arg0, %arg1, %c0_i32, %c0_i32_0 : i32, i32, i32, i32
  }
  func.func @transform_7(%arg0: i32, %arg1: i32) -> (i32, i32, i32) {
    %c1_i32 = arith.constant 1 : i32
    %0 = arith.muli %arg0, %c1_i32 : i32
    %1 = arith.addi %0, %arg1 : i32
    %c0_i32 = arith.constant 0 : i32
    %c0_i32_0 = arith.constant 0 : i32
    %c0_i32_1 = arith.constant 0 : i32
    return %1, %c0_i32, %c0_i32_0 : i32, i32, i32
  }
}

module attributes {stable_mosaic.version = 11 : i64} {
  func.func @_fused_conv3x3_kernel(%arg0: i32, %arg1: i32, %arg2: memref<1x1x16x8xf32, #tpu.memory_space<vmem>>, %arg3: memref<1x16x16x8xf32, #tpu.memory_space<vmem>>, %arg4: memref<1x1x16x8xf32, #tpu.memory_space<vmem>>, %arg5: memref<9x8x8xf32, #tpu.memory_space<vmem>>, %arg6: memref<1x8xf32, #tpu.memory_space<vmem>>, %arg7: memref<1x8xf32, #tpu.memory_space<vmem>>, %arg8: memref<1x16x16x8xf32, #tpu.memory_space<vmem>>, %arg9: memref<1x2x8xf32, #tpu.memory_space<vmem>>) attributes {dimension_semantics = [#tpu.dimension_semantics<parallel>, #tpu.dimension_semantics<parallel>], iteration_bounds = array<i64: 2, 1>, scalar_prefetch = 0 : i64, scratch_operands = 0 : i64, tpu.core_type = #tpu.core_type<tc>, window_params = [{transform_indices = @transform_0, window_bounds = array<i64: 1, 1, 16, 8>}, {transform_indices = @transform_1, window_bounds = array<i64: 1, 16, 16, 8>}, {transform_indices = @transform_2, window_bounds = array<i64: 1, 1, 16, 8>}, {pipeline_mode = #tpu.pipeline_mode<synchronous>, transform_indices = @transform_3, window_bounds = array<i64: 9, 8, 8>}, {pipeline_mode = #tpu.pipeline_mode<synchronous>, transform_indices = @transform_4, window_bounds = array<i64: 1, 8>}, {pipeline_mode = #tpu.pipeline_mode<synchronous>, transform_indices = @transform_5, window_bounds = array<i64: 1, 8>}, {transform_indices = @transform_6, window_bounds = array<i64: 1, 16, 16, 8>}, {transform_indices = @transform_7, window_bounds = array<i64: 1, 2, 8>}]} {
    %c0_i32 = arith.constant 0 : i32
    %0 = arith.cmpi sgt, %arg1, %c0_i32 : i32
    %cst = arith.constant 1.000000e+00 : f32
    %cst_0 = arith.constant 0.000000e+00 : f32
    %1 = arith.select %0, %cst, %cst_0 : f32
    %c0_i32_1 = arith.constant 0 : i32
    %2 = arith.cmpi slt, %arg1, %c0_i32_1 : i32
    %cst_2 = arith.constant 1.000000e+00 : f32
    %cst_3 = arith.constant 0.000000e+00 : f32
    %3 = arith.select %2, %cst_2, %cst_3 : f32
    %c0 = arith.constant 0 : index
    %c0_4 = arith.constant 0 : index
    %c0_5 = arith.constant 0 : index
    %c0_6 = arith.constant 0 : index
    %4 = vector.load %arg2[%c0, %c0_4, %c0_5, %c0_6] : memref<1x1x16x8xf32, #tpu.memory_space<vmem>>, vector<1x1x16x8xf32>
    %5 = vector.shape_cast %4 : vector<1x1x16x8xf32> to vector<1x16x8xf32>
    %c0_7 = arith.constant 0 : index
    %c0_8 = arith.constant 0 : index
    %6 = vector.load %arg6[%c0_7, %c0_8] : memref<1x8xf32, #tpu.memory_space<vmem>>, vector<1x8xf32>
    %7 = vector.shape_cast %6 : vector<1x8xf32> to vector<8xf32>
    %8 = vector.shape_cast %7 : vector<8xf32> to vector<1x1x8xf32>
    %9 = vector.broadcast %8 : vector<1x1x8xf32> to vector<1x16x8xf32>
    %10 = arith.mulf %5, %9 : vector<1x16x8xf32>
    %c0_9 = arith.constant 0 : index
    %c0_10 = arith.constant 0 : index
    %11 = vector.load %arg7[%c0_9, %c0_10] : memref<1x8xf32, #tpu.memory_space<vmem>>, vector<1x8xf32>
    %12 = vector.shape_cast %11 : vector<1x8xf32> to vector<8xf32>
    %13 = vector.shape_cast %12 : vector<8xf32> to vector<1x1x8xf32>
    %14 = vector.broadcast %13 : vector<1x1x8xf32> to vector<1x16x8xf32>
    %15 = arith.addf %10, %14 : vector<1x16x8xf32>
    %cst_11 = arith.constant 0.000000e+00 : f32
    %16 = vector.broadcast %cst_11 : f32 to vector<1x16x8xf32>
    %17 = arith.maximumf %15, %16 : vector<1x16x8xf32>
    %18 = vector.broadcast %1 : f32 to vector<1x16x8xf32>
    %19 = arith.mulf %17, %18 : vector<1x16x8xf32>
    %c0_12 = arith.constant 0 : index
    %c0_13 = arith.constant 0 : index
    %c0_14 = arith.constant 0 : index
    %c0_15 = arith.constant 0 : index
    %20 = vector.load %arg3[%c0_12, %c0_13, %c0_14, %c0_15] : memref<1x16x16x8xf32, #tpu.memory_space<vmem>>, vector<1x16x16x8xf32>
    %21 = vector.shape_cast %20 : vector<1x16x16x8xf32> to vector<16x16x8xf32>
    %c0_16 = arith.constant 0 : index
    %c0_17 = arith.constant 0 : index
    %22 = vector.load %arg6[%c0_16, %c0_17] : memref<1x8xf32, #tpu.memory_space<vmem>>, vector<1x8xf32>
    %23 = vector.shape_cast %22 : vector<1x8xf32> to vector<8xf32>
    %24 = vector.shape_cast %23 : vector<8xf32> to vector<1x1x8xf32>
    %25 = vector.broadcast %24 : vector<1x1x8xf32> to vector<16x16x8xf32>
    %26 = arith.mulf %21, %25 : vector<16x16x8xf32>
    %c0_18 = arith.constant 0 : index
    %c0_19 = arith.constant 0 : index
    %27 = vector.load %arg7[%c0_18, %c0_19] : memref<1x8xf32, #tpu.memory_space<vmem>>, vector<1x8xf32>
    %28 = vector.shape_cast %27 : vector<1x8xf32> to vector<8xf32>
    %29 = vector.shape_cast %28 : vector<8xf32> to vector<1x1x8xf32>
    %30 = vector.broadcast %29 : vector<1x1x8xf32> to vector<16x16x8xf32>
    %31 = arith.addf %26, %30 : vector<16x16x8xf32>
    %cst_20 = arith.constant 0.000000e+00 : f32
    %32 = vector.broadcast %cst_20 : f32 to vector<16x16x8xf32>
    %33 = arith.maximumf %31, %32 : vector<16x16x8xf32>
    %c0_21 = arith.constant 0 : index
    %c0_22 = arith.constant 0 : index
    %c0_23 = arith.constant 0 : index
    %c0_24 = arith.constant 0 : index
    %34 = vector.load %arg4[%c0_21, %c0_22, %c0_23, %c0_24] : memref<1x1x16x8xf32, #tpu.memory_space<vmem>>, vector<1x1x16x8xf32>
    %35 = vector.shape_cast %34 : vector<1x1x16x8xf32> to vector<1x16x8xf32>
    %c0_25 = arith.constant 0 : index
    %c0_26 = arith.constant 0 : index
    %36 = vector.load %arg6[%c0_25, %c0_26] : memref<1x8xf32, #tpu.memory_space<vmem>>, vector<1x8xf32>
    %37 = vector.shape_cast %36 : vector<1x8xf32> to vector<8xf32>
    %38 = vector.shape_cast %37 : vector<8xf32> to vector<1x1x8xf32>
    %39 = vector.broadcast %38 : vector<1x1x8xf32> to vector<1x16x8xf32>
    %40 = arith.mulf %35, %39 : vector<1x16x8xf32>
    %c0_27 = arith.constant 0 : index
    %c0_28 = arith.constant 0 : index
    %41 = vector.load %arg7[%c0_27, %c0_28] : memref<1x8xf32, #tpu.memory_space<vmem>>, vector<1x8xf32>
    %42 = vector.shape_cast %41 : vector<1x8xf32> to vector<8xf32>
    %43 = vector.shape_cast %42 : vector<8xf32> to vector<1x1x8xf32>
    %44 = vector.broadcast %43 : vector<1x1x8xf32> to vector<1x16x8xf32>
    %45 = arith.addf %40, %44 : vector<1x16x8xf32>
    %cst_29 = arith.constant 0.000000e+00 : f32
    %46 = vector.broadcast %cst_29 : f32 to vector<1x16x8xf32>
    %47 = arith.maximumf %45, %46 : vector<1x16x8xf32>
    %48 = vector.broadcast %3 : f32 to vector<1x16x8xf32>
    %49 = arith.mulf %47, %48 : vector<1x16x8xf32>
    %50 = tpu.concatenate %19, %33, %49 in 0 : vector<1x16x8xf32>, vector<16x16x8xf32>, vector<1x16x8xf32> -> vector<18x16x8xf32>
    %cst_30 = arith.constant 0.000000e+00 : f32
    %51 = vector.broadcast %cst_30 : f32 to vector<18x8x8xf32>
    %52 = tpu.concatenate %51, %50, %51 in 1 : vector<18x8x8xf32>, vector<18x16x8xf32>, vector<18x8x8xf32> -> vector<18x32x8xf32>
    %53 = vector.extract_strided_slice %52 {offsets = [0, 7, 0], sizes = [18, 16, 8], strides = [1, 1, 1]} : vector<18x32x8xf32> to vector<18x16x8xf32>
    %54 = vector.extract_strided_slice %52 {offsets = [0, 8, 0], sizes = [18, 16, 8], strides = [1, 1, 1]} : vector<18x32x8xf32> to vector<18x16x8xf32>
    %55 = vector.extract_strided_slice %52 {offsets = [0, 9, 0], sizes = [18, 16, 8], strides = [1, 1, 1]} : vector<18x32x8xf32> to vector<18x16x8xf32>
    %cst_31 = arith.constant 0.000000e+00 : f32
    %56 = vector.broadcast %cst_31 : f32 to vector<256x8xf32>
    %57 = vector.extract_strided_slice %53 {offsets = [0, 0, 0], sizes = [16, 16, 8], strides = [1, 1, 1]} : vector<18x16x8xf32> to vector<16x16x8xf32>
    %58 = vector.shape_cast %57 : vector<16x16x8xf32> to vector<256x8xf32>
    %c0_32 = arith.constant 0 : index
    %c0_33 = arith.constant 0 : index
    %c0_34 = arith.constant 0 : index
    %59 = vector.load %arg5[%c0_32, %c0_33, %c0_34] : memref<9x8x8xf32, #tpu.memory_space<vmem>>, vector<1x8x8xf32>
    %60 = vector.shape_cast %59 : vector<1x8x8xf32> to vector<8x8xf32>
    %cst_35 = arith.constant dense<0.000000e+00> : vector<256x8xf32>
    %61 = tpu.matmul %58, %60, %cst_35 {dimension_numbers = #tpu.dot_dimension_numbers<[1], [0], [0], [1], [0, 0, 1, 1], [], []>} : vector<256x8xf32>, vector<8x8xf32>, vector<256x8xf32> -> vector<256x8xf32>
    %62 = arith.addf %56, %61 : vector<256x8xf32>
    %63 = vector.extract_strided_slice %54 {offsets = [0, 0, 0], sizes = [16, 16, 8], strides = [1, 1, 1]} : vector<18x16x8xf32> to vector<16x16x8xf32>
    %64 = vector.shape_cast %63 : vector<16x16x8xf32> to vector<256x8xf32>
    %c1 = arith.constant 1 : index
    %c0_36 = arith.constant 0 : index
    %c0_37 = arith.constant 0 : index
    %65 = vector.load %arg5[%c1, %c0_36, %c0_37] : memref<9x8x8xf32, #tpu.memory_space<vmem>>, vector<1x8x8xf32>
    %66 = vector.shape_cast %65 : vector<1x8x8xf32> to vector<8x8xf32>
    %cst_38 = arith.constant dense<0.000000e+00> : vector<256x8xf32>
    %67 = tpu.matmul %64, %66, %cst_38 {dimension_numbers = #tpu.dot_dimension_numbers<[1], [0], [0], [1], [0, 0, 1, 1], [], []>} : vector<256x8xf32>, vector<8x8xf32>, vector<256x8xf32> -> vector<256x8xf32>
    %68 = arith.addf %62, %67 : vector<256x8xf32>
    %69 = vector.extract_strided_slice %55 {offsets = [0, 0, 0], sizes = [16, 16, 8], strides = [1, 1, 1]} : vector<18x16x8xf32> to vector<16x16x8xf32>
    %70 = vector.shape_cast %69 : vector<16x16x8xf32> to vector<256x8xf32>
    %c2 = arith.constant 2 : index
    %c0_39 = arith.constant 0 : index
    %c0_40 = arith.constant 0 : index
    %71 = vector.load %arg5[%c2, %c0_39, %c0_40] : memref<9x8x8xf32, #tpu.memory_space<vmem>>, vector<1x8x8xf32>
    %72 = vector.shape_cast %71 : vector<1x8x8xf32> to vector<8x8xf32>
    %cst_41 = arith.constant dense<0.000000e+00> : vector<256x8xf32>
    %73 = tpu.matmul %70, %72, %cst_41 {dimension_numbers = #tpu.dot_dimension_numbers<[1], [0], [0], [1], [0, 0, 1, 1], [], []>} : vector<256x8xf32>, vector<8x8xf32>, vector<256x8xf32> -> vector<256x8xf32>
    %74 = arith.addf %68, %73 : vector<256x8xf32>
    %75 = vector.extract_strided_slice %53 {offsets = [1, 0, 0], sizes = [16, 16, 8], strides = [1, 1, 1]} : vector<18x16x8xf32> to vector<16x16x8xf32>
    %76 = vector.shape_cast %75 : vector<16x16x8xf32> to vector<256x8xf32>
    %c3 = arith.constant 3 : index
    %c0_42 = arith.constant 0 : index
    %c0_43 = arith.constant 0 : index
    %77 = vector.load %arg5[%c3, %c0_42, %c0_43] : memref<9x8x8xf32, #tpu.memory_space<vmem>>, vector<1x8x8xf32>
    %78 = vector.shape_cast %77 : vector<1x8x8xf32> to vector<8x8xf32>
    %cst_44 = arith.constant dense<0.000000e+00> : vector<256x8xf32>
    %79 = tpu.matmul %76, %78, %cst_44 {dimension_numbers = #tpu.dot_dimension_numbers<[1], [0], [0], [1], [0, 0, 1, 1], [], []>} : vector<256x8xf32>, vector<8x8xf32>, vector<256x8xf32> -> vector<256x8xf32>
    %80 = arith.addf %74, %79 : vector<256x8xf32>
    %81 = vector.extract_strided_slice %54 {offsets = [1, 0, 0], sizes = [16, 16, 8], strides = [1, 1, 1]} : vector<18x16x8xf32> to vector<16x16x8xf32>
    %82 = vector.shape_cast %81 : vector<16x16x8xf32> to vector<256x8xf32>
    %c4 = arith.constant 4 : index
    %c0_45 = arith.constant 0 : index
    %c0_46 = arith.constant 0 : index
    %83 = vector.load %arg5[%c4, %c0_45, %c0_46] : memref<9x8x8xf32, #tpu.memory_space<vmem>>, vector<1x8x8xf32>
    %84 = vector.shape_cast %83 : vector<1x8x8xf32> to vector<8x8xf32>
    %cst_47 = arith.constant dense<0.000000e+00> : vector<256x8xf32>
    %85 = tpu.matmul %82, %84, %cst_47 {dimension_numbers = #tpu.dot_dimension_numbers<[1], [0], [0], [1], [0, 0, 1, 1], [], []>} : vector<256x8xf32>, vector<8x8xf32>, vector<256x8xf32> -> vector<256x8xf32>
    %86 = arith.addf %80, %85 : vector<256x8xf32>
    %87 = vector.extract_strided_slice %55 {offsets = [1, 0, 0], sizes = [16, 16, 8], strides = [1, 1, 1]} : vector<18x16x8xf32> to vector<16x16x8xf32>
    %88 = vector.shape_cast %87 : vector<16x16x8xf32> to vector<256x8xf32>
    %c5 = arith.constant 5 : index
    %c0_48 = arith.constant 0 : index
    %c0_49 = arith.constant 0 : index
    %89 = vector.load %arg5[%c5, %c0_48, %c0_49] : memref<9x8x8xf32, #tpu.memory_space<vmem>>, vector<1x8x8xf32>
    %90 = vector.shape_cast %89 : vector<1x8x8xf32> to vector<8x8xf32>
    %cst_50 = arith.constant dense<0.000000e+00> : vector<256x8xf32>
    %91 = tpu.matmul %88, %90, %cst_50 {dimension_numbers = #tpu.dot_dimension_numbers<[1], [0], [0], [1], [0, 0, 1, 1], [], []>} : vector<256x8xf32>, vector<8x8xf32>, vector<256x8xf32> -> vector<256x8xf32>
    %92 = arith.addf %86, %91 : vector<256x8xf32>
    %93 = vector.extract_strided_slice %53 {offsets = [2, 0, 0], sizes = [16, 16, 8], strides = [1, 1, 1]} : vector<18x16x8xf32> to vector<16x16x8xf32>
    %94 = vector.shape_cast %93 : vector<16x16x8xf32> to vector<256x8xf32>
    %c6 = arith.constant 6 : index
    %c0_51 = arith.constant 0 : index
    %c0_52 = arith.constant 0 : index
    %95 = vector.load %arg5[%c6, %c0_51, %c0_52] : memref<9x8x8xf32, #tpu.memory_space<vmem>>, vector<1x8x8xf32>
    %96 = vector.shape_cast %95 : vector<1x8x8xf32> to vector<8x8xf32>
    %cst_53 = arith.constant dense<0.000000e+00> : vector<256x8xf32>
    %97 = tpu.matmul %94, %96, %cst_53 {dimension_numbers = #tpu.dot_dimension_numbers<[1], [0], [0], [1], [0, 0, 1, 1], [], []>} : vector<256x8xf32>, vector<8x8xf32>, vector<256x8xf32> -> vector<256x8xf32>
    %98 = arith.addf %92, %97 : vector<256x8xf32>
    %99 = vector.extract_strided_slice %54 {offsets = [2, 0, 0], sizes = [16, 16, 8], strides = [1, 1, 1]} : vector<18x16x8xf32> to vector<16x16x8xf32>
    %100 = vector.shape_cast %99 : vector<16x16x8xf32> to vector<256x8xf32>
    %c7 = arith.constant 7 : index
    %c0_54 = arith.constant 0 : index
    %c0_55 = arith.constant 0 : index
    %101 = vector.load %arg5[%c7, %c0_54, %c0_55] : memref<9x8x8xf32, #tpu.memory_space<vmem>>, vector<1x8x8xf32>
    %102 = vector.shape_cast %101 : vector<1x8x8xf32> to vector<8x8xf32>
    %cst_56 = arith.constant dense<0.000000e+00> : vector<256x8xf32>
    %103 = tpu.matmul %100, %102, %cst_56 {dimension_numbers = #tpu.dot_dimension_numbers<[1], [0], [0], [1], [0, 0, 1, 1], [], []>} : vector<256x8xf32>, vector<8x8xf32>, vector<256x8xf32> -> vector<256x8xf32>
    %104 = arith.addf %98, %103 : vector<256x8xf32>
    %105 = vector.extract_strided_slice %55 {offsets = [2, 0, 0], sizes = [16, 16, 8], strides = [1, 1, 1]} : vector<18x16x8xf32> to vector<16x16x8xf32>
    %106 = vector.shape_cast %105 : vector<16x16x8xf32> to vector<256x8xf32>
    %c8 = arith.constant 8 : index
    %c0_57 = arith.constant 0 : index
    %c0_58 = arith.constant 0 : index
    %107 = vector.load %arg5[%c8, %c0_57, %c0_58] : memref<9x8x8xf32, #tpu.memory_space<vmem>>, vector<1x8x8xf32>
    %108 = vector.shape_cast %107 : vector<1x8x8xf32> to vector<8x8xf32>
    %cst_59 = arith.constant dense<0.000000e+00> : vector<256x8xf32>
    %109 = tpu.matmul %106, %108, %cst_59 {dimension_numbers = #tpu.dot_dimension_numbers<[1], [0], [0], [1], [0, 0, 1, 1], [], []>} : vector<256x8xf32>, vector<8x8xf32>, vector<256x8xf32> -> vector<256x8xf32>
    %110 = arith.addf %104, %109 : vector<256x8xf32>
    %111 = vector.shape_cast %110 : vector<256x8xf32> to vector<16x16x8xf32>
    %c0_60 = arith.constant 0 : index
    %c0_61 = arith.constant 0 : index
    %c0_62 = arith.constant 0 : index
    %c0_63 = arith.constant 0 : index
    %112 = vector.load %arg8[%c0_60, %c0_61, %c0_62, %c0_63] : memref<1x16x16x8xf32, #tpu.memory_space<vmem>>, vector<1x16x16x8xf32>
    %113 = vector.shape_cast %112 : vector<1x16x16x8xf32> to vector<16x16x8xf32>
    %114 = vector.shape_cast %111 : vector<16x16x8xf32> to vector<1x16x16x8xf32>
    tpu.vector_store %arg8[%c0_60, %c0_61, %c0_62, %c0_63], %114 {strides = array<i32>} : memref<1x16x16x8xf32, #tpu.memory_space<vmem>>, vector<1x16x16x8xf32>,
    %cst_64 = arith.constant dense<0.000000e+00> : vector<8xf32>
    %115 = vector.multi_reduction <add>, %110, %cst_64 [0] : vector<256x8xf32> to vector<8xf32>
    %116 = vector.shape_cast %115 : vector<8xf32> to vector<1x8xf32>
    %117 = arith.mulf %110, %110 : vector<256x8xf32>
    %cst_65 = arith.constant dense<0.000000e+00> : vector<8xf32>
    %118 = vector.multi_reduction <add>, %117, %cst_65 [0] : vector<256x8xf32> to vector<8xf32>
    %119 = vector.shape_cast %118 : vector<8xf32> to vector<1x8xf32>
    %120 = tpu.iota {dimensions = array<i32: 0>} : vector<2x8xi32>
    %c0_i32_66 = arith.constant 0 : i32
    %121 = vector.broadcast %c0_i32_66 : i32 to vector<2x8xi32>
    %122 = arith.cmpi eq, %120, %121 : vector<2x8xi32>
    %123 = vector.shape_cast %116 : vector<1x8xf32> to vector<1x8xf32>
    %124 = vector.broadcast %123 : vector<1x8xf32> to vector<2x8xf32>
    %125 = vector.shape_cast %119 : vector<1x8xf32> to vector<1x8xf32>
    %126 = vector.broadcast %125 : vector<1x8xf32> to vector<2x8xf32>
    %127 = arith.select %122, %124, %126 : vector<2x8xi1>, vector<2x8xf32>
    %c0_67 = arith.constant 0 : index
    %c0_68 = arith.constant 0 : index
    %c0_69 = arith.constant 0 : index
    %128 = vector.load %arg9[%c0_67, %c0_68, %c0_69] : memref<1x2x8xf32, #tpu.memory_space<vmem>>, vector<1x2x8xf32>
    %129 = vector.shape_cast %128 : vector<1x2x8xf32> to vector<2x8xf32>
    %130 = vector.shape_cast %127 : vector<2x8xf32> to vector<1x2x8xf32>
    tpu.vector_store %arg9[%c0_67, %c0_68, %c0_69], %130 {strides = array<i32>} : memref<1x2x8xf32, #tpu.memory_space<vmem>>, vector<1x2x8xf32>,
    return
  }
  func.func @transform_0(%arg0: i32, %arg1: i32) -> (i32, i32, i32, i32) {
    %c16_i32 = arith.constant 16 : i32
    %0 = arith.muli %arg1, %c16_i32 : i32
    %c1_i32 = arith.constant 1 : i32
    %1 = arith.subi %0, %c1_i32 : i32
    %c0_i32 = arith.constant 0 : i32
    %2 = arith.maxsi %1, %c0_i32 : i32
    %c0_i32_0 = arith.constant 0 : i32
    %c0_i32_1 = arith.constant 0 : i32
    %c0_i32_2 = arith.constant 0 : i32
    return %arg0, %2, %c0_i32_0, %c0_i32_1 : i32, i32, i32, i32
  }
  func.func @transform_1(%arg0: i32, %arg1: i32) -> (i32, i32, i32, i32) {
    %c0_i32 = arith.constant 0 : i32
    %c0_i32_0 = arith.constant 0 : i32
    %c0_i32_1 = arith.constant 0 : i32
    return %arg0, %arg1, %c0_i32, %c0_i32_0 : i32, i32, i32, i32
  }
  func.func @transform_2(%arg0: i32, %arg1: i32) -> (i32, i32, i32, i32) {
    %c16_i32 = arith.constant 16 : i32
    %0 = arith.muli %arg1, %c16_i32 : i32
    %c16_i32_0 = arith.constant 16 : i32
    %1 = arith.addi %0, %c16_i32_0 : i32
    %c15_i32 = arith.constant 15 : i32
    %2 = arith.minsi %1, %c15_i32 : i32
    %c0_i32 = arith.constant 0 : i32
    %c0_i32_1 = arith.constant 0 : i32
    %c0_i32_2 = arith.constant 0 : i32
    return %arg0, %2, %c0_i32, %c0_i32_1 : i32, i32, i32, i32
  }
  func.func @transform_3(%arg0: i32, %arg1: i32) -> (i32, i32, i32) {
    %c0_i32 = arith.constant 0 : i32
    %c0_i32_0 = arith.constant 0 : i32
    %c0_i32_1 = arith.constant 0 : i32
    %c0_i32_2 = arith.constant 0 : i32
    return %c0_i32, %c0_i32_0, %c0_i32_1 : i32, i32, i32
  }
  func.func @transform_4(%arg0: i32, %arg1: i32) -> (i32, i32) {
    %c0_i32 = arith.constant 0 : i32
    %c0_i32_0 = arith.constant 0 : i32
    %c0_i32_1 = arith.constant 0 : i32
    return %c0_i32, %c0_i32_0 : i32, i32
  }
  func.func @transform_5(%arg0: i32, %arg1: i32) -> (i32, i32) {
    %c0_i32 = arith.constant 0 : i32
    %c0_i32_0 = arith.constant 0 : i32
    %c0_i32_1 = arith.constant 0 : i32
    return %c0_i32, %c0_i32_0 : i32, i32
  }
  func.func @transform_6(%arg0: i32, %arg1: i32) -> (i32, i32, i32, i32) {
    %c0_i32 = arith.constant 0 : i32
    %c0_i32_0 = arith.constant 0 : i32
    %c0_i32_1 = arith.constant 0 : i32
    return %arg0, %arg1, %c0_i32, %c0_i32_0 : i32, i32, i32, i32
  }
  func.func @transform_7(%arg0: i32, %arg1: i32) -> (i32, i32, i32) {
    %c1_i32 = arith.constant 1 : i32
    %0 = arith.muli %arg0, %c1_i32 : i32
    %1 = arith.addi %0, %arg1 : i32
    %c0_i32 = arith.constant 0 : i32
    %c0_i32_0 = arith.constant 0 : i32
    %c0_i32_1 = arith.constant 0 : i32
    return %1, %c0_i32, %c0_i32_0 : i32, i32, i32
  }
}

module attributes {stable_mosaic.version = 11 : i64} {
  func.func @_affine_relu_kernel(%arg0: i32, %arg1: memref<8x128xf32, #tpu.memory_space<vmem>>, %arg2: memref<1x128xf32, #tpu.memory_space<vmem>>, %arg3: memref<1x128xf32, #tpu.memory_space<vmem>>, %arg4: memref<8x128xf32, #tpu.memory_space<vmem>>) attributes {dimension_semantics = [#tpu.dimension_semantics<parallel>], iteration_bounds = array<i64: 4>, scalar_prefetch = 0 : i64, scratch_operands = 0 : i64, tpu.core_type = #tpu.core_type<tc>, window_params = [{transform_indices = @transform_0, window_bounds = array<i64: 8, 128>}, {pipeline_mode = #tpu.pipeline_mode<synchronous>, transform_indices = @transform_1, window_bounds = array<i64: 1, 128>}, {pipeline_mode = #tpu.pipeline_mode<synchronous>, transform_indices = @transform_2, window_bounds = array<i64: 1, 128>}, {transform_indices = @transform_3, window_bounds = array<i64: 8, 128>}]} {
    %c0 = arith.constant 0 : index
    %c0_0 = arith.constant 0 : index
    %0 = vector.load %arg1[%c0, %c0_0] : memref<8x128xf32, #tpu.memory_space<vmem>>, vector<8x128xf32>
    %c0_1 = arith.constant 0 : index
    %c0_2 = arith.constant 0 : index
    %1 = vector.load %arg2[%c0_1, %c0_2] : memref<1x128xf32, #tpu.memory_space<vmem>>, vector<1x128xf32>
    %2 = vector.shape_cast %1 : vector<1x128xf32> to vector<128xf32>
    %3 = vector.shape_cast %2 : vector<128xf32> to vector<1x128xf32>
    %4 = vector.broadcast %3 : vector<1x128xf32> to vector<8x128xf32>
    %5 = arith.mulf %0, %4 : vector<8x128xf32>
    %c0_3 = arith.constant 0 : index
    %c0_4 = arith.constant 0 : index
    %6 = vector.load %arg3[%c0_3, %c0_4] : memref<1x128xf32, #tpu.memory_space<vmem>>, vector<1x128xf32>
    %7 = vector.shape_cast %6 : vector<1x128xf32> to vector<128xf32>
    %8 = vector.shape_cast %7 : vector<128xf32> to vector<1x128xf32>
    %9 = vector.broadcast %8 : vector<1x128xf32> to vector<8x128xf32>
    %10 = arith.addf %5, %9 : vector<8x128xf32>
    %cst = arith.constant 0.000000e+00 : f32
    %11 = vector.broadcast %cst : f32 to vector<8x128xf32>
    %12 = arith.maximumf %10, %11 : vector<8x128xf32>
    %c0_5 = arith.constant 0 : index
    %c0_6 = arith.constant 0 : index
    %13 = vector.load %arg4[%c0_5, %c0_6] : memref<8x128xf32, #tpu.memory_space<vmem>>, vector<8x128xf32>
    tpu.vector_store %arg4[%c0_5, %c0_6], %12 {strides = array<i32>} : memref<8x128xf32, #tpu.memory_space<vmem>>, vector<8x128xf32>,
    return
  }
  func.func @transform_0(%arg0: i32) -> (i32, i32) {
    %c0_i32 = arith.constant 0 : i32
    %c0_i32_0 = arith.constant 0 : i32
    return %arg0, %c0_i32 : i32, i32
  }
  func.func @transform_1(%arg0: i32) -> (i32, i32) {
    %c0_i32 = arith.constant 0 : i32
    %c0_i32_0 = arith.constant 0 : i32
    %c0_i32_1 = arith.constant 0 : i32
    return %c0_i32, %c0_i32_0 : i32, i32
  }
  func.func @transform_2(%arg0: i32) -> (i32, i32) {
    %c0_i32 = arith.constant 0 : i32
    %c0_i32_0 = arith.constant 0 : i32
    %c0_i32_1 = arith.constant 0 : i32
    return %c0_i32, %c0_i32_0 : i32, i32
  }
  func.func @transform_3(%arg0: i32) -> (i32, i32) {
    %c0_i32 = arith.constant 0 : i32
    %c0_i32_0 = arith.constant 0 : i32
    return %arg0, %c0_i32 : i32, i32
  }
}

</mosaic_0001>

<llo_original>
// kernel: tile.17
$region0: #{tile.17}
  #allocation0 [shape = 's32[1]{0}', space=sflag, size = 0x4, scoped, tag = 'scoped memory for tile.17']
  %s0 = inlined_call_operand.vmem [shape: f32[8], index: 0, kind: input, shape index: {}]
  %s1 = inlined_call_operand.vmem [shape: f32[16,8], index: 1, kind: output, shape index: {}]
  // Predicated region
  $region2: #{tile.17} parent=0 // pred_check
    _
  $region3: #{tile.17} parent=0 // pred_check_branch
    %3 = sbr.rel (0) target = $region5
  $region4: #{tile.17} parent=0 // pred_region
    _
  $region5: #{tile.17} parent=0 // pred_fallthru
    _
  %v4 = vld [vmem:[%s0] ss:$0 sm:$0xff]
  %5 = vst [vmem:[%s1] sm:$0xff] %v4
  %s6 = scalar_lea.vmem %s1, 8
  %7 = vst [vmem:[%s6] sm:$0xff] %v4

// kernel: tile.19
$region0: #{tile.19}
  %s0 = inlined_call_operand.vmem [shape: f32[16,8], index: 0, kind: input, shape index: {}]
  %s1 = inlined_call_operand.vmem [shape: f32[1,128], index: 1, kind: output, shape index: {}]
  $region1: #{tile.19} parent=0
    #allocation0 [shape = 'u8[4096]{0}', space=vmem, size = 0x1000, scoped, tag = 'scoped mem for output reshape']
    %v2 = vld [vmem:[%s0] sm:$0x1]
    %vm3 = vcmask 64512
    %4 = vst.msk [vmem:[#allocation0] sm:$0x1] %vm3, %v2
    %s5 = scalar_lea.vmem %s0, 15
    %v6 = vld [vmem:[%s5] sm:$0x1]
    %7 = vrot.lane.b32.xlu0 %v6, 120
    %v8 = vpop.permute.xlu0 %7
    %vm9 = vcmask 1048512
    %10 = vst.msk [vmem:[#allocation0] sm:$0x1] %vm9, %v8
    %s11 = scalar_lea.vmem %s0, 14
    %v12 = vld [vmem:[%s11] sm:$0x1]
    %13 = vrot.lane.b32.xlu0 %v12, 112
    %v14 = vpop.permute.xlu0 %13
    %vm15 = vcmask 982912
    %16 = vst.msk [vmem:[#allocation0] sm:$0x1] %vm15, %v14
    %s17 = scalar_lea.vmem %s0, 13
    %v18 = vld [vmem:[%s17] sm:$0x1]
    %19 = vrot.lane.b32.xlu0 %v18, 104
    %v20 = vpop.permute.xlu0 %19
    %vm21 = vcmask 917312
    %22 = vst.msk [vmem:[#allocation0] sm:$0x1] %vm21, %v20
    %s23 = scalar_lea.vmem %s0, 12
    %v24 = vld [vmem:[%s23] sm:$0x1]
    %25 = vrot.lane.b32.xlu0 %v24, 96
    %v26 = vpop.permute.xlu0 %25
    %vm27 = vcmask 851712
    %28 = vst.msk [vmem:[#allocation0] sm:$0x1] %vm27, %v26
    %s29 = scalar_lea.vmem %s0, 11
    %v30 = vld [vmem:[%s29] sm:$0x1]
    %31 = vrot.lane.b32.xlu0 %v30, 88
    %v32 = vpop.permute.xlu0 %31
    %vm33 = vcmask 786112
    %34 = vst.msk [vmem:[#allocation0] sm:$0x1] %vm33, %v32
    %s35 = scalar_lea.vmem %s0, 10
    %v36 = vld [vmem:[%s35] sm:$0x1]
    %37 = vrot.lane.b32.xlu0 %v36, 80
    %v38 = vpop.permute.xlu0 %37
    %vm39 = vcmask 720512
    %40 = vst.msk [vmem:[#allocation0] sm:$0x1] %vm39, %v38
    %s41 = scalar_lea.vmem %s0, 9
    %v42 = vld [vmem:[%s41] sm:$0x1]
    %43 = vrot.lane.b32.xlu0 %v42, 72
    %v44 = vpop.permute.xlu0 %43
    %vm45 = vcmask 654912
    %46 = vst.msk [vmem:[#allocation0] sm:$0x1] %vm45, %v44
    %s47 = scalar_lea.vmem %s0, 8
    %v48 = vld [vmem:[%s47] sm:$0x1]
    %49 = vrot.lane.b32.xlu0 %v48, 64
    %v50 = vpop.permute.xlu0 %49
    %vm51 = vcmask 589312
    %52 = vst.msk [vmem:[#allocation0] sm:$0x1] %vm51, %v50
    %s53 = scalar_lea.vmem %s0, 7
    %v54 = vld [vmem:[%s53] sm:$0x1]
    %55 = vrot.lane.b32.xlu0 %v54, 56
    %v56 = vpop.permute.xlu0 %55
    %vm57 = vcmask 523712
    %58 = vst.msk [vmem:[#allocation0] sm:$0x1] %vm57, %v56
    %s59 = scalar_lea.vmem %s0, 6
    %v60 = vld [vmem:[%s59] sm:$0x1]
    %61 = vrot.lane.b32.xlu0 %v60, 48
    %v62 = vpop.permute.xlu0 %61
    %vm63 = vcmask 458112
    %64 = vst.msk [vmem:[#allocation0] sm:$0x1] %vm63, %v62
    %s65 = scalar_lea.vmem %s0, 5
    %v66 = vld [vmem:[%s65] sm:$0x1]
    %67 = vrot.lane.b32.xlu0 %v66, 40
    %v68 = vpop.permute.xlu0 %67
    %vm69 = vcmask 392512
    %70 = vst.msk [vmem:[#allocation0] sm:$0x1] %vm69, %v68
    %s71 = scalar_lea.vmem %s0, 4
    %v72 = vld [vmem:[%s71] sm:$0x1]
    %73 = vrot.lane.b32.xlu0 %v72, 32
    %v74 = vpop.permute.xlu0 %73
    %vm75 = vcmask 326912
    %76 = vst.msk [vmem:[#allocation0] sm:$0x1] %vm75, %v74
    %s77 = scalar_lea.vmem %s0, 3
    %v78 = vld [vmem:[%s77] sm:$0x1]
    %79 = vrot.lane.b32.xlu0 %v78, 24
    %v80 = vpop.permute.xlu0 %79
    %vm81 = vcmask 261312
    %82 = vst.msk [vmem:[#allocation0] sm:$0x1] %vm81, %v80
    %s83 = scalar_lea.vmem %s0, 2
    %v84 = vld [vmem:[%s83] sm:$0x1]
    %85 = vrot.lane.b32.xlu0 %v84, 16
    %v86 = vpop.permute.xlu0 %85
    %vm87 = vcmask 195712
    %88 = vst.msk [vmem:[#allocation0] sm:$0x1] %vm87, %v86
    %s89 = scalar_lea.vmem %s0, 1
    %v90 = vld [vmem:[%s89] sm:$0x1]
    %91 = vrot.lane.b32.xlu0 %v90, 8
    %v92 = vpop.permute.xlu0 %91
    %vm93 = vcmask 130112
    %94 = vst.msk [vmem:[#allocation0] sm:$0x1] %vm93, %v92
    %s96 = sshllo.u32 0, 1
    %v98 = vld [vmem:[#allocation0] sm:%s96]
    %s99 = sshllo.u32 0, 1
    %100 = vst [vmem:[%s1] sm:%s99] %v98

// kernel: conv_block1_forward.5
$region0: #{conv_block1_forward.5}
  #allocation0 [shape = 'u32[]', space=smem, size = 0x4, offset = 0x4, fixed_abs, tag = 'smem constant byte address 0x4 - core index']
  #allocation1 [shape = 'u32[144,128]{1,0:T(1,128)}', space=vmem, size = 0x12000, scoped, tag = 'internal scratch']
  %s0 = inlined_call_operand.vmem [shape: f32[32,128], index: 0, kind: input, shape index: {}]
  %s1 = inlined_call_operand.vmem [shape: f32[1,128], index: 1, kind: input, shape index: {}]
  %s2 = inlined_call_operand.vmem [shape: f32[1,128], index: 2, kind: input, shape index: {}]
  %s3 = inlined_call_operand.vmem [shape: f32[32,128], index: 3, kind: output, shape index: {}]
  %s4 = sld [smem:[#allocation0]]
  $region45: #{conv_block1_forward.5} parent=0
    _
  %s6 = ssub.s32 1, %s4
  %s7 = scalar_select 0, %s6, %s4
  loop: start=0, step=1, limit=6
  $region2: #{conv_block1_forward.5} parent=0 // loop_pre_header
    _
  $region3: #{conv_block1_forward.5} parent=0 // loop_header
    %s9 = sphi 0, %s13
    %p10 = scmp.ge.s32.totalorder %s9, 6
    %s19 = sphi 0, %s21
    %s22 = sphi 0, %s19
    %s23 = sphi 0, %s22
    %s39 = sphi 0, %s23
    %s43 = sphi 0, %s43
    %s45 = sphi 0, %s43
    %s46 = sphi 0, %s45
    %s60 = sphi 0, %s46
    %s64 = sphi 0, %s64
    %s66 = sphi 0, %s64
    %s67 = sphi 0, %s66
    %s81 = sphi 0, %s67
    %s87 = sphi 0, %s89
    %s90 = sphi 0, %s87
    %s91 = sphi 0, %s90
    %s107 = sphi 0, %s91
  $region4: #{conv_block1_forward.5} parent=0 // loop_header_branch
    %12 = sbr.rel (%p10) target = $region8
  $region5: #{conv_block1_forward.5} parent=0 // loop_body
    %s14 = ssub.s32 %s9, 1
    %s15 = ssub.s32 %s9, 2
    %s16 = sadd.s32 %s9, 1
    %s17 = ssub.s32 %s9, %s16
    %p18 = scmp.eq.s32.totalorder %s17, 0
    %s20 = sadd.s32 %s19, 1
    %s21 = scalar_select %p18, %s19, %s20
    %p24 = pneg %p18
    %p25 = scmp.eq.s32.totalorder %s9, 3
    %p26 = por %p24, %p25
    %p27 = scmp.ne.s32.totalorder %s19, %s22
    %p28 = scmp.eq.s32.totalorder %s9, 0
    %p29 = por %p27, %p28
    %p30 = scmp.ne.s32.totalorder %s19, %s22
    %p31 = scmp.eq.s32.totalorder %s14, 3
    %p32 = por %p30, %p31
    %p33 = scmp.ne.s32.totalorder %s22, %s23
    %p34 = scmp.eq.s32.totalorder %s14, 0
    %p35 = por %p33, %p34
    %p36 = scmp.ne.s32.totalorder %s22, %s23
    %p37 = scmp.eq.s32.totalorder %s15, 3
    %p38 = por %p36, %p37
    %p40 = scmp.ne.s32.totalorder %s23, %s39
    %p41 = scmp.eq.s32.totalorder %s15, 0
    %p42 = por %p40, %p41
    %s44 = sadd.s32 %s43, 1
    %p47 = scmp.eq.s32.totalorder %s9, 3
    %p48 = scmp.ne.s32.totalorder %s43, %s45
    %p49 = scmp.eq.s32.totalorder %s9, 0
    %p50 = por %p48, %p49
    %p51 = scmp.ne.s32.totalorder %s43, %s45
    %p52 = scmp.eq.s32.totalorder %s14, 3
    %p53 = por %p51, %p52
    %p54 = scmp.ne.s32.totalorder %s45, %s46
    %p55 = scmp.eq.s32.totalorder %s14, 0
    %p56 = por %p54, %p55
    %p57 = scmp.ne.s32.totalorder %s45, %s46
    %p58 = scmp.eq.s32.totalorder %s15, 3
    %p59 = por %p57, %p58
    %p61 = scmp.ne.s32.totalorder %s46, %s60
    %p62 = scmp.eq.s32.totalorder %s15, 0
    %p63 = por %p61, %p62
    %s65 = sadd.s32 %s64, 1
    %p68 = scmp.eq.s32.totalorder %s9, 3
    %p69 = scmp.ne.s32.totalorder %s64, %s66
    %p70 = scmp.eq.s32.totalorder %s9, 0
    %p71 = por %p69, %p70
    %p72 = scmp.ne.s32.totalorder %s64, %s66
    %p73 = scmp.eq.s32.totalorder %s14, 3
    %p74 = por %p72, %p73
    %p75 = scmp.ne.s32.totalorder %s66, %s67
    %p76 = scmp.eq.s32.totalorder %s14, 0
    %p77 = por %p75, %p76
    %p78 = scmp.ne.s32.totalorder %s66, %s67
    %p79 = scmp.eq.s32.totalorder %s15, 3
    %p80 = por %p78, %p79
    %p82 = scmp.ne.s32.totalorder %s67, %s81
    %p83 = scmp.eq.s32.totalorder %s15, 0
    %p84 = por %p82, %p83
    %s85 = ssub.s32 %s9, %s16
    %p86 = scmp.eq.s32.totalorder %s85, 0
    %s88 = sadd.s32 %s87, 1
    %s89 = scalar_select %p86, %s87, %s88
    %p92 = pneg %p86
    %p93 = scmp.eq.s32.totalorder %s9, 3
    %p94 = por %p92, %p93
    %p95 = scmp.ne.s32.totalorder %s87, %s90
    %p96 = scmp.eq.s32.totalorder %s9, 0
    %p97 = por %p95, %p96
    %p98 = scmp.ne.s32.totalorder %s87, %s90
    %p99 = scmp.eq.s32.totalorder %s14, 3
    %p100 = por %p98, %p99
    %p101 = scmp.ne.s32.totalorder %s90, %s91
    %p102 = scmp.eq.s32.totalorder %s14, 0
    %p103 = por %p101, %p102
    %p104 = scmp.ne.s32.totalorder %s90, %s91
    %p105 = scmp.eq.s32.totalorder %s15, 3
    %p106 = por %p104, %p105
    %p108 = scmp.ne.s32.totalorder %s91, %s107
    %p109 = scmp.eq.s32.totalorder %s15, 0
    %p110 = por %p108, %p109
    %p111 = scmp.le.s32.totalorder 1, %s9
    %p112 = scmp.lt.s32.totalorder %s9, 5
    %p113 = pnand %p111, %p112
    %p114 = pneg %p113
    // Predicated region
    $region9: #{conv_block1_forward.5} parent=5 // pred_check
      _
    $region10: #{conv_block1_forward.5} parent=5 // pred_check_branch
      %116 = sbr.rel (%p113) target = $region12
    $region11: #{conv_block1_forward.5} parent=5 // pred_region
      %s117 = ssub.s32 %s9, 1
      // Predicated region
      $region13: #{conv_block1_forward.5} parent=11 // pred_check
        %p118 = pneg %p56
      $region14: #{conv_block1_forward.5} parent=11 // pred_check_branch
        %120 = sbr.rel (%p118) target = $region16
      $region15: #{conv_block1_forward.5} parent=11 // pred_region
        _
      $region16: #{conv_block1_forward.5} parent=11 // pred_fallthru
        _
      // Predicated region
      $region17: #{conv_block1_forward.5} parent=11 // pred_check
        %p121 = pneg %p77
      $region18: #{conv_block1_forward.5} parent=11 // pred_check_branch
        %123 = sbr.rel (%p121) target = $region20
      $region19: #{conv_block1_forward.5} parent=11 // pred_region
        _
      $region20: #{conv_block1_forward.5} parent=11 // pred_fallthru
        _
    $region12: #{conv_block1_forward.5} parent=5 // pred_fallthru
      _
    %p124 = scmp.lt.s32.totalorder %s9, 4
    // Predicated region
    $region21: #{conv_block1_forward.5} parent=5 // pred_check
      %p125 = pneg %p124
    $region22: #{conv_block1_forward.5} parent=5 // pred_check_branch
      %127 = sbr.rel (%p125) target = $region24
    $region23: #{conv_block1_forward.5} parent=5 // pred_region
      // Predicated region
      $region25: #{conv_block1_forward.5} parent=23 // pred_check
        %p128 = pneg %p29
      $region26: #{conv_block1_forward.5} parent=23 // pred_check_branch
        %130 = sbr.rel (%p128) target = $region28
      $region27: #{conv_block1_forward.5} parent=23 // pred_region
        %p131 = scmp.lt.s32.totalorder %s9, 3
        %s132 = scalar_select %p131, %s9, 3
        %s133 = smul.addr %s132, 8
        %s134 = scalar_lea.vmem %s0, %s133
      $region28: #{conv_block1_forward.5} parent=23 // pred_fallthru
        _
    $region24: #{conv_block1_forward.5} parent=5 // pred_fallthru
      _
    %p135 = scmp.le.s32.totalorder 1, %s9
    %p136 = scmp.lt.s32.totalorder %s9, 5
    %p137 = pnand %p135, %p136
    %p138 = pneg %p137
    // Predicated region
    $region29: #{conv_block1_forward.5} parent=5 // pred_check
      _
    $region30: #{conv_block1_forward.5} parent=5 // pred_check_branch
      %140 = sbr.rel (%p137) target = $region32
    $region31: #{conv_block1_forward.5} parent=5 // pred_region
      %s141 = ssub.s32 %s9, 1
      %p142 = scmp.lt.s32.totalorder %s14, 3
      %s143 = scalar_select %p142, %s14, 3
      %s144 = smul.addr %s143, 8
      %s145 = scalar_lea.vmem %s0, %s144
      %p146 = pneg %p35
      %p147 = pneg %p32
      %p148 = pneg %p56
      %p149 = pneg %p53
      %p150 = pneg %p77
      %p151 = pneg %p74
      %p152 = pneg %p103
      %p153 = pneg %p100
      %p154 = scmp.lt.s32.totalorder %s14, 3
      %s155 = scalar_select %p154, %s14, 3
      %s156 = smul.addr %s155, 8
      %s157 = scalar_lea.vmem %s3, %s156
      %p158 = scmp.lt.s32.totalorder %s14, 3
      %s159 = scalar_select %p158, %s14, 3
      %s160 = smul.addr %s159, 8
      %s161 = scalar_lea.vmem %s0, %s160
      %p162 = scmp.lt.s32.totalorder %s14, 3
      %s163 = scalar_select %p162, %s14, 3
      %s164 = smul.addr %s163, 8
      %s165 = scalar_lea.vmem %s3, %s164
      %v166 = vld [vmem:[%s161] sm:$0xff]
      %v167 = vld [vmem:[%s1] sm:$0x1]
      %v169 = vlaneseq
      %v170 = vshrl.u32 %v169, 7
      %v171 = vsub.s32 0, %v170
      %v172 = vrot.slane %v167, %v171
      %v174 = vmul.f32 %v166, %v172
      %v175 = vld [vmem:[%s2] sm:$0x1]
      %v177 = vlaneseq
      %v178 = vshrl.u32 %v177, 7
      %v179 = vsub.s32 0, %v178
      %v180 = vrot.slane %v175, %v179
      %v182 = vadd.f32 %v174, %v180
      %v183 = vmax.f32 %v182, 0.0
      %184 = vst [vmem:[%s165] sm:$0xff] %v183
      %p185 = scmp.lt.s32.totalorder %s14, 3
      %s186 = scalar_select %p185, %s14, 3
      %s187 = smul.addr %s186, 8
      %s188 = scalar_lea.vmem %s3, %s187
      // Predicated region
      $region33: #{conv_block1_forward.5} parent=31 // pred_check
        %p189 = pneg %p100
      $region34: #{conv_block1_forward.5} parent=31 // pred_check_branch
        %191 = sbr.rel (%p189) target = $region36
      $region35: #{conv_block1_forward.5} parent=31 // pred_region
        _
      $region36: #{conv_block1_forward.5} parent=31 // pred_fallthru
        _
    $region32: #{conv_block1_forward.5} parent=5 // pred_fallthru
      _
    %p192 = scmp.le.s32.totalorder 2, %s9
    // Predicated region
    $region37: #{conv_block1_forward.5} parent=5 // pred_check
      %p193 = pneg %p192
    $region38: #{conv_block1_forward.5} parent=5 // pred_check_branch
      %195 = sbr.rel (%p193) target = $region40
    $region39: #{conv_block1_forward.5} parent=5 // pred_region
      %s196 = ssub.s32 %s9, 2
      // Predicated region
      $region41: #{conv_block1_forward.5} parent=39 // pred_check
        %p197 = pneg %p106
      $region42: #{conv_block1_forward.5} parent=39 // pred_check_branch
        %199 = sbr.rel (%p197) target = $region44
      $region43: #{conv_block1_forward.5} parent=39 // pred_region
        %p200 = scmp.lt.s32.totalorder %s15, 3
        %s201 = scalar_select %p200, %s15, 3
        %s202 = smul.addr %s201, 8
        %s203 = scalar_lea.vmem %s3, %s202
      $region44: #{conv_block1_forward.5} parent=39 // pred_fallthru
        _
    $region40: #{conv_block1_forward.5} parent=5 // pred_fallthru
      _
  $region6: #{conv_block1_forward.5} parent=0 // loop_footer
    %s13 = sadd.s32 1, %s9
  $region7: #{conv_block1_forward.5} parent=0 // loop_footer_branch
    %8 = sbr.rel target = $region3
  $region8: #{conv_block1_forward.5} parent=0 // loop_exit
    _

// kernel: conv_block1_forward.3
$region0: #{conv_block1_forward.3}
  #allocation0 [shape = 'u32[]', space=smem, size = 0x4, offset = 0x4, fixed_abs, tag = 'smem constant byte address 0x4 - core index']
  #allocation1 [shape = 'u32[144,128]{1,0:T(1,128)}', space=vmem, size = 0x12000, scoped, tag = 'internal scratch']
  %s0 = inlined_call_operand.vmem [shape: f32[2,16,16,4], index: 0, kind: input, shape index: {}, may-alias: {0,1,2}]
  %s1 = inlined_call_operand.vmem [shape: f32[2,16,16,4], index: 1, kind: input, shape index: {}, may-alias: {0,1,2}]
  %s2 = inlined_call_operand.vmem [shape: f32[2,16,16,4], index: 2, kind: input, shape index: {}, may-alias: {0,1,2}]
  %s3 = inlined_call_operand.vmem [shape: f32[9,4,8], index: 3, kind: input, shape index: {}]
  %s4 = inlined_call_operand.vmem [shape: f32[1,4], index: 4, kind: input, shape index: {}]
  %s5 = inlined_call_operand.vmem [shape: f32[1,4], index: 5, kind: input, shape index: {}]
  %s6 = inlined_call_operand.vmem [shape: f32[2,16,16,8], index: 6, kind: output, shape index: {0}]
  %s7 = inlined_call_operand.vmem [shape: f32[2,2,8], index: 7, kind: output, shape index: {1}]
  %8 = xla_tuple %s6, %s7
  %s9 = sld [smem:[#allocation0]]
  $region65: #{conv_block1_forward.3} parent=0
    _
  %s11 = ssub.s32 1, %s9
  %s12 = scalar_select 0, %s11, %s9
  loop: start=0, step=1, limit=4
  $region2: #{conv_block1_forward.3} parent=0 // loop_pre_header
    _
  $region3: #{conv_block1_forward.3} parent=0 // loop_header
    %s14 = sphi 0, %s18
    %p15 = scmp.ge.s32.totalorder %s14, 4
    %s21 = sphi 0, %s33
    %s22 = sphi 0, %s29
    %s23 = sphi 0, %s21
    %s24 = sphi 0, %s22
    %s25 = sphi 0, %s23
    %s26 = sphi 0, %s24
    %s46 = sphi 0, %s48
    %s49 = sphi 0, %s46
    %s50 = sphi 0, %s49
    %s66 = sphi 0, %s50
    %s74 = sphi 0, %s76
    %s77 = sphi 0, %s74
    %s78 = sphi 0, %s77
    %s94 = sphi 0, %s78
    %s110 = sphi 0, %s112
    %s113 = sphi 0, %s110
    %s114 = sphi 0, %s113
    %s130 = sphi 0, %s114
    %s134 = sphi 0, %s134
    %s136 = sphi 0, %s134
    %s137 = sphi 0, %s136
    %s151 = sphi 0, %s137
    %s155 = sphi 0, %s155
    %s157 = sphi 0, %s155
    %s158 = sphi 0, %s157
    %s172 = sphi 0, %s158
    %s176 = sphi 0, %s176
    %s178 = sphi 0, %s176
    %s179 = sphi 0, %s178
    %s193 = sphi 0, %s179
    %s201 = sphi 0, %s203
    %s204 = sphi 0, %s201
    %s205 = sphi 0, %s204
    %s221 = sphi 0, %s205
    %s229 = sphi 0, %s231
    %s232 = sphi 0, %s229
    %s233 = sphi 0, %s232
    %s249 = sphi 0, %s233
  $region4: #{conv_block1_forward.3} parent=0 // loop_header_branch
    %17 = sbr.rel (%p15) target = $region8
  $region5: #{conv_block1_forward.3} parent=0 // loop_body
    %s19 = ssub.s32 %s14, 1
    %s20 = ssub.s32 %s14, 2
    %s27 = sadd.s32 1, %s22
    %p28 = scmp.ge.s32.totalorder %s27, 1
    %s29 = scalar_select %p28, 0, %s27
    %s30 = sadd.s32 1, %s21
    %s31 = scalar_select %p28, %s30, %s21
    %p32 = scmp.ge.s32.totalorder %s31, 2
    %s33 = scalar_select %p32, 0, %s31
    %s34 = smul.u32 %s22, 16
    %s35 = ssub.s32 %s34, 1
    %p36 = scmp.gt.s32.totalorder %s35, 0
    %s37 = scalar_select %p36, %s35, 0
    %s38 = smul.u32 %s29, 16
    %s39 = ssub.s32 %s38, 1
    %p40 = scmp.gt.s32.totalorder %s39, 0
    %s41 = scalar_select %p40, %s39, 0
    %s42 = ssub.s32 %s21, %s33
    %s43 = ssub.s32 %s37, %s41
    %s44 = sor.u32 %s42, %s43
    %p45 = scmp.eq.s32.totalorder %s44, 0
    %s47 = sadd.s32 %s46, 1
    %s48 = scalar_select %p45, %s46, %s47
    %p51 = pneg %p45
    %p52 = scmp.eq.s32.totalorder %s14, 1
    %p53 = por %p51, %p52
    %p54 = scmp.ne.s32.totalorder %s46, %s49
    %p55 = scmp.eq.s32.totalorder %s14, 0
    %p56 = por %p54, %p55
    %p57 = scmp.ne.s32.totalorder %s46, %s49
    %p58 = scmp.eq.s32.totalorder %s19, 1
    %p59 = por %p57, %p58
    %p60 = scmp.ne.s32.totalorder %s49, %s50
    %p61 = scmp.eq.s32.totalorder %s19, 0
    %p62 = por %p60, %p61
    %p63 = scmp.ne.s32.totalorder %s49, %s50
    %p64 = scmp.eq.s32.totalorder %s20, 1
    %p65 = por %p63, %p64
    %p67 = scmp.ne.s32.totalorder %s50, %s66
    %p68 = scmp.eq.s32.totalorder %s20, 0
    %p69 = por %p67, %p68
    %s70 = ssub.s32 %s21, %s33
    %s71 = ssub.s32 %s22, %s29
    %s72 = sor.u32 %s70, %s71
    %p73 = scmp.eq.s32.totalorder %s72, 0
    %s75 = sadd.s32 %s74, 1
    %s76 = scalar_select %p73, %s74, %s75
    %p79 = pneg %p73
    %p80 = scmp.eq.s32.totalorder %s14, 1
    %p81 = por %p79, %p80
    %p82 = scmp.ne.s32.totalorder %s74, %s77
    %p83 = scmp.eq.s32.totalorder %s14, 0
    %p84 = por %p82, %p83
    %p85 = scmp.ne.s32.totalorder %s74, %s77
    %p86 = scmp.eq.s32.totalorder %s19, 1
    %p87 = por %p85, %p86
    %p88 = scmp.ne.s32.totalorder %s77, %s78
    %p89 = scmp.eq.s32.totalorder %s19, 0
    %p90 = por %p88, %p89
    %p91 = scmp.ne.s32.totalorder %s77, %s78
    %p92 = scmp.eq.s32.totalorder %s20, 1
    %p93 = por %p91, %p92
    %p95 = scmp.ne.s32.totalorder %s78, %s94
    %p96 = scmp.eq.s32.totalorder %s20, 0
    %p97 = por %p95, %p96
    %s98 = smul.u32 %s22, 16
    %s99 = sadd.s32 %s98, 16
    %p100 = scmp.lt.s32.totalorder %s99, 15
    %s101 = scalar_select %p100, %s99, 15
    %s102 = smul.u32 %s29, 16
    %s103 = sadd.s32 %s102, 16
    %p104 = scmp.lt.s32.totalorder %s103, 15
    %s105 = scalar_select %p104, %s103, 15
    %s106 = ssub.s32 %s21, %s33
    %s107 = ssub.s32 %s101, %s105
    %s108 = sor.u32 %s106, %s107
    %p109 = scmp.eq.s32.totalorder %s108, 0
    %s111 = sadd.s32 %s110, 1
    %s112 = scalar_select %p109, %s110, %s111
    %p115 = pneg %p109
    %p116 = scmp.eq.s32.totalorder %s14, 1
    %p117 = por %p115, %p116
    %p118 = scmp.ne.s32.totalorder %s110, %s113
    %p119 = scmp.eq.s32.totalorder %s14, 0
    %p120 = por %p118, %p119
    %p121 = scmp.ne.s32.totalorder %s110, %s113
    %p122 = scmp.eq.s32.totalorder %s19, 1
    %p123 = por %p121, %p122
    %p124 = scmp.ne.s32.totalorder %s113, %s114
    %p125 = scmp.eq.s32.totalorder %s19, 0
    %p126 = por %p124, %p125
    %p127 = scmp.ne.s32.totalorder %s113, %s114
    %p128 = scmp.eq.s32.totalorder %s20, 1
    %p129 = por %p127, %p128
    %p131 = scmp.ne.s32.totalorder %s114, %s130
    %p132 = scmp.eq.s32.totalorder %s20, 0
    %p133 = por %p131, %p132
    %s135 = sadd.s32 %s134, 1
    %p138 = scmp.eq.s32.totalorder %s14, 1
    %p139 = scmp.ne.s32.totalorder %s134, %s136
    %p140 = scmp.eq.s32.totalorder %s14, 0
    %p141 = por %p139, %p140
    %p142 = scmp.ne.s32.totalorder %s134, %s136
    %p143 = scmp.eq.s32.totalorder %s19, 1
    %p144 = por %p142, %p143
    %p145 = scmp.ne.s32.totalorder %s136, %s137
    %p146 = scmp.eq.s32.totalorder %s19, 0
    %p147 = por %p145, %p146
    %p148 = scmp.ne.s32.totalorder %s136, %s137
    %p149 = scmp.eq.s32.totalorder %s20, 1
    %p150 = por %p148, %p149
    %p152 = scmp.ne.s32.totalorder %s137, %s151
    %p153 = scmp.eq.s32.totalorder %s20, 0
    %p154 = por %p152, %p153
    %s156 = sadd.s32 %s155, 1
    %p159 = scmp.eq.s32.totalorder %s14, 1
    %p160 = scmp.ne.s32.totalorder %s155, %s157
    %p161 = scmp.eq.s32.totalorder %s14, 0
    %p162 = por %p160, %p161
    %p163 = scmp.ne.s32.totalorder %s155, %s157
    %p164 = scmp.eq.s32.totalorder %s19, 1
    %p165 = por %p163, %p164
    %p166 = scmp.ne.s32.totalorder %s157, %s158
    %p167 = scmp.eq.s32.totalorder %s19, 0
    %p168 = por %p166, %p167
    %p169 = scmp.ne.s32.totalorder %s157, %s158
    %p170 = scmp.eq.s32.totalorder %s20, 1
    %p171 = por %p169, %p170
    %p173 = scmp.ne.s32.totalorder %s158, %s172
    %p174 = scmp.eq.s32.totalorder %s20, 0
    %p175 = por %p173, %p174
    %s177 = sadd.s32 %s176, 1
    %p180 = scmp.eq.s32.totalorder %s14, 1
    %p181 = scmp.ne.s32.totalorder %s176, %s178
    %p182 = scmp.eq.s32.totalorder %s14, 0
    %p183 = por %p181, %p182
    %p184 = scmp.ne.s32.totalorder %s176, %s178
    %p185 = scmp.eq.s32.totalorder %s19, 1
    %p186 = por %p184, %p185
    %p187 = scmp.ne.s32.totalorder %s178, %s179
    %p188 = scmp.eq.s32.totalorder %s19, 0
    %p189 = por %p187, %p188
    %p190 = scmp.ne.s32.totalorder %s178, %s179
    %p191 = scmp.eq.s32.totalorder %s20, 1
    %p192 = por %p190, %p191
    %p194 = scmp.ne.s32.totalorder %s179, %s193
    %p195 = scmp.eq.s32.totalorder %s20, 0
    %p196 = por %p194, %p195
    %s197 = ssub.s32 %s21, %s33
    %s198 = ssub.s32 %s22, %s29
    %s199 = sor.u32 %s197, %s198
    %p200 = scmp.eq.s32.totalorder %s199, 0
    %s202 = sadd.s32 %s201, 1
    %s203 = scalar_select %p200, %s201, %s202
    %p206 = pneg %p200
    %p207 = scmp.eq.s32.totalorder %s14, 1
    %p208 = por %p206, %p207
    %p209 = scmp.ne.s32.totalorder %s201, %s204
    %p210 = scmp.eq.s32.totalorder %s14, 0
    %p211 = por %p209, %p210
    %p212 = scmp.ne.s32.totalorder %s201, %s204
    %p213 = scmp.eq.s32.totalorder %s19, 1
    %p214 = por %p212, %p213
    %p215 = scmp.ne.s32.totalorder %s204, %s205
    %p216 = scmp.eq.s32.totalorder %s19, 0
    %p217 = por %p215, %p216
    %p218 = scmp.ne.s32.totalorder %s204, %s205
    %p219 = scmp.eq.s32.totalorder %s20, 1
    %p220 = por %p218, %p219
    %p222 = scmp.ne.s32.totalorder %s205, %s221
    %p223 = scmp.eq.s32.totalorder %s20, 0
    %p224 = por %p222, %p223
    %s225 = sadd.s32 %s21, %s22
    %s226 = sadd.s32 %s33, %s29
    %s227 = ssub.s32 %s225, %s226
    %p228 = scmp.eq.s32.totalorder %s227, 0
    %s230 = sadd.s32 %s229, 1
    %s231 = scalar_select %p228, %s229, %s230
    %p234 = pneg %p228
    %p235 = scmp.eq.s32.totalorder %s14, 1
    %p236 = por %p234, %p235
    %p237 = scmp.ne.s32.totalorder %s229, %s232
    %p238 = scmp.eq.s32.totalorder %s14, 0
    %p239 = por %p237, %p238
    %p240 = scmp.ne.s32.totalorder %s229, %s232
    %p241 = scmp.eq.s32.totalorder %s19, 1
    %p242 = por %p240, %p241
    %p243 = scmp.ne.s32.totalorder %s232, %s233
    %p244 = scmp.eq.s32.totalorder %s19, 0
    %p245 = por %p243, %p244
    %p246 = scmp.ne.s32.totalorder %s232, %s233
    %p247 = scmp.eq.s32.totalorder %s20, 1
    %p248 = por %p246, %p247
    %p250 = scmp.ne.s32.totalorder %s233, %s249
    %p251 = scmp.eq.s32.totalorder %s20, 0
    %p252 = por %p250, %p251
    %p253 = scmp.le.s32.totalorder 1, %s14
    %p254 = scmp.lt.s32.totalorder %s14, 3
    %p255 = pnand %p253, %p254
    %p256 = pneg %p255
    // Predicated region
    $region9: #{conv_block1_forward.3} parent=5 // pred_check
      _
    $region10: #{conv_block1_forward.3} parent=5 // pred_check_branch
      %258 = sbr.rel (%p255) target = $region12
    $region11: #{conv_block1_forward.3} parent=5 // pred_region
      %s259 = ssub.s32 %s14, 1
      // Predicated region
      $region13: #{conv_block1_forward.3} parent=11 // pred_check
        %p260 = pneg %p147
      $region14: #{conv_block1_forward.3} parent=11 // pred_check_branch
        %262 = sbr.rel (%p260) target = $region16
      $region15: #{conv_block1_forward.3} parent=11 // pred_region
        _
      $region16: #{conv_block1_forward.3} parent=11 // pred_fallthru
        _
      // Predicated region
      $region17: #{conv_block1_forward.3} parent=11 // pred_check
        %p263 = pneg %p168
      $region18: #{conv_block1_forward.3} parent=11 // pred_check_branch
        %265 = sbr.rel (%p263) target = $region20
      $region19: #{conv_block1_forward.3} parent=11 // pred_region
        _
      $region20: #{conv_block1_forward.3} parent=11 // pred_fallthru
        _
      // Predicated region
      $region21: #{conv_block1_forward.3} parent=11 // pred_check
        %p266 = pneg %p189
      $region22: #{conv_block1_forward.3} parent=11 // pred_check_branch
        %268 = sbr.rel (%p266) target = $region24
      $region23: #{conv_block1_forward.3} parent=11 // pred_region
        _
      $region24: #{conv_block1_forward.3} parent=11 // pred_fallthru
        _
    $region12: #{conv_block1_forward.3} parent=5 // pred_fallthru
      _
    %p269 = scmp.lt.s32.totalorder %s14, 2
    // Predicated region
    $region25: #{conv_block1_forward.3} parent=5 // pred_check
      %p270 = pneg %p269
    $region26: #{conv_block1_forward.3} parent=5 // pred_check_branch
      %272 = sbr.rel (%p270) target = $region28
    $region27: #{conv_block1_forward.3} parent=5 // pred_region
      // Predicated region
      $region29: #{conv_block1_forward.3} parent=27 // pred_check
        %p273 = pneg %p56
      $region30: #{conv_block1_forward.3} parent=27 // pred_check_branch
        %275 = sbr.rel (%p273) target = $region32
      $region31: #{conv_block1_forward.3} parent=27 // pred_region
        %s276 = smul.u32 %s22, 16
        %s277 = ssub.s32 %s276, 1
        %p278 = scmp.gt.s32.totalorder %s277, 0
        %s279 = scalar_select %p278, %s277, 0
        %p280 = scmp.lt.s32.totalorder %s21, 1
        %s281 = scalar_select %p280, %s21, 1
        %p282 = scmp.lt.s32.totalorder %s279, 15
        %s283 = scalar_select %p282, %s279, 15
        %s284 = smul.addr %s283, 2
        %s285 = smul.addr %s281, 32
        %s286 = sadd.s32 %s284, %s285
        %s287 = smul.addr %s286, 8
        %s288 = scalar_lea.vmem %s0, %s287
        %s289 = smul.u32 %s22, 16
        %s290 = ssub.s32 %s289, 1
        %p291 = scmp.gt.s32.totalorder %s290, 0
        %s292 = scalar_select %p291, %s290, 0
      $region32: #{conv_block1_forward.3} parent=27 // pred_fallthru
        _
      // Predicated region
      $region33: #{conv_block1_forward.3} parent=27 // pred_check
        %p293 = pneg %p84
      $region34: #{conv_block1_forward.3} parent=27 // pred_check_branch
        %295 = sbr.rel (%p293) target = $region36
      $region35: #{conv_block1_forward.3} parent=27 // pred_region
        %s296 = smul.u32 16, %s22
        %p297 = scmp.lt.s32.totalorder %s21, 1
        %s298 = scalar_select %p297, %s21, 1
        %p299 = scmp.lt.s32.totalorder %s296, 15
        %s300 = scalar_select %p299, %s296, 15
        %s301 = smul.addr %s300, 2
        %s302 = smul.addr %s298, 32
        %s303 = sadd.s32 %s301, %s302
        %s304 = smul.addr %s303, 8
        %s305 = scalar_lea.vmem %s1, %s304
        %s306 = smul.u32 16, %s22
      $region36: #{conv_block1_forward.3} parent=27 // pred_fallthru
        _
      // Predicated region
      $region37: #{conv_block1_forward.3} parent=27 // pred_check
        %p307 = pneg %p120
      $region38: #{conv_block1_forward.3} parent=27 // pred_check_branch
        %309 = sbr.rel (%p307) target = $region40
      $region39: #{conv_block1_forward.3} parent=27 // pred_region
        %s310 = smul.u32 %s22, 16
        %s311 = sadd.s32 %s310, 16
        %p312 = scmp.lt.s32.totalorder %s311, 15
        %s313 = scalar_select %p312, %s311, 15
        %p314 = scmp.lt.s32.totalorder %s21, 1
        %s315 = scalar_select %p314, %s21, 1
        %p316 = scmp.lt.s32.totalorder %s313, 15
        %s317 = scalar_select %p316, %s313, 15
        %s318 = smul.addr %s317, 2
        %s319 = smul.addr %s315, 32
        %s320 = sadd.s32 %s318, %s319
        %s321 = smul.addr %s320, 8
        %s322 = scalar_lea.vmem %s2, %s321
        %s323 = smul.u32 %s22, 16
        %s324 = sadd.s32 %s323, 16
        %p325 = scmp.lt.s32.totalorder %s324, 15
        %s326 = scalar_select %p325, %s324, 15
      $region40: #{conv_block1_forward.3} parent=27 // pred_fallthru
        _
    $region28: #{conv_block1_forward.3} parent=5 // pred_fallthru
      _
    %p327 = scmp.le.s32.totalorder 1, %s14
    %p328 = scmp.lt.s32.totalorder %s14, 3
    %p329 = pnand %p327, %p328
    %p330 = pneg %p329
    // Predicated region
    $region41: #{conv_block1_forward.3} parent=5 // pred_check
      _
    $region42: #{conv_block1_forward.3} parent=5 // pred_check_branch
      %332 = sbr.rel (%p329) target = $region44
    $region43: #{conv_block1_forward.3} parent=5 // pred_region
      %s333 = ssub.s32 %s14, 1
      %s334 = smul.u32 %s24, 16
      %s335 = ssub.s32 %s334, 1
      %p336 = scmp.gt.s32.totalorder %s335, 0
      %s337 = scalar_select %p336, %s335, 0
      %p338 = scmp.lt.s32.totalorder %s23, 1
      %s339 = scalar_select %p338, %s23, 1
      %p340 = scmp.lt.s32.totalorder %s337, 15
      %s341 = scalar_select %p340, %s337, 15
      %s342 = smul.addr %s341, 2
      %s343 = smul.addr %s339, 32
      %s344 = sadd.s32 %s342, %s343
      %s345 = smul.addr %s344, 8
      %s346 = scalar_lea.vmem %s0, %s345
      %p347 = pneg %p62
      %p348 = pneg %p59
      %s349 = smul.u32 16, %s24
      %p350 = scmp.lt.s32.totalorder %s23, 1
      %s351 = scalar_select %p350, %s23, 1
      %p352 = scmp.lt.s32.totalorder %s349, 15
      %s353 = scalar_select %p352, %s349, 15
      %s354 = smul.addr %s353, 2
      %s355 = smul.addr %s351, 32
      %s356 = sadd.s32 %s354, %s355
      %s357 = smul.addr %s356, 8
      %s358 = scalar_lea.vmem %s1, %s357
      %p359 = pneg %p90
      %p360 = pneg %p87
      %s361 = smul.u32 %s24, 16
      %s362 = sadd.s32 %s361, 16
      %p363 = scmp.lt.s32.totalorder %s362, 15
      %s364 = scalar_select %p363, %s362, 15
      %p365 = scmp.lt.s32.totalorder %s23, 1
      %s366 = scalar_select %p365, %s23, 1
      %p367 = scmp.lt.s32.totalorder %s364, 15
      %s368 = scalar_select %p367, %s364, 15
      %s369 = smul.addr %s368, 2
      %s370 = smul.addr %s366, 32
      %s371 = sadd.s32 %s369, %s370
      %s372 = smul.addr %s371, 8
      %s373 = scalar_lea.vmem %s2, %s372
      %p374 = pneg %p126
      %p375 = pneg %p123
      %p376 = pneg %p147
      %p377 = pneg %p144
      %p378 = pneg %p168
      %p379 = pneg %p165
      %p380 = pneg %p189
      %p381 = pneg %p186
      %p382 = pneg %p217
      %p383 = pneg %p214
      %s384 = smul.u32 16, %s24
      %p385 = scmp.lt.s32.totalorder %s23, 1
      %s386 = scalar_select %p385, %s23, 1
      %p387 = scmp.lt.s32.totalorder %s384, 15
      %s388 = scalar_select %p387, %s384, 15
      %s389 = smul.addr %s388, 2
      %s390 = smul.addr %s386, 32
      %s391 = sadd.s32 %s389, %s390
      %s392 = smul.addr %s391, 8
      %s393 = scalar_lea.vmem %s6, %s392
      %p394 = pneg %p245
      %p395 = pneg %p242
      %s396 = sadd.s32 %s23, %s24
      %p397 = scmp.lt.s32.totalorder %s396, 1
      %s398 = scalar_select %p397, %s396, 1
      %s399 = smul.addr %s398, 2
      %s400 = scalar_lea.vmem %s7, %s399
      %s401 = smul.u32 %s24, 16
      %s402 = ssub.s32 %s401, 1
      %p403 = scmp.gt.s32.totalorder %s402, 0
      %s404 = scalar_select %p403, %s402, 0
      %p405 = scmp.lt.s32.totalorder %s23, 1
      %s406 = scalar_select %p405, %s23, 1
      %p407 = scmp.lt.s32.totalorder %s404, 15
      %s408 = scalar_select %p407, %s404, 15
      %s409 = smul.addr %s408, 2
      %s410 = smul.addr %s406, 32
      %s411 = sadd.s32 %s409, %s410
      %s412 = smul.addr %s411, 8
      %s413 = scalar_lea.vmem %s0, %s412
      %s414 = smul.u32 %s24, 16
      %s415 = ssub.s32 %s414, 1
      %p416 = scmp.gt.s32.totalorder %s415, 0
      %s417 = scalar_select %p416, %s415, 0
      %s418 = smul.u32 16, %s24
      %p419 = scmp.lt.s32.totalorder %s23, 1
      %s420 = scalar_select %p419, %s23, 1
      %p421 = scmp.lt.s32.totalorder %s418, 15
      %s422 = scalar_select %p421, %s418, 15
      %s423 = smul.addr %s422, 2
      %s424 = smul.addr %s420, 32
      %s425 = sadd.s32 %s423, %s424
      %s426 = smul.addr %s425, 8
      %s427 = scalar_lea.vmem %s1, %s426
      %s428 = smul.u32 16, %s24
      %s429 = smul.u32 %s24, 16
      %s430 = sadd.s32 %s429, 16
      %p431 = scmp.lt.s32.totalorder %s430, 15
      %s432 = scalar_select %p431, %s430, 15
      %p433 = scmp.lt.s32.totalorder %s23, 1
      %s434 = scalar_select %p433, %s23, 1
      %p435 = scmp.lt.s32.totalorder %s432, 15
      %s436 = scalar_select %p435, %s432, 15
      %s437 = smul.addr %s436, 2
      %s438 = smul.addr %s434, 32
      %s439 = sadd.s32 %s437, %s438
      %s440 = smul.addr %s439, 8
      %s441 = scalar_lea.vmem %s2, %s440
      %s442 = smul.u32 %s24, 16
      %s443 = sadd.s32 %s442, 16
      %p444 = scmp.lt.s32.totalorder %s443, 15
      %s445 = scalar_select %p444, %s443, 15
      %s446 = smul.u32 16, %s24
      %p447 = scmp.lt.s32.totalorder %s23, 1
      %s448 = scalar_select %p447, %s23, 1
      %p449 = scmp.lt.s32.totalorder %s446, 15
      %s450 = scalar_select %p449, %s446, 15
      %s451 = smul.addr %s450, 2
      %s452 = smul.addr %s448, 32
      %s453 = sadd.s32 %s451, %s452
      %s454 = smul.addr %s453, 8
      %s455 = scalar_lea.vmem %s6, %s454
      %s456 = smul.u32 16, %s24
      %s457 = sadd.s32 %s23, %s24
      %p458 = scmp.lt.s32.totalorder %s457, 1
      %s459 = scalar_select %p458, %s457, 1
      %s460 = smul.addr %s459, 2
      %s461 = scalar_lea.vmem %s7, %s460
      %s462 = sadd.s32 %s23, %s24
      %p463 = scmp.gt.s32.totalorder %s24, 0
      %s464 = scalar_select %p463, 1.0, 0.0
      %p465 = scmp.lt.s32.totalorder %s24, 0
      %s466 = scalar_select %p465, 1.0, 0.0
      %v467 = vld [vmem:[%s413] sm:$0xff]
      %v468 = vld [vmem:[%s413 + $0x8] sm:$0xff]
      %v469 = vstv %s464
      %v470 = vmul.f32 %v467, %v469
      %v471 = vmul.f32 %v468, %v469
      %v472 = vld [vmem:[%s427] sm:$0xff]
      %v473 = vld [vmem:[%s427 + $0x8] sm:$0xff]
      %v474 = vld [vmem:[%s427 + $0x10] sm:$0xff]
      %v475 = vld [vmem:[%s427 + $0x18] sm:$0xff]
      %v476 = vld [vmem:[%s427 + $0x20] sm:$0xff]
      %v477 = vld [vmem:[%s427 + $0x28] sm:$0xff]
      %v478 = vld [vmem:[%s427 + $0x30] sm:$0xff]
      %v479 = vld [vmem:[%s427 + $0x38] sm:$0xff]
      %v480 = vld [vmem:[%s427 + $0x40] sm:$0xff]
      %v481 = vld [vmem:[%s427 + $0x48] sm:$0xff]
      %v482 = vld [vmem:[%s427 + $0x50] sm:$0xff]
      %v483 = vld [vmem:[%s427 + $0x58] sm:$0xff]
      %v484 = vld [vmem:[%s427 + $0x60] sm:$0xff]
      %v485 = vld [vmem:[%s427 + $0x68] sm:$0xff]
      %v486 = vld [vmem:[%s427 + $0x70] sm:$0xff]
      %v487 = vld [vmem:[%s427 + $0x78] sm:$0xff]
      %v488 = vld [vmem:[%s427 + $0x80] sm:$0xff]
      %v489 = vld [vmem:[%s427 + $0x88] sm:$0xff]
      %v490 = vld [vmem:[%s427 + $0x90] sm:$0xff]
      %v491 = vld [vmem:[%s427 + $0x98] sm:$0xff]
      %v492 = vld [vmem:[%s427 + $0xa0] sm:$0xff]
      %v493 = vld [vmem:[%s427 + $0xa8] sm:$0xff]
      %v494 = vld [vmem:[%s427 + $0xb0] sm:$0xff]
      %v495 = vld [vmem:[%s427 + $0xb8] sm:$0xff]
      %v496 = vld [vmem:[%s427 + $0xc0] sm:$0xff]
      %v497 = vld [vmem:[%s427 + $0xc8] sm:$0xff]
      %v498 = vld [vmem:[%s427 + $0xd0] sm:$0xff]
      %v499 = vld [vmem:[%s427 + $0xd8] sm:$0xff]
      %v500 = vld [vmem:[%s427 + $0xe0] sm:$0xff]
      %v501 = vld [vmem:[%s427 + $0xe8] sm:$0xff]
      %v502 = vld [vmem:[%s427 + $0xf0] sm:$0xff]
      %v503 = vld [vmem:[%s427 + $0xf8] sm:$0xff]
      %v504 = vld [vmem:[%s441] sm:$0xff]
      %v505 = vld [vmem:[%s441 + $0x8] sm:$0xff]
      %v506 = vstv %s466
      %v507 = vmul.f32 %v504, %v506
      %v508 = vmul.f32 %v505, %v506
      %vm542 = vcmask 1040384
      %v543 = vrot.slane 0.0, 7
      %v544 = vrot.slane %v470, 7
      %v545 = vsel %vm542, %v543, %v544
      %v546 = vrot.slane %v471, 7
      %v547 = vsel %vm542, %v544, %v546
      %v548 = vrot.slane %v472, 7
      %v549 = vsel %vm542, %v543, %v548
      %v550 = vrot.slane %v473, 7
      %v551 = vsel %vm542, %v548, %v550
      %v552 = vrot.slane %v474, 7
      %v553 = vsel %vm542, %v543, %v552
      %v554 = vrot.slane %v475, 7
      %v555 = vsel %vm542, %v552, %v554
      %v556 = vrot.slane %v476, 7
      %v557 = vsel %vm542, %v543, %v556
      %v558 = vrot.slane %v477, 7
      %v559 = vsel %vm542, %v556, %v558
      %v560 = vrot.slane %v478, 7
      %v561 = vsel %vm542, %v543, %v560
      %v562 = vrot.slane %v479, 7
      %v563 = vsel %vm542, %v560, %v562
      %v564 = vrot.slane %v480, 7
      %v565 = vsel %vm542, %v543, %v564
      %v566 = vrot.slane %v481, 7
      %v567 = vsel %vm542, %v564, %v566
      %v568 = vrot.slane %v482, 7
      %v569 = vsel %vm542, %v543, %v568
      %v570 = vrot.slane %v483, 7
      %v571 = vsel %vm542, %v568, %v570
      %v572 = vrot.slane %v484, 7
      %v573 = vsel %vm542, %v543, %v572
      %v574 = vrot.slane %v485, 7
      %v575 = vsel %vm542, %v572, %v574
      %v576 = vrot.slane %v486, 7
      %v577 = vsel %vm542, %v543, %v576
      %v578 = vrot.slane %v487, 7
      %v579 = vsel %vm542, %v576, %v578
      %v580 = vrot.slane %v488, 7
      %v581 = vsel %vm542, %v543, %v580
      %v582 = vrot.slane %v489, 7
      %v583 = vsel %vm542, %v580, %v582
      %v584 = vrot.slane %v490, 7
      %v585 = vsel %vm542, %v543, %v584
      %v586 = vrot.slane %v491, 7
      %v587 = vsel %vm542, %v584, %v586
      %v588 = vrot.slane %v492, 7
      %v589 = vsel %vm542, %v543, %v588
      %v590 = vrot.slane %v493, 7
      %v591 = vsel %vm542, %v588, %v590
      %v592 = vrot.slane %v494, 7
      %v593 = vsel %vm542, %v543, %v592
      %v594 = vrot.slane %v495, 7
      %v595 = vsel %vm542, %v592, %v594
      %v596 = vrot.slane %v496, 7
      %v597 = vsel %vm542, %v543, %v596
      %v598 = vrot.slane %v497, 7
      %v599 = vsel %vm542, %v596, %v598
      %v600 = vrot.slane %v498, 7
      %v601 = vsel %vm542, %v543, %v600
      %v602 = vrot.slane %v499, 7
      %v603 = vsel %vm542, %v600, %v602
      %v604 = vrot.slane %v500, 7
      %v605 = vsel %vm542, %v543, %v604
      %v606 = vrot.slane %v501, 7
      %v607 = vsel %vm542, %v604, %v606
      %v608 = vld [vmem:[%s3] sm:$0xf]
      %s609 = scalar_lea.vmem %s3, 4
      %v610 = vld [vmem:[%s609] sm:$0xf]
      %vm611 = vcmask 31744
      %v612 = vsel %vm611, %v470, 0
      %v614 = vsel %vm611, %v471, 0
      %v616 = vsel %vm611, %v472, 0
      %v618 = vsel %vm611, %v473, 0
      %v620 = vsel %vm611, %v474, 0
      %v622 = vsel %vm611, %v475, 0
      %v624 = vsel %vm611, %v476, 0
      %v626 = vsel %vm611, %v477, 0
      %v628 = vsel %vm611, %v478, 0
      %v630 = vsel %vm611, %v479, 0
      %v632 = vsel %vm611, %v480, 0
      %v634 = vsel %vm611, %v481, 0
      %v636 = vsel %vm611, %v482, 0
      %v638 = vsel %vm611, %v483, 0
      %v640 = vsel %vm611, %v484, 0
      %v642 = vsel %vm611, %v485, 0
      %v644 = vsel %vm611, %v486, 0
      %v646 = vsel %vm611, %v487, 0
      %v648 = vsel %vm611, %v488, 0
      %v650 = vsel %vm611, %v489, 0
      %v652 = vsel %vm611, %v490, 0
      %v654 = vsel %vm611, %v491, 0
      %v656 = vsel %vm611, %v492, 0
      %v658 = vsel %vm611, %v493, 0
      %v660 = vsel %vm611, %v494, 0
      %v662 = vsel %vm611, %v495, 0
      %v664 = vsel %vm611, %v496, 0
      %v666 = vsel %vm611, %v497, 0
      %v668 = vsel %vm611, %v498, 0
      %v670 = vsel %vm611, %v499, 0
      %v672 = vsel %vm611, %v500, 0
      %v674 = vsel %vm611, %v501, 0
      %vm676 = vcmask 1043456
      %v678 = vsel %vm676, %v610, 0
      %680 = vmatprep.subr.mxu0 0.0
      %681 = vmatpush1.msra.mxu0 %v678
      %682 = vmatprep.subr.mxu0 0.0
      %683 = vmatpush1.msra.mxu0 0.0
      %684 = vmatprep.subr.mxu0 0.0
      %685 = vmatpush1.msra.mxu0 0.0
      %686 = vmatprep.subr.mxu0 0.0
      %687 = vmatpush1.msra.mxu0 0.0
      %688 = vmatprep.subr.mxu0 0.0
      %689 = vmatpush1.msra.mxu0 0.0
      %690 = vmatprep.subr.mxu0 0.0
      %691 = vmatpush1.msra.mxu0 0.0
      %692 = vmatprep.subr.mxu0 0.0
      %693 = vmatpush1.msra.mxu0 0.0
      %694 = vmatprep.subr.mxu0 0.0
      %695 = vmatpush1.msra.mxu0 0.0
      %696 = vmatprep.subr.mxu0 0.0
      %697 = vmatpush1.msra.mxu0 0.0
      %698 = vmatprep.subr.mxu0 0.0
      %699 = vmatpush1.msra.mxu0 0.0
      %700 = vmatprep.subr.mxu0 0.0
      %701 = vmatpush1.msra.mxu0 0.0
      %702 = vmatprep.subr.mxu0 0.0
      %703 = vmatpush1.msra.mxu0 0.0
      %704 = vmatprep.subr.mxu0 0.0
      %705 = vmatpush1.msra.mxu0 0.0
      %706 = vmatprep.subr.mxu0 0.0
      %707 = vmatpush1.msra.mxu0 0.0
      %708 = vmatprep.subr.mxu0 0.0
      %709 = vmatpush1.msra.mxu0 0.0
      %710 = vmatprep.subr.mxu0 0.0
      %711 = vmatpush1.msra.mxu0 0.0
      %712 = vmatprep.subr.mxu0 0.0
      %713 = vmatpush1.msra.mxu0 0.0
      %714 = vmatprep.subr.mxu0 0.0
      %715 = vmatpush1.msra.mxu0 0.0
      %716 = vmatprep.subr.mxu0 0.0
      %717 = vmatpush1.msra.mxu0 0.0
      %718 = vmatprep.subr.mxu0 0.0
      %719 = vmatpush1.msra.mxu0 0.0
      %720 = vmatprep.subr.mxu0 0.0
      %721 = vmatpush1.msra.mxu0 0.0
      %722 = vmatprep.subr.mxu0 0.0
      %723 = vmatpush1.msra.mxu0 0.0
      %724 = vmatprep.subr.mxu0 0.0
      %725 = vmatpush1.msra.mxu0 0.0
      %726 = vmatprep.subr.mxu0 0.0
      %727 = vmatpush1.msra.mxu0 0.0
      %728 = vmatprep.subr.mxu0 0.0
      %729 = vmatpush1.msra.mxu0 0.0
      %730 = vmatprep.subr.mxu0 0.0
      %731 = vmatpush1.msra.mxu0 0.0
      %732 = vmatprep.subr.mxu0 0.0
      %733 = vmatpush1.msra.mxu0 0.0
      %734 = vmatprep.subr.mxu0 0.0
      %735 = vmatpush1.msra.mxu0 0.0
      %736 = vmatprep.subr.mxu0 0.0
      %737 = vmatpush1.msra.mxu0 0.0
      %738 = vmatprep.subr.mxu0 0.0
      %739 = vmatpush1.msra.mxu0 0.0
      %740 = vmatprep.subr.mxu0 0.0
      %741 = vmatpush1.msra.mxu0 0.0
      %742 = vmatprep.subr.mxu0 0.0
      %743 = vmatpush1.msra.mxu0 0.0
      %744 = vmatprep.mubr.f32.mxu0 0.0
      %745 = vmatmul.mubr.f32.gmra.mrb[0].mxu0 %v612
      %v746 = vpop.f32.mrb[0].mxu0
      %v747 = vadd.f32 0.0, %v746
      %v748 = vpop.f32.mrb[0].mxu0
      %749 = vmatprep.mubr.f32.mxu0 0.0
      %750 = vmatmul.mubr.f32.gmra.mrb[0].mxu0 %v614
      %v751 = vpop.f32.mrb[0].mxu0
      %v752 = vadd.f32 0.0, %v751
      %v753 = vpop.f32.mrb[0].mxu0
      %754 = vmatprep.mubr.f32.mxu0 0.0
      %755 = vmatmul.mubr.f32.gmra.mrb[0].mxu0 %v616
      %v756 = vpop.f32.mrb[0].mxu0
      %v757 = vadd.f32 0.0, %v756
      %v758 = vpop.f32.mrb[0].mxu0
      %759 = vmatprep.mubr.f32.mxu0 0.0
      %760 = vmatmul.mubr.f32.gmra.mrb[0].mxu0 %v618
      %v761 = vpop.f32.mrb[0].mxu0
      %v762 = vadd.f32 0.0, %v761
      %v763 = vpop.f32.mrb[0].mxu0
      %764 = vmatprep.mubr.f32.mxu0 0.0
      %765 = vmatmul.mubr.f32.gmra.mrb[0].mxu0 %v620
      %v766 = vpop.f32.mrb[0].mxu0
      %v767 = vadd.f32 0.0, %v766
      %v768 = vpop.f32.mrb[0].mxu0
      %769 = vmatprep.mubr.f32.mxu0 0.0
      %770 = vmatmul.mubr.f32.gmra.mrb[0].mxu0 %v622
      %v771 = vpop.f32.mrb[0].mxu0
      %v772 = vadd.f32 0.0, %v771
      %v773 = vpop.f32.mrb[0].mxu0
      %774 = vmatprep.mubr.f32.mxu0 0.0
      %775 = vmatmul.mubr.f32.gmra.mrb[0].mxu0 %v624
      %v776 = vpop.f32.mrb[0].mxu0
      %v777 = vadd.f32 0.0, %v776
      %v778 = vpop.f32.mrb[0].mxu0
      %779 = vmatprep.mubr.f32.mxu0 0.0
      %780 = vmatmul.mubr.f32.gmra.mrb[0].mxu0 %v626
      %v781 = vpop.f32.mrb[0].mxu0
      %v782 = vadd.f32 0.0, %v781
      %v783 = vpop.f32.mrb[0].mxu0
      %784 = vmatprep.mubr.f32.mxu0 0.0
      %785 = vmatmul.mubr.f32.gmra.mrb[0].mxu0 %v628
      %v786 = vpop.f32.mrb[0].mxu0
      %v787 = vadd.f32 0.0, %v786
      %v788 = vpop.f32.mrb[0].mxu0
      %789 = vmatprep.mubr.f32.mxu0 0.0
      %790 = vmatmul.mubr.f32.gmra.mrb[0].mxu0 %v630
      %v791 = vpop.f32.mrb[0].mxu0
      %v792 = vadd.f32 0.0, %v791
      %v793 = vpop.f32.mrb[0].mxu0
      %794 = vmatprep.mubr.f32.mxu0 0.0
      %795 = vmatmul.mubr.f32.gmra.mrb[0].mxu0 %v632
      %v796 = vpop.f32.mrb[0].mxu0
      %v797 = vadd.f32 0.0, %v796
      %v798 = vpop.f32.mrb[0].mxu0
      %799 = vmatprep.mubr.f32.mxu0 0.0
      %800 = vmatmul.mubr.f32.gmra.mrb[0].mxu0 %v634
      %v801 = vpop.f32.mrb[0].mxu0
      %v802 = vadd.f32 0.0, %v801
      %v803 = vpop.f32.mrb[0].mxu0
      %804 = vmatprep.mubr.f32.mxu0 0.0
      %805 = vmatmul.mubr.f32.gmra.mrb[0].mxu0 %v636
      %v806 = vpop.f32.mrb[0].mxu0
      %v807 = vadd.f32 0.0, %v806
      %v808 = vpop.f32.mrb[0].mxu0
      %809 = vmatprep.mubr.f32.mxu0 0.0
      %810 = vmatmul.mubr.f32.gmra.mrb[0].mxu0 %v638
      %v811 = vpop.f32.mrb[0].mxu0
      %v812 = vadd.f32 0.0, %v811
      %v813 = vpop.f32.mrb[0].mxu0
      %814 = vmatprep.mubr.f32.mxu0 0.0
      %815 = vmatmul.mubr.f32.gmra.mrb[0].mxu0 %v640
      %v816 = vpop.f32.mrb[0].mxu0
      %v817 = vadd.f32 0.0, %v816
      %v818 = vpop.f32.mrb[0].mxu0
      %819 = vmatprep.mubr.f32.mxu0 0.0
      %820 = vmatmul.mubr.f32.gmra.mrb[0].mxu0 %v642
      %v821 = vpop.f32.mrb[0].mxu0
      %v822 = vadd.f32 0.0, %v821
      %v823 = vpop.f32.mrb[0].mxu0
      %824 = vmatprep.mubr.f32.mxu0 0.0
      %825 = vmatmul.mubr.f32.gmra.mrb[0].mxu0 %v644
      %v826 = vpop.f32.mrb[0].mxu0
      %v827 = vadd.f32 0.0, %v826
      %v828 = vpop.f32.mrb[0].mxu0
      %829 = vmatprep.mubr.f32.mxu0 0.0
      %830 = vmatmul.mubr.f32.gmra.mrb[0].mxu0 %v646
      %v831 = vpop.f32.mrb[0].mxu0
      %v832 = vadd.f32 0.0, %v831
      %v833 = vpop.f32.mrb[0].mxu0
      %834 = vmatprep.mubr.f32.mxu0 0.0
      %835 = vmatmul.mubr.f32.gmra.mrb[0].mxu0 %v648
      %v836 = vpop.f32.mrb[0].mxu0
      %v837 = vadd.f32 0.0, %v836
      %v838 = vpop.f32.mrb[0].mxu0
      %839 = vmatprep.mubr.f32.mxu0 0.0
      %840 = vmatmul.mubr.f32.gmra.mrb[0].mxu0 %v650
      %v841 = vpop.f32.mrb[0].mxu0
      %v842 = vadd.f32 0.0, %v841
      %v843 = vpop.f32.mrb[0].mxu0
      %844 = vmatprep.mubr.f32.mxu0 0.0
      %845 = vmatmul.mubr.f32.gmra.mrb[0].mxu0 %v652
      %v846 = vpop.f32.mrb[0].mxu0
      %v847 = vadd.f32 0.0, %v846
      %v848 = vpop.f32.mrb[0].mxu0
      %849 = vmatprep.mubr.f32.mxu0 0.0
      %850 = vmatmul.mubr.f32.gmra.mrb[0].mxu0 %v654
      %v851 = vpop.f32.mrb[0].mxu0
      %v852 = vadd.f32 0.0, %v851
      %v853 = vpop.f32.mrb[0].mxu0
      %854 = vmatprep.mubr.f32.mxu0 0.0
      %855 = vmatmul.mubr.f32.gmra.mrb[0].mxu0 %v656
      %v856 = vpop.f32.mrb[0].mxu0
      %v857 = vadd.f32 0.0, %v856
      %v858 = vpop.f32.mrb[0].mxu0
      %859 = vmatprep.mubr.f32.mxu0 0.0
      %860 = vmatmul.mubr.f32.gmra.mrb[0].mxu0 %v658
      %v861 = vpop.f32.mrb[0].mxu0
      %v862 = vadd.f32 0.0, %v861
      %v863 = vpop.f32.mrb[0].mxu0
      %864 = vmatprep.mubr.f32.mxu0 0.0
      %865 = vmatmul.mubr.f32.gmra.mrb[0].mxu0 %v660
      %v866 = vpop.f32.mrb[0].mxu0
      %v867 = vadd.f32 0.0, %v866
      %v868 = vpop.f32.mrb[0].mxu0
      %869 = vmatprep.mubr.f32.mxu0 0.0
      %870 = vmatmul.mubr.f32.gmra.mrb[0].mxu0 %v662
      %v871 = vpop.f32.mrb[0].mxu0
      %v872 = vadd.f32 0.0, %v871
      %v873 = vpop.f32.mrb[0].mxu0
      %874 = vmatprep.mubr.f32.mxu0 0.0
      %875 = vmatmul.mubr.f32.gmra.mrb[0].mxu0 %v664
      %v876 = vpop.f32.mrb[0].mxu0
      %v877 = vadd.f32 0.0, %v876
      %v878 = vpop.f32.mrb[0].mxu0
      %879 = vmatprep.mubr.f32.mxu0 0.0
      %880 = vmatmul.mubr.f32.gmra.mrb[0].mxu0 %v666
      %v881 = vpop.f32.mrb[0].mxu0
      %v882 = vadd.f32 0.0, %v881
      %v883 = vpop.f32.mrb[0].mxu0
      %884 = vmatprep.mubr.f32.mxu0 0.0
      %885 = vmatmul.mubr.f32.gmra.mrb[0].mxu0 %v668
      %v886 = vpop.f32.mrb[0].mxu0
      %v887 = vadd.f32 0.0, %v886
      %v888 = vpop.f32.mrb[0].mxu0
      %889 = vmatprep.mubr.f32.mxu0 0.0
      %890 = vmatmul.mubr.f32.gmra.mrb[0].mxu0 %v670
      %v891 = vpop.f32.mrb[0].mxu0
      %v892 = vadd.f32 0.0, %v891
      %v893 = vpop.f32.mrb[0].mxu0
      %894 = vmatprep.mubr.f32.mxu0 0.0
      %895 = vmatmul.mubr.f32.gmra.mrb[0].mxu0 %v672
      %v896 = vpop.f32.mrb[0].mxu0
      %v897 = vadd.f32 0.0, %v896
      %v898 = vpop.f32.mrb[0].mxu0
      %899 = vmatprep.mubr.f32.mxu0 0.0
      %900 = vmatmul.mubr.f32.gmra.mrb[0].mxu0 %v674
      %v901 = vpop.f32.mrb[0].mxu0
      %v902 = vadd.f32 0.0, %v901
      %v903 = vpop.f32.mrb[0].mxu0
      %904 = vdwg.mxu0
      %v905 = vsel %vm611, %v545, 0
      %v907 = vsel %vm611, %v547, 0
      %v909 = vsel %vm611, %v549, 0
      %v911 = vsel %vm611, %v551, 0
      %v913 = vsel %vm611, %v553, 0
      %v915 = vsel %vm611, %v555, 0
      %v917 = vsel %vm611, %v557, 0
      %v919 = vsel %vm611, %v559, 0
      %v921 = vsel %vm611, %v561, 0
      %v923 = vsel %vm611, %v563, 0
      %v925 = vsel %vm611, %v565, 0
      %v927 = vsel %vm611, %v567, 0
      %v929 = vsel %vm611, %v569, 0
      %v931 = vsel %vm611, %v571, 0
      %v933 = vsel %vm611, %v573, 0
      %v935 = vsel %vm611, %v575, 0
      %v937 = vsel %vm611, %v577, 0
      %v939 = vsel %vm611, %v579, 0
      %v941 = vsel %vm611, %v581, 0
      %v943 = vsel %vm611, %v583, 0
      %v945 = vsel %vm611, %v585, 0
      %v947 = vsel %vm611, %v587, 0
      %v949 = vsel %vm611, %v589, 0
      %v951 = vsel %vm611, %v591, 0
      %v953 = vsel %vm611, %v593, 0
      %v955 = vsel %vm611, %v595, 0
      %v957 = vsel %vm611, %v597, 0
      %v959 = vsel %vm611, %v599, 0
      %v961 = vsel %vm611, %v601, 0
      %v963 = vsel %vm611, %v603, 0
      %v965 = vsel %vm611, %v605, 0
      %v967 = vsel %vm611, %v607, 0
      %v970 = vsel %vm676, %v608, 0
      %972 = vmatprep.subr.mxu0 0.0
      %973 = vmatpush1.msra.mxu0 %v970
      %974 = vmatprep.subr.mxu0 0.0
      %975 = vmatpush1.msra.mxu0 0.0
      %976 = vmatprep.subr.mxu0 0.0
      %977 = vmatpush1.msra.mxu0 0.0
      %978 = vmatprep.subr.mxu0 0.0
      %979 = vmatpush1.msra.mxu0 0.0
      %980 = vmatprep.subr.mxu0 0.0
      %981 = vmatpush1.msra.mxu0 0.0
      %982 = vmatprep.subr.mxu0 0.0
      %983 = vmatpush1.msra.mxu0 0.0
      %984 = vmatprep.subr.mxu0 0.0
      %985 = vmatpush1.msra.mxu0 0.0
      %986 = vmatprep.subr.mxu0 0.0
      %987 = vmatpush1.msra.mxu0 0.0
      %988 = vmatprep.subr.mxu0 0.0
      %989 = vmatpush1.msra.mxu0 0.0
      %990 = vmatprep.subr.mxu0 0.0
      %991 = vmatpush1.msra.mxu0 0.0
      %992 = vmatprep.subr.mxu0 0.0
      %993 = vmatpush1.msra.mxu0 0.0
      %994 = vmatprep.subr.mxu0 0.0
      %995 = vmatpush1.msra.mxu0 0.0
      %996 = vmatprep.subr.mxu0 0.0
      %997 = vmatpush1.msra.mxu0 0.0
      %998 = vmatprep.subr.mxu0 0.0
      %999 = vmatpush1.msra.mxu0 0.0
      %1000 = vmatprep.subr.mxu0 0.0
      %1001 = vmatpush1.msra.mxu0 0.0
      %1002 = vmatprep.subr.mxu0 0.0
      %1003 = vmatpush1.msra.mxu0 0.0
      %1004 = vmatprep.subr.mxu0 0.0
      %1005 = vmatpush1.msra.mxu0 0.0
      %1006 = vmatprep.subr.mxu0 0.0
      %1007 = vmatpush1.msra.mxu0 0.0
      %1008 = vmatprep.subr.mxu0 0.0
      %1009 = vmatpush1.msra.mxu0 0.0
      %1010 = vmatprep.subr.mxu0 0.0
      %1011 = vmatpush1.msra.mxu0 0.0
      %1012 = vmatprep.subr.mxu0 0.0
      %1013 = vmatpush1.msra.mxu0 0.0
      %1014 = vmatprep.subr.mxu0 0.0
      %1015 = vmatpush1.msra.mxu0 0.0
      %1016 = vmatprep.subr.mxu0 0.0
      %1017 = vmatpush1.msra.mxu0 0.0
      %1018 = vmatprep.subr.mxu0 0.0
      %1019 = vmatpush1.msra.mxu0 0.0
      %1020 = vmatprep.subr.mxu0 0.0
      %1021 = vmatpush1.msra.mxu0 0.0
      %1022 = vmatprep.subr.mxu0 0.0
      %1023 = vmatpush1.msra.mxu0 0.0
      %1024 = vmatprep.subr.mxu0 0.0
      %1025 = vmatpush1.msra.mxu0 0.0
      %1026 = vmatprep.subr.mxu0 0.0
      %1027 = vmatpush1.msra.mxu0 0.0
      %1028 = vmatprep.subr.mxu0 0.0
      %1029 = vmatpush1.msra.mxu0 0.0
      %1030 = vmatprep.subr.mxu0 0.0
      %1031 = vmatpush1.msra.mxu0 0.0
      %1032 = vmatprep.subr.mxu0 0.0
      %1033 = vmatpush1.msra.mxu0 0.0
      %1034 = vmatprep.subr.mxu0 0.0
      %1035 = vmatpush1.msra.mxu0 0.0
      %1036 = vmatprep.mubr.f32.mxu0 0.0
      %1037 = vmatmul.mubr.f32.gmra.mrb[0].mxu0 %v905
      %v1038 = vpop.f32.mrb[0].mxu0
      %v1039 = vadd.f32 %v747, %v1038
      %v1040 = vpop.f32.mrb[0].mxu0
      %1041 = vmatprep.mubr.f32.mxu0 0.0
      %1042 = vmatmul.mubr.f32.gmra.mrb[0].mxu0 %v907
      %v1043 = vpop.f32.mrb[0].mxu0
      %v1044 = vadd.f32 %v752, %v1043
      %v1045 = vpop.f32.mrb[0].mxu0
      %1046 = vmatprep.mubr.f32.mxu0 0.0
      %1047 = vmatmul.mubr.f32.gmra.mrb[0].mxu0 %v909
      %v1048 = vpop.f32.mrb[0].mxu0
      %v1049 = vadd.f32 %v757, %v1048
      %v1050 = vpop.f32.mrb[0].mxu0
      %1051 = vmatprep.mubr.f32.mxu0 0.0
      %1052 = vmatmul.mubr.f32.gmra.mrb[0].mxu0 %v911
      %v1053 = vpop.f32.mrb[0].mxu0
      %v1054 = vadd.f32 %v762, %v1053
      %v1055 = vpop.f32.mrb[0].mxu0
      %1056 = vmatprep.mubr.f32.mxu0 0.0
      %1057 = vmatmul.mubr.f32.gmra.mrb[0].mxu0 %v913
      %v1058 = vpop.f32.mrb[0].mxu0
      %v1059 = vadd.f32 %v767, %v1058
      %v1060 = vpop.f32.mrb[0].mxu0
      %1061 = vmatprep.mubr.f32.mxu0 0.0
      %1062 = vmatmul.mubr.f32.gmra.mrb[0].mxu0 %v915
      %v1063 = vpop.f32.mrb[0].mxu0
      %v1064 = vadd.f32 %v772, %v1063
      %v1065 = vpop.f32.mrb[0].mxu0
      %1066 = vmatprep.mubr.f32.mxu0 0.0
      %1067 = vmatmul.mubr.f32.gmra.mrb[0].mxu0 %v917
      %v1068 = vpop.f32.mrb[0].mxu0
      %v1069 = vadd.f32 %v777, %v1068
      %v1070 = vpop.f32.mrb[0].mxu0
      %1071 = vmatprep.mubr.f32.mxu0 0.0
      %1072 = vmatmul.mubr.f32.gmra.mrb[0].mxu0 %v919
      %v1073 = vpop.f32.mrb[0].mxu0
      %v1074 = vadd.f32 %v782, %v1073
      %v1075 = vpop.f32.mrb[0].mxu0
      %1076 = vmatprep.mubr.f32.mxu0 0.0
      %1077 = vmatmul.mubr.f32.gmra.mrb[0].mxu0 %v921
      %v1078 = vpop.f32.mrb[0].mxu0
      %v1079 = vadd.f32 %v787, %v1078
      %v1080 = vpop.f32.mrb[0].mxu0
      %1081 = vmatprep.mubr.f32.mxu0 0.0
      %1082 = vmatmul.mubr.f32.gmra.mrb[0].mxu0 %v923
      %v1083 = vpop.f32.mrb[0].mxu0
      %v1084 = vadd.f32 %v792, %v1083
      %v1085 = vpop.f32.mrb[0].mxu0
      %1086 = vmatprep.mubr.f32.mxu0 0.0
      %1087 = vmatmul.mubr.f32.gmra.mrb[0].mxu0 %v925
      %v1088 = vpop.f32.mrb[0].mxu0
      %v1089 = vadd.f32 %v797, %v1088
      %v1090 = vpop.f32.mrb[0].mxu0
      %1091 = vmatprep.mubr.f32.mxu0 0.0
      %1092 = vmatmul.mubr.f32.gmra.mrb[0].mxu0 %v927
      %v1093 = vpop.f32.mrb[0].mxu0
      %v1094 = vadd.f32 %v802, %v1093
      %v1095 = vpop.f32.mrb[0].mxu0
      %1096 = vmatprep.mubr.f32.mxu0 0.0
      %1097 = vmatmul.mubr.f32.gmra.mrb[0].mxu0 %v929
      %v1098 = vpop.f32.mrb[0].mxu0
      %v1099 = vadd.f32 %v807, %v1098
      %v1100 = vpop.f32.mrb[0].mxu0
      %1101 = vmatprep.mubr.f32.mxu0 0.0
      %1102 = vmatmul.mubr.f32.gmra.mrb[0].mxu0 %v931
      %v1103 = vpop.f32.mrb[0].mxu0
      %v1104 = vadd.f32 %v812, %v1103
      %v1105 = vpop.f32.mrb[0].mxu0
      %1106 = vmatprep.mubr.f32.mxu0 0.0
      %1107 = vmatmul.mubr.f32.gmra.mrb[0].mxu0 %v933
      %v1108 = vpop.f32.mrb[0].mxu0
      %v1109 = vadd.f32 %v817, %v1108
      %v1110 = vpop.f32.mrb[0].mxu0
      %1111 = vmatprep.mubr.f32.mxu0 0.0
      %1112 = vmatmul.mubr.f32.gmra.mrb[0].mxu0 %v935
      %v1113 = vpop.f32.mrb[0].mxu0
      %v1114 = vadd.f32 %v822, %v1113
      %v1115 = vpop.f32.mrb[0].mxu0
      %1116 = vmatprep.mubr.f32.mxu0 0.0
      %1117 = vmatmul.mubr.f32.gmra.mrb[0].mxu0 %v937
      %v1118 = vpop.f32.mrb[0].mxu0
      %v1119 = vadd.f32 %v827, %v1118
      %v1120 = vpop.f32.mrb[0].mxu0
      %1121 = vmatprep.mubr.f32.mxu0 0.0
      %1122 = vmatmul.mubr.f32.gmra.mrb[0].mxu0 %v939
      %v1123 = vpop.f32.mrb[0].mxu0
      %v1124 = vadd.f32 %v832, %v1123
      %v1125 = vpop.f32.mrb[0].mxu0
      %1126 = vmatprep.mubr.f32.mxu0 0.0
      %1127 = vmatmul.mubr.f32.gmra.mrb[0].mxu0 %v941
      %v1128 = vpop.f32.mrb[0].mxu0
      %v1129 = vadd.f32 %v837, %v1128
      %v1130 = vpop.f32.mrb[0].mxu0
      %1131 = vmatprep.mubr.f32.mxu0 0.0
      %1132 = vmatmul.mubr.f32.gmra.mrb[0].mxu0 %v943
      %v1133 = vpop.f32.mrb[0].mxu0
      %v1134 = vadd.f32 %v842, %v1133
      %v1135 = vpop.f32.mrb[0].mxu0
      %1136 = vmatprep.mubr.f32.mxu0 0.0
      %1137 = vmatmul.mubr.f32.gmra.mrb[0].mxu0 %v945
      %v1138 = vpop.f32.mrb[0].mxu0
      %v1139 = vadd.f32 %v847, %v1138
      %v1140 = vpop.f32.mrb[0].mxu0
      %1141 = vmatprep.mubr.f32.mxu0 0.0
      %1142 = vmatmul.mubr.f32.gmra.mrb[0].mxu0 %v947
      %v1143 = vpop.f32.mrb[0].mxu0
      %v1144 = vadd.f32 %v852, %v1143
      %v1145 = vpop.f32.mrb[0].mxu0
      %1146 = vmatprep.mubr.f32.mxu0 0.0
      %1147 = vmatmul.mubr.f32.gmra.mrb[0].mxu0 %v949
      %v1148 = vpop.f32.mrb[0].mxu0
      %v1149 = vadd.f32 %v857, %v1148
      %v1150 = vpop.f32.mrb[0].mxu0
      %1151 = vmatprep.mubr.f32.mxu0 0.0
      %1152 = vmatmul.mubr.f32.gmra.mrb[0].mxu0 %v951
      %v1153 = vpop.f32.mrb[0].mxu0
      %v1154 = vadd.f32 %v862, %v1153
      %v1155 = vpop.f32.mrb[0].mxu0
      %1156 = vmatprep.mubr.f32.mxu0 0.0
      %1157 = vmatmul.mubr.f32.gmra.mrb[0].mxu0 %v953
      %v1158 = vpop.f32.mrb[0].mxu0
      %v1159 = vadd.f32 %v867, %v1158
      %v1160 = vpop.f32.mrb[0].mxu0
      %1161 = vmatprep.mubr.f32.mxu0 0.0
      %1162 = vmatmul.mubr.f32.gmra.mrb[0].mxu0 %v955
      %v1163 = vpop.f32.mrb[0].mxu0
      %v1164 = vadd.f32 %v872, %v1163
      %v1165 = vpop.f32.mrb[0].mxu0
      %1166 = vmatprep.mubr.f32.mxu0 0.0
      %1167 = vmatmul.mubr.f32.gmra.mrb[0].mxu0 %v957
      %v1168 = vpop.f32.mrb[0].mxu0
      %v1169 = vadd.f32 %v877, %v1168
      %v1170 = vpop.f32.mrb[0].mxu0
      %1171 = vmatprep.mubr.f32.mxu0 0.0
      %1172 = vmatmul.mubr.f32.gmra.mrb[0].mxu0 %v959
      %v1173 = vpop.f32.mrb[0].mxu0
      %v1174 = vadd.f32 %v882, %v1173
      %v1175 = vpop.f32.mrb[0].mxu0
      %1176 = vmatprep.mubr.f32.mxu0 0.0
      %1177 = vmatmul.mubr.f32.gmra.mrb[0].mxu0 %v961
      %v1178 = vpop.f32.mrb[0].mxu0
      %v1179 = vadd.f32 %v887, %v1178
      %v1180 = vpop.f32.mrb[0].mxu0
      %1181 = vmatprep.mubr.f32.mxu0 0.0
      %1182 = vmatmul.mubr.f32.gmra.mrb[0].mxu0 %v963
      %v1183 = vpop.f32.mrb[0].mxu0
      %v1184 = vadd.f32 %v892, %v1183
      %v1185 = vpop.f32.mrb[0].mxu0
      %1186 = vmatprep.mubr.f32.mxu0 0.0
      %1187 = vmatmul.mubr.f32.gmra.mrb[0].mxu0 %v965
      %v1188 = vpop.f32.mrb[0].mxu0
      %v1189 = vadd.f32 %v897, %v1188
      %v1190 = vpop.f32.mrb[0].mxu0
      %1191 = vmatprep.mubr.f32.mxu0 0.0
      %1192 = vmatmul.mubr.f32.gmra.mrb[0].mxu0 %v967
      %v1193 = vpop.f32.mrb[0].mxu0
      %v1194 = vadd.f32 %v902, %v1193
      %v1195 = vpop.f32.mrb[0].mxu0
      %1196 = vdwg.mxu0
      %vm1197 = vcmask 1046528
      %v1198 = vrot.slane %v470, 1
      %v1199 = vrot.slane %v471, 1
      %v1200 = vsel %vm1197, %v1198, %v1199
      %v1201 = vrot.slane 0.0, 1
      %v1202 = vsel %vm1197, %v1199, %v1201
      %v1203 = vrot.slane %v472, 1
      %v1204 = vrot.slane %v473, 1
      %v1205 = vsel %vm1197, %v1203, %v1204
      %v1206 = vsel %vm1197, %v1204, %v1201
      %v1207 = vrot.slane %v474, 1
      %v1208 = vrot.slane %v475, 1
      %v1209 = vsel %vm1197, %v1207, %v1208
      %v1210 = vsel %vm1197, %v1208, %v1201
      %v1211 = vrot.slane %v476, 1
      %v1212 = vrot.slane %v477, 1
      %v1213 = vsel %vm1197, %v1211, %v1212
      %v1214 = vsel %vm1197, %v1212, %v1201
      %v1215 = vrot.slane %v478, 1
      %v1216 = vrot.slane %v479, 1
      %v1217 = vsel %vm1197, %v1215, %v1216
      %v1218 = vsel %vm1197, %v1216, %v1201
      %v1219 = vrot.slane %v480, 1
      %v1220 = vrot.slane %v481, 1
      %v1221 = vsel %vm1197, %v1219, %v1220
      %v1222 = vsel %vm1197, %v1220, %v1201
      %v1223 = vrot.slane %v482, 1
      %v1224 = vrot.slane %v483, 1
      %v1225 = vsel %vm1197, %v1223, %v1224
      %v1226 = vsel %vm1197, %v1224, %v1201
      %v1227 = vrot.slane %v484, 1
      %v1228 = vrot.slane %v485, 1
      %v1229 = vsel %vm1197, %v1227, %v1228
      %v1230 = vsel %vm1197, %v1228, %v1201
      %v1231 = vrot.slane %v486, 1
      %v1232 = vrot.slane %v487, 1
      %v1233 = vsel %vm1197, %v1231, %v1232
      %v1234 = vsel %vm1197, %v1232, %v1201
      %v1235 = vrot.slane %v488, 1
      %v1236 = vrot.slane %v489, 1
      %v1237 = vsel %vm1197, %v1235, %v1236
      %v1238 = vsel %vm1197, %v1236, %v1201
      %v1239 = vrot.slane %v490, 1
      %v1240 = vrot.slane %v491, 1
      %v1241 = vsel %vm1197, %v1239, %v1240
      %v1242 = vsel %vm1197, %v1240, %v1201
      %v1243 = vrot.slane %v492, 1
      %v1244 = vrot.slane %v493, 1
      %v1245 = vsel %vm1197, %v1243, %v1244
      %v1246 = vsel %vm1197, %v1244, %v1201
      %v1247 = vrot.slane %v494, 1
      %v1248 = vrot.slane %v495, 1
      %v1249 = vsel %vm1197, %v1247, %v1248
      %v1250 = vsel %vm1197, %v1248, %v1201
      %v1251 = vrot.slane %v496, 1
      %v1252 = vrot.slane %v497, 1
      %v1253 = vsel %vm1197, %v1251, %v1252
      %v1254 = vsel %vm1197, %v1252, %v1201
      %v1255 = vrot.slane %v498, 1
      %v1256 = vrot.slane %v499, 1
      %v1257 = vsel %vm1197, %v1255, %v1256
      %v1258 = vsel %vm1197, %v1256, %v1201
      %v1259 = vrot.slane %v500, 1
      %v1260 = vrot.slane %v501, 1
      %v1261 = vsel %vm1197, %v1259, %v1260
      %v1262 = vsel %vm1197, %v1260, %v1201
      %s1263 = scalar_lea.vmem %s3, 8
      %v1264 = vld [vmem:[%s1263] sm:$0xf]
      %v1265 = vsel %vm611, %v1200, 0
      %v1267 = vsel %vm611, %v1202, 0
      %v1269 = vsel %vm611, %v1205, 0
      %v1271 = vsel %vm611, %v1206, 0
      %v1273 = vsel %vm611, %v1209, 0
      %v1275 = vsel %vm611, %v1210, 0
      %v1277 = vsel %vm611, %v1213, 0
      %v1279 = vsel %vm611, %v1214, 0
      %v1281 = vsel %vm611, %v1217, 0
      %v1283 = vsel %vm611, %v1218, 0
      %v1285 = vsel %vm611, %v1221, 0
      %v1287 = vsel %vm611, %v1222, 0
      %v1289 = vsel %vm611, %v1225, 0
      %v1291 = vsel %vm611, %v1226, 0
      %v1293 = vsel %vm611, %v1229, 0
      %v1295 = vsel %vm611, %v1230, 0
      %v1297 = vsel %vm611, %v1233, 0
      %v1299 = vsel %vm611, %v1234, 0
      %v1301 = vsel %vm611, %v1237, 0
      %v1303 = vsel %vm611, %v1238, 0
      %v1305 = vsel %vm611, %v1241, 0
      %v1307 = vsel %vm611, %v1242, 0
      %v1309 = vsel %vm611, %v1245, 0
      %v1311 = vsel %vm611, %v1246, 0
      %v1313 = vsel %vm611, %v1249, 0
      %v1315 = vsel %vm611, %v1250, 0
      %v1317 = vsel %vm611, %v1253, 0
      %v1319 = vsel %vm611, %v1254, 0
      %v1321 = vsel %vm611, %v1257, 0
      %v1323 = vsel %vm611, %v1258, 0
      %v1325 = vsel %vm611, %v1261, 0
      %v1327 = vsel %vm611, %v1262, 0
      %v1330 = vsel %vm676, %v1264, 0
      %1332 = vmatprep.subr.mxu0 0.0
      %1333 = vmatpush1.msra.mxu0 %v1330
      %1334 = vmatprep.subr.mxu0 0.0
      %1335 = vmatpush1.msra.mxu0 0.0
      %1336 = vmatprep.subr.mxu0 0.0
      %1337 = vmatpush1.msra.mxu0 0.0
      %1338 = vmatprep.subr.mxu0 0.0
      %1339 = vmatpush1.msra.mxu0 0.0
      %1340 = vmatprep.subr.mxu0 0.0
      %1341 = vmatpush1.msra.mxu0 0.0
      %1342 = vmatprep.subr.mxu0 0.0
      %1343 = vmatpush1.msra.mxu0 0.0
      %1344 = vmatprep.subr.mxu0 0.0
      %1345 = vmatpush1.msra.mxu0 0.0
      %1346 = vmatprep.subr.mxu0 0.0
      %1347 = vmatpush1.msra.mxu0 0.0
      %1348 = vmatprep.subr.mxu0 0.0
      %1349 = vmatpush1.msra.mxu0 0.0
      %1350 = vmatprep.subr.mxu0 0.0
      %1351 = vmatpush1.msra.mxu0 0.0
      %1352 = vmatprep.subr.mxu0 0.0
      %1353 = vmatpush1.msra.mxu0 0.0
      %1354 = vmatprep.subr.mxu0 0.0
      %1355 = vmatpush1.msra.mxu0 0.0
      %1356 = vmatprep.subr.mxu0 0.0
      %1357 = vmatpush1.msra.mxu0 0.0
      %1358 = vmatprep.subr.mxu0 0.0
      %1359 = vmatpush1.msra.mxu0 0.0
      %1360 = vmatprep.subr.mxu0 0.0
      %1361 = vmatpush1.msra.mxu0 0.0
      %1362 = vmatprep.subr.mxu0 0.0
      %1363 = vmatpush1.msra.mxu0 0.0
      %1364 = vmatprep.subr.mxu0 0.0
      %1365 = vmatpush1.msra.mxu0 0.0
      %1366 = vmatprep.subr.mxu0 0.0
      %1367 = vmatpush1.msra.mxu0 0.0
      %1368 = vmatprep.subr.mxu0 0.0
      %1369 = vmatpush1.msra.mxu0 0.0
      %1370 = vmatprep.subr.mxu0 0.0
      %1371 = vmatpush1.msra.mxu0 0.0
      %1372 = vmatprep.subr.mxu0 0.0
      %1373 = vmatpush1.msra.mxu0 0.0
      %1374 = vmatprep.subr.mxu0 0.0
      %1375 = vmatpush1.msra.mxu0 0.0
      %1376 = vmatprep.subr.mxu0 0.0
      %1377 = vmatpush1.msra.mxu0 0.0
      %1378 = vmatprep.subr.mxu0 0.0
      %1379 = vmatpush1.msra.mxu0 0.0
      %1380 = vmatprep.subr.mxu0 0.0
      %1381 = vmatpush1.msra.mxu0 0.0
      %1382 = vmatprep.subr.mxu0 0.0
      %1383 = vmatpush1.msra.mxu0 0.0
      %1384 = vmatprep.subr.mxu0 0.0
      %1385 = vmatpush1.msra.mxu0 0.0
      %1386 = vmatprep.subr.mxu0 0.0
      %1387 = vmatpush1.msra.mxu0 0.0
      %1388 = vmatprep.subr.mxu0 0.0
      %1389 = vmatpush1.msra.mxu0 0.0
      %1390 = vmatprep.subr.mxu0 0.0
      %1391 = vmatpush1.msra.mxu0 0.0
      %1392 = vmatprep.subr.mxu0 0.0
      %1393 = vmatpush1.msra.mxu0 0.0
      %1394 = vmatprep.subr.mxu0 0.0
      %1395 = vmatpush1.msra.mxu0 0.0
      %1396 = vmatprep.mubr.f32.mxu0 0.0
      %1397 = vmatmul.mubr.f32.gmra.mrb[0].mxu0 %v1265
      %v1398 = vpop.f32.mrb[0].mxu0
      %v1399 = vadd.f32 0.0, %v1398
      %v1400 = vpop.f32.mrb[0].mxu0
      %1401 = vmatprep.mubr.f32.mxu0 0.0
      %1402 = vmatmul.mubr.f32.gmra.mrb[0].mxu0 %v1267
      %v1403 = vpop.f32.mrb[0].mxu0
      %v1404 = vadd.f32 0.0, %v1403
      %v1405 = vpop.f32.mrb[0].mxu0
      %1406 = vmatprep.mubr.f32.mxu0 0.0
      %1407 = vmatmul.mubr.f32.gmra.mrb[0].mxu0 %v1269
      %v1408 = vpop.f32.mrb[0].mxu0
      %v1409 = vadd.f32 0.0, %v1408
      %v1410 = vpop.f32.mrb[0].mxu0
      %1411 = vmatprep.mubr.f32.mxu0 0.0
      %1412 = vmatmul.mubr.f32.gmra.mrb[0].mxu0 %v1271
      %v1413 = vpop.f32.mrb[0].mxu0
      %v1414 = vadd.f32 0.0, %v1413
      %v1415 = vpop.f32.mrb[0].mxu0
      %1416 = vmatprep.mubr.f32.mxu0 0.0
      %1417 = vmatmul.mubr.f32.gmra.mrb[0].mxu0 %v1273
      %v1418 = vpop.f32.mrb[0].mxu0
      %v1419 = vadd.f32 0.0, %v1418
      %v1420 = vpop.f32.mrb[0].mxu0
      %1421 = vmatprep.mubr.f32.mxu0 0.0
      %1422 = vmatmul.mubr.f32.gmra.mrb[0].mxu0 %v1275
      %v1423 = vpop.f32.mrb[0].mxu0
      %v1424 = vadd.f32 0.0, %v1423
      %v1425 = vpop.f32.mrb[0].mxu0
      %1426 = vmatprep.mubr.f32.mxu0 0.0
      %1427 = vmatmul.mubr.f32.gmra.mrb[0].mxu0 %v1277
      %v1428 = vpop.f32.mrb[0].mxu0
      %v1429 = vadd.f32 0.0, %v1428
      %v1430 = vpop.f32.mrb[0].mxu0
      %1431 = vmatprep.mubr.f32.mxu0 0.0
      %1432 = vmatmul.mubr.f32.gmra.mrb[0].mxu0 %v1279
      %v1433 = vpop.f32.mrb[0].mxu0
      %v1434 = vadd.f32 0.0, %v1433
      %v1435 = vpop.f32.mrb[0].mxu0
      %1436 = vmatprep.mubr.f32.mxu0 0.0
      %1437 = vmatmul.mubr.f32.gmra.mrb[0].mxu0 %v1281
      %v1438 = vpop.f32.mrb[0].mxu0
      %v1439 = vadd.f32 0.0, %v1438
      %v1440 = vpop.f32.mrb[0].mxu0
      %1441 = vmatprep.mubr.f32.mxu0 0.0
      %1442 = vmatmul.mubr.f32.gmra.mrb[0].mxu0 %v1283
      %v1443 = vpop.f32.mrb[0].mxu0
      %v1444 = vadd.f32 0.0, %v1443
      %v1445 = vpop.f32.mrb[0].mxu0
      %1446 = vmatprep.mubr.f32.mxu0 0.0
      %1447 = vmatmul.mubr.f32.gmra.mrb[0].mxu0 %v1285
      %v1448 = vpop.f32.mrb[0].mxu0
      %v1449 = vadd.f32 0.0, %v1448
      %v1450 = vpop.f32.mrb[0].mxu0
      %1451 = vmatprep.mubr.f32.mxu0 0.0
      %1452 = vmatmul.mubr.f32.gmra.mrb[0].mxu0 %v1287
      %v1453 = vpop.f32.mrb[0].mxu0
      %v1454 = vadd.f32 0.0, %v1453
      %v1455 = vpop.f32.mrb[0].mxu0
      %1456 = vmatprep.mubr.f32.mxu0 0.0
      %1457 = vmatmul.mubr.f32.gmra.mrb[0].mxu0 %v1289
      %v1458 = vpop.f32.mrb[0].mxu0
      %v1459 = vadd.f32 0.0, %v1458
      %v1460 = vpop.f32.mrb[0].mxu0
      %1461 = vmatprep.mubr.f32.mxu0 0.0
      %1462 = vmatmul.mubr.f32.gmra.mrb[0].mxu0 %v1291
      %v1463 = vpop.f32.mrb[0].mxu0
      %v1464 = vadd.f32 0.0, %v1463
      %v1465 = vpop.f32.mrb[0].mxu0
      %1466 = vmatprep.mubr.f32.mxu0 0.0
      %1467 = vmatmul.mubr.f32.gmra.mrb[0].mxu0 %v1293
      %v1468 = vpop.f32.mrb[0].mxu0
      %v1469 = vadd.f32 0.0, %v1468
      %v1470 = vpop.f32.mrb[0].mxu0
      %1471 = vmatprep.mubr.f32.mxu0 0.0
      %1472 = vmatmul.mubr.f32.gmra.mrb[0].mxu0 %v1295
      %v1473 = vpop.f32.mrb[0].mxu0
      %v1474 = vadd.f32 0.0, %v1473
      %v1475 = vpop.f32.mrb[0].mxu0
      %1476 = vmatprep.mubr.f32.mxu0 0.0
      %1477 = vmatmul.mubr.f32.gmra.mrb[0].mxu0 %v1297
      %v1478 = vpop.f32.mrb[0].mxu0
      %v1479 = vadd.f32 0.0, %v1478
      %v1480 = vpop.f32.mrb[0].mxu0
      %1481 = vmatprep.mubr.f32.mxu0 0.0
      %1482 = vmatmul.mubr.f32.gmra.mrb[0].mxu0 %v1299
      %v1483 = vpop.f32.mrb[0].mxu0
      %v1484 = vadd.f32 0.0, %v1483
      %v1485 = vpop.f32.mrb[0].mxu0
      %1486 = vmatprep.mubr.f32.mxu0 0.0
      %1487 = vmatmul.mubr.f32.gmra.mrb[0].mxu0 %v1301
      %v1488 = vpop.f32.mrb[0].mxu0
      %v1489 = vadd.f32 0.0, %v1488
      %v1490 = vpop.f32.mrb[0].mxu0
      %1491 = vmatprep.mubr.f32.mxu0 0.0
      %1492 = vmatmul.mubr.f32.gmra.mrb[0].mxu0 %v1303
      %v1493 = vpop.f32.mrb[0].mxu0
      %v1494 = vadd.f32 0.0, %v1493
      %v1495 = vpop.f32.mrb[0].mxu0
      %1496 = vmatprep.mubr.f32.mxu0 0.0
      %1497 = vmatmul.mubr.f32.gmra.mrb[0].mxu0 %v1305
      %v1498 = vpop.f32.mrb[0].mxu0
      %v1499 = vadd.f32 0.0, %v1498
      %v1500 = vpop.f32.mrb[0].mxu0
      %1501 = vmatprep.mubr.f32.mxu0 0.0
      %1502 = vmatmul.mubr.f32.gmra.mrb[0].mxu0 %v1307
      %v1503 = vpop.f32.mrb[0].mxu0
      %v1504 = vadd.f32 0.0, %v1503
      %v1505 = vpop.f32.mrb[0].mxu0
      %1506 = vmatprep.mubr.f32.mxu0 0.0
      %1507 = vmatmul.mubr.f32.gmra.mrb[0].mxu0 %v1309
      %v1508 = vpop.f32.mrb[0].mxu0
      %v1509 = vadd.f32 0.0, %v1508
      %v1510 = vpop.f32.mrb[0].mxu0
      %1511 = vmatprep.mubr.f32.mxu0 0.0
      %1512 = vmatmul.mubr.f32.gmra.mrb[0].mxu0 %v1311
      %v1513 = vpop.f32.mrb[0].mxu0
      %v1514 = vadd.f32 0.0, %v1513
      %v1515 = vpop.f32.mrb[0].mxu0
      %1516 = vmatprep.mubr.f32.mxu0 0.0
      %1517 = vmatmul.mubr.f32.gmra.mrb[0].mxu0 %v1313
      %v1518 = vpop.f32.mrb[0].mxu0
      %v1519 = vadd.f32 0.0, %v1518
      %v1520 = vpop.f32.mrb[0].mxu0
      %1521 = vmatprep.mubr.f32.mxu0 0.0
      %1522 = vmatmul.mubr.f32.gmra.mrb[0].mxu0 %v1315
      %v1523 = vpop.f32.mrb[0].mxu0
      %v1524 = vadd.f32 0.0, %v1523
      %v1525 = vpop.f32.mrb[0].mxu0
      %1526 = vmatprep.mubr.f32.mxu0 0.0
      %1527 = vmatmul.mubr.f32.gmra.mrb[0].mxu0 %v1317
      %v1528 = vpop.f32.mrb[0].mxu0
      %v1529 = vadd.f32 0.0, %v1528
      %v1530 = vpop.f32.mrb[0].mxu0
      %1531 = vmatprep.mubr.f32.mxu0 0.0
      %1532 = vmatmul.mubr.f32.gmra.mrb[0].mxu0 %v1319
      %v1533 = vpop.f32.mrb[0].mxu0
      %v1534 = vadd.f32 0.0, %v1533
      %v1535 = vpop.f32.mrb[0].mxu0
      %1536 = vmatprep.mubr.f32.mxu0 0.0
      %1537 = vmatmul.mubr.f32.gmra.mrb[0].mxu0 %v1321
      %v1538 = vpop.f32.mrb[0].mxu0
      %v1539 = vadd.f32 0.0, %v1538
      %v1540 = vpop.f32.mrb[0].mxu0
      %1541 = vmatprep.mubr.f32.mxu0 0.0
      %1542 = vmatmul.mubr.f32.gmra.mrb[0].mxu0 %v1323
      %v1543 = vpop.f32.mrb[0].mxu0
      %v1544 = vadd.f32 0.0, %v1543
      %v1545 = vpop.f32.mrb[0].mxu0
      %1546 = vmatprep.mubr.f32.mxu0 0.0
      %1547 = vmatmul.mubr.f32.gmra.mrb[0].mxu0 %v1325
      %v1548 = vpop.f32.mrb[0].mxu0
      %v1549 = vadd.f32 0.0, %v1548
      %v1550 = vpop.f32.mrb[0].mxu0
      %1551 = vmatprep.mubr.f32.mxu0 0.0
      %1552 = vmatmul.mubr.f32.gmra.mrb[0].mxu0 %v1327
      %v1553 = vpop.f32.mrb[0].mxu0
      %v1554 = vadd.f32 0.0, %v1553
      %v1555 = vpop.f32.mrb[0].mxu0
      %1556 = vdwg.mxu0
      %v1557 = vadd.f32 %v1039, %v1399
      %v1558 = vadd.f32 %v1044, %v1404
      %v1559 = vadd.f32 %v1049, %v1409
      %v1560 = vadd.f32 %v1054, %v1414
      %v1561 = vadd.f32 %v1059, %v1419
      %v1562 = vadd.f32 %v1064, %v1424
      %v1563 = vadd.f32 %v1069, %v1429
      %v1564 = vadd.f32 %v1074, %v1434
      %v1565 = vadd.f32 %v1079, %v1439
      %v1566 = vadd.f32 %v1084, %v1444
      %v1567 = vadd.f32 %v1089, %v1449
      %v1568 = vadd.f32 %v1094, %v1454
      %v1569 = vadd.f32 %v1099, %v1459
      %v1570 = vadd.f32 %v1104, %v1464
      %v1571 = vadd.f32 %v1109, %v1469
      %v1572 = vadd.f32 %v1114, %v1474
      %v1573 = vadd.f32 %v1119, %v1479
      %v1574 = vadd.f32 %v1124, %v1484
      %v1575 = vadd.f32 %v1129, %v1489
      %v1576 = vadd.f32 %v1134, %v1494
      %v1577 = vadd.f32 %v1139, %v1499
      %v1578 = vadd.f32 %v1144, %v1504
      %v1579 = vadd.f32 %v1149, %v1509
      %v1580 = vadd.f32 %v1154, %v1514
      %v1581 = vadd.f32 %v1159, %v1519
      %v1582 = vadd.f32 %v1164, %v1524
      %v1583 = vadd.f32 %v1169, %v1529
      %v1584 = vadd.f32 %v1174, %v1534
      %v1585 = vadd.f32 %v1179, %v1539
      %v1586 = vadd.f32 %v1184, %v1544
      %v1587 = vadd.f32 %v1189, %v1549
      %v1588 = vadd.f32 %v1194, %v1554
      %v1591 = vrot.slane %v502, 7
      %v1592 = vsel %vm542, %v543, %v1591
      %v1593 = vrot.slane %v503, 7
      %v1594 = vsel %vm542, %v1591, %v1593
      %s1595 = scalar_lea.vmem %s3, 12
      %v1596 = vld [vmem:[%s1595] sm:$0xf]
      %v1597 = vsel %vm611, %v1592, 0
      %v1599 = vsel %vm611, %v1594, 0
      %v1602 = vsel %vm676, %v1596, 0
      %1604 = vmatprep.subr.mxu0 0.0
      %1605 = vmatpush1.msra.mxu0 %v1602
      %1606 = vmatprep.subr.mxu0 0.0
      %1607 = vmatpush1.msra.mxu0 0.0
      %1608 = vmatprep.subr.mxu0 0.0
      %1609 = vmatpush1.msra.mxu0 0.0
      %1610 = vmatprep.subr.mxu0 0.0
      %1611 = vmatpush1.msra.mxu0 0.0
      %1612 = vmatprep.subr.mxu0 0.0
      %1613 = vmatpush1.msra.mxu0 0.0
      %1614 = vmatprep.subr.mxu0 0.0
      %1615 = vmatpush1.msra.mxu0 0.0
      %1616 = vmatprep.subr.mxu0 0.0
      %1617 = vmatpush1.msra.mxu0 0.0
      %1618 = vmatprep.subr.mxu0 0.0
      %1619 = vmatpush1.msra.mxu0 0.0
      %1620 = vmatprep.subr.mxu0 0.0
      %1621 = vmatpush1.msra.mxu0 0.0
      %1622 = vmatprep.subr.mxu0 0.0
      %1623 = vmatpush1.msra.mxu0 0.0
      %1624 = vmatprep.subr.mxu0 0.0
      %1625 = vmatpush1.msra.mxu0 0.0
      %1626 = vmatprep.subr.mxu0 0.0
      %1627 = vmatpush1.msra.mxu0 0.0
      %1628 = vmatprep.subr.mxu0 0.0
      %1629 = vmatpush1.msra.mxu0 0.0
      %1630 = vmatprep.subr.mxu0 0.0
      %1631 = vmatpush1.msra.mxu0 0.0
      %1632 = vmatprep.subr.mxu0 0.0
      %1633 = vmatpush1.msra.mxu0 0.0
      %1634 = vmatprep.subr.mxu0 0.0
      %1635 = vmatpush1.msra.mxu0 0.0
      %1636 = vmatprep.subr.mxu0 0.0
      %1637 = vmatpush1.msra.mxu0 0.0
      %1638 = vmatprep.subr.mxu0 0.0
      %1639 = vmatpush1.msra.mxu0 0.0
      %1640 = vmatprep.subr.mxu0 0.0
      %1641 = vmatpush1.msra.mxu0 0.0
      %1642 = vmatprep.subr.mxu0 0.0
      %1643 = vmatpush1.msra.mxu0 0.0
      %1644 = vmatprep.subr.mxu0 0.0
      %1645 = vmatpush1.msra.mxu0 0.0
      %1646 = vmatprep.subr.mxu0 0.0
      %1647 = vmatpush1.msra.mxu0 0.0
      %1648 = vmatprep.subr.mxu0 0.0
      %1649 = vmatpush1.msra.mxu0 0.0
      %1650 = vmatprep.subr.mxu0 0.0
      %1651 = vmatpush1.msra.mxu0 0.0
      %1652 = vmatprep.subr.mxu0 0.0
      %1653 = vmatpush1.msra.mxu0 0.0
      %1654 = vmatprep.subr.mxu0 0.0
      %1655 = vmatpush1.msra.mxu0 0.0
      %1656 = vmatprep.subr.mxu0 0.0
      %1657 = vmatpush1.msra.mxu0 0.0
      %1658 = vmatprep.subr.mxu0 0.0
      %1659 = vmatpush1.msra.mxu0 0.0
      %1660 = vmatprep.subr.mxu0 0.0
      %1661 = vmatpush1.msra.mxu0 0.0
      %1662 = vmatprep.subr.mxu0 0.0
      %1663 = vmatpush1.msra.mxu0 0.0
      %1664 = vmatprep.subr.mxu0 0.0
      %1665 = vmatpush1.msra.mxu0 0.0
      %1666 = vmatprep.subr.mxu0 0.0
      %1667 = vmatpush1.msra.mxu0 0.0
      %1668 = vmatprep.mubr.f32.mxu0 0.0
      %1669 = vmatmul.mubr.f32.gmra.mrb[0].mxu0 %v909
      %v1670 = vpop.f32.mrb[0].mxu0
      %v1671 = vadd.f32 0.0, %v1670
      %v1672 = vpop.f32.mrb[0].mxu0
      %1673 = vmatprep.mubr.f32.mxu0 0.0
      %1674 = vmatmul.mubr.f32.gmra.mrb[0].mxu0 %v911
      %v1675 = vpop.f32.mrb[0].mxu0
      %v1676 = vadd.f32 0.0, %v1675
      %v1677 = vpop.f32.mrb[0].mxu0
      %1678 = vmatprep.mubr.f32.mxu0 0.0
      %1679 = vmatmul.mubr.f32.gmra.mrb[0].mxu0 %v913
      %v1680 = vpop.f32.mrb[0].mxu0
      %v1681 = vadd.f32 0.0, %v1680
      %v1682 = vpop.f32.mrb[0].mxu0
      %1683 = vmatprep.mubr.f32.mxu0 0.0
      %1684 = vmatmul.mubr.f32.gmra.mrb[0].mxu0 %v915
      %v1685 = vpop.f32.mrb[0].mxu0
      %v1686 = vadd.f32 0.0, %v1685
      %v1687 = vpop.f32.mrb[0].mxu0
      %1688 = vmatprep.mubr.f32.mxu0 0.0
      %1689 = vmatmul.mubr.f32.gmra.mrb[0].mxu0 %v917
      %v1690 = vpop.f32.mrb[0].mxu0
      %v1691 = vadd.f32 0.0, %v1690
      %v1692 = vpop.f32.mrb[0].mxu0
      %1693 = vmatprep.mubr.f32.mxu0 0.0
      %1694 = vmatmul.mubr.f32.gmra.mrb[0].mxu0 %v919
      %v1695 = vpop.f32.mrb[0].mxu0
      %v1696 = vadd.f32 0.0, %v1695
      %v1697 = vpop.f32.mrb[0].mxu0
      %1698 = vmatprep.mubr.f32.mxu0 0.0
      %1699 = vmatmul.mubr.f32.gmra.mrb[0].mxu0 %v921
      %v1700 = vpop.f32.mrb[0].mxu0
      %v1701 = vadd.f32 0.0, %v1700
      %v1702 = vpop.f32.mrb[0].mxu0
      %1703 = vmatprep.mubr.f32.mxu0 0.0
      %1704 = vmatmul.mubr.f32.gmra.mrb[0].mxu0 %v923
      %v1705 = vpop.f32.mrb[0].mxu0
      %v1706 = vadd.f32 0.0, %v1705
      %v1707 = vpop.f32.mrb[0].mxu0
      %1708 = vmatprep.mubr.f32.mxu0 0.0
      %1709 = vmatmul.mubr.f32.gmra.mrb[0].mxu0 %v925
      %v1710 = vpop.f32.mrb[0].mxu0
      %v1711 = vadd.f32 0.0, %v1710
      %v1712 = vpop.f32.mrb[0].mxu0
      %1713 = vmatprep.mubr.f32.mxu0 0.0
      %1714 = vmatmul.mubr.f32.gmra.mrb[0].mxu0 %v927
      %v1715 = vpop.f32.mrb[0].mxu0
      %v1716 = vadd.f32 0.0, %v1715
      %v1717 = vpop.f32.mrb[0].mxu0
      %1718 = vmatprep.mubr.f32.mxu0 0.0
      %1719 = vmatmul.mubr.f32.gmra.mrb[0].mxu0 %v929
      %v1720 = vpop.f32.mrb[0].mxu0
      %v1721 = vadd.f32 0.0, %v1720
      %v1722 = vpop.f32.mrb[0].mxu0
      %1723 = vmatprep.mubr.f32.mxu0 0.0
      %1724 = vmatmul.mubr.f32.gmra.mrb[0].mxu0 %v931
      %v1725 = vpop.f32.mrb[0].mxu0
      %v1726 = vadd.f32 0.0, %v1725
      %v1727 = vpop.f32.mrb[0].mxu0
      %1728 = vmatprep.mubr.f32.mxu0 0.0
      %1729 = vmatmul.mubr.f32.gmra.mrb[0].mxu0 %v933
      %v1730 = vpop.f32.mrb[0].mxu0
      %v1731 = vadd.f32 0.0, %v1730
      %v1732 = vpop.f32.mrb[0].mxu0
      %1733 = vmatprep.mubr.f32.mxu0 0.0
      %1734 = vmatmul.mubr.f32.gmra.mrb[0].mxu0 %v935
      %v1735 = vpop.f32.mrb[0].mxu0
      %v1736 = vadd.f32 0.0, %v1735
      %v1737 = vpop.f32.mrb[0].mxu0
      %1738 = vmatprep.mubr.f32.mxu0 0.0
      %1739 = vmatmul.mubr.f32.gmra.mrb[0].mxu0 %v937
      %v1740 = vpop.f32.mrb[0].mxu0
      %v1741 = vadd.f32 0.0, %v1740
      %v1742 = vpop.f32.mrb[0].mxu0
      %1743 = vmatprep.mubr.f32.mxu0 0.0
      %1744 = vmatmul.mubr.f32.gmra.mrb[0].mxu0 %v939
      %v1745 = vpop.f32.mrb[0].mxu0
      %v1746 = vadd.f32 0.0, %v1745
      %v1747 = vpop.f32.mrb[0].mxu0
      %1748 = vmatprep.mubr.f32.mxu0 0.0
      %1749 = vmatmul.mubr.f32.gmra.mrb[0].mxu0 %v941
      %v1750 = vpop.f32.mrb[0].mxu0
      %v1751 = vadd.f32 0.0, %v1750
      %v1752 = vpop.f32.mrb[0].mxu0
      %1753 = vmatprep.mubr.f32.mxu0 0.0
      %1754 = vmatmul.mubr.f32.gmra.mrb[0].mxu0 %v943
      %v1755 = vpop.f32.mrb[0].mxu0
      %v1756 = vadd.f32 0.0, %v1755
      %v1757 = vpop.f32.mrb[0].mxu0
      %1758 = vmatprep.mubr.f32.mxu0 0.0
      %1759 = vmatmul.mubr.f32.gmra.mrb[0].mxu0 %v945
      %v1760 = vpop.f32.mrb[0].mxu0
      %v1761 = vadd.f32 0.0, %v1760
      %v1762 = vpop.f32.mrb[0].mxu0
      %1763 = vmatprep.mubr.f32.mxu0 0.0
      %1764 = vmatmul.mubr.f32.gmra.mrb[0].mxu0 %v947
      %v1765 = vpop.f32.mrb[0].mxu0
      %v1766 = vadd.f32 0.0, %v1765
      %v1767 = vpop.f32.mrb[0].mxu0
      %1768 = vmatprep.mubr.f32.mxu0 0.0
      %1769 = vmatmul.mubr.f32.gmra.mrb[0].mxu0 %v949
      %v1770 = vpop.f32.mrb[0].mxu0
      %v1771 = vadd.f32 0.0, %v1770
      %v1772 = vpop.f32.mrb[0].mxu0
      %1773 = vmatprep.mubr.f32.mxu0 0.0
      %1774 = vmatmul.mubr.f32.gmra.mrb[0].mxu0 %v951
      %v1775 = vpop.f32.mrb[0].mxu0
      %v1776 = vadd.f32 0.0, %v1775
      %v1777 = vpop.f32.mrb[0].mxu0
      %1778 = vmatprep.mubr.f32.mxu0 0.0
      %1779 = vmatmul.mubr.f32.gmra.mrb[0].mxu0 %v953
      %v1780 = vpop.f32.mrb[0].mxu0
      %v1781 = vadd.f32 0.0, %v1780
      %v1782 = vpop.f32.mrb[0].mxu0
      %1783 = vmatprep.mubr.f32.mxu0 0.0
      %1784 = vmatmul.mubr.f32.gmra.mrb[0].mxu0 %v955
      %v1785 = vpop.f32.mrb[0].mxu0
      %v1786 = vadd.f32 0.0, %v1785
      %v1787 = vpop.f32.mrb[0].mxu0
      %1788 = vmatprep.mubr.f32.mxu0 0.0
      %1789 = vmatmul.mubr.f32.gmra.mrb[0].mxu0 %v957
      %v1790 = vpop.f32.mrb[0].mxu0
      %v1791 = vadd.f32 0.0, %v1790
      %v1792 = vpop.f32.mrb[0].mxu0
      %1793 = vmatprep.mubr.f32.mxu0 0.0
      %1794 = vmatmul.mubr.f32.gmra.mrb[0].mxu0 %v959
      %v1795 = vpop.f32.mrb[0].mxu0
      %v1796 = vadd.f32 0.0, %v1795
      %v1797 = vpop.f32.mrb[0].mxu0
      %1798 = vmatprep.mubr.f32.mxu0 0.0
      %1799 = vmatmul.mubr.f32.gmra.mrb[0].mxu0 %v961
      %v1800 = vpop.f32.mrb[0].mxu0
      %v1801 = vadd.f32 0.0, %v1800
      %v1802 = vpop.f32.mrb[0].mxu0
      %1803 = vmatprep.mubr.f32.mxu0 0.0
      %1804 = vmatmul.mubr.f32.gmra.mrb[0].mxu0 %v963
      %v1805 = vpop.f32.mrb[0].mxu0
      %v1806 = vadd.f32 0.0, %v1805
      %v1807 = vpop.f32.mrb[0].mxu0
      %1808 = vmatprep.mubr.f32.mxu0 0.0
      %1809 = vmatmul.mubr.f32.gmra.mrb[0].mxu0 %v965
      %v1810 = vpop.f32.mrb[0].mxu0
      %v1811 = vadd.f32 0.0, %v1810
      %v1812 = vpop.f32.mrb[0].mxu0
      %1813 = vmatprep.mubr.f32.mxu0 0.0
      %1814 = vmatmul.mubr.f32.gmra.mrb[0].mxu0 %v967
      %v1815 = vpop.f32.mrb[0].mxu0
      %v1816 = vadd.f32 0.0, %v1815
      %v1817 = vpop.f32.mrb[0].mxu0
      %1818 = vmatprep.mubr.f32.mxu0 0.0
      %1819 = vmatmul.mubr.f32.gmra.mrb[0].mxu0 %v1597
      %v1820 = vpop.f32.mrb[0].mxu0
      %v1821 = vadd.f32 0.0, %v1820
      %v1822 = vpop.f32.mrb[0].mxu0
      %1823 = vmatprep.mubr.f32.mxu0 0.0
      %1824 = vmatmul.mubr.f32.gmra.mrb[0].mxu0 %v1599
      %v1825 = vpop.f32.mrb[0].mxu0
      %v1826 = vadd.f32 0.0, %v1825
      %v1827 = vpop.f32.mrb[0].mxu0
      %1828 = vdwg.mxu0
      %v1829 = vadd.f32 %v1557, %v1671
      %v1830 = vadd.f32 %v1558, %v1676
      %v1831 = vadd.f32 %v1559, %v1681
      %v1832 = vadd.f32 %v1560, %v1686
      %v1833 = vadd.f32 %v1561, %v1691
      %v1834 = vadd.f32 %v1562, %v1696
      %v1835 = vadd.f32 %v1563, %v1701
      %v1836 = vadd.f32 %v1564, %v1706
      %v1837 = vadd.f32 %v1565, %v1711
      %v1838 = vadd.f32 %v1566, %v1716
      %v1839 = vadd.f32 %v1567, %v1721
      %v1840 = vadd.f32 %v1568, %v1726
      %v1841 = vadd.f32 %v1569, %v1731
      %v1842 = vadd.f32 %v1570, %v1736
      %v1843 = vadd.f32 %v1571, %v1741
      %v1844 = vadd.f32 %v1572, %v1746
      %v1845 = vadd.f32 %v1573, %v1751
      %v1846 = vadd.f32 %v1574, %v1756
      %v1847 = vadd.f32 %v1575, %v1761
      %v1848 = vadd.f32 %v1576, %v1766
      %v1849 = vadd.f32 %v1577, %v1771
      %v1850 = vadd.f32 %v1578, %v1776
      %v1851 = vadd.f32 %v1579, %v1781
      %v1852 = vadd.f32 %v1580, %v1786
      %v1853 = vadd.f32 %v1581, %v1791
      %v1854 = vadd.f32 %v1582, %v1796
      %v1855 = vadd.f32 %v1583, %v1801
      %v1856 = vadd.f32 %v1584, %v1806
      %v1857 = vadd.f32 %v1585, %v1811
      %v1858 = vadd.f32 %v1586, %v1816
      %v1859 = vadd.f32 %v1587, %v1821
      %v1860 = vadd.f32 %v1588, %v1826
      %s1861 = scalar_lea.vmem %s3, 16
      %v1862 = vld [vmem:[%s1861] sm:$0xf]
      %v1863 = vsel %vm611, %v502, 0
      %v1865 = vsel %vm611, %v503, 0
      %v1868 = vsel %vm676, %v1862, 0
      %1870 = vmatprep.subr.mxu0 0.0
      %1871 = vmatpush1.msra.mxu0 %v1868
      %1872 = vmatprep.subr.mxu0 0.0
      %1873 = vmatpush1.msra.mxu0 0.0
      %1874 = vmatprep.subr.mxu0 0.0
      %1875 = vmatpush1.msra.mxu0 0.0
      %1876 = vmatprep.subr.mxu0 0.0
      %1877 = vmatpush1.msra.mxu0 0.0
      %1878 = vmatprep.subr.mxu0 0.0
      %1879 = vmatpush1.msra.mxu0 0.0
      %1880 = vmatprep.subr.mxu0 0.0
      %1881 = vmatpush1.msra.mxu0 0.0
      %1882 = vmatprep.subr.mxu0 0.0
      %1883 = vmatpush1.msra.mxu0 0.0
      %1884 = vmatprep.subr.mxu0 0.0
      %1885 = vmatpush1.msra.mxu0 0.0
      %1886 = vmatprep.subr.mxu0 0.0
      %1887 = vmatpush1.msra.mxu0 0.0
      %1888 = vmatprep.subr.mxu0 0.0
      %1889 = vmatpush1.msra.mxu0 0.0
      %1890 = vmatprep.subr.mxu0 0.0
      %1891 = vmatpush1.msra.mxu0 0.0
      %1892 = vmatprep.subr.mxu0 0.0
      %1893 = vmatpush1.msra.mxu0 0.0
      %1894 = vmatprep.subr.mxu0 0.0
      %1895 = vmatpush1.msra.mxu0 0.0
      %1896 = vmatprep.subr.mxu0 0.0
      %1897 = vmatpush1.msra.mxu0 0.0
      %1898 = vmatprep.subr.mxu0 0.0
      %1899 = vmatpush1.msra.mxu0 0.0
      %1900 = vmatprep.subr.mxu0 0.0
      %1901 = vmatpush1.msra.mxu0 0.0
      %1902 = vmatprep.subr.mxu0 0.0
      %1903 = vmatpush1.msra.mxu0 0.0
      %1904 = vmatprep.subr.mxu0 0.0
      %1905 = vmatpush1.msra.mxu0 0.0
      %1906 = vmatprep.subr.mxu0 0.0
      %1907 = vmatpush1.msra.mxu0 0.0
      %1908 = vmatprep.subr.mxu0 0.0
      %1909 = vmatpush1.msra.mxu0 0.0
      %1910 = vmatprep.subr.mxu0 0.0
      %1911 = vmatpush1.msra.mxu0 0.0
      %1912 = vmatprep.subr.mxu0 0.0
      %1913 = vmatpush1.msra.mxu0 0.0
      %1914 = vmatprep.subr.mxu0 0.0
      %1915 = vmatpush1.msra.mxu0 0.0
      %1916 = vmatprep.subr.mxu0 0.0
      %1917 = vmatpush1.msra.mxu0 0.0
      %1918 = vmatprep.subr.mxu0 0.0
      %1919 = vmatpush1.msra.mxu0 0.0
      %1920 = vmatprep.subr.mxu0 0.0
      %1921 = vmatpush1.msra.mxu0 0.0
      %1922 = vmatprep.subr.mxu0 0.0
      %1923 = vmatpush1.msra.mxu0 0.0
      %1924 = vmatprep.subr.mxu0 0.0
      %1925 = vmatpush1.msra.mxu0 0.0
      %1926 = vmatprep.subr.mxu0 0.0
      %1927 = vmatpush1.msra.mxu0 0.0
      %1928 = vmatprep.subr.mxu0 0.0
      %1929 = vmatpush1.msra.mxu0 0.0
      %1930 = vmatprep.subr.mxu0 0.0
      %1931 = vmatpush1.msra.mxu0 0.0
      %1932 = vmatprep.subr.mxu0 0.0
      %1933 = vmatpush1.msra.mxu0 0.0
      %1934 = vmatprep.mubr.f32.mxu0 0.0
      %1935 = vmatmul.mubr.f32.gmra.mrb[0].mxu0 %v616
      %v1936 = vpop.f32.mrb[0].mxu0
      %v1937 = vadd.f32 0.0, %v1936
      %v1938 = vpop.f32.mrb[0].mxu0
      %1939 = vmatprep.mubr.f32.mxu0 0.0
      %1940 = vmatmul.mubr.f32.gmra.mrb[0].mxu0 %v618
      %v1941 = vpop.f32.mrb[0].mxu0
      %v1942 = vadd.f32 0.0, %v1941
      %v1943 = vpop.f32.mrb[0].mxu0
      %1944 = vmatprep.mubr.f32.mxu0 0.0
      %1945 = vmatmul.mubr.f32.gmra.mrb[0].mxu0 %v620
      %v1946 = vpop.f32.mrb[0].mxu0
      %v1947 = vadd.f32 0.0, %v1946
      %v1948 = vpop.f32.mrb[0].mxu0
      %1949 = vmatprep.mubr.f32.mxu0 0.0
      %1950 = vmatmul.mubr.f32.gmra.mrb[0].mxu0 %v622
      %v1951 = vpop.f32.mrb[0].mxu0
      %v1952 = vadd.f32 0.0, %v1951
      %v1953 = vpop.f32.mrb[0].mxu0
      %1954 = vmatprep.mubr.f32.mxu0 0.0
      %1955 = vmatmul.mubr.f32.gmra.mrb[0].mxu0 %v624
      %v1956 = vpop.f32.mrb[0].mxu0
      %v1957 = vadd.f32 0.0, %v1956
      %v1958 = vpop.f32.mrb[0].mxu0
      %1959 = vmatprep.mubr.f32.mxu0 0.0
      %1960 = vmatmul.mubr.f32.gmra.mrb[0].mxu0 %v626
      %v1961 = vpop.f32.mrb[0].mxu0
      %v1962 = vadd.f32 0.0, %v1961
      %v1963 = vpop.f32.mrb[0].mxu0
      %1964 = vmatprep.mubr.f32.mxu0 0.0
      %1965 = vmatmul.mubr.f32.gmra.mrb[0].mxu0 %v628
      %v1966 = vpop.f32.mrb[0].mxu0
      %v1967 = vadd.f32 0.0, %v1966
      %v1968 = vpop.f32.mrb[0].mxu0
      %1969 = vmatprep.mubr.f32.mxu0 0.0
      %1970 = vmatmul.mubr.f32.gmra.mrb[0].mxu0 %v630
      %v1971 = vpop.f32.mrb[0].mxu0
      %v1972 = vadd.f32 0.0, %v1971
      %v1973 = vpop.f32.mrb[0].mxu0
      %1974 = vmatprep.mubr.f32.mxu0 0.0
      %1975 = vmatmul.mubr.f32.gmra.mrb[0].mxu0 %v632
      %v1976 = vpop.f32.mrb[0].mxu0
      %v1977 = vadd.f32 0.0, %v1976
      %v1978 = vpop.f32.mrb[0].mxu0
      %1979 = vmatprep.mubr.f32.mxu0 0.0
      %1980 = vmatmul.mubr.f32.gmra.mrb[0].mxu0 %v634
      %v1981 = vpop.f32.mrb[0].mxu0
      %v1982 = vadd.f32 0.0, %v1981
      %v1983 = vpop.f32.mrb[0].mxu0
      %1984 = vmatprep.mubr.f32.mxu0 0.0
      %1985 = vmatmul.mubr.f32.gmra.mrb[0].mxu0 %v636
      %v1986 = vpop.f32.mrb[0].mxu0
      %v1987 = vadd.f32 0.0, %v1986
      %v1988 = vpop.f32.mrb[0].mxu0
      %1989 = vmatprep.mubr.f32.mxu0 0.0
      %1990 = vmatmul.mubr.f32.gmra.mrb[0].mxu0 %v638
      %v1991 = vpop.f32.mrb[0].mxu0
      %v1992 = vadd.f32 0.0, %v1991
      %v1993 = vpop.f32.mrb[0].mxu0
      %1994 = vmatprep.mubr.f32.mxu0 0.0
      %1995 = vmatmul.mubr.f32.gmra.mrb[0].mxu0 %v640
      %v1996 = vpop.f32.mrb[0].mxu0
      %v1997 = vadd.f32 0.0, %v1996
      %v1998 = vpop.f32.mrb[0].mxu0
      %1999 = vmatprep.mubr.f32.mxu0 0.0
      %2000 = vmatmul.mubr.f32.gmra.mrb[0].mxu0 %v642
      %v2001 = vpop.f32.mrb[0].mxu0
      %v2002 = vadd.f32 0.0, %v2001
      %v2003 = vpop.f32.mrb[0].mxu0
      %2004 = vmatprep.mubr.f32.mxu0 0.0
      %2005 = vmatmul.mubr.f32.gmra.mrb[0].mxu0 %v644
      %v2006 = vpop.f32.mrb[0].mxu0
      %v2007 = vadd.f32 0.0, %v2006
      %v2008 = vpop.f32.mrb[0].mxu0
      %2009 = vmatprep.mubr.f32.mxu0 0.0
      %2010 = vmatmul.mubr.f32.gmra.mrb[0].mxu0 %v646
      %v2011 = vpop.f32.mrb[0].mxu0
      %v2012 = vadd.f32 0.0, %v2011
      %v2013 = vpop.f32.mrb[0].mxu0
      %2014 = vmatprep.mubr.f32.mxu0 0.0
      %2015 = vmatmul.mubr.f32.gmra.mrb[0].mxu0 %v648
      %v2016 = vpop.f32.mrb[0].mxu0
      %v2017 = vadd.f32 0.0, %v2016
      %v2018 = vpop.f32.mrb[0].mxu0
      %2019 = vmatprep.mubr.f32.mxu0 0.0
      %2020 = vmatmul.mubr.f32.gmra.mrb[0].mxu0 %v650
      %v2021 = vpop.f32.mrb[0].mxu0
      %v2022 = vadd.f32 0.0, %v2021
      %v2023 = vpop.f32.mrb[0].mxu0
      %2024 = vmatprep.mubr.f32.mxu0 0.0
      %2025 = vmatmul.mubr.f32.gmra.mrb[0].mxu0 %v652
      %v2026 = vpop.f32.mrb[0].mxu0
      %v2027 = vadd.f32 0.0, %v2026
      %v2028 = vpop.f32.mrb[0].mxu0
      %2029 = vmatprep.mubr.f32.mxu0 0.0
      %2030 = vmatmul.mubr.f32.gmra.mrb[0].mxu0 %v654
      %v2031 = vpop.f32.mrb[0].mxu0
      %v2032 = vadd.f32 0.0, %v2031
      %v2033 = vpop.f32.mrb[0].mxu0
      %2034 = vmatprep.mubr.f32.mxu0 0.0
      %2035 = vmatmul.mubr.f32.gmra.mrb[0].mxu0 %v656
      %v2036 = vpop.f32.mrb[0].mxu0
      %v2037 = vadd.f32 0.0, %v2036
      %v2038 = vpop.f32.mrb[0].mxu0
      %2039 = vmatprep.mubr.f32.mxu0 0.0
      %2040 = vmatmul.mubr.f32.gmra.mrb[0].mxu0 %v658
      %v2041 = vpop.f32.mrb[0].mxu0
      %v2042 = vadd.f32 0.0, %v2041
      %v2043 = vpop.f32.mrb[0].mxu0
      %2044 = vmatprep.mubr.f32.mxu0 0.0
      %2045 = vmatmul.mubr.f32.gmra.mrb[0].mxu0 %v660
      %v2046 = vpop.f32.mrb[0].mxu0
      %v2047 = vadd.f32 0.0, %v2046
      %v2048 = vpop.f32.mrb[0].mxu0
      %2049 = vmatprep.mubr.f32.mxu0 0.0
      %2050 = vmatmul.mubr.f32.gmra.mrb[0].mxu0 %v662
      %v2051 = vpop.f32.mrb[0].mxu0
      %v2052 = vadd.f32 0.0, %v2051
      %v2053 = vpop.f32.mrb[0].mxu0
      %2054 = vmatprep.mubr.f32.mxu0 0.0
      %2055 = vmatmul.mubr.f32.gmra.mrb[0].mxu0 %v664
      %v2056 = vpop.f32.mrb[0].mxu0
      %v2057 = vadd.f32 0.0, %v2056
      %v2058 = vpop.f32.mrb[0].mxu0
      %2059 = vmatprep.mubr.f32.mxu0 0.0
      %2060 = vmatmul.mubr.f32.gmra.mrb[0].mxu0 %v666
      %v2061 = vpop.f32.mrb[0].mxu0
      %v2062 = vadd.f32 0.0, %v2061
      %v2063 = vpop.f32.mrb[0].mxu0
      %2064 = vmatprep.mubr.f32.mxu0 0.0
      %2065 = vmatmul.mubr.f32.gmra.mrb[0].mxu0 %v668
      %v2066 = vpop.f32.mrb[0].mxu0
      %v2067 = vadd.f32 0.0, %v2066
      %v2068 = vpop.f32.mrb[0].mxu0
      %2069 = vmatprep.mubr.f32.mxu0 0.0
      %2070 = vmatmul.mubr.f32.gmra.mrb[0].mxu0 %v670
      %v2071 = vpop.f32.mrb[0].mxu0
      %v2072 = vadd.f32 0.0, %v2071
      %v2073 = vpop.f32.mrb[0].mxu0
      %2074 = vmatprep.mubr.f32.mxu0 0.0
      %2075 = vmatmul.mubr.f32.gmra.mrb[0].mxu0 %v672
      %v2076 = vpop.f32.mrb[0].mxu0
      %v2077 = vadd.f32 0.0, %v2076
      %v2078 = vpop.f32.mrb[0].mxu0
      %2079 = vmatprep.mubr.f32.mxu0 0.0
      %2080 = vmatmul.mubr.f32.gmra.mrb[0].mxu0 %v674
      %v2081 = vpop.f32.mrb[0].mxu0
      %v2082 = vadd.f32 0.0, %v2081
      %v2083 = vpop.f32.mrb[0].mxu0
      %2084 = vmatprep.mubr.f32.mxu0 0.0
      %2085 = vmatmul.mubr.f32.gmra.mrb[0].mxu0 %v1863
      %v2086 = vpop.f32.mrb[0].mxu0
      %v2087 = vadd.f32 0.0, %v2086
      %v2088 = vpop.f32.mrb[0].mxu0
      %2089 = vmatprep.mubr.f32.mxu0 0.0
      %2090 = vmatmul.mubr.f32.gmra.mrb[0].mxu0 %v1865
      %v2091 = vpop.f32.mrb[0].mxu0
      %v2092 = vadd.f32 0.0, %v2091
      %v2093 = vpop.f32.mrb[0].mxu0
      %2094 = vdwg.mxu0
      %v2095 = vadd.f32 %v1829, %v1937
      %v2096 = vadd.f32 %v1830, %v1942
      %v2097 = vadd.f32 %v1831, %v1947
      %v2098 = vadd.f32 %v1832, %v1952
      %v2099 = vadd.f32 %v1833, %v1957
      %v2100 = vadd.f32 %v1834, %v1962
      %v2101 = vadd.f32 %v1835, %v1967
      %v2102 = vadd.f32 %v1836, %v1972
      %v2103 = vadd.f32 %v1837, %v1977
      %v2104 = vadd.f32 %v1838, %v1982
      %v2105 = vadd.f32 %v1839, %v1987
      %v2106 = vadd.f32 %v1840, %v1992
      %v2107 = vadd.f32 %v1841, %v1997
      %v2108 = vadd.f32 %v1842, %v2002
      %v2109 = vadd.f32 %v1843, %v2007
      %v2110 = vadd.f32 %v1844, %v2012
      %v2111 = vadd.f32 %v1845, %v2017
      %v2112 = vadd.f32 %v1846, %v2022
      %v2113 = vadd.f32 %v1847, %v2027
      %v2114 = vadd.f32 %v1848, %v2032
      %v2115 = vadd.f32 %v1849, %v2037
      %v2116 = vadd.f32 %v1850, %v2042
      %v2117 = vadd.f32 %v1851, %v2047
      %v2118 = vadd.f32 %v1852, %v2052
      %v2119 = vadd.f32 %v1853, %v2057
      %v2120 = vadd.f32 %v1854, %v2062
      %v2121 = vadd.f32 %v1855, %v2067
      %v2122 = vadd.f32 %v1856, %v2072
      %v2123 = vadd.f32 %v1857, %v2077
      %v2124 = vadd.f32 %v1858, %v2082
      %v2125 = vadd.f32 %v1859, %v2087
      %v2126 = vadd.f32 %v1860, %v2092
      %v2127 = vrot.slane %v502, 1
      %v2128 = vrot.slane %v503, 1
      %v2129 = vsel %vm1197, %v2127, %v2128
      %v2130 = vsel %vm1197, %v2128, %v1201
      %s2131 = scalar_lea.vmem %s3, 20
      %v2132 = vld [vmem:[%s2131] sm:$0xf]
      %v2133 = vsel %vm611, %v2129, 0
      %v2135 = vsel %vm611, %v2130, 0
      %v2138 = vsel %vm676, %v2132, 0
      %2140 = vmatprep.subr.mxu0 0.0
      %2141 = vmatpush1.msra.mxu0 %v2138
      %2142 = vmatprep.subr.mxu0 0.0
      %2143 = vmatpush1.msra.mxu0 0.0
      %2144 = vmatprep.subr.mxu0 0.0
      %2145 = vmatpush1.msra.mxu0 0.0
      %2146 = vmatprep.subr.mxu0 0.0
      %2147 = vmatpush1.msra.mxu0 0.0
      %2148 = vmatprep.subr.mxu0 0.0
      %2149 = vmatpush1.msra.mxu0 0.0
      %2150 = vmatprep.subr.mxu0 0.0
      %2151 = vmatpush1.msra.mxu0 0.0
      %2152 = vmatprep.subr.mxu0 0.0
      %2153 = vmatpush1.msra.mxu0 0.0
      %2154 = vmatprep.subr.mxu0 0.0
      %2155 = vmatpush1.msra.mxu0 0.0
      %2156 = vmatprep.subr.mxu0 0.0
      %2157 = vmatpush1.msra.mxu0 0.0
      %2158 = vmatprep.subr.mxu0 0.0
      %2159 = vmatpush1.msra.mxu0 0.0
      %2160 = vmatprep.subr.mxu0 0.0
      %2161 = vmatpush1.msra.mxu0 0.0
      %2162 = vmatprep.subr.mxu0 0.0
      %2163 = vmatpush1.msra.mxu0 0.0
      %2164 = vmatprep.subr.mxu0 0.0
      %2165 = vmatpush1.msra.mxu0 0.0
      %2166 = vmatprep.subr.mxu0 0.0
      %2167 = vmatpush1.msra.mxu0 0.0
      %2168 = vmatprep.subr.mxu0 0.0
      %2169 = vmatpush1.msra.mxu0 0.0
      %2170 = vmatprep.subr.mxu0 0.0
      %2171 = vmatpush1.msra.mxu0 0.0
      %2172 = vmatprep.subr.mxu0 0.0
      %2173 = vmatpush1.msra.mxu0 0.0
      %2174 = vmatprep.subr.mxu0 0.0
      %2175 = vmatpush1.msra.mxu0 0.0
      %2176 = vmatprep.subr.mxu0 0.0
      %2177 = vmatpush1.msra.mxu0 0.0
      %2178 = vmatprep.subr.mxu0 0.0
      %2179 = vmatpush1.msra.mxu0 0.0
      %2180 = vmatprep.subr.mxu0 0.0
      %2181 = vmatpush1.msra.mxu0 0.0
      %2182 = vmatprep.subr.mxu0 0.0
      %2183 = vmatpush1.msra.mxu0 0.0
      %2184 = vmatprep.subr.mxu0 0.0
      %2185 = vmatpush1.msra.mxu0 0.0
      %2186 = vmatprep.subr.mxu0 0.0
      %2187 = vmatpush1.msra.mxu0 0.0
      %2188 = vmatprep.subr.mxu0 0.0
      %2189 = vmatpush1.msra.mxu0 0.0
      %2190 = vmatprep.subr.mxu0 0.0
      %2191 = vmatpush1.msra.mxu0 0.0
      %2192 = vmatprep.subr.mxu0 0.0
      %2193 = vmatpush1.msra.mxu0 0.0
      %2194 = vmatprep.subr.mxu0 0.0
      %2195 = vmatpush1.msra.mxu0 0.0
      %2196 = vmatprep.subr.mxu0 0.0
      %2197 = vmatpush1.msra.mxu0 0.0
      %2198 = vmatprep.subr.mxu0 0.0
      %2199 = vmatpush1.msra.mxu0 0.0
      %2200 = vmatprep.subr.mxu0 0.0
      %2201 = vmatpush1.msra.mxu0 0.0
      %2202 = vmatprep.subr.mxu0 0.0
      %2203 = vmatpush1.msra.mxu0 0.0
      %2204 = vmatprep.mubr.f32.mxu0 0.0
      %2205 = vmatmul.mubr.f32.gmra.mrb[0].mxu0 %v1269
      %v2206 = vpop.f32.mrb[0].mxu0
      %v2207 = vadd.f32 0.0, %v2206
      %v2208 = vpop.f32.mrb[0].mxu0
      %2209 = vmatprep.mubr.f32.mxu0 0.0
      %2210 = vmatmul.mubr.f32.gmra.mrb[0].mxu0 %v1271
      %v2211 = vpop.f32.mrb[0].mxu0
      %v2212 = vadd.f32 0.0, %v2211
      %v2213 = vpop.f32.mrb[0].mxu0
      %2214 = vmatprep.mubr.f32.mxu0 0.0
      %2215 = vmatmul.mubr.f32.gmra.mrb[0].mxu0 %v1273
      %v2216 = vpop.f32.mrb[0].mxu0
      %v2217 = vadd.f32 0.0, %v2216
      %v2218 = vpop.f32.mrb[0].mxu0
      %2219 = vmatprep.mubr.f32.mxu0 0.0
      %2220 = vmatmul.mubr.f32.gmra.mrb[0].mxu0 %v1275
      %v2221 = vpop.f32.mrb[0].mxu0
      %v2222 = vadd.f32 0.0, %v2221
      %v2223 = vpop.f32.mrb[0].mxu0
      %2224 = vmatprep.mubr.f32.mxu0 0.0
      %2225 = vmatmul.mubr.f32.gmra.mrb[0].mxu0 %v1277
      %v2226 = vpop.f32.mrb[0].mxu0
      %v2227 = vadd.f32 0.0, %v2226
      %v2228 = vpop.f32.mrb[0].mxu0
      %2229 = vmatprep.mubr.f32.mxu0 0.0
      %2230 = vmatmul.mubr.f32.gmra.mrb[0].mxu0 %v1279
      %v2231 = vpop.f32.mrb[0].mxu0
      %v2232 = vadd.f32 0.0, %v2231
      %v2233 = vpop.f32.mrb[0].mxu0
      %2234 = vmatprep.mubr.f32.mxu0 0.0
      %2235 = vmatmul.mubr.f32.gmra.mrb[0].mxu0 %v1281
      %v2236 = vpop.f32.mrb[0].mxu0
      %v2237 = vadd.f32 0.0, %v2236
      %v2238 = vpop.f32.mrb[0].mxu0
      %2239 = vmatprep.mubr.f32.mxu0 0.0
      %2240 = vmatmul.mubr.f32.gmra.mrb[0].mxu0 %v1283
      %v2241 = vpop.f32.mrb[0].mxu0
      %v2242 = vadd.f32 0.0, %v2241
      %v2243 = vpop.f32.mrb[0].mxu0
      %2244 = vmatprep.mubr.f32.mxu0 0.0
      %2245 = vmatmul.mubr.f32.gmra.mrb[0].mxu0 %v1285
      %v2246 = vpop.f32.mrb[0].mxu0
      %v2247 = vadd.f32 0.0, %v2246
      %v2248 = vpop.f32.mrb[0].mxu0
      %2249 = vmatprep.mubr.f32.mxu0 0.0
      %2250 = vmatmul.mubr.f32.gmra.mrb[0].mxu0 %v1287
      %v2251 = vpop.f32.mrb[0].mxu0
      %v2252 = vadd.f32 0.0, %v2251
      %v2253 = vpop.f32.mrb[0].mxu0
      %2254 = vmatprep.mubr.f32.mxu0 0.0
      %2255 = vmatmul.mubr.f32.gmra.mrb[0].mxu0 %v1289
      %v2256 = vpop.f32.mrb[0].mxu0
      %v2257 = vadd.f32 0.0, %v2256
      %v2258 = vpop.f32.mrb[0].mxu0
      %2259 = vmatprep.mubr.f32.mxu0 0.0
      %2260 = vmatmul.mubr.f32.gmra.mrb[0].mxu0 %v1291
      %v2261 = vpop.f32.mrb[0].mxu0
      %v2262 = vadd.f32 0.0, %v2261
      %v2263 = vpop.f32.mrb[0].mxu0
      %2264 = vmatprep.mubr.f32.mxu0 0.0
      %2265 = vmatmul.mubr.f32.gmra.mrb[0].mxu0 %v1293
      %v2266 = vpop.f32.mrb[0].mxu0
      %v2267 = vadd.f32 0.0, %v2266
      %v2268 = vpop.f32.mrb[0].mxu0
      %2269 = vmatprep.mubr.f32.mxu0 0.0
      %2270 = vmatmul.mubr.f32.gmra.mrb[0].mxu0 %v1295
      %v2271 = vpop.f32.mrb[0].mxu0
      %v2272 = vadd.f32 0.0, %v2271
      %v2273 = vpop.f32.mrb[0].mxu0
      %2274 = vmatprep.mubr.f32.mxu0 0.0
      %2275 = vmatmul.mubr.f32.gmra.mrb[0].mxu0 %v1297
      %v2276 = vpop.f32.mrb[0].mxu0
      %v2277 = vadd.f32 0.0, %v2276
      %v2278 = vpop.f32.mrb[0].mxu0
      %2279 = vmatprep.mubr.f32.mxu0 0.0
      %2280 = vmatmul.mubr.f32.gmra.mrb[0].mxu0 %v1299
      %v2281 = vpop.f32.mrb[0].mxu0
      %v2282 = vadd.f32 0.0, %v2281
      %v2283 = vpop.f32.mrb[0].mxu0
      %2284 = vmatprep.mubr.f32.mxu0 0.0
      %2285 = vmatmul.mubr.f32.gmra.mrb[0].mxu0 %v1301
      %v2286 = vpop.f32.mrb[0].mxu0
      %v2287 = vadd.f32 0.0, %v2286
      %v2288 = vpop.f32.mrb[0].mxu0
      %2289 = vmatprep.mubr.f32.mxu0 0.0
      %2290 = vmatmul.mubr.f32.gmra.mrb[0].mxu0 %v1303
      %v2291 = vpop.f32.mrb[0].mxu0
      %v2292 = vadd.f32 0.0, %v2291
      %v2293 = vpop.f32.mrb[0].mxu0
      %2294 = vmatprep.mubr.f32.mxu0 0.0
      %2295 = vmatmul.mubr.f32.gmra.mrb[0].mxu0 %v1305
      %v2296 = vpop.f32.mrb[0].mxu0
      %v2297 = vadd.f32 0.0, %v2296
      %v2298 = vpop.f32.mrb[0].mxu0
      %2299 = vmatprep.mubr.f32.mxu0 0.0
      %2300 = vmatmul.mubr.f32.gmra.mrb[0].mxu0 %v1307
      %v2301 = vpop.f32.mrb[0].mxu0
      %v2302 = vadd.f32 0.0, %v2301
      %v2303 = vpop.f32.mrb[0].mxu0
      %2304 = vmatprep.mubr.f32.mxu0 0.0
      %2305 = vmatmul.mubr.f32.gmra.mrb[0].mxu0 %v1309
      %v2306 = vpop.f32.mrb[0].mxu0
      %v2307 = vadd.f32 0.0, %v2306
      %v2308 = vpop.f32.mrb[0].mxu0
      %2309 = vmatprep.mubr.f32.mxu0 0.0
      %2310 = vmatmul.mubr.f32.gmra.mrb[0].mxu0 %v1311
      %v2311 = vpop.f32.mrb[0].mxu0
      %v2312 = vadd.f32 0.0, %v2311
      %v2313 = vpop.f32.mrb[0].mxu0
      %2314 = vmatprep.mubr.f32.mxu0 0.0
      %2315 = vmatmul.mubr.f32.gmra.mrb[0].mxu0 %v1313
      %v2316 = vpop.f32.mrb[0].mxu0
      %v2317 = vadd.f32 0.0, %v2316
      %v2318 = vpop.f32.mrb[0].mxu0
      %2319 = vmatprep.mubr.f32.mxu0 0.0
      %2320 = vmatmul.mubr.f32.gmra.mrb[0].mxu0 %v1315
      %v2321 = vpop.f32.mrb[0].mxu0
      %v2322 = vadd.f32 0.0, %v2321
      %v2323 = vpop.f32.mrb[0].mxu0
      %2324 = vmatprep.mubr.f32.mxu0 0.0
      %2325 = vmatmul.mubr.f32.gmra.mrb[0].mxu0 %v1317
      %v2326 = vpop.f32.mrb[0].mxu0
      %v2327 = vadd.f32 0.0, %v2326
      %v2328 = vpop.f32.mrb[0].mxu0
      %2329 = vmatprep.mubr.f32.mxu0 0.0
      %2330 = vmatmul.mubr.f32.gmra.mrb[0].mxu0 %v1319
      %v2331 = vpop.f32.mrb[0].mxu0
      %v2332 = vadd.f32 0.0, %v2331
      %v2333 = vpop.f32.mrb[0].mxu0
      %2334 = vmatprep.mubr.f32.mxu0 0.0
      %2335 = vmatmul.mubr.f32.gmra.mrb[0].mxu0 %v1321
      %v2336 = vpop.f32.mrb[0].mxu0
      %v2337 = vadd.f32 0.0, %v2336
      %v2338 = vpop.f32.mrb[0].mxu0
      %2339 = vmatprep.mubr.f32.mxu0 0.0
      %2340 = vmatmul.mubr.f32.gmra.mrb[0].mxu0 %v1323
      %v2341 = vpop.f32.mrb[0].mxu0
      %v2342 = vadd.f32 0.0, %v2341
      %v2343 = vpop.f32.mrb[0].mxu0
      %2344 = vmatprep.mubr.f32.mxu0 0.0
      %2345 = vmatmul.mubr.f32.gmra.mrb[0].mxu0 %v1325
      %v2346 = vpop.f32.mrb[0].mxu0
      %v2347 = vadd.f32 0.0, %v2346
      %v2348 = vpop.f32.mrb[0].mxu0
      %2349 = vmatprep.mubr.f32.mxu0 0.0
      %2350 = vmatmul.mubr.f32.gmra.mrb[0].mxu0 %v1327
      %v2351 = vpop.f32.mrb[0].mxu0
      %v2352 = vadd.f32 0.0, %v2351
      %v2353 = vpop.f32.mrb[0].mxu0
      %2354 = vmatprep.mubr.f32.mxu0 0.0
      %2355 = vmatmul.mubr.f32.gmra.mrb[0].mxu0 %v2133
      %v2356 = vpop.f32.mrb[0].mxu0
      %v2357 = vadd.f32 0.0, %v2356
      %v2358 = vpop.f32.mrb[0].mxu0
      %2359 = vmatprep.mubr.f32.mxu0 0.0
      %2360 = vmatmul.mubr.f32.gmra.mrb[0].mxu0 %v2135
      %v2361 = vpop.f32.mrb[0].mxu0
      %v2362 = vadd.f32 0.0, %v2361
      %v2363 = vpop.f32.mrb[0].mxu0
      %2364 = vdwg.mxu0
      %v2365 = vadd.f32 %v2095, %v2207
      %v2366 = vadd.f32 %v2096, %v2212
      %v2367 = vadd.f32 %v2097, %v2217
      %v2368 = vadd.f32 %v2098, %v2222
      %v2369 = vadd.f32 %v2099, %v2227
      %v2370 = vadd.f32 %v2100, %v2232
      %v2371 = vadd.f32 %v2101, %v2237
      %v2372 = vadd.f32 %v2102, %v2242
      %v2373 = vadd.f32 %v2103, %v2247
      %v2374 = vadd.f32 %v2104, %v2252
      %v2375 = vadd.f32 %v2105, %v2257
      %v2376 = vadd.f32 %v2106, %v2262
      %v2377 = vadd.f32 %v2107, %v2267
      %v2378 = vadd.f32 %v2108, %v2272
      %v2379 = vadd.f32 %v2109, %v2277
      %v2380 = vadd.f32 %v2110, %v2282
      %v2381 = vadd.f32 %v2111, %v2287
      %v2382 = vadd.f32 %v2112, %v2292
      %v2383 = vadd.f32 %v2113, %v2297
      %v2384 = vadd.f32 %v2114, %v2302
      %v2385 = vadd.f32 %v2115, %v2307
      %v2386 = vadd.f32 %v2116, %v2312
      %v2387 = vadd.f32 %v2117, %v2317
      %v2388 = vadd.f32 %v2118, %v2322
      %v2389 = vadd.f32 %v2119, %v2327
      %v2390 = vadd.f32 %v2120, %v2332
      %v2391 = vadd.f32 %v2121, %v2337
      %v2392 = vadd.f32 %v2122, %v2342
      %v2393 = vadd.f32 %v2123, %v2347
      %v2394 = vadd.f32 %v2124, %v2352
      %v2395 = vadd.f32 %v2125, %v2357
      %v2396 = vadd.f32 %v2126, %v2362
      %v2399 = vrot.slane %v507, 7
      %v2400 = vsel %vm542, %v543, %v2399
      %v2401 = vrot.slane %v508, 7
      %v2402 = vsel %vm542, %v2399, %v2401
      %s2403 = scalar_lea.vmem %s3, 24
      %v2404 = vld [vmem:[%s2403] sm:$0xf]
      %v2405 = vsel %vm611, %v2400, 0
      %v2407 = vsel %vm611, %v2402, 0
      %v2410 = vsel %vm676, %v2404, 0
      %2412 = vmatprep.subr.mxu0 0.0
      %2413 = vmatpush1.msra.mxu0 %v2410
      %2414 = vmatprep.subr.mxu0 0.0
      %2415 = vmatpush1.msra.mxu0 0.0
      %2416 = vmatprep.subr.mxu0 0.0
      %2417 = vmatpush1.msra.mxu0 0.0
      %2418 = vmatprep.subr.mxu0 0.0
      %2419 = vmatpush1.msra.mxu0 0.0
      %2420 = vmatprep.subr.mxu0 0.0
      %2421 = vmatpush1.msra.mxu0 0.0
      %2422 = vmatprep.subr.mxu0 0.0
      %2423 = vmatpush1.msra.mxu0 0.0
      %2424 = vmatprep.subr.mxu0 0.0
      %2425 = vmatpush1.msra.mxu0 0.0
      %2426 = vmatprep.subr.mxu0 0.0
      %2427 = vmatpush1.msra.mxu0 0.0
      %2428 = vmatprep.subr.mxu0 0.0
      %2429 = vmatpush1.msra.mxu0 0.0
      %2430 = vmatprep.subr.mxu0 0.0
      %2431 = vmatpush1.msra.mxu0 0.0
      %2432 = vmatprep.subr.mxu0 0.0
      %2433 = vmatpush1.msra.mxu0 0.0
      %2434 = vmatprep.subr.mxu0 0.0
      %2435 = vmatpush1.msra.mxu0 0.0
      %2436 = vmatprep.subr.mxu0 0.0
      %2437 = vmatpush1.msra.mxu0 0.0
      %2438 = vmatprep.subr.mxu0 0.0
      %2439 = vmatpush1.msra.mxu0 0.0
      %2440 = vmatprep.subr.mxu0 0.0
      %2441 = vmatpush1.msra.mxu0 0.0
      %2442 = vmatprep.subr.mxu0 0.0
      %2443 = vmatpush1.msra.mxu0 0.0
      %2444 = vmatprep.subr.mxu0 0.0
      %2445 = vmatpush1.msra.mxu0 0.0
      %2446 = vmatprep.subr.mxu0 0.0
      %2447 = vmatpush1.msra.mxu0 0.0
      %2448 = vmatprep.subr.mxu0 0.0
      %2449 = vmatpush1.msra.mxu0 0.0
      %2450 = vmatprep.subr.mxu0 0.0
      %2451 = vmatpush1.msra.mxu0 0.0
      %2452 = vmatprep.subr.mxu0 0.0
      %2453 = vmatpush1.msra.mxu0 0.0
      %2454 = vmatprep.subr.mxu0 0.0
      %2455 = vmatpush1.msra.mxu0 0.0
      %2456 = vmatprep.subr.mxu0 0.0
      %2457 = vmatpush1.msra.mxu0 0.0
      %2458 = vmatprep.subr.mxu0 0.0
      %2459 = vmatpush1.msra.mxu0 0.0
      %2460 = vmatprep.subr.mxu0 0.0
      %2461 = vmatpush1.msra.mxu0 0.0
      %2462 = vmatprep.subr.mxu0 0.0
      %2463 = vmatpush1.msra.mxu0 0.0
      %2464 = vmatprep.subr.mxu0 0.0
      %2465 = vmatpush1.msra.mxu0 0.0
      %2466 = vmatprep.subr.mxu0 0.0
      %2467 = vmatpush1.msra.mxu0 0.0
      %2468 = vmatprep.subr.mxu0 0.0
      %2469 = vmatpush1.msra.mxu0 0.0
      %2470 = vmatprep.subr.mxu0 0.0
      %2471 = vmatpush1.msra.mxu0 0.0
      %2472 = vmatprep.subr.mxu0 0.0
      %2473 = vmatpush1.msra.mxu0 0.0
      %2474 = vmatprep.subr.mxu0 0.0
      %2475 = vmatpush1.msra.mxu0 0.0
      %2476 = vmatprep.mubr.f32.mxu0 0.0
      %2477 = vmatmul.mubr.f32.gmra.mrb[0].mxu0 %v913
      %v2478 = vpop.f32.mrb[0].mxu0
      %v2479 = vadd.f32 0.0, %v2478
      %v2480 = vpop.f32.mrb[0].mxu0
      %2481 = vmatprep.mubr.f32.mxu0 0.0
      %2482 = vmatmul.mubr.f32.gmra.mrb[0].mxu0 %v915
      %v2483 = vpop.f32.mrb[0].mxu0
      %v2484 = vadd.f32 0.0, %v2483
      %v2485 = vpop.f32.mrb[0].mxu0
      %2486 = vmatprep.mubr.f32.mxu0 0.0
      %2487 = vmatmul.mubr.f32.gmra.mrb[0].mxu0 %v917
      %v2488 = vpop.f32.mrb[0].mxu0
      %v2489 = vadd.f32 0.0, %v2488
      %v2490 = vpop.f32.mrb[0].mxu0
      %2491 = vmatprep.mubr.f32.mxu0 0.0
      %2492 = vmatmul.mubr.f32.gmra.mrb[0].mxu0 %v919
      %v2493 = vpop.f32.mrb[0].mxu0
      %v2494 = vadd.f32 0.0, %v2493
      %v2495 = vpop.f32.mrb[0].mxu0
      %2496 = vmatprep.mubr.f32.mxu0 0.0
      %2497 = vmatmul.mubr.f32.gmra.mrb[0].mxu0 %v921
      %v2498 = vpop.f32.mrb[0].mxu0
      %v2499 = vadd.f32 0.0, %v2498
      %v2500 = vpop.f32.mrb[0].mxu0
      %2501 = vmatprep.mubr.f32.mxu0 0.0
      %2502 = vmatmul.mubr.f32.gmra.mrb[0].mxu0 %v923
      %v2503 = vpop.f32.mrb[0].mxu0
      %v2504 = vadd.f32 0.0, %v2503
      %v2505 = vpop.f32.mrb[0].mxu0
      %2506 = vmatprep.mubr.f32.mxu0 0.0
      %2507 = vmatmul.mubr.f32.gmra.mrb[0].mxu0 %v925
      %v2508 = vpop.f32.mrb[0].mxu0
      %v2509 = vadd.f32 0.0, %v2508
      %v2510 = vpop.f32.mrb[0].mxu0
      %2511 = vmatprep.mubr.f32.mxu0 0.0
      %2512 = vmatmul.mubr.f32.gmra.mrb[0].mxu0 %v927
      %v2513 = vpop.f32.mrb[0].mxu0
      %v2514 = vadd.f32 0.0, %v2513
      %v2515 = vpop.f32.mrb[0].mxu0
      %2516 = vmatprep.mubr.f32.mxu0 0.0
      %2517 = vmatmul.mubr.f32.gmra.mrb[0].mxu0 %v929
      %v2518 = vpop.f32.mrb[0].mxu0
      %v2519 = vadd.f32 0.0, %v2518
      %v2520 = vpop.f32.mrb[0].mxu0
      %2521 = vmatprep.mubr.f32.mxu0 0.0
      %2522 = vmatmul.mubr.f32.gmra.mrb[0].mxu0 %v931
      %v2523 = vpop.f32.mrb[0].mxu0
      %v2524 = vadd.f32 0.0, %v2523
      %v2525 = vpop.f32.mrb[0].mxu0
      %2526 = vmatprep.mubr.f32.mxu0 0.0
      %2527 = vmatmul.mubr.f32.gmra.mrb[0].mxu0 %v933
      %v2528 = vpop.f32.mrb[0].mxu0
      %v2529 = vadd.f32 0.0, %v2528
      %v2530 = vpop.f32.mrb[0].mxu0
      %2531 = vmatprep.mubr.f32.mxu0 0.0
      %2532 = vmatmul.mubr.f32.gmra.mrb[0].mxu0 %v935
      %v2533 = vpop.f32.mrb[0].mxu0
      %v2534 = vadd.f32 0.0, %v2533
      %v2535 = vpop.f32.mrb[0].mxu0
      %2536 = vmatprep.mubr.f32.mxu0 0.0
      %2537 = vmatmul.mubr.f32.gmra.mrb[0].mxu0 %v937
      %v2538 = vpop.f32.mrb[0].mxu0
      %v2539 = vadd.f32 0.0, %v2538
      %v2540 = vpop.f32.mrb[0].mxu0
      %2541 = vmatprep.mubr.f32.mxu0 0.0
      %2542 = vmatmul.mubr.f32.gmra.mrb[0].mxu0 %v939
      %v2543 = vpop.f32.mrb[0].mxu0
      %v2544 = vadd.f32 0.0, %v2543
      %v2545 = vpop.f32.mrb[0].mxu0
      %2546 = vmatprep.mubr.f32.mxu0 0.0
      %2547 = vmatmul.mubr.f32.gmra.mrb[0].mxu0 %v941
      %v2548 = vpop.f32.mrb[0].mxu0
      %v2549 = vadd.f32 0.0, %v2548
      %v2550 = vpop.f32.mrb[0].mxu0
      %2551 = vmatprep.mubr.f32.mxu0 0.0
      %2552 = vmatmul.mubr.f32.gmra.mrb[0].mxu0 %v943
      %v2553 = vpop.f32.mrb[0].mxu0
      %v2554 = vadd.f32 0.0, %v2553
      %v2555 = vpop.f32.mrb[0].mxu0
      %2556 = vmatprep.mubr.f32.mxu0 0.0
      %2557 = vmatmul.mubr.f32.gmra.mrb[0].mxu0 %v945
      %v2558 = vpop.f32.mrb[0].mxu0
      %v2559 = vadd.f32 0.0, %v2558
      %v2560 = vpop.f32.mrb[0].mxu0
      %2561 = vmatprep.mubr.f32.mxu0 0.0
      %2562 = vmatmul.mubr.f32.gmra.mrb[0].mxu0 %v947
      %v2563 = vpop.f32.mrb[0].mxu0
      %v2564 = vadd.f32 0.0, %v2563
      %v2565 = vpop.f32.mrb[0].mxu0
      %2566 = vmatprep.mubr.f32.mxu0 0.0
      %2567 = vmatmul.mubr.f32.gmra.mrb[0].mxu0 %v949
      %v2568 = vpop.f32.mrb[0].mxu0
      %v2569 = vadd.f32 0.0, %v2568
      %v2570 = vpop.f32.mrb[0].mxu0
      %2571 = vmatprep.mubr.f32.mxu0 0.0
      %2572 = vmatmul.mubr.f32.gmra.mrb[0].mxu0 %v951
      %v2573 = vpop.f32.mrb[0].mxu0
      %v2574 = vadd.f32 0.0, %v2573
      %v2575 = vpop.f32.mrb[0].mxu0
      %2576 = vmatprep.mubr.f32.mxu0 0.0
      %2577 = vmatmul.mubr.f32.gmra.mrb[0].mxu0 %v953
      %v2578 = vpop.f32.mrb[0].mxu0
      %v2579 = vadd.f32 0.0, %v2578
      %v2580 = vpop.f32.mrb[0].mxu0
      %2581 = vmatprep.mubr.f32.mxu0 0.0
      %2582 = vmatmul.mubr.f32.gmra.mrb[0].mxu0 %v955
      %v2583 = vpop.f32.mrb[0].mxu0
      %v2584 = vadd.f32 0.0, %v2583
      %v2585 = vpop.f32.mrb[0].mxu0
      %2586 = vmatprep.mubr.f32.mxu0 0.0
      %2587 = vmatmul.mubr.f32.gmra.mrb[0].mxu0 %v957
      %v2588 = vpop.f32.mrb[0].mxu0
      %v2589 = vadd.f32 0.0, %v2588
      %v2590 = vpop.f32.mrb[0].mxu0
      %2591 = vmatprep.mubr.f32.mxu0 0.0
      %2592 = vmatmul.mubr.f32.gmra.mrb[0].mxu0 %v959
      %v2593 = vpop.f32.mrb[0].mxu0
      %v2594 = vadd.f32 0.0, %v2593
      %v2595 = vpop.f32.mrb[0].mxu0
      %2596 = vmatprep.mubr.f32.mxu0 0.0
      %2597 = vmatmul.mubr.f32.gmra.mrb[0].mxu0 %v961
      %v2598 = vpop.f32.mrb[0].mxu0
      %v2599 = vadd.f32 0.0, %v2598
      %v2600 = vpop.f32.mrb[0].mxu0
      %2601 = vmatprep.mubr.f32.mxu0 0.0
      %2602 = vmatmul.mubr.f32.gmra.mrb[0].mxu0 %v963
      %v2603 = vpop.f32.mrb[0].mxu0
      %v2604 = vadd.f32 0.0, %v2603
      %v2605 = vpop.f32.mrb[0].mxu0
      %2606 = vmatprep.mubr.f32.mxu0 0.0
      %2607 = vmatmul.mubr.f32.gmra.mrb[0].mxu0 %v965
      %v2608 = vpop.f32.mrb[0].mxu0
      %v2609 = vadd.f32 0.0, %v2608
      %v2610 = vpop.f32.mrb[0].mxu0
      %2611 = vmatprep.mubr.f32.mxu0 0.0
      %2612 = vmatmul.mubr.f32.gmra.mrb[0].mxu0 %v967
      %v2613 = vpop.f32.mrb[0].mxu0
      %v2614 = vadd.f32 0.0, %v2613
      %v2615 = vpop.f32.mrb[0].mxu0
      %2616 = vmatprep.mubr.f32.mxu0 0.0
      %2617 = vmatmul.mubr.f32.gmra.mrb[0].mxu0 %v1597
      %v2618 = vpop.f32.mrb[0].mxu0
      %v2619 = vadd.f32 0.0, %v2618
      %v2620 = vpop.f32.mrb[0].mxu0
      %2621 = vmatprep.mubr.f32.mxu0 0.0
      %2622 = vmatmul.mubr.f32.gmra.mrb[0].mxu0 %v1599
      %v2623 = vpop.f32.mrb[0].mxu0
      %v2624 = vadd.f32 0.0, %v2623
      %v2625 = vpop.f32.mrb[0].mxu0
      %2626 = vmatprep.mubr.f32.mxu0 0.0
      %2627 = vmatmul.mubr.f32.gmra.mrb[0].mxu0 %v2405
      %v2628 = vpop.f32.mrb[0].mxu0
      %v2629 = vadd.f32 0.0, %v2628
      %v2630 = vpop.f32.mrb[0].mxu0
      %2631 = vmatprep.mubr.f32.mxu0 0.0
      %2632 = vmatmul.mubr.f32.gmra.mrb[0].mxu0 %v2407
      %v2633 = vpop.f32.mrb[0].mxu0
      %v2634 = vadd.f32 0.0, %v2633
      %v2635 = vpop.f32.mrb[0].mxu0
      %2636 = vdwg.mxu0
      %v2637 = vadd.f32 %v2365, %v2479
      %v2638 = vadd.f32 %v2366, %v2484
      %v2639 = vadd.f32 %v2367, %v2489
      %v2640 = vadd.f32 %v2368, %v2494
      %v2641 = vadd.f32 %v2369, %v2499
      %v2642 = vadd.f32 %v2370, %v2504
      %v2643 = vadd.f32 %v2371, %v2509
      %v2644 = vadd.f32 %v2372, %v2514
      %v2645 = vadd.f32 %v2373, %v2519
      %v2646 = vadd.f32 %v2374, %v2524
      %v2647 = vadd.f32 %v2375, %v2529
      %v2648 = vadd.f32 %v2376, %v2534
      %v2649 = vadd.f32 %v2377, %v2539
      %v2650 = vadd.f32 %v2378, %v2544
      %v2651 = vadd.f32 %v2379, %v2549
      %v2652 = vadd.f32 %v2380, %v2554
      %v2653 = vadd.f32 %v2381, %v2559
      %v2654 = vadd.f32 %v2382, %v2564
      %v2655 = vadd.f32 %v2383, %v2569
      %v2656 = vadd.f32 %v2384, %v2574
      %v2657 = vadd.f32 %v2385, %v2579
      %v2658 = vadd.f32 %v2386, %v2584
      %v2659 = vadd.f32 %v2387, %v2589
      %v2660 = vadd.f32 %v2388, %v2594
      %v2661 = vadd.f32 %v2389, %v2599
      %v2662 = vadd.f32 %v2390, %v2604
      %v2663 = vadd.f32 %v2391, %v2609
      %v2664 = vadd.f32 %v2392, %v2614
      %v2665 = vadd.f32 %v2393, %v2619
      %v2666 = vadd.f32 %v2394, %v2624
      %v2667 = vadd.f32 %v2395, %v2629
      %v2668 = vadd.f32 %v2396, %v2634
      %s2669 = scalar_lea.vmem %s3, 28
      %v2670 = vld [vmem:[%s2669] sm:$0xf]
      %v2671 = vsel %vm611, %v507, 0
      %v2673 = vsel %vm611, %v508, 0
      %v2676 = vsel %vm676, %v2670, 0
      %2678 = vmatprep.subr.mxu0 0.0
      %2679 = vmatpush1.msra.mxu0 %v2676
      %2680 = vmatprep.subr.mxu0 0.0
      %2681 = vmatpush1.msra.mxu0 0.0
      %2682 = vmatprep.subr.mxu0 0.0
      %2683 = vmatpush1.msra.mxu0 0.0
      %2684 = vmatprep.subr.mxu0 0.0
      %2685 = vmatpush1.msra.mxu0 0.0
      %2686 = vmatprep.subr.mxu0 0.0
      %2687 = vmatpush1.msra.mxu0 0.0
      %2688 = vmatprep.subr.mxu0 0.0
      %2689 = vmatpush1.msra.mxu0 0.0
      %2690 = vmatprep.subr.mxu0 0.0
      %2691 = vmatpush1.msra.mxu0 0.0
      %2692 = vmatprep.subr.mxu0 0.0
      %2693 = vmatpush1.msra.mxu0 0.0
      %2694 = vmatprep.subr.mxu0 0.0
      %2695 = vmatpush1.msra.mxu0 0.0
      %2696 = vmatprep.subr.mxu0 0.0
      %2697 = vmatpush1.msra.mxu0 0.0
      %2698 = vmatprep.subr.mxu0 0.0
      %2699 = vmatpush1.msra.mxu0 0.0
      %2700 = vmatprep.subr.mxu0 0.0
      %2701 = vmatpush1.msra.mxu0 0.0
      %2702 = vmatprep.subr.mxu0 0.0
      %2703 = vmatpush1.msra.mxu0 0.0
      %2704 = vmatprep.subr.mxu0 0.0
      %2705 = vmatpush1.msra.mxu0 0.0
      %2706 = vmatprep.subr.mxu0 0.0
      %2707 = vmatpush1.msra.mxu0 0.0
      %2708 = vmatprep.subr.mxu0 0.0
      %2709 = vmatpush1.msra.mxu0 0.0
      %2710 = vmatprep.subr.mxu0 0.0
      %2711 = vmatpush1.msra.mxu0 0.0
      %2712 = vmatprep.subr.mxu0 0.0
      %2713 = vmatpush1.msra.mxu0 0.0
      %2714 = vmatprep.subr.mxu0 0.0
      %2715 = vmatpush1.msra.mxu0 0.0
      %2716 = vmatprep.subr.mxu0 0.0
      %2717 = vmatpush1.msra.mxu0 0.0
      %2718 = vmatprep.subr.mxu0 0.0
      %2719 = vmatpush1.msra.mxu0 0.0
      %2720 = vmatprep.subr.mxu0 0.0
      %2721 = vmatpush1.msra.mxu0 0.0
      %2722 = vmatprep.subr.mxu0 0.0
      %2723 = vmatpush1.msra.mxu0 0.0
      %2724 = vmatprep.subr.mxu0 0.0
      %2725 = vmatpush1.msra.mxu0 0.0
      %2726 = vmatprep.subr.mxu0 0.0
      %2727 = vmatpush1.msra.mxu0 0.0
      %2728 = vmatprep.subr.mxu0 0.0
      %2729 = vmatpush1.msra.mxu0 0.0
      %2730 = vmatprep.subr.mxu0 0.0
      %2731 = vmatpush1.msra.mxu0 0.0
      %2732 = vmatprep.subr.mxu0 0.0
      %2733 = vmatpush1.msra.mxu0 0.0
      %2734 = vmatprep.subr.mxu0 0.0
      %2735 = vmatpush1.msra.mxu0 0.0
      %2736 = vmatprep.subr.mxu0 0.0
      %2737 = vmatpush1.msra.mxu0 0.0
      %2738 = vmatprep.subr.mxu0 0.0
      %2739 = vmatpush1.msra.mxu0 0.0
      %2740 = vmatprep.subr.mxu0 0.0
      %2741 = vmatpush1.msra.mxu0 0.0
      %2742 = vmatprep.mubr.f32.mxu0 0.0
      %2743 = vmatmul.mubr.f32.gmra.mrb[0].mxu0 %v620
      %v2744 = vpop.f32.mrb[0].mxu0
      %v2745 = vadd.f32 0.0, %v2744
      %v2746 = vpop.f32.mrb[0].mxu0
      %2747 = vmatprep.mubr.f32.mxu0 0.0
      %2748 = vmatmul.mubr.f32.gmra.mrb[0].mxu0 %v622
      %v2749 = vpop.f32.mrb[0].mxu0
      %v2750 = vadd.f32 0.0, %v2749
      %v2751 = vpop.f32.mrb[0].mxu0
      %2752 = vmatprep.mubr.f32.mxu0 0.0
      %2753 = vmatmul.mubr.f32.gmra.mrb[0].mxu0 %v624
      %v2754 = vpop.f32.mrb[0].mxu0
      %v2755 = vadd.f32 0.0, %v2754
      %v2756 = vpop.f32.mrb[0].mxu0
      %2757 = vmatprep.mubr.f32.mxu0 0.0
      %2758 = vmatmul.mubr.f32.gmra.mrb[0].mxu0 %v626
      %v2759 = vpop.f32.mrb[0].mxu0
      %v2760 = vadd.f32 0.0, %v2759
      %v2761 = vpop.f32.mrb[0].mxu0
      %2762 = vmatprep.mubr.f32.mxu0 0.0
      %2763 = vmatmul.mubr.f32.gmra.mrb[0].mxu0 %v628
      %v2764 = vpop.f32.mrb[0].mxu0
      %v2765 = vadd.f32 0.0, %v2764
      %v2766 = vpop.f32.mrb[0].mxu0
      %2767 = vmatprep.mubr.f32.mxu0 0.0
      %2768 = vmatmul.mubr.f32.gmra.mrb[0].mxu0 %v630
      %v2769 = vpop.f32.mrb[0].mxu0
      %v2770 = vadd.f32 0.0, %v2769
      %v2771 = vpop.f32.mrb[0].mxu0
      %2772 = vmatprep.mubr.f32.mxu0 0.0
      %2773 = vmatmul.mubr.f32.gmra.mrb[0].mxu0 %v632
      %v2774 = vpop.f32.mrb[0].mxu0
      %v2775 = vadd.f32 0.0, %v2774
      %v2776 = vpop.f32.mrb[0].mxu0
      %2777 = vmatprep.mubr.f32.mxu0 0.0
      %2778 = vmatmul.mubr.f32.gmra.mrb[0].mxu0 %v634
      %v2779 = vpop.f32.mrb[0].mxu0
      %v2780 = vadd.f32 0.0, %v2779
      %v2781 = vpop.f32.mrb[0].mxu0
      %2782 = vmatprep.mubr.f32.mxu0 0.0
      %2783 = vmatmul.mubr.f32.gmra.mrb[0].mxu0 %v636
      %v2784 = vpop.f32.mrb[0].mxu0
      %v2785 = vadd.f32 0.0, %v2784
      %v2786 = vpop.f32.mrb[0].mxu0
      %2787 = vmatprep.mubr.f32.mxu0 0.0
      %2788 = vmatmul.mubr.f32.gmra.mrb[0].mxu0 %v638
      %v2789 = vpop.f32.mrb[0].mxu0
      %v2790 = vadd.f32 0.0, %v2789
      %v2791 = vpop.f32.mrb[0].mxu0
      %2792 = vmatprep.mubr.f32.mxu0 0.0
      %2793 = vmatmul.mubr.f32.gmra.mrb[0].mxu0 %v640
      %v2794 = vpop.f32.mrb[0].mxu0
      %v2795 = vadd.f32 0.0, %v2794
      %v2796 = vpop.f32.mrb[0].mxu0
      %2797 = vmatprep.mubr.f32.mxu0 0.0
      %2798 = vmatmul.mubr.f32.gmra.mrb[0].mxu0 %v642
      %v2799 = vpop.f32.mrb[0].mxu0
      %v2800 = vadd.f32 0.0, %v2799
      %v2801 = vpop.f32.mrb[0].mxu0
      %2802 = vmatprep.mubr.f32.mxu0 0.0
      %2803 = vmatmul.mubr.f32.gmra.mrb[0].mxu0 %v644
      %v2804 = vpop.f32.mrb[0].mxu0
      %v2805 = vadd.f32 0.0, %v2804
      %v2806 = vpop.f32.mrb[0].mxu0
      %2807 = vmatprep.mubr.f32.mxu0 0.0
      %2808 = vmatmul.mubr.f32.gmra.mrb[0].mxu0 %v646
      %v2809 = vpop.f32.mrb[0].mxu0
      %v2810 = vadd.f32 0.0, %v2809
      %v2811 = vpop.f32.mrb[0].mxu0
      %2812 = vmatprep.mubr.f32.mxu0 0.0
      %2813 = vmatmul.mubr.f32.gmra.mrb[0].mxu0 %v648
      %v2814 = vpop.f32.mrb[0].mxu0
      %v2815 = vadd.f32 0.0, %v2814
      %v2816 = vpop.f32.mrb[0].mxu0
      %2817 = vmatprep.mubr.f32.mxu0 0.0
      %2818 = vmatmul.mubr.f32.gmra.mrb[0].mxu0 %v650
      %v2819 = vpop.f32.mrb[0].mxu0
      %v2820 = vadd.f32 0.0, %v2819
      %v2821 = vpop.f32.mrb[0].mxu0
      %2822 = vmatprep.mubr.f32.mxu0 0.0
      %2823 = vmatmul.mubr.f32.gmra.mrb[0].mxu0 %v652
      %v2824 = vpop.f32.mrb[0].mxu0
      %v2825 = vadd.f32 0.0, %v2824
      %v2826 = vpop.f32.mrb[0].mxu0
      %2827 = vmatprep.mubr.f32.mxu0 0.0
      %2828 = vmatmul.mubr.f32.gmra.mrb[0].mxu0 %v654
      %v2829 = vpop.f32.mrb[0].mxu0
      %v2830 = vadd.f32 0.0, %v2829
      %v2831 = vpop.f32.mrb[0].mxu0
      %2832 = vmatprep.mubr.f32.mxu0 0.0
      %2833 = vmatmul.mubr.f32.gmra.mrb[0].mxu0 %v656
      %v2834 = vpop.f32.mrb[0].mxu0
      %v2835 = vadd.f32 0.0, %v2834
      %v2836 = vpop.f32.mrb[0].mxu0
      %2837 = vmatprep.mubr.f32.mxu0 0.0
      %2838 = vmatmul.mubr.f32.gmra.mrb[0].mxu0 %v658
      %v2839 = vpop.f32.mrb[0].mxu0
      %v2840 = vadd.f32 0.0, %v2839
      %v2841 = vpop.f32.mrb[0].mxu0
      %2842 = vmatprep.mubr.f32.mxu0 0.0
      %2843 = vmatmul.mubr.f32.gmra.mrb[0].mxu0 %v660
      %v2844 = vpop.f32.mrb[0].mxu0
      %v2845 = vadd.f32 0.0, %v2844
      %v2846 = vpop.f32.mrb[0].mxu0
      %2847 = vmatprep.mubr.f32.mxu0 0.0
      %2848 = vmatmul.mubr.f32.gmra.mrb[0].mxu0 %v662
      %v2849 = vpop.f32.mrb[0].mxu0
      %v2850 = vadd.f32 0.0, %v2849
      %v2851 = vpop.f32.mrb[0].mxu0
      %2852 = vmatprep.mubr.f32.mxu0 0.0
      %2853 = vmatmul.mubr.f32.gmra.mrb[0].mxu0 %v664
      %v2854 = vpop.f32.mrb[0].mxu0
      %v2855 = vadd.f32 0.0, %v2854
      %v2856 = vpop.f32.mrb[0].mxu0
      %2857 = vmatprep.mubr.f32.mxu0 0.0
      %2858 = vmatmul.mubr.f32.gmra.mrb[0].mxu0 %v666
      %v2859 = vpop.f32.mrb[0].mxu0
      %v2860 = vadd.f32 0.0, %v2859
      %v2861 = vpop.f32.mrb[0].mxu0
      %2862 = vmatprep.mubr.f32.mxu0 0.0
      %2863 = vmatmul.mubr.f32.gmra.mrb[0].mxu0 %v668
      %v2864 = vpop.f32.mrb[0].mxu0
      %v2865 = vadd.f32 0.0, %v2864
      %v2866 = vpop.f32.mrb[0].mxu0
      %2867 = vmatprep.mubr.f32.mxu0 0.0
      %2868 = vmatmul.mubr.f32.gmra.mrb[0].mxu0 %v670
      %v2869 = vpop.f32.mrb[0].mxu0
      %v2870 = vadd.f32 0.0, %v2869
      %v2871 = vpop.f32.mrb[0].mxu0
      %2872 = vmatprep.mubr.f32.mxu0 0.0
      %2873 = vmatmul.mubr.f32.gmra.mrb[0].mxu0 %v672
      %v2874 = vpop.f32.mrb[0].mxu0
      %v2875 = vadd.f32 0.0, %v2874
      %v2876 = vpop.f32.mrb[0].mxu0
      %2877 = vmatprep.mubr.f32.mxu0 0.0
      %2878 = vmatmul.mubr.f32.gmra.mrb[0].mxu0 %v674
      %v2879 = vpop.f32.mrb[0].mxu0
      %v2880 = vadd.f32 0.0, %v2879
      %v2881 = vpop.f32.mrb[0].mxu0
      %2882 = vmatprep.mubr.f32.mxu0 0.0
      %2883 = vmatmul.mubr.f32.gmra.mrb[0].mxu0 %v1863
      %v2884 = vpop.f32.mrb[0].mxu0
      %v2885 = vadd.f32 0.0, %v2884
      %v2886 = vpop.f32.mrb[0].mxu0
      %2887 = vmatprep.mubr.f32.mxu0 0.0
      %2888 = vmatmul.mubr.f32.gmra.mrb[0].mxu0 %v1865
      %v2889 = vpop.f32.mrb[0].mxu0
      %v2890 = vadd.f32 0.0, %v2889
      %v2891 = vpop.f32.mrb[0].mxu0
      %2892 = vmatprep.mubr.f32.mxu0 0.0
      %2893 = vmatmul.mubr.f32.gmra.mrb[0].mxu0 %v2671
      %v2894 = vpop.f32.mrb[0].mxu0
      %v2895 = vadd.f32 0.0, %v2894
      %v2896 = vpop.f32.mrb[0].mxu0
      %2897 = vmatprep.mubr.f32.mxu0 0.0
      %2898 = vmatmul.mubr.f32.gmra.mrb[0].mxu0 %v2673
      %v2899 = vpop.f32.mrb[0].mxu0
      %v2900 = vadd.f32 0.0, %v2899
      %v2901 = vpop.f32.mrb[0].mxu0
      %2902 = vdwg.mxu0
      %v2903 = vadd.f32 %v2637, %v2745
      %v2904 = vadd.f32 %v2638, %v2750
      %v2905 = vadd.f32 %v2639, %v2755
      %v2906 = vadd.f32 %v2640, %v2760
      %v2907 = vadd.f32 %v2641, %v2765
      %v2908 = vadd.f32 %v2642, %v2770
      %v2909 = vadd.f32 %v2643, %v2775
      %v2910 = vadd.f32 %v2644, %v2780
      %v2911 = vadd.f32 %v2645, %v2785
      %v2912 = vadd.f32 %v2646, %v2790
      %v2913 = vadd.f32 %v2647, %v2795
      %v2914 = vadd.f32 %v2648, %v2800
      %v2915 = vadd.f32 %v2649, %v2805
      %v2916 = vadd.f32 %v2650, %v2810
      %v2917 = vadd.f32 %v2651, %v2815
      %v2918 = vadd.f32 %v2652, %v2820
      %v2919 = vadd.f32 %v2653, %v2825
      %v2920 = vadd.f32 %v2654, %v2830
      %v2921 = vadd.f32 %v2655, %v2835
      %v2922 = vadd.f32 %v2656, %v2840
      %v2923 = vadd.f32 %v2657, %v2845
      %v2924 = vadd.f32 %v2658, %v2850
      %v2925 = vadd.f32 %v2659, %v2855
      %v2926 = vadd.f32 %v2660, %v2860
      %v2927 = vadd.f32 %v2661, %v2865
      %v2928 = vadd.f32 %v2662, %v2870
      %v2929 = vadd.f32 %v2663, %v2875
      %v2930 = vadd.f32 %v2664, %v2880
      %v2931 = vadd.f32 %v2665, %v2885
      %v2932 = vadd.f32 %v2666, %v2890
      %v2933 = vadd.f32 %v2667, %v2895
      %v2934 = vadd.f32 %v2668, %v2900
      %v2935 = vrot.slane %v507, 1
      %v2936 = vrot.slane %v508, 1
      %v2937 = vsel %vm1197, %v2935, %v2936
      %v2938 = vsel %vm1197, %v2936, %v1201
      %s2939 = scalar_lea.vmem %s3, 32
      %v2940 = vld [vmem:[%s2939] sm:$0xf]
      %v2941 = vsel %vm611, %v2937, 0
      %v2943 = vsel %vm611, %v2938, 0
      %v2946 = vsel %vm676, %v2940, 0
      %2948 = vmatprep.subr.mxu0 0.0
      %2949 = vmatpush1.msra.mxu0 %v2946
      %2950 = vmatprep.subr.mxu0 0.0
      %2951 = vmatpush1.msra.mxu0 0.0
      %2952 = vmatprep.subr.mxu0 0.0
      %2953 = vmatpush1.msra.mxu0 0.0
      %2954 = vmatprep.subr.mxu0 0.0
      %2955 = vmatpush1.msra.mxu0 0.0
      %2956 = vmatprep.subr.mxu0 0.0
      %2957 = vmatpush1.msra.mxu0 0.0
      %2958 = vmatprep.subr.mxu0 0.0
      %2959 = vmatpush1.msra.mxu0 0.0
      %2960 = vmatprep.subr.mxu0 0.0
      %2961 = vmatpush1.msra.mxu0 0.0
      %2962 = vmatprep.subr.mxu0 0.0
      %2963 = vmatpush1.msra.mxu0 0.0
      %2964 = vmatprep.subr.mxu0 0.0
      %2965 = vmatpush1.msra.mxu0 0.0
      %2966 = vmatprep.subr.mxu0 0.0
      %2967 = vmatpush1.msra.mxu0 0.0
      %2968 = vmatprep.subr.mxu0 0.0
      %2969 = vmatpush1.msra.mxu0 0.0
      %2970 = vmatprep.subr.mxu0 0.0
      %2971 = vmatpush1.msra.mxu0 0.0
      %2972 = vmatprep.subr.mxu0 0.0
      %2973 = vmatpush1.msra.mxu0 0.0
      %2974 = vmatprep.subr.mxu0 0.0
      %2975 = vmatpush1.msra.mxu0 0.0
      %2976 = vmatprep.subr.mxu0 0.0
      %2977 = vmatpush1.msra.mxu0 0.0
      %2978 = vmatprep.subr.mxu0 0.0
      %2979 = vmatpush1.msra.mxu0 0.0
      %2980 = vmatprep.subr.mxu0 0.0
      %2981 = vmatpush1.msra.mxu0 0.0
      %2982 = vmatprep.subr.mxu0 0.0
      %2983 = vmatpush1.msra.mxu0 0.0
      %2984 = vmatprep.subr.mxu0 0.0
      %2985 = vmatpush1.msra.mxu0 0.0
      %2986 = vmatprep.subr.mxu0 0.0
      %2987 = vmatpush1.msra.mxu0 0.0
      %2988 = vmatprep.subr.mxu0 0.0
      %2989 = vmatpush1.msra.mxu0 0.0
      %2990 = vmatprep.subr.mxu0 0.0
      %2991 = vmatpush1.msra.mxu0 0.0
      %2992 = vmatprep.subr.mxu0 0.0
      %2993 = vmatpush1.msra.mxu0 0.0
      %2994 = vmatprep.subr.mxu0 0.0
      %2995 = vmatpush1.msra.mxu0 0.0
      %2996 = vmatprep.subr.mxu0 0.0
      %2997 = vmatpush1.msra.mxu0 0.0
      %2998 = vmatprep.subr.mxu0 0.0
      %2999 = vmatpush1.msra.mxu0 0.0
      %3000 = vmatprep.subr.mxu0 0.0
      %3001 = vmatpush1.msra.mxu0 0.0
      %3002 = vmatprep.subr.mxu0 0.0
      %3003 = vmatpush1.msra.mxu0 0.0
      %3004 = vmatprep.subr.mxu0 0.0
      %3005 = vmatpush1.msra.mxu0 0.0
      %3006 = vmatprep.subr.mxu0 0.0
      %3007 = vmatpush1.msra.mxu0 0.0
      %3008 = vmatprep.subr.mxu0 0.0
      %3009 = vmatpush1.msra.mxu0 0.0
      %3010 = vmatprep.subr.mxu0 0.0
      %3011 = vmatpush1.msra.mxu0 0.0
      %3012 = vmatprep.mubr.f32.mxu0 0.0
      %3013 = vmatmul.mubr.f32.gmra.mrb[0].mxu0 %v1273
      %v3014 = vpop.f32.mrb[0].mxu0
      %v3015 = vadd.f32 0.0, %v3014
      %v3016 = vpop.f32.mrb[0].mxu0
      %3017 = vmatprep.mubr.f32.mxu0 0.0
      %3018 = vmatmul.mubr.f32.gmra.mrb[0].mxu0 %v1275
      %v3019 = vpop.f32.mrb[0].mxu0
      %v3020 = vadd.f32 0.0, %v3019
      %v3021 = vpop.f32.mrb[0].mxu0
      %3022 = vmatprep.mubr.f32.mxu0 0.0
      %3023 = vmatmul.mubr.f32.gmra.mrb[0].mxu0 %v1277
      %v3024 = vpop.f32.mrb[0].mxu0
      %v3025 = vadd.f32 0.0, %v3024
      %v3026 = vpop.f32.mrb[0].mxu0
      %3027 = vmatprep.mubr.f32.mxu0 0.0
      %3028 = vmatmul.mubr.f32.gmra.mrb[0].mxu0 %v1279
      %v3029 = vpop.f32.mrb[0].mxu0
      %v3030 = vadd.f32 0.0, %v3029
      %v3031 = vpop.f32.mrb[0].mxu0
      %3032 = vmatprep.mubr.f32.mxu0 0.0
      %3033 = vmatmul.mubr.f32.gmra.mrb[0].mxu0 %v1281
      %v3034 = vpop.f32.mrb[0].mxu0
      %v3035 = vadd.f32 0.0, %v3034
      %v3036 = vpop.f32.mrb[0].mxu0
      %3037 = vmatprep.mubr.f32.mxu0 0.0
      %3038 = vmatmul.mubr.f32.gmra.mrb[0].mxu0 %v1283
      %v3039 = vpop.f32.mrb[0].mxu0
      %v3040 = vadd.f32 0.0, %v3039
      %v3041 = vpop.f32.mrb[0].mxu0
      %3042 = vmatprep.mubr.f32.mxu0 0.0
      %3043 = vmatmul.mubr.f32.gmra.mrb[0].mxu0 %v1285
      %v3044 = vpop.f32.mrb[0].mxu0
      %v3045 = vadd.f32 0.0, %v3044
      %v3046 = vpop.f32.mrb[0].mxu0
      %3047 = vmatprep.mubr.f32.mxu0 0.0
      %3048 = vmatmul.mubr.f32.gmra.mrb[0].mxu0 %v1287
      %v3049 = vpop.f32.mrb[0].mxu0
      %v3050 = vadd.f32 0.0, %v3049
      %v3051 = vpop.f32.mrb[0].mxu0
      %3052 = vmatprep.mubr.f32.mxu0 0.0
      %3053 = vmatmul.mubr.f32.gmra.mrb[0].mxu0 %v1289
      %v3054 = vpop.f32.mrb[0].mxu0
      %v3055 = vadd.f32 0.0, %v3054
      %v3056 = vpop.f32.mrb[0].mxu0
      %3057 = vmatprep.mubr.f32.mxu0 0.0
      %3058 = vmatmul.mubr.f32.gmra.mrb[0].mxu0 %v1291
      %v3059 = vpop.f32.mrb[0].mxu0
      %v3060 = vadd.f32 0.0, %v3059
      %v3061 = vpop.f32.mrb[0].mxu0
      %3062 = vmatprep.mubr.f32.mxu0 0.0
      %3063 = vmatmul.mubr.f32.gmra.mrb[0].mxu0 %v1293
      %v3064 = vpop.f32.mrb[0].mxu0
      %v3065 = vadd.f32 0.0, %v3064
      %v3066 = vpop.f32.mrb[0].mxu0
      %3067 = vmatprep.mubr.f32.mxu0 0.0
      %3068 = vmatmul.mubr.f32.gmra.mrb[0].mxu0 %v1295
      %v3069 = vpop.f32.mrb[0].mxu0
      %v3070 = vadd.f32 0.0, %v3069
      %v3071 = vpop.f32.mrb[0].mxu0
      %3072 = vmatprep.mubr.f32.mxu0 0.0
      %3073 = vmatmul.mubr.f32.gmra.mrb[0].mxu0 %v1297
      %v3074 = vpop.f32.mrb[0].mxu0
      %v3075 = vadd.f32 0.0, %v3074
      %v3076 = vpop.f32.mrb[0].mxu0
      %3077 = vmatprep.mubr.f32.mxu0 0.0
      %3078 = vmatmul.mubr.f32.gmra.mrb[0].mxu0 %v1299
      %v3079 = vpop.f32.mrb[0].mxu0
      %v3080 = vadd.f32 0.0, %v3079
      %v3081 = vpop.f32.mrb[0].mxu0
      %3082 = vmatprep.mubr.f32.mxu0 0.0
      %3083 = vmatmul.mubr.f32.gmra.mrb[0].mxu0 %v1301
      %v3084 = vpop.f32.mrb[0].mxu0
      %v3085 = vadd.f32 0.0, %v3084
      %v3086 = vpop.f32.mrb[0].mxu0
      %3087 = vmatprep.mubr.f32.mxu0 0.0
      %3088 = vmatmul.mubr.f32.gmra.mrb[0].mxu0 %v1303
      %v3089 = vpop.f32.mrb[0].mxu0
      %v3090 = vadd.f32 0.0, %v3089
      %v3091 = vpop.f32.mrb[0].mxu0
      %3092 = vmatprep.mubr.f32.mxu0 0.0
      %3093 = vmatmul.mubr.f32.gmra.mrb[0].mxu0 %v1305
      %v3094 = vpop.f32.mrb[0].mxu0
      %v3095 = vadd.f32 0.0, %v3094
      %v3096 = vpop.f32.mrb[0].mxu0
      %3097 = vmatprep.mubr.f32.mxu0 0.0
      %3098 = vmatmul.mubr.f32.gmra.mrb[0].mxu0 %v1307
      %v3099 = vpop.f32.mrb[0].mxu0
      %v3100 = vadd.f32 0.0, %v3099
      %v3101 = vpop.f32.mrb[0].mxu0
      %3102 = vmatprep.mubr.f32.mxu0 0.0
      %3103 = vmatmul.mubr.f32.gmra.mrb[0].mxu0 %v1309
      %v3104 = vpop.f32.mrb[0].mxu0
      %v3105 = vadd.f32 0.0, %v3104
      %v3106 = vpop.f32.mrb[0].mxu0
      %3107 = vmatprep.mubr.f32.mxu0 0.0
      %3108 = vmatmul.mubr.f32.gmra.mrb[0].mxu0 %v1311
      %v3109 = vpop.f32.mrb[0].mxu0
      %v3110 = vadd.f32 0.0, %v3109
      %v3111 = vpop.f32.mrb[0].mxu0
      %3112 = vmatprep.mubr.f32.mxu0 0.0
      %3113 = vmatmul.mubr.f32.gmra.mrb[0].mxu0 %v1313
      %v3114 = vpop.f32.mrb[0].mxu0
      %v3115 = vadd.f32 0.0, %v3114
      %v3116 = vpop.f32.mrb[0].mxu0
      %3117 = vmatprep.mubr.f32.mxu0 0.0
      %3118 = vmatmul.mubr.f32.gmra.mrb[0].mxu0 %v1315
      %v3119 = vpop.f32.mrb[0].mxu0
      %v3120 = vadd.f32 0.0, %v3119
      %v3121 = vpop.f32.mrb[0].mxu0
      %3122 = vmatprep.mubr.f32.mxu0 0.0
      %3123 = vmatmul.mubr.f32.gmra.mrb[0].mxu0 %v1317
      %v3124 = vpop.f32.mrb[0].mxu0
      %v3125 = vadd.f32 0.0, %v3124
      %v3126 = vpop.f32.mrb[0].mxu0
      %3127 = vmatprep.mubr.f32.mxu0 0.0
      %3128 = vmatmul.mubr.f32.gmra.mrb[0].mxu0 %v1319
      %v3129 = vpop.f32.mrb[0].mxu0
      %v3130 = vadd.f32 0.0, %v3129
      %v3131 = vpop.f32.mrb[0].mxu0
      %3132 = vmatprep.mubr.f32.mxu0 0.0
      %3133 = vmatmul.mubr.f32.gmra.mrb[0].mxu0 %v1321
      %v3134 = vpop.f32.mrb[0].mxu0
      %v3135 = vadd.f32 0.0, %v3134
      %v3136 = vpop.f32.mrb[0].mxu0
      %3137 = vmatprep.mubr.f32.mxu0 0.0
      %3138 = vmatmul.mubr.f32.gmra.mrb[0].mxu0 %v1323
      %v3139 = vpop.f32.mrb[0].mxu0
      %v3140 = vadd.f32 0.0, %v3139
      %v3141 = vpop.f32.mrb[0].mxu0
      %3142 = vmatprep.mubr.f32.mxu0 0.0
      %3143 = vmatmul.mubr.f32.gmra.mrb[0].mxu0 %v1325
      %v3144 = vpop.f32.mrb[0].mxu0
      %v3145 = vadd.f32 0.0, %v3144
      %v3146 = vpop.f32.mrb[0].mxu0
      %3147 = vmatprep.mubr.f32.mxu0 0.0
      %3148 = vmatmul.mubr.f32.gmra.mrb[0].mxu0 %v1327
      %v3149 = vpop.f32.mrb[0].mxu0
      %v3150 = vadd.f32 0.0, %v3149
      %v3151 = vpop.f32.mrb[0].mxu0
      %3152 = vmatprep.mubr.f32.mxu0 0.0
      %3153 = vmatmul.mubr.f32.gmra.mrb[0].mxu0 %v2133
      %v3154 = vpop.f32.mrb[0].mxu0
      %v3155 = vadd.f32 0.0, %v3154
      %v3156 = vpop.f32.mrb[0].mxu0
      %3157 = vmatprep.mubr.f32.mxu0 0.0
      %3158 = vmatmul.mubr.f32.gmra.mrb[0].mxu0 %v2135
      %v3159 = vpop.f32.mrb[0].mxu0
      %v3160 = vadd.f32 0.0, %v3159
      %v3161 = vpop.f32.mrb[0].mxu0
      %3162 = vmatprep.mubr.f32.mxu0 0.0
      %3163 = vmatmul.mubr.f32.gmra.mrb[0].mxu0 %v2941
      %v3164 = vpop.f32.mrb[0].mxu0
      %v3165 = vadd.f32 0.0, %v3164
      %v3166 = vpop.f32.mrb[0].mxu0
      %3167 = vmatprep.mubr.f32.mxu0 0.0
      %3168 = vmatmul.mubr.f32.gmra.mrb[0].mxu0 %v2943
      %v3169 = vpop.f32.mrb[0].mxu0
      %v3170 = vadd.f32 0.0, %v3169
      %v3171 = vpop.f32.mrb[0].mxu0
      %3172 = vdwg.mxu0
      %v3173 = vadd.f32 %v2903, %v3015
      %v3174 = vadd.f32 %v2904, %v3020
      %v3175 = vadd.f32 %v2905, %v3025
      %v3176 = vadd.f32 %v2906, %v3030
      %v3177 = vadd.f32 %v2907, %v3035
      %v3178 = vadd.f32 %v2908, %v3040
      %v3179 = vadd.f32 %v2909, %v3045
      %v3180 = vadd.f32 %v2910, %v3050
      %v3181 = vadd.f32 %v2911, %v3055
      %v3182 = vadd.f32 %v2912, %v3060
      %v3183 = vadd.f32 %v2913, %v3065
      %v3184 = vadd.f32 %v2914, %v3070
      %v3185 = vadd.f32 %v2915, %v3075
      %v3186 = vadd.f32 %v2916, %v3080
      %v3187 = vadd.f32 %v2917, %v3085
      %v3188 = vadd.f32 %v2918, %v3090
      %v3189 = vadd.f32 %v2919, %v3095
      %v3190 = vadd.f32 %v2920, %v3100
      %v3191 = vadd.f32 %v2921, %v3105
      %v3192 = vadd.f32 %v2922, %v3110
      %v3193 = vadd.f32 %v2923, %v3115
      %v3194 = vadd.f32 %v2924, %v3120
      %v3195 = vadd.f32 %v2925, %v3125
      %v3196 = vadd.f32 %v2926, %v3130
      %v3197 = vadd.f32 %v2927, %v3135
      %v3198 = vadd.f32 %v2928, %v3140
      %v3199 = vadd.f32 %v2929, %v3145
      %v3200 = vadd.f32 %v2930, %v3150
      %v3201 = vadd.f32 %v2931, %v3155
      %v3202 = vadd.f32 %v2932, %v3160
      %v3203 = vadd.f32 %v2933, %v3165
      %v3204 = vadd.f32 %v2934, %v3170
      %vm3205 = vcmask 64512
      %3206 = vst.msk [vmem:[%s455] sm:$0xff] %vm3205, %v3173
      %3207 = vst.msk [vmem:[%s455 + $0x8] sm:$0xff] %vm3205, %v3174
      %3208 = vst.msk [vmem:[%s455 + $0x10] sm:$0xff] %vm3205, %v3175
      %3209 = vst.msk [vmem:[%s455 + $0x18] sm:$0xff] %vm3205, %v3176
      %3210 = vst.msk [vmem:[%s455 + $0x20] sm:$0xff] %vm3205, %v3177
      %3211 = vst.msk [vmem:[%s455 + $0x28] sm:$0xff] %vm3205, %v3178
      %3212 = vst.msk [vmem:[%s455 + $0x30] sm:$0xff] %vm3205, %v3179
      %3213 = vst.msk [vmem:[%s455 + $0x38] sm:$0xff] %vm3205, %v3180
      %3214 = vst.msk [vmem:[%s455 + $0x40] sm:$0xff] %vm3205, %v3181
      %3215 = vst.msk [vmem:[%s455 + $0x48] sm:$0xff] %vm3205, %v3182
      %3216 = vst.msk [vmem:[%s455 + $0x50] sm:$0xff] %vm3205, %v3183
      %3217 = vst.msk [vmem:[%s455 + $0x58] sm:$0xff] %vm3205, %v3184
      %3218 = vst.msk [vmem:[%s455 + $0x60] sm:$0xff] %vm3205, %v3185
      %3219 = vst.msk [vmem:[%s455 + $0x68] sm:$0xff] %vm3205, %v3186
      %3220 = vst.msk [vmem:[%s455 + $0x70] sm:$0xff] %vm3205, %v3187
      %3221 = vst.msk [vmem:[%s455 + $0x78] sm:$0xff] %vm3205, %v3188
      %3222 = vst.msk [vmem:[%s455 + $0x80] sm:$0xff] %vm3205, %v3189
      %3223 = vst.msk [vmem:[%s455 + $0x88] sm:$0xff] %vm3205, %v3190
      %3224 = vst.msk [vmem:[%s455 + $0x90] sm:$0xff] %vm3205, %v3191
      %3225 = vst.msk [vmem:[%s455 + $0x98] sm:$0xff] %vm3205, %v3192
      %3226 = vst.msk [vmem:[%s455 + $0xa0] sm:$0xff] %vm3205, %v3193
      %3227 = vst.msk [vmem:[%s455 + $0xa8] sm:$0xff] %vm3205, %v3194
      %3228 = vst.msk [vmem:[%s455 + $0xb0] sm:$0xff] %vm3205, %v3195
      %3229 = vst.msk [vmem:[%s455 + $0xb8] sm:$0xff] %vm3205, %v3196
      %3230 = vst.msk [vmem:[%s455 + $0xc0] sm:$0xff] %vm3205, %v3197
      %3231 = vst.msk [vmem:[%s455 + $0xc8] sm:$0xff] %vm3205, %v3198
      %3232 = vst.msk [vmem:[%s455 + $0xd0] sm:$0xff] %vm3205, %v3199
      %3233 = vst.msk [vmem:[%s455 + $0xd8] sm:$0xff] %vm3205, %v3200
      %3234 = vst.msk [vmem:[%s455 + $0xe0] sm:$0xff] %vm3205, %v3201
      %3235 = vst.msk [vmem:[%s455 + $0xe8] sm:$0xff] %vm3205, %v3202
      %3236 = vst.msk [vmem:[%s455 + $0xf0] sm:$0xff] %vm3205, %v3203
      %3237 = vst.msk [vmem:[%s455 + $0xf8] sm:$0xff] %vm3205, %v3204
      %v3238 = vsel %vm3205, %v3173, 0.0
      %v3239 = vsel %vm3205, %v3174, 0.0
      %v3240 = vadd.f32 %v3238, %v3239
      %v3241 = vsel %vm3205, %v3175, 0.0
      %v3242 = vadd.f32 %v3240, %v3241
      %v3243 = vsel %vm3205, %v3176, 0.0
      %v3244 = vadd.f32 %v3242, %v3243
      %v3245 = vsel %vm3205, %v3177, 0.0
      %v3246 = vadd.f32 %v3244, %v3245
      %v3247 = vsel %vm3205, %v3178, 0.0
      %v3248 = vadd.f32 %v3246, %v3247
      %v3249 = vsel %vm3205, %v3179, 0.0
      %v3250 = vadd.f32 %v3248, %v3249
      %v3251 = vsel %vm3205, %v3180, 0.0
      %v3252 = vadd.f32 %v3250, %v3251
      %v3253 = vsel %vm3205, %v3181, 0.0
      %v3254 = vadd.f32 %v3252, %v3253
      %v3255 = vsel %vm3205, %v3182, 0.0
      %v3256 = vadd.f32 %v3254, %v3255
      %v3257 = vsel %vm3205, %v3183, 0.0
      %v3258 = vadd.f32 %v3256, %v3257
      %v3259 = vsel %vm3205, %v3184, 0.0
      %v3260 = vadd.f32 %v3258, %v3259
      %v3261 = vsel %vm3205, %v3185, 0.0
      %v3262 = vadd.f32 %v3260, %v3261
      %v3263 = vsel %vm3205, %v3186, 0.0
      %v3264 = vadd.f32 %v3262, %v3263
      %v3265 = vsel %vm3205, %v3187, 0.0
      %v3266 = vadd.f32 %v3264, %v3265
      %v3267 = vsel %vm3205, %v3188, 0.0
      %v3268 = vadd.f32 %v3266, %v3267
      %v3269 = vsel %vm3205, %v3189, 0.0
      %v3270 = vadd.f32 %v3268, %v3269
      %v3271 = vsel %vm3205, %v3190, 0.0
      %v3272 = vadd.f32 %v3270, %v3271
      %v3273 = vsel %vm3205, %v3191, 0.0
      %v3274 = vadd.f32 %v3272, %v3273
      %v3275 = vsel %vm3205, %v3192, 0.0
      %v3276 = vadd.f32 %v3274, %v3275
      %v3277 = vsel %vm3205, %v3193, 0.0
      %v3278 = vadd.f32 %v3276, %v3277
      %v3279 = vsel %vm3205, %v3194, 0.0
      %v3280 = vadd.f32 %v3278, %v3279
      %v3281 = vsel %vm3205, %v3195, 0.0
      %v3282 = vadd.f32 %v3280, %v3281
      %v3283 = vsel %vm3205, %v3196, 0.0
      %v3284 = vadd.f32 %v3282, %v3283
      %v3285 = vsel %vm3205, %v3197, 0.0
      %v3286 = vadd.f32 %v3284, %v3285
      %v3287 = vsel %vm3205, %v3198, 0.0
      %v3288 = vadd.f32 %v3286, %v3287
      %v3289 = vsel %vm3205, %v3199, 0.0
      %v3290 = vadd.f32 %v3288, %v3289
      %v3291 = vsel %vm3205, %v3200, 0.0
      %v3292 = vadd.f32 %v3290, %v3291
      %v3293 = vsel %vm3205, %v3201, 0.0
      %v3294 = vadd.f32 %v3292, %v3293
      %v3295 = vsel %vm3205, %v3202, 0.0
      %v3296 = vadd.f32 %v3294, %v3295
      %v3297 = vsel %vm3205, %v3203, 0.0
      %v3298 = vadd.f32 %v3296, %v3297
      %v3299 = vsel %vm3205, %v3204, 0.0
      %v3300 = vadd.f32 %v3298, %v3299
      %v3301 = vrot.slane %v3300, 4
      %v3302 = vadd.f32 %v3300, %v3301
      %v3303 = vrot.slane %v3302, 2
      %v3304 = vadd.f32 %v3302, %v3303
      %v3305 = vrot.slane %v3304, 1
      %v3306 = vadd.f32 %v3304, %v3305
      %v3307 = vmul.f32 %v3173, %v3173
      %v3308 = vmul.f32 %v3174, %v3174
      %v3309 = vmul.f32 %v3175, %v3175
      %v3310 = vmul.f32 %v3176, %v3176
      %v3311 = vmul.f32 %v3177, %v3177
      %v3312 = vmul.f32 %v3178, %v3178
      %v3313 = vmul.f32 %v3179, %v3179
      %v3314 = vmul.f32 %v3180, %v3180
      %v3315 = vmul.f32 %v3181, %v3181
      %v3316 = vmul.f32 %v3182, %v3182
      %v3317 = vmul.f32 %v3183, %v3183
      %v3318 = vmul.f32 %v3184, %v3184
      %v3319 = vmul.f32 %v3185, %v3185
      %v3320 = vmul.f32 %v3186, %v3186
      %v3321 = vmul.f32 %v3187, %v3187
      %v3322 = vmul.f32 %v3188, %v3188
      %v3323 = vmul.f32 %v3189, %v3189
      %v3324 = vmul.f32 %v3190, %v3190
      %v3325 = vmul.f32 %v3191, %v3191
      %v3326 = vmul.f32 %v3192, %v3192
      %v3327 = vmul.f32 %v3193, %v3193
      %v3328 = vmul.f32 %v3194, %v3194
      %v3329 = vmul.f32 %v3195, %v3195
      %v3330 = vmul.f32 %v3196, %v3196
      %v3331 = vmul.f32 %v3197, %v3197
      %v3332 = vmul.f32 %v3198, %v3198
      %v3333 = vmul.f32 %v3199, %v3199
      %v3334 = vmul.f32 %v3200, %v3200
      %v3335 = vmul.f32 %v3201, %v3201
      %v3336 = vmul.f32 %v3202, %v3202
      %v3337 = vmul.f32 %v3203, %v3203
      %v3338 = vmul.f32 %v3204, %v3204
      %v3339 = vsel %vm3205, %v3307, 0.0
      %v3340 = vsel %vm3205, %v3308, 0.0
      %v3341 = vadd.f32 %v3339, %v3340
      %v3342 = vsel %vm3205, %v3309, 0.0
      %v3343 = vadd.f32 %v3341, %v3342
      %v3344 = vsel %vm3205, %v3310, 0.0
      %v3345 = vadd.f32 %v3343, %v3344
      %v3346 = vsel %vm3205, %v3311, 0.0
      %v3347 = vadd.f32 %v3345, %v3346
      %v3348 = vsel %vm3205, %v3312, 0.0
      %v3349 = vadd.f32 %v3347, %v3348
      %v3350 = vsel %vm3205, %v3313, 0.0
      %v3351 = vadd.f32 %v3349, %v3350
      %v3352 = vsel %vm3205, %v3314, 0.0
      %v3353 = vadd.f32 %v3351, %v3352
      %v3354 = vsel %vm3205, %v3315, 0.0
      %v3355 = vadd.f32 %v3353, %v3354
      %v3356 = vsel %vm3205, %v3316, 0.0
      %v3357 = vadd.f32 %v3355, %v3356
      %v3358 = vsel %vm3205, %v3317, 0.0
      %v3359 = vadd.f32 %v3357, %v3358
      %v3360 = vsel %vm3205, %v3318, 0.0
      %v3361 = vadd.f32 %v3359, %v3360
      %v3362 = vsel %vm3205, %v3319, 0.0
      %v3363 = vadd.f32 %v3361, %v3362
      %v3364 = vsel %vm3205, %v3320, 0.0
      %v3365 = vadd.f32 %v3363, %v3364
      %v3366 = vsel %vm3205, %v3321, 0.0
      %v3367 = vadd.f32 %v3365, %v3366
      %v3368 = vsel %vm3205, %v3322, 0.0
      %v3369 = vadd.f32 %v3367, %v3368
      %v3370 = vsel %vm3205, %v3323, 0.0
      %v3371 = vadd.f32 %v3369, %v3370
      %v3372 = vsel %vm3205, %v3324, 0.0
      %v3373 = vadd.f32 %v3371, %v3372
      %v3374 = vsel %vm3205, %v3325, 0.0
      %v3375 = vadd.f32 %v3373, %v3374
      %v3376 = vsel %vm3205, %v3326, 0.0
      %v3377 = vadd.f32 %v3375, %v3376
      %v3378 = vsel %vm3205, %v3327, 0.0
      %v3379 = vadd.f32 %v3377, %v3378
      %v3380 = vsel %vm3205, %v3328, 0.0
      %v3381 = vadd.f32 %v3379, %v3380
      %v3382 = vsel %vm3205, %v3329, 0.0
      %v3383 = vadd.f32 %v3381, %v3382
      %v3384 = vsel %vm3205, %v3330, 0.0
      %v3385 = vadd.f32 %v3383, %v3384
      %v3386 = vsel %vm3205, %v3331, 0.0
      %v3387 = vadd.f32 %v3385, %v3386
      %v3388 = vsel %vm3205, %v3332, 0.0
      %v3389 = vadd.f32 %v3387, %v3388
      %v3390 = vsel %vm3205, %v3333, 0.0
      %v3391 = vadd.f32 %v3389, %v3390
      %v3392 = vsel %vm3205, %v3334, 0.0
      %v3393 = vadd.f32 %v3391, %v3392
      %v3394 = vsel %vm3205, %v3335, 0.0
      %v3395 = vadd.f32 %v3393, %v3394
      %v3396 = vsel %vm3205, %v3336, 0.0
      %v3397 = vadd.f32 %v3395, %v3396
      %v3398 = vsel %vm3205, %v3337, 0.0
      %v3399 = vadd.f32 %v3397, %v3398
      %v3400 = vsel %vm3205, %v3338, 0.0
      %v3401 = vadd.f32 %v3399, %v3400
      %v3402 = vrot.slane %v3401, 4
      %v3403 = vadd.f32 %v3401, %v3402
      %v3404 = vrot.slane %v3403, 2
      %v3405 = vadd.f32 %v3403, %v3404
      %v3406 = vrot.slane %v3405, 1
      %v3407 = vadd.f32 %v3405, %v3406
      %v3408 = vlaneseq
      %v3409 = vshrl.u32 %v3408, 7
      %vm3410 = vcmp.eq.s32.totalorder %v3409, 0
      %v3411 = vsel %vm3410, %v3306, %v3407
      %vm3412 = vcmask 58368
      %3413 = vst.msk [vmem:[%s461] sm:$0x3] %vm3412, %v3411
      %s3414 = smul.u32 16, %s24
      %p3415 = scmp.lt.s32.totalorder %s23, 1
      %s3416 = scalar_select %p3415, %s23, 1
      %p3417 = scmp.lt.s32.totalorder %s3414, 15
      %s3418 = scalar_select %p3417, %s3414, 15
      %s3419 = smul.addr %s3418, 2
      %s3420 = smul.addr %s3416, 32
      %s3421 = sadd.s32 %s3419, %s3420
      %s3422 = smul.addr %s3421, 8
      %s3423 = scalar_lea.vmem %s6, %s3422
      %s3424 = sadd.s32 %s23, %s24
      %p3425 = scmp.lt.s32.totalorder %s3424, 1
      %s3426 = scalar_select %p3425, %s3424, 1
      %s3427 = smul.addr %s3426, 2
      %s3428 = scalar_lea.vmem %s7, %s3427
      // Predicated region
      $region45: #{conv_block1_forward.3} parent=43 // pred_check
        %p3429 = pneg %p214
      $region46: #{conv_block1_forward.3} parent=43 // pred_check_branch
        %3431 = sbr.rel (%p3429) target = $region48
      $region47: #{conv_block1_forward.3} parent=43 // pred_region
        %s3432 = smul.u32 16, %s24
      $region48: #{conv_block1_forward.3} parent=43 // pred_fallthru
        _
      // Predicated region
      $region49: #{conv_block1_forward.3} parent=43 // pred_check
        %p3433 = pneg %p242
      $region50: #{conv_block1_forward.3} parent=43 // pred_check_branch
        %3435 = sbr.rel (%p3433) target = $region52
      $region51: #{conv_block1_forward.3} parent=43 // pred_region
        %s3436 = sadd.s32 %s23, %s24
      $region52: #{conv_block1_forward.3} parent=43 // pred_fallthru
        _
    $region44: #{conv_block1_forward.3} parent=5 // pred_fallthru
      _
    %p3437 = scmp.le.s32.totalorder 2, %s14
    // Predicated region
    $region53: #{conv_block1_forward.3} parent=5 // pred_check
      %p3438 = pneg %p3437
    $region54: #{conv_block1_forward.3} parent=5 // pred_check_branch
      %3440 = sbr.rel (%p3438) target = $region56
    $region55: #{conv_block1_forward.3} parent=5 // pred_region
      %s3441 = ssub.s32 %s14, 2
      // Predicated region
      $region57: #{conv_block1_forward.3} parent=55 // pred_check
        %p3442 = pneg %p220
      $region58: #{conv_block1_forward.3} parent=55 // pred_check_branch
        %3444 = sbr.rel (%p3442) target = $region60
      $region59: #{conv_block1_forward.3} parent=55 // pred_region
        %s3445 = smul.u32 16, %s26
        %p3446 = scmp.lt.s32.totalorder %s25, 1
        %s3447 = scalar_select %p3446, %s25, 1
        %p3448 = scmp.lt.s32.totalorder %s3445, 15
        %s3449 = scalar_select %p3448, %s3445, 15
        %s3450 = smul.addr %s3449, 2
        %s3451 = smul.addr %s3447, 32
        %s3452 = sadd.s32 %s3450, %s3451
        %s3453 = smul.addr %s3452, 8
        %s3454 = scalar_lea.vmem %s6, %s3453
      $region60: #{conv_block1_forward.3} parent=55 // pred_fallthru
        _
      // Predicated region
      $region61: #{conv_block1_forward.3} parent=55 // pred_check
        %p3455 = pneg %p248
      $region62: #{conv_block1_forward.3} parent=55 // pred_check_branch
        %3457 = sbr.rel (%p3455) target = $region64
      $region63: #{conv_block1_forward.3} parent=55 // pred_region
        %s3458 = sadd.s32 %s25, %s26
        %p3459 = scmp.lt.s32.totalorder %s3458, 1
        %s3460 = scalar_select %p3459, %s3458, 1
        %s3461 = smul.addr %s3460, 2
        %s3462 = scalar_lea.vmem %s7, %s3461
      $region64: #{conv_block1_forward.3} parent=55 // pred_fallthru
        _
    $region56: #{conv_block1_forward.3} parent=5 // pred_fallthru
      _
  $region6: #{conv_block1_forward.3} parent=0 // loop_footer
    %s18 = sadd.s32 1, %s14
  $region7: #{conv_block1_forward.3} parent=0 // loop_footer_branch
    %13 = sbr.rel target = $region3
  $region8: #{conv_block1_forward.3} parent=0 // loop_exit
    _

// kernel: conv_block1_forward.4
$region0: #{conv_block1_forward.4}
  #allocation0 [shape = 'u32[]', space=smem, size = 0x4, offset = 0x4, fixed_abs, tag = 'smem constant byte address 0x4 - core index']
  #allocation1 [shape = 'u32[144,128]{1,0:T(1,128)}', space=vmem, size = 0x12000, scoped, tag = 'internal scratch']
  %s0 = inlined_call_operand.vmem [shape: f32[2,16,16,8], index: 0, kind: input, shape index: {}, may-alias: {0,1,2}]
  %s1 = inlined_call_operand.vmem [shape: f32[2,16,16,8], index: 1, kind: input, shape index: {}, may-alias: {0,1,2}]
  %s2 = inlined_call_operand.vmem [shape: f32[2,16,16,8], index: 2, kind: input, shape index: {}, may-alias: {0,1,2}]
  %s3 = inlined_call_operand.vmem [shape: f32[9,8,8], index: 3, kind: input, shape index: {}]
  %s4 = inlined_call_operand.vmem [shape: f32[1,8], index: 4, kind: input, shape index: {}]
  %s5 = inlined_call_operand.vmem [shape: f32[1,8], index: 5, kind: input, shape index: {}]
  %s6 = inlined_call_operand.vmem [shape: f32[2,16,16,8], index: 6, kind: output, shape index: {0}]
  %s7 = inlined_call_operand.vmem [shape: f32[2,2,8], index: 7, kind: output, shape index: {1}]
  %8 = xla_tuple %s6, %s7
  %s9 = sld [smem:[#allocation0]]
  $region65: #{conv_block1_forward.4} parent=0
    _
  %s11 = ssub.s32 1, %s9
  %s12 = scalar_select 0, %s11, %s9
  loop: start=0, step=1, limit=4
  $region2: #{conv_block1_forward.4} parent=0 // loop_pre_header
    _
  $region3: #{conv_block1_forward.4} parent=0 // loop_header
    %s14 = sphi 0, %s18
    %p15 = scmp.ge.s32.totalorder %s14, 4
    %s21 = sphi 0, %s33
    %s22 = sphi 0, %s29
    %s23 = sphi 0, %s21
    %s24 = sphi 0, %s22
    %s25 = sphi 0, %s23
    %s26 = sphi 0, %s24
    %s46 = sphi 0, %s48
    %s49 = sphi 0, %s46
    %s50 = sphi 0, %s49
    %s66 = sphi 0, %s50
    %s74 = sphi 0, %s76
    %s77 = sphi 0, %s74
    %s78 = sphi 0, %s77
    %s94 = sphi 0, %s78
    %s110 = sphi 0, %s112
    %s113 = sphi 0, %s110
    %s114 = sphi 0, %s113
    %s130 = sphi 0, %s114
    %s134 = sphi 0, %s134
    %s136 = sphi 0, %s134
    %s137 = sphi 0, %s136
    %s151 = sphi 0, %s137
    %s155 = sphi 0, %s155
    %s157 = sphi 0, %s155
    %s158 = sphi 0, %s157
    %s172 = sphi 0, %s158
    %s176 = sphi 0, %s176
    %s178 = sphi 0, %s176
    %s179 = sphi 0, %s178
    %s193 = sphi 0, %s179
    %s201 = sphi 0, %s203
    %s204 = sphi 0, %s201
    %s205 = sphi 0, %s204
    %s221 = sphi 0, %s205
    %s229 = sphi 0, %s231
    %s232 = sphi 0, %s229
    %s233 = sphi 0, %s232
    %s249 = sphi 0, %s233
  $region4: #{conv_block1_forward.4} parent=0 // loop_header_branch
    %17 = sbr.rel (%p15) target = $region8
  $region5: #{conv_block1_forward.4} parent=0 // loop_body
    %s19 = ssub.s32 %s14, 1
    %s20 = ssub.s32 %s14, 2
    %s27 = sadd.s32 1, %s22
    %p28 = scmp.ge.s32.totalorder %s27, 1
    %s29 = scalar_select %p28, 0, %s27
    %s30 = sadd.s32 1, %s21
    %s31 = scalar_select %p28, %s30, %s21
    %p32 = scmp.ge.s32.totalorder %s31, 2
    %s33 = scalar_select %p32, 0, %s31
    %s34 = smul.u32 %s22, 16
    %s35 = ssub.s32 %s34, 1
    %p36 = scmp.gt.s32.totalorder %s35, 0
    %s37 = scalar_select %p36, %s35, 0
    %s38 = smul.u32 %s29, 16
    %s39 = ssub.s32 %s38, 1
    %p40 = scmp.gt.s32.totalorder %s39, 0
    %s41 = scalar_select %p40, %s39, 0
    %s42 = ssub.s32 %s21, %s33
    %s43 = ssub.s32 %s37, %s41
    %s44 = sor.u32 %s42, %s43
    %p45 = scmp.eq.s32.totalorder %s44, 0
    %s47 = sadd.s32 %s46, 1
    %s48 = scalar_select %p45, %s46, %s47
    %p51 = pneg %p45
    %p52 = scmp.eq.s32.totalorder %s14, 1
    %p53 = por %p51, %p52
    %p54 = scmp.ne.s32.totalorder %s46, %s49
    %p55 = scmp.eq.s32.totalorder %s14, 0
    %p56 = por %p54, %p55
    %p57 = scmp.ne.s32.totalorder %s46, %s49
    %p58 = scmp.eq.s32.totalorder %s19, 1
    %p59 = por %p57, %p58
    %p60 = scmp.ne.s32.totalorder %s49, %s50
    %p61 = scmp.eq.s32.totalorder %s19, 0
    %p62 = por %p60, %p61
    %p63 = scmp.ne.s32.totalorder %s49, %s50
    %p64 = scmp.eq.s32.totalorder %s20, 1
    %p65 = por %p63, %p64
    %p67 = scmp.ne.s32.totalorder %s50, %s66
    %p68 = scmp.eq.s32.totalorder %s20, 0
    %p69 = por %p67, %p68
    %s70 = ssub.s32 %s21, %s33
    %s71 = ssub.s32 %s22, %s29
    %s72 = sor.u32 %s70, %s71
    %p73 = scmp.eq.s32.totalorder %s72, 0
    %s75 = sadd.s32 %s74, 1
    %s76 = scalar_select %p73, %s74, %s75
    %p79 = pneg %p73
    %p80 = scmp.eq.s32.totalorder %s14, 1
    %p81 = por %p79, %p80
    %p82 = scmp.ne.s32.totalorder %s74, %s77
    %p83 = scmp.eq.s32.totalorder %s14, 0
    %p84 = por %p82, %p83
    %p85 = scmp.ne.s32.totalorder %s74, %s77
    %p86 = scmp.eq.s32.totalorder %s19, 1
    %p87 = por %p85, %p86
    %p88 = scmp.ne.s32.totalorder %s77, %s78
    %p89 = scmp.eq.s32.totalorder %s19, 0
    %p90 = por %p88, %p89
    %p91 = scmp.ne.s32.totalorder %s77, %s78
    %p92 = scmp.eq.s32.totalorder %s20, 1
    %p93 = por %p91, %p92
    %p95 = scmp.ne.s32.totalorder %s78, %s94
    %p96 = scmp.eq.s32.totalorder %s20, 0
    %p97 = por %p95, %p96
    %s98 = smul.u32 %s22, 16
    %s99 = sadd.s32 %s98, 16
    %p100 = scmp.lt.s32.totalorder %s99, 15
    %s101 = scalar_select %p100, %s99, 15
    %s102 = smul.u32 %s29, 16
    %s103 = sadd.s32 %s102, 16
    %p104 = scmp.lt.s32.totalorder %s103, 15
    %s105 = scalar_select %p104, %s103, 15
    %s106 = ssub.s32 %s21, %s33
    %s107 = ssub.s32 %s101, %s105
    %s108 = sor.u32 %s106, %s107
    %p109 = scmp.eq.s32.totalorder %s108, 0
    %s111 = sadd.s32 %s110, 1
    %s112 = scalar_select %p109, %s110, %s111
    %p115 = pneg %p109
    %p116 = scmp.eq.s32.totalorder %s14, 1
    %p117 = por %p115, %p116
    %p118 = scmp.ne.s32.totalorder %s110, %s113
    %p119 = scmp.eq.s32.totalorder %s14, 0
    %p120 = por %p118, %p119
    %p121 = scmp.ne.s32.totalorder %s110, %s113
    %p122 = scmp.eq.s32.totalorder %s19, 1
    %p123 = por %p121, %p122
    %p124 = scmp.ne.s32.totalorder %s113, %s114
    %p125 = scmp.eq.s32.totalorder %s19, 0
    %p126 = por %p124, %p125
    %p127 = scmp.ne.s32.totalorder %s113, %s114
    %p128 = scmp.eq.s32.totalorder %s20, 1
    %p129 = por %p127, %p128
    %p131 = scmp.ne.s32.totalorder %s114, %s130
    %p132 = scmp.eq.s32.totalorder %s20, 0
    %p133 = por %p131, %p132
    %s135 = sadd.s32 %s134, 1
    %p138 = scmp.eq.s32.totalorder %s14, 1
    %p139 = scmp.ne.s32.totalorder %s134, %s136
    %p140 = scmp.eq.s32.totalorder %s14, 0
    %p141 = por %p139, %p140
    %p142 = scmp.ne.s32.totalorder %s134, %s136
    %p143 = scmp.eq.s32.totalorder %s19, 1
    %p144 = por %p142, %p143
    %p145 = scmp.ne.s32.totalorder %s136, %s137
    %p146 = scmp.eq.s32.totalorder %s19, 0
    %p147 = por %p145, %p146
    %p148 = scmp.ne.s32.totalorder %s136, %s137
    %p149 = scmp.eq.s32.totalorder %s20, 1
    %p150 = por %p148, %p149
    %p152 = scmp.ne.s32.totalorder %s137, %s151
    %p153 = scmp.eq.s32.totalorder %s20, 0
    %p154 = por %p152, %p153
    %s156 = sadd.s32 %s155, 1
    %p159 = scmp.eq.s32.totalorder %s14, 1
    %p160 = scmp.ne.s32.totalorder %s155, %s157
    %p161 = scmp.eq.s32.totalorder %s14, 0
    %p162 = por %p160, %p161
    %p163 = scmp.ne.s32.totalorder %s155, %s157
    %p164 = scmp.eq.s32.totalorder %s19, 1
    %p165 = por %p163, %p164
    %p166 = scmp.ne.s32.totalorder %s157, %s158
    %p167 = scmp.eq.s32.totalorder %s19, 0
    %p168 = por %p166, %p167
    %p169 = scmp.ne.s32.totalorder %s157, %s158
    %p170 = scmp.eq.s32.totalorder %s20, 1
    %p171 = por %p169, %p170
    %p173 = scmp.ne.s32.totalorder %s158, %s172
    %p174 = scmp.eq.s32.totalorder %s20, 0
    %p175 = por %p173, %p174
    %s177 = sadd.s32 %s176, 1
    %p180 = scmp.eq.s32.totalorder %s14, 1
    %p181 = scmp.ne.s32.totalorder %s176, %s178
    %p182 = scmp.eq.s32.totalorder %s14, 0
    %p183 = por %p181, %p182
    %p184 = scmp.ne.s32.totalorder %s176, %s178
    %p185 = scmp.eq.s32.totalorder %s19, 1
    %p186 = por %p184, %p185
    %p187 = scmp.ne.s32.totalorder %s178, %s179
    %p188 = scmp.eq.s32.totalorder %s19, 0
    %p189 = por %p187, %p188
    %p190 = scmp.ne.s32.totalorder %s178, %s179
    %p191 = scmp.eq.s32.totalorder %s20, 1
    %p192 = por %p190, %p191
    %p194 = scmp.ne.s32.totalorder %s179, %s193
    %p195 = scmp.eq.s32.totalorder %s20, 0
    %p196 = por %p194, %p195
    %s197 = ssub.s32 %s21, %s33
    %s198 = ssub.s32 %s22, %s29
    %s199 = sor.u32 %s197, %s198
    %p200 = scmp.eq.s32.totalorder %s199, 0
    %s202 = sadd.s32 %s201, 1
    %s203 = scalar_select %p200, %s201, %s202
    %p206 = pneg %p200
    %p207 = scmp.eq.s32.totalorder %s14, 1
    %p208 = por %p206, %p207
    %p209 = scmp.ne.s32.totalorder %s201, %s204
    %p210 = scmp.eq.s32.totalorder %s14, 0
    %p211 = por %p209, %p210
    %p212 = scmp.ne.s32.totalorder %s201, %s204
    %p213 = scmp.eq.s32.totalorder %s19, 1
    %p214 = por %p212, %p213
    %p215 = scmp.ne.s32.totalorder %s204, %s205
    %p216 = scmp.eq.s32.totalorder %s19, 0
    %p217 = por %p215, %p216
    %p218 = scmp.ne.s32.totalorder %s204, %s205
    %p219 = scmp.eq.s32.totalorder %s20, 1
    %p220 = por %p218, %p219
    %p222 = scmp.ne.s32.totalorder %s205, %s221
    %p223 = scmp.eq.s32.totalorder %s20, 0
    %p224 = por %p222, %p223
    %s225 = sadd.s32 %s21, %s22
    %s226 = sadd.s32 %s33, %s29
    %s227 = ssub.s32 %s225, %s226
    %p228 = scmp.eq.s32.totalorder %s227, 0
    %s230 = sadd.s32 %s229, 1
    %s231 = scalar_select %p228, %s229, %s230
    %p234 = pneg %p228
    %p235 = scmp.eq.s32.totalorder %s14, 1
    %p236 = por %p234, %p235
    %p237 = scmp.ne.s32.totalorder %s229, %s232
    %p238 = scmp.eq.s32.totalorder %s14, 0
    %p239 = por %p237, %p238
    %p240 = scmp.ne.s32.totalorder %s229, %s232
    %p241 = scmp.eq.s32.totalorder %s19, 1
    %p242 = por %p240, %p241
    %p243 = scmp.ne.s32.totalorder %s232, %s233
    %p244 = scmp.eq.s32.totalorder %s19, 0
    %p245 = por %p243, %p244
    %p246 = scmp.ne.s32.totalorder %s232, %s233
    %p247 = scmp.eq.s32.totalorder %s20, 1
    %p248 = por %p246, %p247
    %p250 = scmp.ne.s32.totalorder %s233, %s249
    %p251 = scmp.eq.s32.totalorder %s20, 0
    %p252 = por %p250, %p251
    %p253 = scmp.le.s32.totalorder 1, %s14
    %p254 = scmp.lt.s32.totalorder %s14, 3
    %p255 = pnand %p253, %p254
    %p256 = pneg %p255
    // Predicated region
    $region9: #{conv_block1_forward.4} parent=5 // pred_check
      _
    $region10: #{conv_block1_forward.4} parent=5 // pred_check_branch
      %258 = sbr.rel (%p255) target = $region12
    $region11: #{conv_block1_forward.4} parent=5 // pred_region
      %s259 = ssub.s32 %s14, 1
      // Predicated region
      $region13: #{conv_block1_forward.4} parent=11 // pred_check
        %p260 = pneg %p147
      $region14: #{conv_block1_forward.4} parent=11 // pred_check_branch
        %262 = sbr.rel (%p260) target = $region16
      $region15: #{conv_block1_forward.4} parent=11 // pred_region
        _
      $region16: #{conv_block1_forward.4} parent=11 // pred_fallthru
        _
      // Predicated region
      $region17: #{conv_block1_forward.4} parent=11 // pred_check
        %p263 = pneg %p168
      $region18: #{conv_block1_forward.4} parent=11 // pred_check_branch
        %265 = sbr.rel (%p263) target = $region20
      $region19: #{conv_block1_forward.4} parent=11 // pred_region
        _
      $region20: #{conv_block1_forward.4} parent=11 // pred_fallthru
        _
      // Predicated region
      $region21: #{conv_block1_forward.4} parent=11 // pred_check
        %p266 = pneg %p189
      $region22: #{conv_block1_forward.4} parent=11 // pred_check_branch
        %268 = sbr.rel (%p266) target = $region24
      $region23: #{conv_block1_forward.4} parent=11 // pred_region
        _
      $region24: #{conv_block1_forward.4} parent=11 // pred_fallthru
        _
    $region12: #{conv_block1_forward.4} parent=5 // pred_fallthru
      _
    %p269 = scmp.lt.s32.totalorder %s14, 2
    // Predicated region
    $region25: #{conv_block1_forward.4} parent=5 // pred_check
      %p270 = pneg %p269
    $region26: #{conv_block1_forward.4} parent=5 // pred_check_branch
      %272 = sbr.rel (%p270) target = $region28
    $region27: #{conv_block1_forward.4} parent=5 // pred_region
      // Predicated region
      $region29: #{conv_block1_forward.4} parent=27 // pred_check
        %p273 = pneg %p56
      $region30: #{conv_block1_forward.4} parent=27 // pred_check_branch
        %275 = sbr.rel (%p273) target = $region32
      $region31: #{conv_block1_forward.4} parent=27 // pred_region
        %s276 = smul.u32 %s22, 16
        %s277 = ssub.s32 %s276, 1
        %p278 = scmp.gt.s32.totalorder %s277, 0
        %s279 = scalar_select %p278, %s277, 0
        %p280 = scmp.lt.s32.totalorder %s21, 1
        %s281 = scalar_select %p280, %s21, 1
        %p282 = scmp.lt.s32.totalorder %s279, 15
        %s283 = scalar_select %p282, %s279, 15
        %s284 = smul.addr %s283, 2
        %s285 = smul.addr %s281, 32
        %s286 = sadd.s32 %s284, %s285
        %s287 = smul.addr %s286, 8
        %s288 = scalar_lea.vmem %s0, %s287
        %s289 = smul.u32 %s22, 16
        %s290 = ssub.s32 %s289, 1
        %p291 = scmp.gt.s32.totalorder %s290, 0
        %s292 = scalar_select %p291, %s290, 0
      $region32: #{conv_block1_forward.4} parent=27 // pred_fallthru
        _
      // Predicated region
      $region33: #{conv_block1_forward.4} parent=27 // pred_check
        %p293 = pneg %p84
      $region34: #{conv_block1_forward.4} parent=27 // pred_check_branch
        %295 = sbr.rel (%p293) target = $region36
      $region35: #{conv_block1_forward.4} parent=27 // pred_region
        %s296 = smul.u32 16, %s22
        %p297 = scmp.lt.s32.totalorder %s21, 1
        %s298 = scalar_select %p297, %s21, 1
        %p299 = scmp.lt.s32.totalorder %s296, 15
        %s300 = scalar_select %p299, %s296, 15
        %s301 = smul.addr %s300, 2
        %s302 = smul.addr %s298, 32
        %s303 = sadd.s32 %s301, %s302
        %s304 = smul.addr %s303, 8
        %s305 = scalar_lea.vmem %s1, %s304
        %s306 = smul.u32 16, %s22
      $region36: #{conv_block1_forward.4} parent=27 // pred_fallthru
        _
      // Predicated region
      $region37: #{conv_block1_forward.4} parent=27 // pred_check
        %p307 = pneg %p120
      $region38: #{conv_block1_forward.4} parent=27 // pred_check_branch
        %309 = sbr.rel (%p307) target = $region40
      $region39: #{conv_block1_forward.4} parent=27 // pred_region
        %s310 = smul.u32 %s22, 16
        %s311 = sadd.s32 %s310, 16
        %p312 = scmp.lt.s32.totalorder %s311, 15
        %s313 = scalar_select %p312, %s311, 15
        %p314 = scmp.lt.s32.totalorder %s21, 1
        %s315 = scalar_select %p314, %s21, 1
        %p316 = scmp.lt.s32.totalorder %s313, 15
        %s317 = scalar_select %p316, %s313, 15
        %s318 = smul.addr %s317, 2
        %s319 = smul.addr %s315, 32
        %s320 = sadd.s32 %s318, %s319
        %s321 = smul.addr %s320, 8
        %s322 = scalar_lea.vmem %s2, %s321
        %s323 = smul.u32 %s22, 16
        %s324 = sadd.s32 %s323, 16
        %p325 = scmp.lt.s32.totalorder %s324, 15
        %s326 = scalar_select %p325, %s324, 15
      $region40: #{conv_block1_forward.4} parent=27 // pred_fallthru
        _
    $region28: #{conv_block1_forward.4} parent=5 // pred_fallthru
      _
    %p327 = scmp.le.s32.totalorder 1, %s14
    %p328 = scmp.lt.s32.totalorder %s14, 3
    %p329 = pnand %p327, %p328
    %p330 = pneg %p329
    // Predicated region
    $region41: #{conv_block1_forward.4} parent=5 // pred_check
      _
    $region42: #{conv_block1_forward.4} parent=5 // pred_check_branch
      %332 = sbr.rel (%p329) target = $region44
    $region43: #{conv_block1_forward.4} parent=5 // pred_region
      %s333 = ssub.s32 %s14, 1
      %s334 = smul.u32 %s24, 16
      %s335 = ssub.s32 %s334, 1
      %p336 = scmp.gt.s32.totalorder %s335, 0
      %s337 = scalar_select %p336, %s335, 0
      %p338 = scmp.lt.s32.totalorder %s23, 1
      %s339 = scalar_select %p338, %s23, 1
      %p340 = scmp.lt.s32.totalorder %s337, 15
      %s341 = scalar_select %p340, %s337, 15
      %s342 = smul.addr %s341, 2
      %s343 = smul.addr %s339, 32
      %s344 = sadd.s32 %s342, %s343
      %s345 = smul.addr %s344, 8
      %s346 = scalar_lea.vmem %s0, %s345
      %p347 = pneg %p62
      %p348 = pneg %p59
      %s349 = smul.u32 16, %s24
      %p350 = scmp.lt.s32.totalorder %s23, 1
      %s351 = scalar_select %p350, %s23, 1
      %p352 = scmp.lt.s32.totalorder %s349, 15
      %s353 = scalar_select %p352, %s349, 15
      %s354 = smul.addr %s353, 2
      %s355 = smul.addr %s351, 32
      %s356 = sadd.s32 %s354, %s355
      %s357 = smul.addr %s356, 8
      %s358 = scalar_lea.vmem %s1, %s357
      %p359 = pneg %p90
      %p360 = pneg %p87
      %s361 = smul.u32 %s24, 16
      %s362 = sadd.s32 %s361, 16
      %p363 = scmp.lt.s32.totalorder %s362, 15
      %s364 = scalar_select %p363, %s362, 15
      %p365 = scmp.lt.s32.totalorder %s23, 1
      %s366 = scalar_select %p365, %s23, 1
      %p367 = scmp.lt.s32.totalorder %s364, 15
      %s368 = scalar_select %p367, %s364, 15
      %s369 = smul.addr %s368, 2
      %s370 = smul.addr %s366, 32
      %s371 = sadd.s32 %s369, %s370
      %s372 = smul.addr %s371, 8
      %s373 = scalar_lea.vmem %s2, %s372
      %p374 = pneg %p126
      %p375 = pneg %p123
      %p376 = pneg %p147
      %p377 = pneg %p144
      %p378 = pneg %p168
      %p379 = pneg %p165
      %p380 = pneg %p189
      %p381 = pneg %p186
      %p382 = pneg %p217
      %p383 = pneg %p214
      %s384 = smul.u32 16, %s24
      %p385 = scmp.lt.s32.totalorder %s23, 1
      %s386 = scalar_select %p385, %s23, 1
      %p387 = scmp.lt.s32.totalorder %s384, 15
      %s388 = scalar_select %p387, %s384, 15
      %s389 = smul.addr %s388, 2
      %s390 = smul.addr %s386, 32
      %s391 = sadd.s32 %s389, %s390
      %s392 = smul.addr %s391, 8
      %s393 = scalar_lea.vmem %s6, %s392
      %p394 = pneg %p245
      %p395 = pneg %p242
      %s396 = sadd.s32 %s23, %s24
      %p397 = scmp.lt.s32.totalorder %s396, 1
      %s398 = scalar_select %p397, %s396, 1
      %s399 = smul.addr %s398, 2
      %s400 = scalar_lea.vmem %s7, %s399
      %s401 = smul.u32 %s24, 16
      %s402 = ssub.s32 %s401, 1
      %p403 = scmp.gt.s32.totalorder %s402, 0
      %s404 = scalar_select %p403, %s402, 0
      %p405 = scmp.lt.s32.totalorder %s23, 1
      %s406 = scalar_select %p405, %s23, 1
      %p407 = scmp.lt.s32.totalorder %s404, 15
      %s408 = scalar_select %p407, %s404, 15
      %s409 = smul.addr %s408, 2
      %s410 = smul.addr %s406, 32
      %s411 = sadd.s32 %s409, %s410
      %s412 = smul.addr %s411, 8
      %s413 = scalar_lea.vmem %s0, %s412
      %s414 = smul.u32 %s24, 16
      %s415 = ssub.s32 %s414, 1
      %p416 = scmp.gt.s32.totalorder %s415, 0
      %s417 = scalar_select %p416, %s415, 0
      %s418 = smul.u32 16, %s24
      %p419 = scmp.lt.s32.totalorder %s23, 1
      %s420 = scalar_select %p419, %s23, 1
      %p421 = scmp.lt.s32.totalorder %s418, 15
      %s422 = scalar_select %p421, %s418, 15
      %s423 = smul.addr %s422, 2
      %s424 = smul.addr %s420, 32
      %s425 = sadd.s32 %s423, %s424
      %s426 = smul.addr %s425, 8
      %s427 = scalar_lea.vmem %s1, %s426
      %s428 = smul.u32 16, %s24
      %s429 = smul.u32 %s24, 16
      %s430 = sadd.s32 %s429, 16
      %p431 = scmp.lt.s32.totalorder %s430, 15
      %s432 = scalar_select %p431, %s430, 15
      %p433 = scmp.lt.s32.totalorder %s23, 1
      %s434 = scalar_select %p433, %s23, 1
      %p435 = scmp.lt.s32.totalorder %s432, 15
      %s436 = scalar_select %p435, %s432, 15
      %s437 = smul.addr %s436, 2
      %s438 = smul.addr %s434, 32
      %s439 = sadd.s32 %s437, %s438
      %s440 = smul.addr %s439, 8
      %s441 = scalar_lea.vmem %s2, %s440
      %s442 = smul.u32 %s24, 16
      %s443 = sadd.s32 %s442, 16
      %p444 = scmp.lt.s32.totalorder %s443, 15
      %s445 = scalar_select %p444, %s443, 15
      %s446 = smul.u32 16, %s24
      %p447 = scmp.lt.s32.totalorder %s23, 1
      %s448 = scalar_select %p447, %s23, 1
      %p449 = scmp.lt.s32.totalorder %s446, 15
      %s450 = scalar_select %p449, %s446, 15
      %s451 = smul.addr %s450, 2
      %s452 = smul.addr %s448, 32
      %s453 = sadd.s32 %s451, %s452
      %s454 = smul.addr %s453, 8
      %s455 = scalar_lea.vmem %s6, %s454
      %s456 = smul.u32 16, %s24
      %s457 = sadd.s32 %s23, %s24
      %p458 = scmp.lt.s32.totalorder %s457, 1
      %s459 = scalar_select %p458, %s457, 1
      %s460 = smul.addr %s459, 2
      %s461 = scalar_lea.vmem %s7, %s460
      %s462 = sadd.s32 %s23, %s24
      %p463 = scmp.gt.s32.totalorder %s24, 0
      %s464 = scalar_select %p463, 1.0, 0.0
      %p465 = scmp.lt.s32.totalorder %s24, 0
      %s466 = scalar_select %p465, 1.0, 0.0
      %v467 = vld [vmem:[%s413] sm:$0xff]
      %v468 = vld [vmem:[%s413 + $0x8] sm:$0xff]
      %v469 = vld [vmem:[%s4] sm:$0x1]
      %v471 = vlaneseq
      %v472 = vshrl.u32 %v471, 7
      %v473 = vsub.s32 0, %v472
      %v474 = vrot.slane %v469, %v473
      %v476 = vmul.f32 %v467, %v474
      %v477 = vmul.f32 %v468, %v474
      %v478 = vld [vmem:[%s5] sm:$0x1]
      %v480 = vlaneseq
      %v481 = vshrl.u32 %v480, 7
      %v482 = vsub.s32 0, %v481
      %v483 = vrot.slane %v478, %v482
      %v485 = vadd.f32 %v476, %v483
      %v486 = vadd.f32 %v477, %v483
      %v487 = vmax.f32 %v485, 0.0
      %v488 = vmax.f32 %v486, 0.0
      %v489 = vstv %s464
      %v490 = vmul.f32 %v487, %v489
      %v491 = vmul.f32 %v488, %v489
      %v492 = vld [vmem:[%s427] sm:$0xff]
      %v493 = vld [vmem:[%s427 + $0x8] sm:$0xff]
      %v494 = vld [vmem:[%s427 + $0x10] sm:$0xff]
      %v495 = vld [vmem:[%s427 + $0x18] sm:$0xff]
      %v496 = vld [vmem:[%s427 + $0x20] sm:$0xff]
      %v497 = vld [vmem:[%s427 + $0x28] sm:$0xff]
      %v498 = vld [vmem:[%s427 + $0x30] sm:$0xff]
      %v499 = vld [vmem:[%s427 + $0x38] sm:$0xff]
      %v500 = vld [vmem:[%s427 + $0x40] sm:$0xff]
      %v501 = vld [vmem:[%s427 + $0x48] sm:$0xff]
      %v502 = vld [vmem:[%s427 + $0x50] sm:$0xff]
      %v503 = vld [vmem:[%s427 + $0x58] sm:$0xff]
      %v504 = vld [vmem:[%s427 + $0x60] sm:$0xff]
      %v505 = vld [vmem:[%s427 + $0x68] sm:$0xff]
      %v506 = vld [vmem:[%s427 + $0x70] sm:$0xff]
      %v507 = vld [vmem:[%s427 + $0x78] sm:$0xff]
      %v508 = vld [vmem:[%s427 + $0x80] sm:$0xff]
      %v509 = vld [vmem:[%s427 + $0x88] sm:$0xff]
      %v510 = vld [vmem:[%s427 + $0x90] sm:$0xff]
      %v511 = vld [vmem:[%s427 + $0x98] sm:$0xff]
      %v512 = vld [vmem:[%s427 + $0xa0] sm:$0xff]
      %v513 = vld [vmem:[%s427 + $0xa8] sm:$0xff]
      %v514 = vld [vmem:[%s427 + $0xb0] sm:$0xff]
      %v515 = vld [vmem:[%s427 + $0xb8] sm:$0xff]
      %v516 = vld [vmem:[%s427 + $0xc0] sm:$0xff]
      %v517 = vld [vmem:[%s427 + $0xc8] sm:$0xff]
      %v518 = vld [vmem:[%s427 + $0xd0] sm:$0xff]
      %v519 = vld [vmem:[%s427 + $0xd8] sm:$0xff]
      %v520 = vld [vmem:[%s427 + $0xe0] sm:$0xff]
      %v521 = vld [vmem:[%s427 + $0xe8] sm:$0xff]
      %v522 = vld [vmem:[%s427 + $0xf0] sm:$0xff]
      %v523 = vld [vmem:[%s427 + $0xf8] sm:$0xff]
      %v524 = vmul.f32 %v492, %v474
      %v525 = vmul.f32 %v493, %v474
      %v526 = vmul.f32 %v494, %v474
      %v527 = vmul.f32 %v495, %v474
      %v528 = vmul.f32 %v496, %v474
      %v529 = vmul.f32 %v497, %v474
      %v530 = vmul.f32 %v498, %v474
      %v531 = vmul.f32 %v499, %v474
      %v532 = vmul.f32 %v500, %v474
      %v533 = vmul.f32 %v501, %v474
      %v534 = vmul.f32 %v502, %v474
      %v535 = vmul.f32 %v503, %v474
      %v536 = vmul.f32 %v504, %v474
      %v537 = vmul.f32 %v505, %v474
      %v538 = vmul.f32 %v506, %v474
      %v539 = vmul.f32 %v507, %v474
      %v540 = vmul.f32 %v508, %v474
      %v541 = vmul.f32 %v509, %v474
      %v542 = vmul.f32 %v510, %v474
      %v543 = vmul.f32 %v511, %v474
      %v544 = vmul.f32 %v512, %v474
      %v545 = vmul.f32 %v513, %v474
      %v546 = vmul.f32 %v514, %v474
      %v547 = vmul.f32 %v515, %v474
      %v548 = vmul.f32 %v516, %v474
      %v549 = vmul.f32 %v517, %v474
      %v550 = vmul.f32 %v518, %v474
      %v551 = vmul.f32 %v519, %v474
      %v552 = vmul.f32 %v520, %v474
      %v553 = vmul.f32 %v521, %v474
      %v554 = vmul.f32 %v522, %v474
      %v555 = vmul.f32 %v523, %v474
      %v556 = vadd.f32 %v524, %v483
      %v557 = vadd.f32 %v525, %v483
      %v558 = vadd.f32 %v526, %v483
      %v559 = vadd.f32 %v527, %v483
      %v560 = vadd.f32 %v528, %v483
      %v561 = vadd.f32 %v529, %v483
      %v562 = vadd.f32 %v530, %v483
      %v563 = vadd.f32 %v531, %v483
      %v564 = vadd.f32 %v532, %v483
      %v565 = vadd.f32 %v533, %v483
      %v566 = vadd.f32 %v534, %v483
      %v567 = vadd.f32 %v535, %v483
      %v568 = vadd.f32 %v536, %v483
      %v569 = vadd.f32 %v537, %v483
      %v570 = vadd.f32 %v538, %v483
      %v571 = vadd.f32 %v539, %v483
      %v572 = vadd.f32 %v540, %v483
      %v573 = vadd.f32 %v541, %v483
      %v574 = vadd.f32 %v542, %v483
      %v575 = vadd.f32 %v543, %v483
      %v576 = vadd.f32 %v544, %v483
      %v577 = vadd.f32 %v545, %v483
      %v578 = vadd.f32 %v546, %v483
      %v579 = vadd.f32 %v547, %v483
      %v580 = vadd.f32 %v548, %v483
      %v581 = vadd.f32 %v549, %v483
      %v582 = vadd.f32 %v550, %v483
      %v583 = vadd.f32 %v551, %v483
      %v584 = vadd.f32 %v552, %v483
      %v585 = vadd.f32 %v553, %v483
      %v586 = vadd.f32 %v554, %v483
      %v587 = vadd.f32 %v555, %v483
      %v588 = vmax.f32 %v556, 0.0
      %v589 = vmax.f32 %v557, 0.0
      %v590 = vmax.f32 %v558, 0.0
      %v591 = vmax.f32 %v559, 0.0
      %v592 = vmax.f32 %v560, 0.0
      %v593 = vmax.f32 %v561, 0.0
      %v594 = vmax.f32 %v562, 0.0
      %v595 = vmax.f32 %v563, 0.0
      %v596 = vmax.f32 %v564, 0.0
      %v597 = vmax.f32 %v565, 0.0
      %v598 = vmax.f32 %v566, 0.0
      %v599 = vmax.f32 %v567, 0.0
      %v600 = vmax.f32 %v568, 0.0
      %v601 = vmax.f32 %v569, 0.0
      %v602 = vmax.f32 %v570, 0.0
      %v603 = vmax.f32 %v571, 0.0
      %v604 = vmax.f32 %v572, 0.0
      %v605 = vmax.f32 %v573, 0.0
      %v606 = vmax.f32 %v574, 0.0
      %v607 = vmax.f32 %v575, 0.0
      %v608 = vmax.f32 %v576, 0.0
      %v609 = vmax.f32 %v577, 0.0
      %v610 = vmax.f32 %v578, 0.0
      %v611 = vmax.f32 %v579, 0.0
      %v612 = vmax.f32 %v580, 0.0
      %v613 = vmax.f32 %v581, 0.0
      %v614 = vmax.f32 %v582, 0.0
      %v615 = vmax.f32 %v583, 0.0
      %v616 = vmax.f32 %v584, 0.0
      %v617 = vmax.f32 %v585, 0.0
      %v618 = vmax.f32 %v586, 0.0
      %v619 = vmax.f32 %v587, 0.0
      %v620 = vld [vmem:[%s441] sm:$0xff]
      %v621 = vld [vmem:[%s441 + $0x8] sm:$0xff]
      %v622 = vmul.f32 %v620, %v474
      %v623 = vmul.f32 %v621, %v474
      %v624 = vadd.f32 %v622, %v483
      %v625 = vadd.f32 %v623, %v483
      %v626 = vmax.f32 %v624, 0.0
      %v627 = vmax.f32 %v625, 0.0
      %v628 = vstv %s466
      %v629 = vmul.f32 %v626, %v628
      %v630 = vmul.f32 %v627, %v628
      %vm664 = vcmask 1040384
      %v665 = vrot.slane 0.0, 7
      %v666 = vrot.slane %v490, 7
      %v667 = vsel %vm664, %v665, %v666
      %v668 = vrot.slane %v491, 7
      %v669 = vsel %vm664, %v666, %v668
      %v670 = vrot.slane %v588, 7
      %v671 = vsel %vm664, %v665, %v670
      %v672 = vrot.slane %v589, 7
      %v673 = vsel %vm664, %v670, %v672
      %v674 = vrot.slane %v590, 7
      %v675 = vsel %vm664, %v665, %v674
      %v676 = vrot.slane %v591, 7
      %v677 = vsel %vm664, %v674, %v676
      %v678 = vrot.slane %v592, 7
      %v679 = vsel %vm664, %v665, %v678
      %v680 = vrot.slane %v593, 7
      %v681 = vsel %vm664, %v678, %v680
      %v682 = vrot.slane %v594, 7
      %v683 = vsel %vm664, %v665, %v682
      %v684 = vrot.slane %v595, 7
      %v685 = vsel %vm664, %v682, %v684
      %v686 = vrot.slane %v596, 7
      %v687 = vsel %vm664, %v665, %v686
      %v688 = vrot.slane %v597, 7
      %v689 = vsel %vm664, %v686, %v688
      %v690 = vrot.slane %v598, 7
      %v691 = vsel %vm664, %v665, %v690
      %v692 = vrot.slane %v599, 7
      %v693 = vsel %vm664, %v690, %v692
      %v694 = vrot.slane %v600, 7
      %v695 = vsel %vm664, %v665, %v694
      %v696 = vrot.slane %v601, 7
      %v697 = vsel %vm664, %v694, %v696
      %v698 = vrot.slane %v602, 7
      %v699 = vsel %vm664, %v665, %v698
      %v700 = vrot.slane %v603, 7
      %v701 = vsel %vm664, %v698, %v700
      %v702 = vrot.slane %v604, 7
      %v703 = vsel %vm664, %v665, %v702
      %v704 = vrot.slane %v605, 7
      %v705 = vsel %vm664, %v702, %v704
      %v706 = vrot.slane %v606, 7
      %v707 = vsel %vm664, %v665, %v706
      %v708 = vrot.slane %v607, 7
      %v709 = vsel %vm664, %v706, %v708
      %v710 = vrot.slane %v608, 7
      %v711 = vsel %vm664, %v665, %v710
      %v712 = vrot.slane %v609, 7
      %v713 = vsel %vm664, %v710, %v712
      %v714 = vrot.slane %v610, 7
      %v715 = vsel %vm664, %v665, %v714
      %v716 = vrot.slane %v611, 7
      %v717 = vsel %vm664, %v714, %v716
      %v718 = vrot.slane %v612, 7
      %v719 = vsel %vm664, %v665, %v718
      %v720 = vrot.slane %v613, 7
      %v721 = vsel %vm664, %v718, %v720
      %v722 = vrot.slane %v614, 7
      %v723 = vsel %vm664, %v665, %v722
      %v724 = vrot.slane %v615, 7
      %v725 = vsel %vm664, %v722, %v724
      %v726 = vrot.slane %v616, 7
      %v727 = vsel %vm664, %v665, %v726
      %v728 = vrot.slane %v617, 7
      %v729 = vsel %vm664, %v726, %v728
      %v730 = vld [vmem:[%s3] sm:$0xff]
      %s731 = scalar_lea.vmem %s3, 8
      %v732 = vld [vmem:[%s731] sm:$0xff]
      %vm733 = vcmask 64512
      %v734 = vsel %vm733, %v490, 0
      %v736 = vsel %vm733, %v491, 0
      %v738 = vsel %vm733, %v588, 0
      %v740 = vsel %vm733, %v589, 0
      %v742 = vsel %vm733, %v590, 0
      %v744 = vsel %vm733, %v591, 0
      %v746 = vsel %vm733, %v592, 0
      %v748 = vsel %vm733, %v593, 0
      %v750 = vsel %vm733, %v594, 0
      %v752 = vsel %vm733, %v595, 0
      %v754 = vsel %vm733, %v596, 0
      %v756 = vsel %vm733, %v597, 0
      %v758 = vsel %vm733, %v598, 0
      %v760 = vsel %vm733, %v599, 0
      %v762 = vsel %vm733, %v600, 0
      %v764 = vsel %vm733, %v601, 0
      %v766 = vsel %vm733, %v602, 0
      %v768 = vsel %vm733, %v603, 0
      %v770 = vsel %vm733, %v604, 0
      %v772 = vsel %vm733, %v605, 0
      %v774 = vsel %vm733, %v606, 0
      %v776 = vsel %vm733, %v607, 0
      %v778 = vsel %vm733, %v608, 0
      %v780 = vsel %vm733, %v609, 0
      %v782 = vsel %vm733, %v610, 0
      %v784 = vsel %vm733, %v611, 0
      %v786 = vsel %vm733, %v612, 0
      %v788 = vsel %vm733, %v613, 0
      %v790 = vsel %vm733, %v614, 0
      %v792 = vsel %vm733, %v615, 0
      %v794 = vsel %vm733, %v616, 0
      %v796 = vsel %vm733, %v617, 0
      %798 = vmatprep.subr.mxu0 0.0
      %799 = vmatpush1.msra.mxu0 %v732
      %800 = vmatprep.subr.mxu0 0.0
      %801 = vmatpush1.msra.mxu0 0.0
      %802 = vmatprep.subr.mxu0 0.0
      %803 = vmatpush1.msra.mxu0 0.0
      %804 = vmatprep.subr.mxu0 0.0
      %805 = vmatpush1.msra.mxu0 0.0
      %806 = vmatprep.subr.mxu0 0.0
      %807 = vmatpush1.msra.mxu0 0.0
      %808 = vmatprep.subr.mxu0 0.0
      %809 = vmatpush1.msra.mxu0 0.0
      %810 = vmatprep.subr.mxu0 0.0
      %811 = vmatpush1.msra.mxu0 0.0
      %812 = vmatprep.subr.mxu0 0.0
      %813 = vmatpush1.msra.mxu0 0.0
      %814 = vmatprep.subr.mxu0 0.0
      %815 = vmatpush1.msra.mxu0 0.0
      %816 = vmatprep.subr.mxu0 0.0
      %817 = vmatpush1.msra.mxu0 0.0
      %818 = vmatprep.subr.mxu0 0.0
      %819 = vmatpush1.msra.mxu0 0.0
      %820 = vmatprep.subr.mxu0 0.0
      %821 = vmatpush1.msra.mxu0 0.0
      %822 = vmatprep.subr.mxu0 0.0
      %823 = vmatpush1.msra.mxu0 0.0
      %824 = vmatprep.subr.mxu0 0.0
      %825 = vmatpush1.msra.mxu0 0.0
      %826 = vmatprep.subr.mxu0 0.0
      %827 = vmatpush1.msra.mxu0 0.0
      %828 = vmatprep.subr.mxu0 0.0
      %829 = vmatpush1.msra.mxu0 0.0
      %830 = vmatprep.subr.mxu0 0.0
      %831 = vmatpush1.msra.mxu0 0.0
      %832 = vmatprep.subr.mxu0 0.0
      %833 = vmatpush1.msra.mxu0 0.0
      %834 = vmatprep.subr.mxu0 0.0
      %835 = vmatpush1.msra.mxu0 0.0
      %836 = vmatprep.subr.mxu0 0.0
      %837 = vmatpush1.msra.mxu0 0.0
      %838 = vmatprep.subr.mxu0 0.0
      %839 = vmatpush1.msra.mxu0 0.0
      %840 = vmatprep.subr.mxu0 0.0
      %841 = vmatpush1.msra.mxu0 0.0
      %842 = vmatprep.subr.mxu0 0.0
      %843 = vmatpush1.msra.mxu0 0.0
      %844 = vmatprep.subr.mxu0 0.0
      %845 = vmatpush1.msra.mxu0 0.0
      %846 = vmatprep.subr.mxu0 0.0
      %847 = vmatpush1.msra.mxu0 0.0
      %848 = vmatprep.subr.mxu0 0.0
      %849 = vmatpush1.msra.mxu0 0.0
      %850 = vmatprep.subr.mxu0 0.0
      %851 = vmatpush1.msra.mxu0 0.0
      %852 = vmatprep.subr.mxu0 0.0
      %853 = vmatpush1.msra.mxu0 0.0
      %854 = vmatprep.subr.mxu0 0.0
      %855 = vmatpush1.msra.mxu0 0.0
      %856 = vmatprep.subr.mxu0 0.0
      %857 = vmatpush1.msra.mxu0 0.0
      %858 = vmatprep.subr.mxu0 0.0
      %859 = vmatpush1.msra.mxu0 0.0
      %860 = vmatprep.subr.mxu0 0.0
      %861 = vmatpush1.msra.mxu0 0.0
      %862 = vmatprep.mubr.f32.mxu0 0.0
      %863 = vmatmul.mubr.f32.gmra.mrb[0].mxu0 %v734
      %v864 = vpop.f32.mrb[0].mxu0
      %v865 = vadd.f32 0.0, %v864
      %v866 = vpop.f32.mrb[0].mxu0
      %867 = vmatprep.mubr.f32.mxu0 0.0
      %868 = vmatmul.mubr.f32.gmra.mrb[0].mxu0 %v736
      %v869 = vpop.f32.mrb[0].mxu0
      %v870 = vadd.f32 0.0, %v869
      %v871 = vpop.f32.mrb[0].mxu0
      %872 = vmatprep.mubr.f32.mxu0 0.0
      %873 = vmatmul.mubr.f32.gmra.mrb[0].mxu0 %v738
      %v874 = vpop.f32.mrb[0].mxu0
      %v875 = vadd.f32 0.0, %v874
      %v876 = vpop.f32.mrb[0].mxu0
      %877 = vmatprep.mubr.f32.mxu0 0.0
      %878 = vmatmul.mubr.f32.gmra.mrb[0].mxu0 %v740
      %v879 = vpop.f32.mrb[0].mxu0
      %v880 = vadd.f32 0.0, %v879
      %v881 = vpop.f32.mrb[0].mxu0
      %882 = vmatprep.mubr.f32.mxu0 0.0
      %883 = vmatmul.mubr.f32.gmra.mrb[0].mxu0 %v742
      %v884 = vpop.f32.mrb[0].mxu0
      %v885 = vadd.f32 0.0, %v884
      %v886 = vpop.f32.mrb[0].mxu0
      %887 = vmatprep.mubr.f32.mxu0 0.0
      %888 = vmatmul.mubr.f32.gmra.mrb[0].mxu0 %v744
      %v889 = vpop.f32.mrb[0].mxu0
      %v890 = vadd.f32 0.0, %v889
      %v891 = vpop.f32.mrb[0].mxu0
      %892 = vmatprep.mubr.f32.mxu0 0.0
      %893 = vmatmul.mubr.f32.gmra.mrb[0].mxu0 %v746
      %v894 = vpop.f32.mrb[0].mxu0
      %v895 = vadd.f32 0.0, %v894
      %v896 = vpop.f32.mrb[0].mxu0
      %897 = vmatprep.mubr.f32.mxu0 0.0
      %898 = vmatmul.mubr.f32.gmra.mrb[0].mxu0 %v748
      %v899 = vpop.f32.mrb[0].mxu0
      %v900 = vadd.f32 0.0, %v899
      %v901 = vpop.f32.mrb[0].mxu0
      %902 = vmatprep.mubr.f32.mxu0 0.0
      %903 = vmatmul.mubr.f32.gmra.mrb[0].mxu0 %v750
      %v904 = vpop.f32.mrb[0].mxu0
      %v905 = vadd.f32 0.0, %v904
      %v906 = vpop.f32.mrb[0].mxu0
      %907 = vmatprep.mubr.f32.mxu0 0.0
      %908 = vmatmul.mubr.f32.gmra.mrb[0].mxu0 %v752
      %v909 = vpop.f32.mrb[0].mxu0
      %v910 = vadd.f32 0.0, %v909
      %v911 = vpop.f32.mrb[0].mxu0
      %912 = vmatprep.mubr.f32.mxu0 0.0
      %913 = vmatmul.mubr.f32.gmra.mrb[0].mxu0 %v754
      %v914 = vpop.f32.mrb[0].mxu0
      %v915 = vadd.f32 0.0, %v914
      %v916 = vpop.f32.mrb[0].mxu0
      %917 = vmatprep.mubr.f32.mxu0 0.0
      %918 = vmatmul.mubr.f32.gmra.mrb[0].mxu0 %v756
      %v919 = vpop.f32.mrb[0].mxu0
      %v920 = vadd.f32 0.0, %v919
      %v921 = vpop.f32.mrb[0].mxu0
      %922 = vmatprep.mubr.f32.mxu0 0.0
      %923 = vmatmul.mubr.f32.gmra.mrb[0].mxu0 %v758
      %v924 = vpop.f32.mrb[0].mxu0
      %v925 = vadd.f32 0.0, %v924
      %v926 = vpop.f32.mrb[0].mxu0
      %927 = vmatprep.mubr.f32.mxu0 0.0
      %928 = vmatmul.mubr.f32.gmra.mrb[0].mxu0 %v760
      %v929 = vpop.f32.mrb[0].mxu0
      %v930 = vadd.f32 0.0, %v929
      %v931 = vpop.f32.mrb[0].mxu0
      %932 = vmatprep.mubr.f32.mxu0 0.0
      %933 = vmatmul.mubr.f32.gmra.mrb[0].mxu0 %v762
      %v934 = vpop.f32.mrb[0].mxu0
      %v935 = vadd.f32 0.0, %v934
      %v936 = vpop.f32.mrb[0].mxu0
      %937 = vmatprep.mubr.f32.mxu0 0.0
      %938 = vmatmul.mubr.f32.gmra.mrb[0].mxu0 %v764
      %v939 = vpop.f32.mrb[0].mxu0
      %v940 = vadd.f32 0.0, %v939
      %v941 = vpop.f32.mrb[0].mxu0
      %942 = vmatprep.mubr.f32.mxu0 0.0
      %943 = vmatmul.mubr.f32.gmra.mrb[0].mxu0 %v766
      %v944 = vpop.f32.mrb[0].mxu0
      %v945 = vadd.f32 0.0, %v944
      %v946 = vpop.f32.mrb[0].mxu0
      %947 = vmatprep.mubr.f32.mxu0 0.0
      %948 = vmatmul.mubr.f32.gmra.mrb[0].mxu0 %v768
      %v949 = vpop.f32.mrb[0].mxu0
      %v950 = vadd.f32 0.0, %v949
      %v951 = vpop.f32.mrb[0].mxu0
      %952 = vmatprep.mubr.f32.mxu0 0.0
      %953 = vmatmul.mubr.f32.gmra.mrb[0].mxu0 %v770
      %v954 = vpop.f32.mrb[0].mxu0
      %v955 = vadd.f32 0.0, %v954
      %v956 = vpop.f32.mrb[0].mxu0
      %957 = vmatprep.mubr.f32.mxu0 0.0
      %958 = vmatmul.mubr.f32.gmra.mrb[0].mxu0 %v772
      %v959 = vpop.f32.mrb[0].mxu0
      %v960 = vadd.f32 0.0, %v959
      %v961 = vpop.f32.mrb[0].mxu0
      %962 = vmatprep.mubr.f32.mxu0 0.0
      %963 = vmatmul.mubr.f32.gmra.mrb[0].mxu0 %v774
      %v964 = vpop.f32.mrb[0].mxu0
      %v965 = vadd.f32 0.0, %v964
      %v966 = vpop.f32.mrb[0].mxu0
      %967 = vmatprep.mubr.f32.mxu0 0.0
      %968 = vmatmul.mubr.f32.gmra.mrb[0].mxu0 %v776
      %v969 = vpop.f32.mrb[0].mxu0
      %v970 = vadd.f32 0.0, %v969
      %v971 = vpop.f32.mrb[0].mxu0
      %972 = vmatprep.mubr.f32.mxu0 0.0
      %973 = vmatmul.mubr.f32.gmra.mrb[0].mxu0 %v778
      %v974 = vpop.f32.mrb[0].mxu0
      %v975 = vadd.f32 0.0, %v974
      %v976 = vpop.f32.mrb[0].mxu0
      %977 = vmatprep.mubr.f32.mxu0 0.0
      %978 = vmatmul.mubr.f32.gmra.mrb[0].mxu0 %v780
      %v979 = vpop.f32.mrb[0].mxu0
      %v980 = vadd.f32 0.0, %v979
      %v981 = vpop.f32.mrb[0].mxu0
      %982 = vmatprep.mubr.f32.mxu0 0.0
      %983 = vmatmul.mubr.f32.gmra.mrb[0].mxu0 %v782
      %v984 = vpop.f32.mrb[0].mxu0
      %v985 = vadd.f32 0.0, %v984
      %v986 = vpop.f32.mrb[0].mxu0
      %987 = vmatprep.mubr.f32.mxu0 0.0
      %988 = vmatmul.mubr.f32.gmra.mrb[0].mxu0 %v784
      %v989 = vpop.f32.mrb[0].mxu0
      %v990 = vadd.f32 0.0, %v989
      %v991 = vpop.f32.mrb[0].mxu0
      %992 = vmatprep.mubr.f32.mxu0 0.0
      %993 = vmatmul.mubr.f32.gmra.mrb[0].mxu0 %v786
      %v994 = vpop.f32.mrb[0].mxu0
      %v995 = vadd.f32 0.0, %v994
      %v996 = vpop.f32.mrb[0].mxu0
      %997 = vmatprep.mubr.f32.mxu0 0.0
      %998 = vmatmul.mubr.f32.gmra.mrb[0].mxu0 %v788
      %v999 = vpop.f32.mrb[0].mxu0
      %v1000 = vadd.f32 0.0, %v999
      %v1001 = vpop.f32.mrb[0].mxu0
      %1002 = vmatprep.mubr.f32.mxu0 0.0
      %1003 = vmatmul.mubr.f32.gmra.mrb[0].mxu0 %v790
      %v1004 = vpop.f32.mrb[0].mxu0
      %v1005 = vadd.f32 0.0, %v1004
      %v1006 = vpop.f32.mrb[0].mxu0
      %1007 = vmatprep.mubr.f32.mxu0 0.0
      %1008 = vmatmul.mubr.f32.gmra.mrb[0].mxu0 %v792
      %v1009 = vpop.f32.mrb[0].mxu0
      %v1010 = vadd.f32 0.0, %v1009
      %v1011 = vpop.f32.mrb[0].mxu0
      %1012 = vmatprep.mubr.f32.mxu0 0.0
      %1013 = vmatmul.mubr.f32.gmra.mrb[0].mxu0 %v794
      %v1014 = vpop.f32.mrb[0].mxu0
      %v1015 = vadd.f32 0.0, %v1014
      %v1016 = vpop.f32.mrb[0].mxu0
      %1017 = vmatprep.mubr.f32.mxu0 0.0
      %1018 = vmatmul.mubr.f32.gmra.mrb[0].mxu0 %v796
      %v1019 = vpop.f32.mrb[0].mxu0
      %v1020 = vadd.f32 0.0, %v1019
      %v1021 = vpop.f32.mrb[0].mxu0
      %1022 = vdwg.mxu0
      %v1023 = vsel %vm733, %v667, 0
      %v1025 = vsel %vm733, %v669, 0
      %v1027 = vsel %vm733, %v671, 0
      %v1029 = vsel %vm733, %v673, 0
      %v1031 = vsel %vm733, %v675, 0
      %v1033 = vsel %vm733, %v677, 0
      %v1035 = vsel %vm733, %v679, 0
      %v1037 = vsel %vm733, %v681, 0
      %v1039 = vsel %vm733, %v683, 0
      %v1041 = vsel %vm733, %v685, 0
      %v1043 = vsel %vm733, %v687, 0
      %v1045 = vsel %vm733, %v689, 0
      %v1047 = vsel %vm733, %v691, 0
      %v1049 = vsel %vm733, %v693, 0
      %v1051 = vsel %vm733, %v695, 0
      %v1053 = vsel %vm733, %v697, 0
      %v1055 = vsel %vm733, %v699, 0
      %v1057 = vsel %vm733, %v701, 0
      %v1059 = vsel %vm733, %v703, 0
      %v1061 = vsel %vm733, %v705, 0
      %v1063 = vsel %vm733, %v707, 0
      %v1065 = vsel %vm733, %v709, 0
      %v1067 = vsel %vm733, %v711, 0
      %v1069 = vsel %vm733, %v713, 0
      %v1071 = vsel %vm733, %v715, 0
      %v1073 = vsel %vm733, %v717, 0
      %v1075 = vsel %vm733, %v719, 0
      %v1077 = vsel %vm733, %v721, 0
      %v1079 = vsel %vm733, %v723, 0
      %v1081 = vsel %vm733, %v725, 0
      %v1083 = vsel %vm733, %v727, 0
      %v1085 = vsel %vm733, %v729, 0
      %1087 = vmatprep.subr.mxu0 0.0
      %1088 = vmatpush1.msra.mxu0 %v730
      %1089 = vmatprep.subr.mxu0 0.0
      %1090 = vmatpush1.msra.mxu0 0.0
      %1091 = vmatprep.subr.mxu0 0.0
      %1092 = vmatpush1.msra.mxu0 0.0
      %1093 = vmatprep.subr.mxu0 0.0
      %1094 = vmatpush1.msra.mxu0 0.0
      %1095 = vmatprep.subr.mxu0 0.0
      %1096 = vmatpush1.msra.mxu0 0.0
      %1097 = vmatprep.subr.mxu0 0.0
      %1098 = vmatpush1.msra.mxu0 0.0
      %1099 = vmatprep.subr.mxu0 0.0
      %1100 = vmatpush1.msra.mxu0 0.0
      %1101 = vmatprep.subr.mxu0 0.0
      %1102 = vmatpush1.msra.mxu0 0.0
      %1103 = vmatprep.subr.mxu0 0.0
      %1104 = vmatpush1.msra.mxu0 0.0
      %1105 = vmatprep.subr.mxu0 0.0
      %1106 = vmatpush1.msra.mxu0 0.0
      %1107 = vmatprep.subr.mxu0 0.0
      %1108 = vmatpush1.msra.mxu0 0.0
      %1109 = vmatprep.subr.mxu0 0.0
      %1110 = vmatpush1.msra.mxu0 0.0
      %1111 = vmatprep.subr.mxu0 0.0
      %1112 = vmatpush1.msra.mxu0 0.0
      %1113 = vmatprep.subr.mxu0 0.0
      %1114 = vmatpush1.msra.mxu0 0.0
      %1115 = vmatprep.subr.mxu0 0.0
      %1116 = vmatpush1.msra.mxu0 0.0
      %1117 = vmatprep.subr.mxu0 0.0
      %1118 = vmatpush1.msra.mxu0 0.0
      %1119 = vmatprep.subr.mxu0 0.0
      %1120 = vmatpush1.msra.mxu0 0.0
      %1121 = vmatprep.subr.mxu0 0.0
      %1122 = vmatpush1.msra.mxu0 0.0
      %1123 = vmatprep.subr.mxu0 0.0
      %1124 = vmatpush1.msra.mxu0 0.0
      %1125 = vmatprep.subr.mxu0 0.0
      %1126 = vmatpush1.msra.mxu0 0.0
      %1127 = vmatprep.subr.mxu0 0.0
      %1128 = vmatpush1.msra.mxu0 0.0
      %1129 = vmatprep.subr.mxu0 0.0
      %1130 = vmatpush1.msra.mxu0 0.0
      %1131 = vmatprep.subr.mxu0 0.0
      %1132 = vmatpush1.msra.mxu0 0.0
      %1133 = vmatprep.subr.mxu0 0.0
      %1134 = vmatpush1.msra.mxu0 0.0
      %1135 = vmatprep.subr.mxu0 0.0
      %1136 = vmatpush1.msra.mxu0 0.0
      %1137 = vmatprep.subr.mxu0 0.0
      %1138 = vmatpush1.msra.mxu0 0.0
      %1139 = vmatprep.subr.mxu0 0.0
      %1140 = vmatpush1.msra.mxu0 0.0
      %1141 = vmatprep.subr.mxu0 0.0
      %1142 = vmatpush1.msra.mxu0 0.0
      %1143 = vmatprep.subr.mxu0 0.0
      %1144 = vmatpush1.msra.mxu0 0.0
      %1145 = vmatprep.subr.mxu0 0.0
      %1146 = vmatpush1.msra.mxu0 0.0
      %1147 = vmatprep.subr.mxu0 0.0
      %1148 = vmatpush1.msra.mxu0 0.0
      %1149 = vmatprep.subr.mxu0 0.0
      %1150 = vmatpush1.msra.mxu0 0.0
      %1151 = vmatprep.mubr.f32.mxu0 0.0
      %1152 = vmatmul.mubr.f32.gmra.mrb[0].mxu0 %v1023
      %v1153 = vpop.f32.mrb[0].mxu0
      %v1154 = vadd.f32 %v865, %v1153
      %v1155 = vpop.f32.mrb[0].mxu0
      %1156 = vmatprep.mubr.f32.mxu0 0.0
      %1157 = vmatmul.mubr.f32.gmra.mrb[0].mxu0 %v1025
      %v1158 = vpop.f32.mrb[0].mxu0
      %v1159 = vadd.f32 %v870, %v1158
      %v1160 = vpop.f32.mrb[0].mxu0
      %1161 = vmatprep.mubr.f32.mxu0 0.0
      %1162 = vmatmul.mubr.f32.gmra.mrb[0].mxu0 %v1027
      %v1163 = vpop.f32.mrb[0].mxu0
      %v1164 = vadd.f32 %v875, %v1163
      %v1165 = vpop.f32.mrb[0].mxu0
      %1166 = vmatprep.mubr.f32.mxu0 0.0
      %1167 = vmatmul.mubr.f32.gmra.mrb[0].mxu0 %v1029
      %v1168 = vpop.f32.mrb[0].mxu0
      %v1169 = vadd.f32 %v880, %v1168
      %v1170 = vpop.f32.mrb[0].mxu0
      %1171 = vmatprep.mubr.f32.mxu0 0.0
      %1172 = vmatmul.mubr.f32.gmra.mrb[0].mxu0 %v1031
      %v1173 = vpop.f32.mrb[0].mxu0
      %v1174 = vadd.f32 %v885, %v1173
      %v1175 = vpop.f32.mrb[0].mxu0
      %1176 = vmatprep.mubr.f32.mxu0 0.0
      %1177 = vmatmul.mubr.f32.gmra.mrb[0].mxu0 %v1033
      %v1178 = vpop.f32.mrb[0].mxu0
      %v1179 = vadd.f32 %v890, %v1178
      %v1180 = vpop.f32.mrb[0].mxu0
      %1181 = vmatprep.mubr.f32.mxu0 0.0
      %1182 = vmatmul.mubr.f32.gmra.mrb[0].mxu0 %v1035
      %v1183 = vpop.f32.mrb[0].mxu0
      %v1184 = vadd.f32 %v895, %v1183
      %v1185 = vpop.f32.mrb[0].mxu0
      %1186 = vmatprep.mubr.f32.mxu0 0.0
      %1187 = vmatmul.mubr.f32.gmra.mrb[0].mxu0 %v1037
      %v1188 = vpop.f32.mrb[0].mxu0
      %v1189 = vadd.f32 %v900, %v1188
      %v1190 = vpop.f32.mrb[0].mxu0
      %1191 = vmatprep.mubr.f32.mxu0 0.0
      %1192 = vmatmul.mubr.f32.gmra.mrb[0].mxu0 %v1039
      %v1193 = vpop.f32.mrb[0].mxu0
      %v1194 = vadd.f32 %v905, %v1193
      %v1195 = vpop.f32.mrb[0].mxu0
      %1196 = vmatprep.mubr.f32.mxu0 0.0
      %1197 = vmatmul.mubr.f32.gmra.mrb[0].mxu0 %v1041
      %v1198 = vpop.f32.mrb[0].mxu0
      %v1199 = vadd.f32 %v910, %v1198
      %v1200 = vpop.f32.mrb[0].mxu0
      %1201 = vmatprep.mubr.f32.mxu0 0.0
      %1202 = vmatmul.mubr.f32.gmra.mrb[0].mxu0 %v1043
      %v1203 = vpop.f32.mrb[0].mxu0
      %v1204 = vadd.f32 %v915, %v1203
      %v1205 = vpop.f32.mrb[0].mxu0
      %1206 = vmatprep.mubr.f32.mxu0 0.0
      %1207 = vmatmul.mubr.f32.gmra.mrb[0].mxu0 %v1045
      %v1208 = vpop.f32.mrb[0].mxu0
      %v1209 = vadd.f32 %v920, %v1208
      %v1210 = vpop.f32.mrb[0].mxu0
      %1211 = vmatprep.mubr.f32.mxu0 0.0
      %1212 = vmatmul.mubr.f32.gmra.mrb[0].mxu0 %v1047
      %v1213 = vpop.f32.mrb[0].mxu0
      %v1214 = vadd.f32 %v925, %v1213
      %v1215 = vpop.f32.mrb[0].mxu0
      %1216 = vmatprep.mubr.f32.mxu0 0.0
      %1217 = vmatmul.mubr.f32.gmra.mrb[0].mxu0 %v1049
      %v1218 = vpop.f32.mrb[0].mxu0
      %v1219 = vadd.f32 %v930, %v1218
      %v1220 = vpop.f32.mrb[0].mxu0
      %1221 = vmatprep.mubr.f32.mxu0 0.0
      %1222 = vmatmul.mubr.f32.gmra.mrb[0].mxu0 %v1051
      %v1223 = vpop.f32.mrb[0].mxu0
      %v1224 = vadd.f32 %v935, %v1223
      %v1225 = vpop.f32.mrb[0].mxu0
      %1226 = vmatprep.mubr.f32.mxu0 0.0
      %1227 = vmatmul.mubr.f32.gmra.mrb[0].mxu0 %v1053
      %v1228 = vpop.f32.mrb[0].mxu0
      %v1229 = vadd.f32 %v940, %v1228
      %v1230 = vpop.f32.mrb[0].mxu0
      %1231 = vmatprep.mubr.f32.mxu0 0.0
      %1232 = vmatmul.mubr.f32.gmra.mrb[0].mxu0 %v1055
      %v1233 = vpop.f32.mrb[0].mxu0
      %v1234 = vadd.f32 %v945, %v1233
      %v1235 = vpop.f32.mrb[0].mxu0
      %1236 = vmatprep.mubr.f32.mxu0 0.0
      %1237 = vmatmul.mubr.f32.gmra.mrb[0].mxu0 %v1057
      %v1238 = vpop.f32.mrb[0].mxu0
      %v1239 = vadd.f32 %v950, %v1238
      %v1240 = vpop.f32.mrb[0].mxu0
      %1241 = vmatprep.mubr.f32.mxu0 0.0
      %1242 = vmatmul.mubr.f32.gmra.mrb[0].mxu0 %v1059
      %v1243 = vpop.f32.mrb[0].mxu0
      %v1244 = vadd.f32 %v955, %v1243
      %v1245 = vpop.f32.mrb[0].mxu0
      %1246 = vmatprep.mubr.f32.mxu0 0.0
      %1247 = vmatmul.mubr.f32.gmra.mrb[0].mxu0 %v1061
      %v1248 = vpop.f32.mrb[0].mxu0
      %v1249 = vadd.f32 %v960, %v1248
      %v1250 = vpop.f32.mrb[0].mxu0
      %1251 = vmatprep.mubr.f32.mxu0 0.0
      %1252 = vmatmul.mubr.f32.gmra.mrb[0].mxu0 %v1063
      %v1253 = vpop.f32.mrb[0].mxu0
      %v1254 = vadd.f32 %v965, %v1253
      %v1255 = vpop.f32.mrb[0].mxu0
      %1256 = vmatprep.mubr.f32.mxu0 0.0
      %1257 = vmatmul.mubr.f32.gmra.mrb[0].mxu0 %v1065
      %v1258 = vpop.f32.mrb[0].mxu0
      %v1259 = vadd.f32 %v970, %v1258
      %v1260 = vpop.f32.mrb[0].mxu0
      %1261 = vmatprep.mubr.f32.mxu0 0.0
      %1262 = vmatmul.mubr.f32.gmra.mrb[0].mxu0 %v1067
      %v1263 = vpop.f32.mrb[0].mxu0
      %v1264 = vadd.f32 %v975, %v1263
      %v1265 = vpop.f32.mrb[0].mxu0
      %1266 = vmatprep.mubr.f32.mxu0 0.0
      %1267 = vmatmul.mubr.f32.gmra.mrb[0].mxu0 %v1069
      %v1268 = vpop.f32.mrb[0].mxu0
      %v1269 = vadd.f32 %v980, %v1268
      %v1270 = vpop.f32.mrb[0].mxu0
      %1271 = vmatprep.mubr.f32.mxu0 0.0
      %1272 = vmatmul.mubr.f32.gmra.mrb[0].mxu0 %v1071
      %v1273 = vpop.f32.mrb[0].mxu0
      %v1274 = vadd.f32 %v985, %v1273
      %v1275 = vpop.f32.mrb[0].mxu0
      %1276 = vmatprep.mubr.f32.mxu0 0.0
      %1277 = vmatmul.mubr.f32.gmra.mrb[0].mxu0 %v1073
      %v1278 = vpop.f32.mrb[0].mxu0
      %v1279 = vadd.f32 %v990, %v1278
      %v1280 = vpop.f32.mrb[0].mxu0
      %1281 = vmatprep.mubr.f32.mxu0 0.0
      %1282 = vmatmul.mubr.f32.gmra.mrb[0].mxu0 %v1075
      %v1283 = vpop.f32.mrb[0].mxu0
      %v1284 = vadd.f32 %v995, %v1283
      %v1285 = vpop.f32.mrb[0].mxu0
      %1286 = vmatprep.mubr.f32.mxu0 0.0
      %1287 = vmatmul.mubr.f32.gmra.mrb[0].mxu0 %v1077
      %v1288 = vpop.f32.mrb[0].mxu0
      %v1289 = vadd.f32 %v1000, %v1288
      %v1290 = vpop.f32.mrb[0].mxu0
      %1291 = vmatprep.mubr.f32.mxu0 0.0
      %1292 = vmatmul.mubr.f32.gmra.mrb[0].mxu0 %v1079
      %v1293 = vpop.f32.mrb[0].mxu0
      %v1294 = vadd.f32 %v1005, %v1293
      %v1295 = vpop.f32.mrb[0].mxu0
      %1296 = vmatprep.mubr.f32.mxu0 0.0
      %1297 = vmatmul.mubr.f32.gmra.mrb[0].mxu0 %v1081
      %v1298 = vpop.f32.mrb[0].mxu0
      %v1299 = vadd.f32 %v1010, %v1298
      %v1300 = vpop.f32.mrb[0].mxu0
      %1301 = vmatprep.mubr.f32.mxu0 0.0
      %1302 = vmatmul.mubr.f32.gmra.mrb[0].mxu0 %v1083
      %v1303 = vpop.f32.mrb[0].mxu0
      %v1304 = vadd.f32 %v1015, %v1303
      %v1305 = vpop.f32.mrb[0].mxu0
      %1306 = vmatprep.mubr.f32.mxu0 0.0
      %1307 = vmatmul.mubr.f32.gmra.mrb[0].mxu0 %v1085
      %v1308 = vpop.f32.mrb[0].mxu0
      %v1309 = vadd.f32 %v1020, %v1308
      %v1310 = vpop.f32.mrb[0].mxu0
      %1311 = vdwg.mxu0
      %vm1312 = vcmask 1046528
      %v1313 = vrot.slane %v490, 1
      %v1314 = vrot.slane %v491, 1
      %v1315 = vsel %vm1312, %v1313, %v1314
      %v1316 = vrot.slane 0.0, 1
      %v1317 = vsel %vm1312, %v1314, %v1316
      %v1318 = vrot.slane %v588, 1
      %v1319 = vrot.slane %v589, 1
      %v1320 = vsel %vm1312, %v1318, %v1319
      %v1321 = vsel %vm1312, %v1319, %v1316
      %v1322 = vrot.slane %v590, 1
      %v1323 = vrot.slane %v591, 1
      %v1324 = vsel %vm1312, %v1322, %v1323
      %v1325 = vsel %vm1312, %v1323, %v1316
      %v1326 = vrot.slane %v592, 1
      %v1327 = vrot.slane %v593, 1
      %v1328 = vsel %vm1312, %v1326, %v1327
      %v1329 = vsel %vm1312, %v1327, %v1316
      %v1330 = vrot.slane %v594, 1
      %v1331 = vrot.slane %v595, 1
      %v1332 = vsel %vm1312, %v1330, %v1331
      %v1333 = vsel %vm1312, %v1331, %v1316
      %v1334 = vrot.slane %v596, 1
      %v1335 = vrot.slane %v597, 1
      %v1336 = vsel %vm1312, %v1334, %v1335
      %v1337 = vsel %vm1312, %v1335, %v1316
      %v1338 = vrot.slane %v598, 1
      %v1339 = vrot.slane %v599, 1
      %v1340 = vsel %vm1312, %v1338, %v1339
      %v1341 = vsel %vm1312, %v1339, %v1316
      %v1342 = vrot.slane %v600, 1
      %v1343 = vrot.slane %v601, 1
      %v1344 = vsel %vm1312, %v1342, %v1343
      %v1345 = vsel %vm1312, %v1343, %v1316
      %v1346 = vrot.slane %v602, 1
      %v1347 = vrot.slane %v603, 1
      %v1348 = vsel %vm1312, %v1346, %v1347
      %v1349 = vsel %vm1312, %v1347, %v1316
      %v1350 = vrot.slane %v604, 1
      %v1351 = vrot.slane %v605, 1
      %v1352 = vsel %vm1312, %v1350, %v1351
      %v1353 = vsel %vm1312, %v1351, %v1316
      %v1354 = vrot.slane %v606, 1
      %v1355 = vrot.slane %v607, 1
      %v1356 = vsel %vm1312, %v1354, %v1355
      %v1357 = vsel %vm1312, %v1355, %v1316
      %v1358 = vrot.slane %v608, 1
      %v1359 = vrot.slane %v609, 1
      %v1360 = vsel %vm1312, %v1358, %v1359
      %v1361 = vsel %vm1312, %v1359, %v1316
      %v1362 = vrot.slane %v610, 1
      %v1363 = vrot.slane %v611, 1
      %v1364 = vsel %vm1312, %v1362, %v1363
      %v1365 = vsel %vm1312, %v1363, %v1316
      %v1366 = vrot.slane %v612, 1
      %v1367 = vrot.slane %v613, 1
      %v1368 = vsel %vm1312, %v1366, %v1367
      %v1369 = vsel %vm1312, %v1367, %v1316
      %v1370 = vrot.slane %v614, 1
      %v1371 = vrot.slane %v615, 1
      %v1372 = vsel %vm1312, %v1370, %v1371
      %v1373 = vsel %vm1312, %v1371, %v1316
      %v1374 = vrot.slane %v616, 1
      %v1375 = vrot.slane %v617, 1
      %v1376 = vsel %vm1312, %v1374, %v1375
      %v1377 = vsel %vm1312, %v1375, %v1316
      %s1378 = scalar_lea.vmem %s3, 16
      %v1379 = vld [vmem:[%s1378] sm:$0xff]
      %v1380 = vsel %vm733, %v1315, 0
      %v1382 = vsel %vm733, %v1317, 0
      %v1384 = vsel %vm733, %v1320, 0
      %v1386 = vsel %vm733, %v1321, 0
      %v1388 = vsel %vm733, %v1324, 0
      %v1390 = vsel %vm733, %v1325, 0
      %v1392 = vsel %vm733, %v1328, 0
      %v1394 = vsel %vm733, %v1329, 0
      %v1396 = vsel %vm733, %v1332, 0
      %v1398 = vsel %vm733, %v1333, 0
      %v1400 = vsel %vm733, %v1336, 0
      %v1402 = vsel %vm733, %v1337, 0
      %v1404 = vsel %vm733, %v1340, 0
      %v1406 = vsel %vm733, %v1341, 0
      %v1408 = vsel %vm733, %v1344, 0
      %v1410 = vsel %vm733, %v1345, 0
      %v1412 = vsel %vm733, %v1348, 0
      %v1414 = vsel %vm733, %v1349, 0
      %v1416 = vsel %vm733, %v1352, 0
      %v1418 = vsel %vm733, %v1353, 0
      %v1420 = vsel %vm733, %v1356, 0
      %v1422 = vsel %vm733, %v1357, 0
      %v1424 = vsel %vm733, %v1360, 0
      %v1426 = vsel %vm733, %v1361, 0
      %v1428 = vsel %vm733, %v1364, 0
      %v1430 = vsel %vm733, %v1365, 0
      %v1432 = vsel %vm733, %v1368, 0
      %v1434 = vsel %vm733, %v1369, 0
      %v1436 = vsel %vm733, %v1372, 0
      %v1438 = vsel %vm733, %v1373, 0
      %v1440 = vsel %vm733, %v1376, 0
      %v1442 = vsel %vm733, %v1377, 0
      %1444 = vmatprep.subr.mxu0 0.0
      %1445 = vmatpush1.msra.mxu0 %v1379
      %1446 = vmatprep.subr.mxu0 0.0
      %1447 = vmatpush1.msra.mxu0 0.0
      %1448 = vmatprep.subr.mxu0 0.0
      %1449 = vmatpush1.msra.mxu0 0.0
      %1450 = vmatprep.subr.mxu0 0.0
      %1451 = vmatpush1.msra.mxu0 0.0
      %1452 = vmatprep.subr.mxu0 0.0
      %1453 = vmatpush1.msra.mxu0 0.0
      %1454 = vmatprep.subr.mxu0 0.0
      %1455 = vmatpush1.msra.mxu0 0.0
      %1456 = vmatprep.subr.mxu0 0.0
      %1457 = vmatpush1.msra.mxu0 0.0
      %1458 = vmatprep.subr.mxu0 0.0
      %1459 = vmatpush1.msra.mxu0 0.0
      %1460 = vmatprep.subr.mxu0 0.0
      %1461 = vmatpush1.msra.mxu0 0.0
      %1462 = vmatprep.subr.mxu0 0.0
      %1463 = vmatpush1.msra.mxu0 0.0
      %1464 = vmatprep.subr.mxu0 0.0
      %1465 = vmatpush1.msra.mxu0 0.0
      %1466 = vmatprep.subr.mxu0 0.0
      %1467 = vmatpush1.msra.mxu0 0.0
      %1468 = vmatprep.subr.mxu0 0.0
      %1469 = vmatpush1.msra.mxu0 0.0
      %1470 = vmatprep.subr.mxu0 0.0
      %1471 = vmatpush1.msra.mxu0 0.0
      %1472 = vmatprep.subr.mxu0 0.0
      %1473 = vmatpush1.msra.mxu0 0.0
      %1474 = vmatprep.subr.mxu0 0.0
      %1475 = vmatpush1.msra.mxu0 0.0
      %1476 = vmatprep.subr.mxu0 0.0
      %1477 = vmatpush1.msra.mxu0 0.0
      %1478 = vmatprep.subr.mxu0 0.0
      %1479 = vmatpush1.msra.mxu0 0.0
      %1480 = vmatprep.subr.mxu0 0.0
      %1481 = vmatpush1.msra.mxu0 0.0
      %1482 = vmatprep.subr.mxu0 0.0
      %1483 = vmatpush1.msra.mxu0 0.0
      %1484 = vmatprep.subr.mxu0 0.0
      %1485 = vmatpush1.msra.mxu0 0.0
      %1486 = vmatprep.subr.mxu0 0.0
      %1487 = vmatpush1.msra.mxu0 0.0
      %1488 = vmatprep.subr.mxu0 0.0
      %1489 = vmatpush1.msra.mxu0 0.0
      %1490 = vmatprep.subr.mxu0 0.0
      %1491 = vmatpush1.msra.mxu0 0.0
      %1492 = vmatprep.subr.mxu0 0.0
      %1493 = vmatpush1.msra.mxu0 0.0
      %1494 = vmatprep.subr.mxu0 0.0
      %1495 = vmatpush1.msra.mxu0 0.0
      %1496 = vmatprep.subr.mxu0 0.0
      %1497 = vmatpush1.msra.mxu0 0.0
      %1498 = vmatprep.subr.mxu0 0.0
      %1499 = vmatpush1.msra.mxu0 0.0
      %1500 = vmatprep.subr.mxu0 0.0
      %1501 = vmatpush1.msra.mxu0 0.0
      %1502 = vmatprep.subr.mxu0 0.0
      %1503 = vmatpush1.msra.mxu0 0.0
      %1504 = vmatprep.subr.mxu0 0.0
      %1505 = vmatpush1.msra.mxu0 0.0
      %1506 = vmatprep.subr.mxu0 0.0
      %1507 = vmatpush1.msra.mxu0 0.0
      %1508 = vmatprep.mubr.f32.mxu0 0.0
      %1509 = vmatmul.mubr.f32.gmra.mrb[0].mxu0 %v1380
      %v1510 = vpop.f32.mrb[0].mxu0
      %v1511 = vadd.f32 0.0, %v1510
      %v1512 = vpop.f32.mrb[0].mxu0
      %1513 = vmatprep.mubr.f32.mxu0 0.0
      %1514 = vmatmul.mubr.f32.gmra.mrb[0].mxu0 %v1382
      %v1515 = vpop.f32.mrb[0].mxu0
      %v1516 = vadd.f32 0.0, %v1515
      %v1517 = vpop.f32.mrb[0].mxu0
      %1518 = vmatprep.mubr.f32.mxu0 0.0
      %1519 = vmatmul.mubr.f32.gmra.mrb[0].mxu0 %v1384
      %v1520 = vpop.f32.mrb[0].mxu0
      %v1521 = vadd.f32 0.0, %v1520
      %v1522 = vpop.f32.mrb[0].mxu0
      %1523 = vmatprep.mubr.f32.mxu0 0.0
      %1524 = vmatmul.mubr.f32.gmra.mrb[0].mxu0 %v1386
      %v1525 = vpop.f32.mrb[0].mxu0
      %v1526 = vadd.f32 0.0, %v1525
      %v1527 = vpop.f32.mrb[0].mxu0
      %1528 = vmatprep.mubr.f32.mxu0 0.0
      %1529 = vmatmul.mubr.f32.gmra.mrb[0].mxu0 %v1388
      %v1530 = vpop.f32.mrb[0].mxu0
      %v1531 = vadd.f32 0.0, %v1530
      %v1532 = vpop.f32.mrb[0].mxu0
      %1533 = vmatprep.mubr.f32.mxu0 0.0
      %1534 = vmatmul.mubr.f32.gmra.mrb[0].mxu0 %v1390
      %v1535 = vpop.f32.mrb[0].mxu0
      %v1536 = vadd.f32 0.0, %v1535
      %v1537 = vpop.f32.mrb[0].mxu0
      %1538 = vmatprep.mubr.f32.mxu0 0.0
      %1539 = vmatmul.mubr.f32.gmra.mrb[0].mxu0 %v1392
      %v1540 = vpop.f32.mrb[0].mxu0
      %v1541 = vadd.f32 0.0, %v1540
      %v1542 = vpop.f32.mrb[0].mxu0
      %1543 = vmatprep.mubr.f32.mxu0 0.0
      %1544 = vmatmul.mubr.f32.gmra.mrb[0].mxu0 %v1394
      %v1545 = vpop.f32.mrb[0].mxu0
      %v1546 = vadd.f32 0.0, %v1545
      %v1547 = vpop.f32.mrb[0].mxu0
      %1548 = vmatprep.mubr.f32.mxu0 0.0
      %1549 = vmatmul.mubr.f32.gmra.mrb[0].mxu0 %v1396
      %v1550 = vpop.f32.mrb[0].mxu0
      %v1551 = vadd.f32 0.0, %v1550
      %v1552 = vpop.f32.mrb[0].mxu0
      %1553 = vmatprep.mubr.f32.mxu0 0.0
      %1554 = vmatmul.mubr.f32.gmra.mrb[0].mxu0 %v1398
      %v1555 = vpop.f32.mrb[0].mxu0
      %v1556 = vadd.f32 0.0, %v1555
      %v1557 = vpop.f32.mrb[0].mxu0
      %1558 = vmatprep.mubr.f32.mxu0 0.0
      %1559 = vmatmul.mubr.f32.gmra.mrb[0].mxu0 %v1400
      %v1560 = vpop.f32.mrb[0].mxu0
      %v1561 = vadd.f32 0.0, %v1560
      %v1562 = vpop.f32.mrb[0].mxu0
      %1563 = vmatprep.mubr.f32.mxu0 0.0
      %1564 = vmatmul.mubr.f32.gmra.mrb[0].mxu0 %v1402
      %v1565 = vpop.f32.mrb[0].mxu0
      %v1566 = vadd.f32 0.0, %v1565
      %v1567 = vpop.f32.mrb[0].mxu0
      %1568 = vmatprep.mubr.f32.mxu0 0.0
      %1569 = vmatmul.mubr.f32.gmra.mrb[0].mxu0 %v1404
      %v1570 = vpop.f32.mrb[0].mxu0
      %v1571 = vadd.f32 0.0, %v1570
      %v1572 = vpop.f32.mrb[0].mxu0
      %1573 = vmatprep.mubr.f32.mxu0 0.0
      %1574 = vmatmul.mubr.f32.gmra.mrb[0].mxu0 %v1406
      %v1575 = vpop.f32.mrb[0].mxu0
      %v1576 = vadd.f32 0.0, %v1575
      %v1577 = vpop.f32.mrb[0].mxu0
      %1578 = vmatprep.mubr.f32.mxu0 0.0
      %1579 = vmatmul.mubr.f32.gmra.mrb[0].mxu0 %v1408
      %v1580 = vpop.f32.mrb[0].mxu0
      %v1581 = vadd.f32 0.0, %v1580
      %v1582 = vpop.f32.mrb[0].mxu0
      %1583 = vmatprep.mubr.f32.mxu0 0.0
      %1584 = vmatmul.mubr.f32.gmra.mrb[0].mxu0 %v1410
      %v1585 = vpop.f32.mrb[0].mxu0
      %v1586 = vadd.f32 0.0, %v1585
      %v1587 = vpop.f32.mrb[0].mxu0
      %1588 = vmatprep.mubr.f32.mxu0 0.0
      %1589 = vmatmul.mubr.f32.gmra.mrb[0].mxu0 %v1412
      %v1590 = vpop.f32.mrb[0].mxu0
      %v1591 = vadd.f32 0.0, %v1590
      %v1592 = vpop.f32.mrb[0].mxu0
      %1593 = vmatprep.mubr.f32.mxu0 0.0
      %1594 = vmatmul.mubr.f32.gmra.mrb[0].mxu0 %v1414
      %v1595 = vpop.f32.mrb[0].mxu0
      %v1596 = vadd.f32 0.0, %v1595
      %v1597 = vpop.f32.mrb[0].mxu0
      %1598 = vmatprep.mubr.f32.mxu0 0.0
      %1599 = vmatmul.mubr.f32.gmra.mrb[0].mxu0 %v1416
      %v1600 = vpop.f32.mrb[0].mxu0
      %v1601 = vadd.f32 0.0, %v1600
      %v1602 = vpop.f32.mrb[0].mxu0
      %1603 = vmatprep.mubr.f32.mxu0 0.0
      %1604 = vmatmul.mubr.f32.gmra.mrb[0].mxu0 %v1418
      %v1605 = vpop.f32.mrb[0].mxu0
      %v1606 = vadd.f32 0.0, %v1605
      %v1607 = vpop.f32.mrb[0].mxu0
      %1608 = vmatprep.mubr.f32.mxu0 0.0
      %1609 = vmatmul.mubr.f32.gmra.mrb[0].mxu0 %v1420
      %v1610 = vpop.f32.mrb[0].mxu0
      %v1611 = vadd.f32 0.0, %v1610
      %v1612 = vpop.f32.mrb[0].mxu0
      %1613 = vmatprep.mubr.f32.mxu0 0.0
      %1614 = vmatmul.mubr.f32.gmra.mrb[0].mxu0 %v1422
      %v1615 = vpop.f32.mrb[0].mxu0
      %v1616 = vadd.f32 0.0, %v1615
      %v1617 = vpop.f32.mrb[0].mxu0
      %1618 = vmatprep.mubr.f32.mxu0 0.0
      %1619 = vmatmul.mubr.f32.gmra.mrb[0].mxu0 %v1424
      %v1620 = vpop.f32.mrb[0].mxu0
      %v1621 = vadd.f32 0.0, %v1620
      %v1622 = vpop.f32.mrb[0].mxu0
      %1623 = vmatprep.mubr.f32.mxu0 0.0
      %1624 = vmatmul.mubr.f32.gmra.mrb[0].mxu0 %v1426
      %v1625 = vpop.f32.mrb[0].mxu0
      %v1626 = vadd.f32 0.0, %v1625
      %v1627 = vpop.f32.mrb[0].mxu0
      %1628 = vmatprep.mubr.f32.mxu0 0.0
      %1629 = vmatmul.mubr.f32.gmra.mrb[0].mxu0 %v1428
      %v1630 = vpop.f32.mrb[0].mxu0
      %v1631 = vadd.f32 0.0, %v1630
      %v1632 = vpop.f32.mrb[0].mxu0
      %1633 = vmatprep.mubr.f32.mxu0 0.0
      %1634 = vmatmul.mubr.f32.gmra.mrb[0].mxu0 %v1430
      %v1635 = vpop.f32.mrb[0].mxu0
      %v1636 = vadd.f32 0.0, %v1635
      %v1637 = vpop.f32.mrb[0].mxu0
      %1638 = vmatprep.mubr.f32.mxu0 0.0
      %1639 = vmatmul.mubr.f32.gmra.mrb[0].mxu0 %v1432
      %v1640 = vpop.f32.mrb[0].mxu0
      %v1641 = vadd.f32 0.0, %v1640
      %v1642 = vpop.f32.mrb[0].mxu0
      %1643 = vmatprep.mubr.f32.mxu0 0.0
      %1644 = vmatmul.mubr.f32.gmra.mrb[0].mxu0 %v1434
      %v1645 = vpop.f32.mrb[0].mxu0
      %v1646 = vadd.f32 0.0, %v1645
      %v1647 = vpop.f32.mrb[0].mxu0
      %1648 = vmatprep.mubr.f32.mxu0 0.0
      %1649 = vmatmul.mubr.f32.gmra.mrb[0].mxu0 %v1436
      %v1650 = vpop.f32.mrb[0].mxu0
      %v1651 = vadd.f32 0.0, %v1650
      %v1652 = vpop.f32.mrb[0].mxu0
      %1653 = vmatprep.mubr.f32.mxu0 0.0
      %1654 = vmatmul.mubr.f32.gmra.mrb[0].mxu0 %v1438
      %v1655 = vpop.f32.mrb[0].mxu0
      %v1656 = vadd.f32 0.0, %v1655
      %v1657 = vpop.f32.mrb[0].mxu0
      %1658 = vmatprep.mubr.f32.mxu0 0.0
      %1659 = vmatmul.mubr.f32.gmra.mrb[0].mxu0 %v1440
      %v1660 = vpop.f32.mrb[0].mxu0
      %v1661 = vadd.f32 0.0, %v1660
      %v1662 = vpop.f32.mrb[0].mxu0
      %1663 = vmatprep.mubr.f32.mxu0 0.0
      %1664 = vmatmul.mubr.f32.gmra.mrb[0].mxu0 %v1442
      %v1665 = vpop.f32.mrb[0].mxu0
      %v1666 = vadd.f32 0.0, %v1665
      %v1667 = vpop.f32.mrb[0].mxu0
      %1668 = vdwg.mxu0
      %v1669 = vadd.f32 %v1154, %v1511
      %v1670 = vadd.f32 %v1159, %v1516
      %v1671 = vadd.f32 %v1164, %v1521
      %v1672 = vadd.f32 %v1169, %v1526
      %v1673 = vadd.f32 %v1174, %v1531
      %v1674 = vadd.f32 %v1179, %v1536
      %v1675 = vadd.f32 %v1184, %v1541
      %v1676 = vadd.f32 %v1189, %v1546
      %v1677 = vadd.f32 %v1194, %v1551
      %v1678 = vadd.f32 %v1199, %v1556
      %v1679 = vadd.f32 %v1204, %v1561
      %v1680 = vadd.f32 %v1209, %v1566
      %v1681 = vadd.f32 %v1214, %v1571
      %v1682 = vadd.f32 %v1219, %v1576
      %v1683 = vadd.f32 %v1224, %v1581
      %v1684 = vadd.f32 %v1229, %v1586
      %v1685 = vadd.f32 %v1234, %v1591
      %v1686 = vadd.f32 %v1239, %v1596
      %v1687 = vadd.f32 %v1244, %v1601
      %v1688 = vadd.f32 %v1249, %v1606
      %v1689 = vadd.f32 %v1254, %v1611
      %v1690 = vadd.f32 %v1259, %v1616
      %v1691 = vadd.f32 %v1264, %v1621
      %v1692 = vadd.f32 %v1269, %v1626
      %v1693 = vadd.f32 %v1274, %v1631
      %v1694 = vadd.f32 %v1279, %v1636
      %v1695 = vadd.f32 %v1284, %v1641
      %v1696 = vadd.f32 %v1289, %v1646
      %v1697 = vadd.f32 %v1294, %v1651
      %v1698 = vadd.f32 %v1299, %v1656
      %v1699 = vadd.f32 %v1304, %v1661
      %v1700 = vadd.f32 %v1309, %v1666
      %v1703 = vrot.slane %v618, 7
      %v1704 = vsel %vm664, %v665, %v1703
      %v1705 = vrot.slane %v619, 7
      %v1706 = vsel %vm664, %v1703, %v1705
      %s1707 = scalar_lea.vmem %s3, 24
      %v1708 = vld [vmem:[%s1707] sm:$0xff]
      %v1709 = vsel %vm733, %v1704, 0
      %v1711 = vsel %vm733, %v1706, 0
      %1713 = vmatprep.subr.mxu0 0.0
      %1714 = vmatpush1.msra.mxu0 %v1708
      %1715 = vmatprep.subr.mxu0 0.0
      %1716 = vmatpush1.msra.mxu0 0.0
      %1717 = vmatprep.subr.mxu0 0.0
      %1718 = vmatpush1.msra.mxu0 0.0
      %1719 = vmatprep.subr.mxu0 0.0
      %1720 = vmatpush1.msra.mxu0 0.0
      %1721 = vmatprep.subr.mxu0 0.0
      %1722 = vmatpush1.msra.mxu0 0.0
      %1723 = vmatprep.subr.mxu0 0.0
      %1724 = vmatpush1.msra.mxu0 0.0
      %1725 = vmatprep.subr.mxu0 0.0
      %1726 = vmatpush1.msra.mxu0 0.0
      %1727 = vmatprep.subr.mxu0 0.0
      %1728 = vmatpush1.msra.mxu0 0.0
      %1729 = vmatprep.subr.mxu0 0.0
      %1730 = vmatpush1.msra.mxu0 0.0
      %1731 = vmatprep.subr.mxu0 0.0
      %1732 = vmatpush1.msra.mxu0 0.0
      %1733 = vmatprep.subr.mxu0 0.0
      %1734 = vmatpush1.msra.mxu0 0.0
      %1735 = vmatprep.subr.mxu0 0.0
      %1736 = vmatpush1.msra.mxu0 0.0
      %1737 = vmatprep.subr.mxu0 0.0
      %1738 = vmatpush1.msra.mxu0 0.0
      %1739 = vmatprep.subr.mxu0 0.0
      %1740 = vmatpush1.msra.mxu0 0.0
      %1741 = vmatprep.subr.mxu0 0.0
      %1742 = vmatpush1.msra.mxu0 0.0
      %1743 = vmatprep.subr.mxu0 0.0
      %1744 = vmatpush1.msra.mxu0 0.0
      %1745 = vmatprep.subr.mxu0 0.0
      %1746 = vmatpush1.msra.mxu0 0.0
      %1747 = vmatprep.subr.mxu0 0.0
      %1748 = vmatpush1.msra.mxu0 0.0
      %1749 = vmatprep.subr.mxu0 0.0
      %1750 = vmatpush1.msra.mxu0 0.0
      %1751 = vmatprep.subr.mxu0 0.0
      %1752 = vmatpush1.msra.mxu0 0.0
      %1753 = vmatprep.subr.mxu0 0.0
      %1754 = vmatpush1.msra.mxu0 0.0
      %1755 = vmatprep.subr.mxu0 0.0
      %1756 = vmatpush1.msra.mxu0 0.0
      %1757 = vmatprep.subr.mxu0 0.0
      %1758 = vmatpush1.msra.mxu0 0.0
      %1759 = vmatprep.subr.mxu0 0.0
      %1760 = vmatpush1.msra.mxu0 0.0
      %1761 = vmatprep.subr.mxu0 0.0
      %1762 = vmatpush1.msra.mxu0 0.0
      %1763 = vmatprep.subr.mxu0 0.0
      %1764 = vmatpush1.msra.mxu0 0.0
      %1765 = vmatprep.subr.mxu0 0.0
      %1766 = vmatpush1.msra.mxu0 0.0
      %1767 = vmatprep.subr.mxu0 0.0
      %1768 = vmatpush1.msra.mxu0 0.0
      %1769 = vmatprep.subr.mxu0 0.0
      %1770 = vmatpush1.msra.mxu0 0.0
      %1771 = vmatprep.subr.mxu0 0.0
      %1772 = vmatpush1.msra.mxu0 0.0
      %1773 = vmatprep.subr.mxu0 0.0
      %1774 = vmatpush1.msra.mxu0 0.0
      %1775 = vmatprep.subr.mxu0 0.0
      %1776 = vmatpush1.msra.mxu0 0.0
      %1777 = vmatprep.mubr.f32.mxu0 0.0
      %1778 = vmatmul.mubr.f32.gmra.mrb[0].mxu0 %v1027
      %v1779 = vpop.f32.mrb[0].mxu0
      %v1780 = vadd.f32 0.0, %v1779
      %v1781 = vpop.f32.mrb[0].mxu0
      %1782 = vmatprep.mubr.f32.mxu0 0.0
      %1783 = vmatmul.mubr.f32.gmra.mrb[0].mxu0 %v1029
      %v1784 = vpop.f32.mrb[0].mxu0
      %v1785 = vadd.f32 0.0, %v1784
      %v1786 = vpop.f32.mrb[0].mxu0
      %1787 = vmatprep.mubr.f32.mxu0 0.0
      %1788 = vmatmul.mubr.f32.gmra.mrb[0].mxu0 %v1031
      %v1789 = vpop.f32.mrb[0].mxu0
      %v1790 = vadd.f32 0.0, %v1789
      %v1791 = vpop.f32.mrb[0].mxu0
      %1792 = vmatprep.mubr.f32.mxu0 0.0
      %1793 = vmatmul.mubr.f32.gmra.mrb[0].mxu0 %v1033
      %v1794 = vpop.f32.mrb[0].mxu0
      %v1795 = vadd.f32 0.0, %v1794
      %v1796 = vpop.f32.mrb[0].mxu0
      %1797 = vmatprep.mubr.f32.mxu0 0.0
      %1798 = vmatmul.mubr.f32.gmra.mrb[0].mxu0 %v1035
      %v1799 = vpop.f32.mrb[0].mxu0
      %v1800 = vadd.f32 0.0, %v1799
      %v1801 = vpop.f32.mrb[0].mxu0
      %1802 = vmatprep.mubr.f32.mxu0 0.0
      %1803 = vmatmul.mubr.f32.gmra.mrb[0].mxu0 %v1037
      %v1804 = vpop.f32.mrb[0].mxu0
      %v1805 = vadd.f32 0.0, %v1804
      %v1806 = vpop.f32.mrb[0].mxu0
      %1807 = vmatprep.mubr.f32.mxu0 0.0
      %1808 = vmatmul.mubr.f32.gmra.mrb[0].mxu0 %v1039
      %v1809 = vpop.f32.mrb[0].mxu0
      %v1810 = vadd.f32 0.0, %v1809
      %v1811 = vpop.f32.mrb[0].mxu0
      %1812 = vmatprep.mubr.f32.mxu0 0.0
      %1813 = vmatmul.mubr.f32.gmra.mrb[0].mxu0 %v1041
      %v1814 = vpop.f32.mrb[0].mxu0
      %v1815 = vadd.f32 0.0, %v1814
      %v1816 = vpop.f32.mrb[0].mxu0
      %1817 = vmatprep.mubr.f32.mxu0 0.0
      %1818 = vmatmul.mubr.f32.gmra.mrb[0].mxu0 %v1043
      %v1819 = vpop.f32.mrb[0].mxu0
      %v1820 = vadd.f32 0.0, %v1819
      %v1821 = vpop.f32.mrb[0].mxu0
      %1822 = vmatprep.mubr.f32.mxu0 0.0
      %1823 = vmatmul.mubr.f32.gmra.mrb[0].mxu0 %v1045
      %v1824 = vpop.f32.mrb[0].mxu0
      %v1825 = vadd.f32 0.0, %v1824
      %v1826 = vpop.f32.mrb[0].mxu0
      %1827 = vmatprep.mubr.f32.mxu0 0.0
      %1828 = vmatmul.mubr.f32.gmra.mrb[0].mxu0 %v1047
      %v1829 = vpop.f32.mrb[0].mxu0
      %v1830 = vadd.f32 0.0, %v1829
      %v1831 = vpop.f32.mrb[0].mxu0
      %1832 = vmatprep.mubr.f32.mxu0 0.0
      %1833 = vmatmul.mubr.f32.gmra.mrb[0].mxu0 %v1049
      %v1834 = vpop.f32.mrb[0].mxu0
      %v1835 = vadd.f32 0.0, %v1834
      %v1836 = vpop.f32.mrb[0].mxu0
      %1837 = vmatprep.mubr.f32.mxu0 0.0
      %1838 = vmatmul.mubr.f32.gmra.mrb[0].mxu0 %v1051
      %v1839 = vpop.f32.mrb[0].mxu0
      %v1840 = vadd.f32 0.0, %v1839
      %v1841 = vpop.f32.mrb[0].mxu0
      %1842 = vmatprep.mubr.f32.mxu0 0.0
      %1843 = vmatmul.mubr.f32.gmra.mrb[0].mxu0 %v1053
      %v1844 = vpop.f32.mrb[0].mxu0
      %v1845 = vadd.f32 0.0, %v1844
      %v1846 = vpop.f32.mrb[0].mxu0
      %1847 = vmatprep.mubr.f32.mxu0 0.0
      %1848 = vmatmul.mubr.f32.gmra.mrb[0].mxu0 %v1055
      %v1849 = vpop.f32.mrb[0].mxu0
      %v1850 = vadd.f32 0.0, %v1849
      %v1851 = vpop.f32.mrb[0].mxu0
      %1852 = vmatprep.mubr.f32.mxu0 0.0
      %1853 = vmatmul.mubr.f32.gmra.mrb[0].mxu0 %v1057
      %v1854 = vpop.f32.mrb[0].mxu0
      %v1855 = vadd.f32 0.0, %v1854
      %v1856 = vpop.f32.mrb[0].mxu0
      %1857 = vmatprep.mubr.f32.mxu0 0.0
      %1858 = vmatmul.mubr.f32.gmra.mrb[0].mxu0 %v1059
      %v1859 = vpop.f32.mrb[0].mxu0
      %v1860 = vadd.f32 0.0, %v1859
      %v1861 = vpop.f32.mrb[0].mxu0
      %1862 = vmatprep.mubr.f32.mxu0 0.0
      %1863 = vmatmul.mubr.f32.gmra.mrb[0].mxu0 %v1061
      %v1864 = vpop.f32.mrb[0].mxu0
      %v1865 = vadd.f32 0.0, %v1864
      %v1866 = vpop.f32.mrb[0].mxu0
      %1867 = vmatprep.mubr.f32.mxu0 0.0
      %1868 = vmatmul.mubr.f32.gmra.mrb[0].mxu0 %v1063
      %v1869 = vpop.f32.mrb[0].mxu0
      %v1870 = vadd.f32 0.0, %v1869
      %v1871 = vpop.f32.mrb[0].mxu0
      %1872 = vmatprep.mubr.f32.mxu0 0.0
      %1873 = vmatmul.mubr.f32.gmra.mrb[0].mxu0 %v1065
      %v1874 = vpop.f32.mrb[0].mxu0
      %v1875 = vadd.f32 0.0, %v1874
      %v1876 = vpop.f32.mrb[0].mxu0
      %1877 = vmatprep.mubr.f32.mxu0 0.0
      %1878 = vmatmul.mubr.f32.gmra.mrb[0].mxu0 %v1067
      %v1879 = vpop.f32.mrb[0].mxu0
      %v1880 = vadd.f32 0.0, %v1879
      %v1881 = vpop.f32.mrb[0].mxu0
      %1882 = vmatprep.mubr.f32.mxu0 0.0
      %1883 = vmatmul.mubr.f32.gmra.mrb[0].mxu0 %v1069
      %v1884 = vpop.f32.mrb[0].mxu0
      %v1885 = vadd.f32 0.0, %v1884
      %v1886 = vpop.f32.mrb[0].mxu0
      %1887 = vmatprep.mubr.f32.mxu0 0.0
      %1888 = vmatmul.mubr.f32.gmra.mrb[0].mxu0 %v1071
      %v1889 = vpop.f32.mrb[0].mxu0
      %v1890 = vadd.f32 0.0, %v1889
      %v1891 = vpop.f32.mrb[0].mxu0
      %1892 = vmatprep.mubr.f32.mxu0 0.0
      %1893 = vmatmul.mubr.f32.gmra.mrb[0].mxu0 %v1073
      %v1894 = vpop.f32.mrb[0].mxu0
      %v1895 = vadd.f32 0.0, %v1894
      %v1896 = vpop.f32.mrb[0].mxu0
      %1897 = vmatprep.mubr.f32.mxu0 0.0
      %1898 = vmatmul.mubr.f32.gmra.mrb[0].mxu0 %v1075
      %v1899 = vpop.f32.mrb[0].mxu0
      %v1900 = vadd.f32 0.0, %v1899
      %v1901 = vpop.f32.mrb[0].mxu0
      %1902 = vmatprep.mubr.f32.mxu0 0.0
      %1903 = vmatmul.mubr.f32.gmra.mrb[0].mxu0 %v1077
      %v1904 = vpop.f32.mrb[0].mxu0
      %v1905 = vadd.f32 0.0, %v1904
      %v1906 = vpop.f32.mrb[0].mxu0
      %1907 = vmatprep.mubr.f32.mxu0 0.0
      %1908 = vmatmul.mubr.f32.gmra.mrb[0].mxu0 %v1079
      %v1909 = vpop.f32.mrb[0].mxu0
      %v1910 = vadd.f32 0.0, %v1909
      %v1911 = vpop.f32.mrb[0].mxu0
      %1912 = vmatprep.mubr.f32.mxu0 0.0
      %1913 = vmatmul.mubr.f32.gmra.mrb[0].mxu0 %v1081
      %v1914 = vpop.f32.mrb[0].mxu0
      %v1915 = vadd.f32 0.0, %v1914
      %v1916 = vpop.f32.mrb[0].mxu0
      %1917 = vmatprep.mubr.f32.mxu0 0.0
      %1918 = vmatmul.mubr.f32.gmra.mrb[0].mxu0 %v1083
      %v1919 = vpop.f32.mrb[0].mxu0
      %v1920 = vadd.f32 0.0, %v1919
      %v1921 = vpop.f32.mrb[0].mxu0
      %1922 = vmatprep.mubr.f32.mxu0 0.0
      %1923 = vmatmul.mubr.f32.gmra.mrb[0].mxu0 %v1085
      %v1924 = vpop.f32.mrb[0].mxu0
      %v1925 = vadd.f32 0.0, %v1924
      %v1926 = vpop.f32.mrb[0].mxu0
      %1927 = vmatprep.mubr.f32.mxu0 0.0
      %1928 = vmatmul.mubr.f32.gmra.mrb[0].mxu0 %v1709
      %v1929 = vpop.f32.mrb[0].mxu0
      %v1930 = vadd.f32 0.0, %v1929
      %v1931 = vpop.f32.mrb[0].mxu0
      %1932 = vmatprep.mubr.f32.mxu0 0.0
      %1933 = vmatmul.mubr.f32.gmra.mrb[0].mxu0 %v1711
      %v1934 = vpop.f32.mrb[0].mxu0
      %v1935 = vadd.f32 0.0, %v1934
      %v1936 = vpop.f32.mrb[0].mxu0
      %1937 = vdwg.mxu0
      %v1938 = vadd.f32 %v1669, %v1780
      %v1939 = vadd.f32 %v1670, %v1785
      %v1940 = vadd.f32 %v1671, %v1790
      %v1941 = vadd.f32 %v1672, %v1795
      %v1942 = vadd.f32 %v1673, %v1800
      %v1943 = vadd.f32 %v1674, %v1805
      %v1944 = vadd.f32 %v1675, %v1810
      %v1945 = vadd.f32 %v1676, %v1815
      %v1946 = vadd.f32 %v1677, %v1820
      %v1947 = vadd.f32 %v1678, %v1825
      %v1948 = vadd.f32 %v1679, %v1830
      %v1949 = vadd.f32 %v1680, %v1835
      %v1950 = vadd.f32 %v1681, %v1840
      %v1951 = vadd.f32 %v1682, %v1845
      %v1952 = vadd.f32 %v1683, %v1850
      %v1953 = vadd.f32 %v1684, %v1855
      %v1954 = vadd.f32 %v1685, %v1860
      %v1955 = vadd.f32 %v1686, %v1865
      %v1956 = vadd.f32 %v1687, %v1870
      %v1957 = vadd.f32 %v1688, %v1875
      %v1958 = vadd.f32 %v1689, %v1880
      %v1959 = vadd.f32 %v1690, %v1885
      %v1960 = vadd.f32 %v1691, %v1890
      %v1961 = vadd.f32 %v1692, %v1895
      %v1962 = vadd.f32 %v1693, %v1900
      %v1963 = vadd.f32 %v1694, %v1905
      %v1964 = vadd.f32 %v1695, %v1910
      %v1965 = vadd.f32 %v1696, %v1915
      %v1966 = vadd.f32 %v1697, %v1920
      %v1967 = vadd.f32 %v1698, %v1925
      %v1968 = vadd.f32 %v1699, %v1930
      %v1969 = vadd.f32 %v1700, %v1935
      %s1970 = scalar_lea.vmem %s3, 32
      %v1971 = vld [vmem:[%s1970] sm:$0xff]
      %v1972 = vsel %vm733, %v618, 0
      %v1974 = vsel %vm733, %v619, 0
      %1976 = vmatprep.subr.mxu0 0.0
      %1977 = vmatpush1.msra.mxu0 %v1971
      %1978 = vmatprep.subr.mxu0 0.0
      %1979 = vmatpush1.msra.mxu0 0.0
      %1980 = vmatprep.subr.mxu0 0.0
      %1981 = vmatpush1.msra.mxu0 0.0
      %1982 = vmatprep.subr.mxu0 0.0
      %1983 = vmatpush1.msra.mxu0 0.0
      %1984 = vmatprep.subr.mxu0 0.0
      %1985 = vmatpush1.msra.mxu0 0.0
      %1986 = vmatprep.subr.mxu0 0.0
      %1987 = vmatpush1.msra.mxu0 0.0
      %1988 = vmatprep.subr.mxu0 0.0
      %1989 = vmatpush1.msra.mxu0 0.0
      %1990 = vmatprep.subr.mxu0 0.0
      %1991 = vmatpush1.msra.mxu0 0.0
      %1992 = vmatprep.subr.mxu0 0.0
      %1993 = vmatpush1.msra.mxu0 0.0
      %1994 = vmatprep.subr.mxu0 0.0
      %1995 = vmatpush1.msra.mxu0 0.0
      %1996 = vmatprep.subr.mxu0 0.0
      %1997 = vmatpush1.msra.mxu0 0.0
      %1998 = vmatprep.subr.mxu0 0.0
      %1999 = vmatpush1.msra.mxu0 0.0
      %2000 = vmatprep.subr.mxu0 0.0
      %2001 = vmatpush1.msra.mxu0 0.0
      %2002 = vmatprep.subr.mxu0 0.0
      %2003 = vmatpush1.msra.mxu0 0.0
      %2004 = vmatprep.subr.mxu0 0.0
      %2005 = vmatpush1.msra.mxu0 0.0
      %2006 = vmatprep.subr.mxu0 0.0
      %2007 = vmatpush1.msra.mxu0 0.0
      %2008 = vmatprep.subr.mxu0 0.0
      %2009 = vmatpush1.msra.mxu0 0.0
      %2010 = vmatprep.subr.mxu0 0.0
      %2011 = vmatpush1.msra.mxu0 0.0
      %2012 = vmatprep.subr.mxu0 0.0
      %2013 = vmatpush1.msra.mxu0 0.0
      %2014 = vmatprep.subr.mxu0 0.0
      %2015 = vmatpush1.msra.mxu0 0.0
      %2016 = vmatprep.subr.mxu0 0.0
      %2017 = vmatpush1.msra.mxu0 0.0
      %2018 = vmatprep.subr.mxu0 0.0
      %2019 = vmatpush1.msra.mxu0 0.0
      %2020 = vmatprep.subr.mxu0 0.0
      %2021 = vmatpush1.msra.mxu0 0.0
      %2022 = vmatprep.subr.mxu0 0.0
      %2023 = vmatpush1.msra.mxu0 0.0
      %2024 = vmatprep.subr.mxu0 0.0
      %2025 = vmatpush1.msra.mxu0 0.0
      %2026 = vmatprep.subr.mxu0 0.0
      %2027 = vmatpush1.msra.mxu0 0.0
      %2028 = vmatprep.subr.mxu0 0.0
      %2029 = vmatpush1.msra.mxu0 0.0
      %2030 = vmatprep.subr.mxu0 0.0
      %2031 = vmatpush1.msra.mxu0 0.0
      %2032 = vmatprep.subr.mxu0 0.0
      %2033 = vmatpush1.msra.mxu0 0.0
      %2034 = vmatprep.subr.mxu0 0.0
      %2035 = vmatpush1.msra.mxu0 0.0
      %2036 = vmatprep.subr.mxu0 0.0
      %2037 = vmatpush1.msra.mxu0 0.0
      %2038 = vmatprep.subr.mxu0 0.0
      %2039 = vmatpush1.msra.mxu0 0.0
      %2040 = vmatprep.mubr.f32.mxu0 0.0
      %2041 = vmatmul.mubr.f32.gmra.mrb[0].mxu0 %v738
      %v2042 = vpop.f32.mrb[0].mxu0
      %v2043 = vadd.f32 0.0, %v2042
      %v2044 = vpop.f32.mrb[0].mxu0
      %2045 = vmatprep.mubr.f32.mxu0 0.0
      %2046 = vmatmul.mubr.f32.gmra.mrb[0].mxu0 %v740
      %v2047 = vpop.f32.mrb[0].mxu0
      %v2048 = vadd.f32 0.0, %v2047
      %v2049 = vpop.f32.mrb[0].mxu0
      %2050 = vmatprep.mubr.f32.mxu0 0.0
      %2051 = vmatmul.mubr.f32.gmra.mrb[0].mxu0 %v742
      %v2052 = vpop.f32.mrb[0].mxu0
      %v2053 = vadd.f32 0.0, %v2052
      %v2054 = vpop.f32.mrb[0].mxu0
      %2055 = vmatprep.mubr.f32.mxu0 0.0
      %2056 = vmatmul.mubr.f32.gmra.mrb[0].mxu0 %v744
      %v2057 = vpop.f32.mrb[0].mxu0
      %v2058 = vadd.f32 0.0, %v2057
      %v2059 = vpop.f32.mrb[0].mxu0
      %2060 = vmatprep.mubr.f32.mxu0 0.0
      %2061 = vmatmul.mubr.f32.gmra.mrb[0].mxu0 %v746
      %v2062 = vpop.f32.mrb[0].mxu0
      %v2063 = vadd.f32 0.0, %v2062
      %v2064 = vpop.f32.mrb[0].mxu0
      %2065 = vmatprep.mubr.f32.mxu0 0.0
      %2066 = vmatmul.mubr.f32.gmra.mrb[0].mxu0 %v748
      %v2067 = vpop.f32.mrb[0].mxu0
      %v2068 = vadd.f32 0.0, %v2067
      %v2069 = vpop.f32.mrb[0].mxu0
      %2070 = vmatprep.mubr.f32.mxu0 0.0
      %2071 = vmatmul.mubr.f32.gmra.mrb[0].mxu0 %v750
      %v2072 = vpop.f32.mrb[0].mxu0
      %v2073 = vadd.f32 0.0, %v2072
      %v2074 = vpop.f32.mrb[0].mxu0
      %2075 = vmatprep.mubr.f32.mxu0 0.0
      %2076 = vmatmul.mubr.f32.gmra.mrb[0].mxu0 %v752
      %v2077 = vpop.f32.mrb[0].mxu0
      %v2078 = vadd.f32 0.0, %v2077
      %v2079 = vpop.f32.mrb[0].mxu0
      %2080 = vmatprep.mubr.f32.mxu0 0.0
      %2081 = vmatmul.mubr.f32.gmra.mrb[0].mxu0 %v754
      %v2082 = vpop.f32.mrb[0].mxu0
      %v2083 = vadd.f32 0.0, %v2082
      %v2084 = vpop.f32.mrb[0].mxu0
      %2085 = vmatprep.mubr.f32.mxu0 0.0
      %2086 = vmatmul.mubr.f32.gmra.mrb[0].mxu0 %v756
      %v2087 = vpop.f32.mrb[0].mxu0
      %v2088 = vadd.f32 0.0, %v2087
      %v2089 = vpop.f32.mrb[0].mxu0
      %2090 = vmatprep.mubr.f32.mxu0 0.0
      %2091 = vmatmul.mubr.f32.gmra.mrb[0].mxu0 %v758
      %v2092 = vpop.f32.mrb[0].mxu0
      %v2093 = vadd.f32 0.0, %v2092
      %v2094 = vpop.f32.mrb[0].mxu0
      %2095 = vmatprep.mubr.f32.mxu0 0.0
      %2096 = vmatmul.mubr.f32.gmra.mrb[0].mxu0 %v760
      %v2097 = vpop.f32.mrb[0].mxu0
      %v2098 = vadd.f32 0.0, %v2097
      %v2099 = vpop.f32.mrb[0].mxu0
      %2100 = vmatprep.mubr.f32.mxu0 0.0
      %2101 = vmatmul.mubr.f32.gmra.mrb[0].mxu0 %v762
      %v2102 = vpop.f32.mrb[0].mxu0
      %v2103 = vadd.f32 0.0, %v2102
      %v2104 = vpop.f32.mrb[0].mxu0
      %2105 = vmatprep.mubr.f32.mxu0 0.0
      %2106 = vmatmul.mubr.f32.gmra.mrb[0].mxu0 %v764
      %v2107 = vpop.f32.mrb[0].mxu0
      %v2108 = vadd.f32 0.0, %v2107
      %v2109 = vpop.f32.mrb[0].mxu0
      %2110 = vmatprep.mubr.f32.mxu0 0.0
      %2111 = vmatmul.mubr.f32.gmra.mrb[0].mxu0 %v766
      %v2112 = vpop.f32.mrb[0].mxu0
      %v2113 = vadd.f32 0.0, %v2112
      %v2114 = vpop.f32.mrb[0].mxu0
      %2115 = vmatprep.mubr.f32.mxu0 0.0
      %2116 = vmatmul.mubr.f32.gmra.mrb[0].mxu0 %v768
      %v2117 = vpop.f32.mrb[0].mxu0
      %v2118 = vadd.f32 0.0, %v2117
      %v2119 = vpop.f32.mrb[0].mxu0
      %2120 = vmatprep.mubr.f32.mxu0 0.0
      %2121 = vmatmul.mubr.f32.gmra.mrb[0].mxu0 %v770
      %v2122 = vpop.f32.mrb[0].mxu0
      %v2123 = vadd.f32 0.0, %v2122
      %v2124 = vpop.f32.mrb[0].mxu0
      %2125 = vmatprep.mubr.f32.mxu0 0.0
      %2126 = vmatmul.mubr.f32.gmra.mrb[0].mxu0 %v772
      %v2127 = vpop.f32.mrb[0].mxu0
      %v2128 = vadd.f32 0.0, %v2127
      %v2129 = vpop.f32.mrb[0].mxu0
      %2130 = vmatprep.mubr.f32.mxu0 0.0
      %2131 = vmatmul.mubr.f32.gmra.mrb[0].mxu0 %v774
      %v2132 = vpop.f32.mrb[0].mxu0
      %v2133 = vadd.f32 0.0, %v2132
      %v2134 = vpop.f32.mrb[0].mxu0
      %2135 = vmatprep.mubr.f32.mxu0 0.0
      %2136 = vmatmul.mubr.f32.gmra.mrb[0].mxu0 %v776
      %v2137 = vpop.f32.mrb[0].mxu0
      %v2138 = vadd.f32 0.0, %v2137
      %v2139 = vpop.f32.mrb[0].mxu0
      %2140 = vmatprep.mubr.f32.mxu0 0.0
      %2141 = vmatmul.mubr.f32.gmra.mrb[0].mxu0 %v778
      %v2142 = vpop.f32.mrb[0].mxu0
      %v2143 = vadd.f32 0.0, %v2142
      %v2144 = vpop.f32.mrb[0].mxu0
      %2145 = vmatprep.mubr.f32.mxu0 0.0
      %2146 = vmatmul.mubr.f32.gmra.mrb[0].mxu0 %v780
      %v2147 = vpop.f32.mrb[0].mxu0
      %v2148 = vadd.f32 0.0, %v2147
      %v2149 = vpop.f32.mrb[0].mxu0
      %2150 = vmatprep.mubr.f32.mxu0 0.0
      %2151 = vmatmul.mubr.f32.gmra.mrb[0].mxu0 %v782
      %v2152 = vpop.f32.mrb[0].mxu0
      %v2153 = vadd.f32 0.0, %v2152
      %v2154 = vpop.f32.mrb[0].mxu0
      %2155 = vmatprep.mubr.f32.mxu0 0.0
      %2156 = vmatmul.mubr.f32.gmra.mrb[0].mxu0 %v784
      %v2157 = vpop.f32.mrb[0].mxu0
      %v2158 = vadd.f32 0.0, %v2157
      %v2159 = vpop.f32.mrb[0].mxu0
      %2160 = vmatprep.mubr.f32.mxu0 0.0
      %2161 = vmatmul.mubr.f32.gmra.mrb[0].mxu0 %v786
      %v2162 = vpop.f32.mrb[0].mxu0
      %v2163 = vadd.f32 0.0, %v2162
      %v2164 = vpop.f32.mrb[0].mxu0
      %2165 = vmatprep.mubr.f32.mxu0 0.0
      %2166 = vmatmul.mubr.f32.gmra.mrb[0].mxu0 %v788
      %v2167 = vpop.f32.mrb[0].mxu0
      %v2168 = vadd.f32 0.0, %v2167
      %v2169 = vpop.f32.mrb[0].mxu0
      %2170 = vmatprep.mubr.f32.mxu0 0.0
      %2171 = vmatmul.mubr.f32.gmra.mrb[0].mxu0 %v790
      %v2172 = vpop.f32.mrb[0].mxu0
      %v2173 = vadd.f32 0.0, %v2172
      %v2174 = vpop.f32.mrb[0].mxu0
      %2175 = vmatprep.mubr.f32.mxu0 0.0
      %2176 = vmatmul.mubr.f32.gmra.mrb[0].mxu0 %v792
      %v2177 = vpop.f32.mrb[0].mxu0
      %v2178 = vadd.f32 0.0, %v2177
      %v2179 = vpop.f32.mrb[0].mxu0
      %2180 = vmatprep.mubr.f32.mxu0 0.0
      %2181 = vmatmul.mubr.f32.gmra.mrb[0].mxu0 %v794
      %v2182 = vpop.f32.mrb[0].mxu0
      %v2183 = vadd.f32 0.0, %v2182
      %v2184 = vpop.f32.mrb[0].mxu0
      %2185 = vmatprep.mubr.f32.mxu0 0.0
      %2186 = vmatmul.mubr.f32.gmra.mrb[0].mxu0 %v796
      %v2187 = vpop.f32.mrb[0].mxu0
      %v2188 = vadd.f32 0.0, %v2187
      %v2189 = vpop.f32.mrb[0].mxu0
      %2190 = vmatprep.mubr.f32.mxu0 0.0
      %2191 = vmatmul.mubr.f32.gmra.mrb[0].mxu0 %v1972
      %v2192 = vpop.f32.mrb[0].mxu0
      %v2193 = vadd.f32 0.0, %v2192
      %v2194 = vpop.f32.mrb[0].mxu0
      %2195 = vmatprep.mubr.f32.mxu0 0.0
      %2196 = vmatmul.mubr.f32.gmra.mrb[0].mxu0 %v1974
      %v2197 = vpop.f32.mrb[0].mxu0
      %v2198 = vadd.f32 0.0, %v2197
      %v2199 = vpop.f32.mrb[0].mxu0
      %2200 = vdwg.mxu0
      %v2201 = vadd.f32 %v1938, %v2043
      %v2202 = vadd.f32 %v1939, %v2048
      %v2203 = vadd.f32 %v1940, %v2053
      %v2204 = vadd.f32 %v1941, %v2058
      %v2205 = vadd.f32 %v1942, %v2063
      %v2206 = vadd.f32 %v1943, %v2068
      %v2207 = vadd.f32 %v1944, %v2073
      %v2208 = vadd.f32 %v1945, %v2078
      %v2209 = vadd.f32 %v1946, %v2083
      %v2210 = vadd.f32 %v1947, %v2088
      %v2211 = vadd.f32 %v1948, %v2093
      %v2212 = vadd.f32 %v1949, %v2098
      %v2213 = vadd.f32 %v1950, %v2103
      %v2214 = vadd.f32 %v1951, %v2108
      %v2215 = vadd.f32 %v1952, %v2113
      %v2216 = vadd.f32 %v1953, %v2118
      %v2217 = vadd.f32 %v1954, %v2123
      %v2218 = vadd.f32 %v1955, %v2128
      %v2219 = vadd.f32 %v1956, %v2133
      %v2220 = vadd.f32 %v1957, %v2138
      %v2221 = vadd.f32 %v1958, %v2143
      %v2222 = vadd.f32 %v1959, %v2148
      %v2223 = vadd.f32 %v1960, %v2153
      %v2224 = vadd.f32 %v1961, %v2158
      %v2225 = vadd.f32 %v1962, %v2163
      %v2226 = vadd.f32 %v1963, %v2168
      %v2227 = vadd.f32 %v1964, %v2173
      %v2228 = vadd.f32 %v1965, %v2178
      %v2229 = vadd.f32 %v1966, %v2183
      %v2230 = vadd.f32 %v1967, %v2188
      %v2231 = vadd.f32 %v1968, %v2193
      %v2232 = vadd.f32 %v1969, %v2198
      %v2233 = vrot.slane %v618, 1
      %v2234 = vrot.slane %v619, 1
      %v2235 = vsel %vm1312, %v2233, %v2234
      %v2236 = vsel %vm1312, %v2234, %v1316
      %s2237 = scalar_lea.vmem %s3, 40
      %v2238 = vld [vmem:[%s2237] sm:$0xff]
      %v2239 = vsel %vm733, %v2235, 0
      %v2241 = vsel %vm733, %v2236, 0
      %2243 = vmatprep.subr.mxu0 0.0
      %2244 = vmatpush1.msra.mxu0 %v2238
      %2245 = vmatprep.subr.mxu0 0.0
      %2246 = vmatpush1.msra.mxu0 0.0
      %2247 = vmatprep.subr.mxu0 0.0
      %2248 = vmatpush1.msra.mxu0 0.0
      %2249 = vmatprep.subr.mxu0 0.0
      %2250 = vmatpush1.msra.mxu0 0.0
      %2251 = vmatprep.subr.mxu0 0.0
      %2252 = vmatpush1.msra.mxu0 0.0
      %2253 = vmatprep.subr.mxu0 0.0
      %2254 = vmatpush1.msra.mxu0 0.0
      %2255 = vmatprep.subr.mxu0 0.0
      %2256 = vmatpush1.msra.mxu0 0.0
      %2257 = vmatprep.subr.mxu0 0.0
      %2258 = vmatpush1.msra.mxu0 0.0
      %2259 = vmatprep.subr.mxu0 0.0
      %2260 = vmatpush1.msra.mxu0 0.0
      %2261 = vmatprep.subr.mxu0 0.0
      %2262 = vmatpush1.msra.mxu0 0.0
      %2263 = vmatprep.subr.mxu0 0.0
      %2264 = vmatpush1.msra.mxu0 0.0
      %2265 = vmatprep.subr.mxu0 0.0
      %2266 = vmatpush1.msra.mxu0 0.0
      %2267 = vmatprep.subr.mxu0 0.0
      %2268 = vmatpush1.msra.mxu0 0.0
      %2269 = vmatprep.subr.mxu0 0.0
      %2270 = vmatpush1.msra.mxu0 0.0
      %2271 = vmatprep.subr.mxu0 0.0
      %2272 = vmatpush1.msra.mxu0 0.0
      %2273 = vmatprep.subr.mxu0 0.0
      %2274 = vmatpush1.msra.mxu0 0.0
      %2275 = vmatprep.subr.mxu0 0.0
      %2276 = vmatpush1.msra.mxu0 0.0
      %2277 = vmatprep.subr.mxu0 0.0
      %2278 = vmatpush1.msra.mxu0 0.0
      %2279 = vmatprep.subr.mxu0 0.0
      %2280 = vmatpush1.msra.mxu0 0.0
      %2281 = vmatprep.subr.mxu0 0.0
      %2282 = vmatpush1.msra.mxu0 0.0
      %2283 = vmatprep.subr.mxu0 0.0
      %2284 = vmatpush1.msra.mxu0 0.0
      %2285 = vmatprep.subr.mxu0 0.0
      %2286 = vmatpush1.msra.mxu0 0.0
      %2287 = vmatprep.subr.mxu0 0.0
      %2288 = vmatpush1.msra.mxu0 0.0
      %2289 = vmatprep.subr.mxu0 0.0
      %2290 = vmatpush1.msra.mxu0 0.0
      %2291 = vmatprep.subr.mxu0 0.0
      %2292 = vmatpush1.msra.mxu0 0.0
      %2293 = vmatprep.subr.mxu0 0.0
      %2294 = vmatpush1.msra.mxu0 0.0
      %2295 = vmatprep.subr.mxu0 0.0
      %2296 = vmatpush1.msra.mxu0 0.0
      %2297 = vmatprep.subr.mxu0 0.0
      %2298 = vmatpush1.msra.mxu0 0.0
      %2299 = vmatprep.subr.mxu0 0.0
      %2300 = vmatpush1.msra.mxu0 0.0
      %2301 = vmatprep.subr.mxu0 0.0
      %2302 = vmatpush1.msra.mxu0 0.0
      %2303 = vmatprep.subr.mxu0 0.0
      %2304 = vmatpush1.msra.mxu0 0.0
      %2305 = vmatprep.subr.mxu0 0.0
      %2306 = vmatpush1.msra.mxu0 0.0
      %2307 = vmatprep.mubr.f32.mxu0 0.0
      %2308 = vmatmul.mubr.f32.gmra.mrb[0].mxu0 %v1384
      %v2309 = vpop.f32.mrb[0].mxu0
      %v2310 = vadd.f32 0.0, %v2309
      %v2311 = vpop.f32.mrb[0].mxu0
      %2312 = vmatprep.mubr.f32.mxu0 0.0
      %2313 = vmatmul.mubr.f32.gmra.mrb[0].mxu0 %v1386
      %v2314 = vpop.f32.mrb[0].mxu0
      %v2315 = vadd.f32 0.0, %v2314
      %v2316 = vpop.f32.mrb[0].mxu0
      %2317 = vmatprep.mubr.f32.mxu0 0.0
      %2318 = vmatmul.mubr.f32.gmra.mrb[0].mxu0 %v1388
      %v2319 = vpop.f32.mrb[0].mxu0
      %v2320 = vadd.f32 0.0, %v2319
      %v2321 = vpop.f32.mrb[0].mxu0
      %2322 = vmatprep.mubr.f32.mxu0 0.0
      %2323 = vmatmul.mubr.f32.gmra.mrb[0].mxu0 %v1390
      %v2324 = vpop.f32.mrb[0].mxu0
      %v2325 = vadd.f32 0.0, %v2324
      %v2326 = vpop.f32.mrb[0].mxu0
      %2327 = vmatprep.mubr.f32.mxu0 0.0
      %2328 = vmatmul.mubr.f32.gmra.mrb[0].mxu0 %v1392
      %v2329 = vpop.f32.mrb[0].mxu0
      %v2330 = vadd.f32 0.0, %v2329
      %v2331 = vpop.f32.mrb[0].mxu0
      %2332 = vmatprep.mubr.f32.mxu0 0.0
      %2333 = vmatmul.mubr.f32.gmra.mrb[0].mxu0 %v1394
      %v2334 = vpop.f32.mrb[0].mxu0
      %v2335 = vadd.f32 0.0, %v2334
      %v2336 = vpop.f32.mrb[0].mxu0
      %2337 = vmatprep.mubr.f32.mxu0 0.0
      %2338 = vmatmul.mubr.f32.gmra.mrb[0].mxu0 %v1396
      %v2339 = vpop.f32.mrb[0].mxu0
      %v2340 = vadd.f32 0.0, %v2339
      %v2341 = vpop.f32.mrb[0].mxu0
      %2342 = vmatprep.mubr.f32.mxu0 0.0
      %2343 = vmatmul.mubr.f32.gmra.mrb[0].mxu0 %v1398
      %v2344 = vpop.f32.mrb[0].mxu0
      %v2345 = vadd.f32 0.0, %v2344
      %v2346 = vpop.f32.mrb[0].mxu0
      %2347 = vmatprep.mubr.f32.mxu0 0.0
      %2348 = vmatmul.mubr.f32.gmra.mrb[0].mxu0 %v1400
      %v2349 = vpop.f32.mrb[0].mxu0
      %v2350 = vadd.f32 0.0, %v2349
      %v2351 = vpop.f32.mrb[0].mxu0
      %2352 = vmatprep.mubr.f32.mxu0 0.0
      %2353 = vmatmul.mubr.f32.gmra.mrb[0].mxu0 %v1402
      %v2354 = vpop.f32.mrb[0].mxu0
      %v2355 = vadd.f32 0.0, %v2354
      %v2356 = vpop.f32.mrb[0].mxu0
      %2357 = vmatprep.mubr.f32.mxu0 0.0
      %2358 = vmatmul.mubr.f32.gmra.mrb[0].mxu0 %v1404
      %v2359 = vpop.f32.mrb[0].mxu0
      %v2360 = vadd.f32 0.0, %v2359
      %v2361 = vpop.f32.mrb[0].mxu0
      %2362 = vmatprep.mubr.f32.mxu0 0.0
      %2363 = vmatmul.mubr.f32.gmra.mrb[0].mxu0 %v1406
      %v2364 = vpop.f32.mrb[0].mxu0
      %v2365 = vadd.f32 0.0, %v2364
      %v2366 = vpop.f32.mrb[0].mxu0
      %2367 = vmatprep.mubr.f32.mxu0 0.0
      %2368 = vmatmul.mubr.f32.gmra.mrb[0].mxu0 %v1408
      %v2369 = vpop.f32.mrb[0].mxu0
      %v2370 = vadd.f32 0.0, %v2369
      %v2371 = vpop.f32.mrb[0].mxu0
      %2372 = vmatprep.mubr.f32.mxu0 0.0
      %2373 = vmatmul.mubr.f32.gmra.mrb[0].mxu0 %v1410
      %v2374 = vpop.f32.mrb[0].mxu0
      %v2375 = vadd.f32 0.0, %v2374
      %v2376 = vpop.f32.mrb[0].mxu0
      %2377 = vmatprep.mubr.f32.mxu0 0.0
      %2378 = vmatmul.mubr.f32.gmra.mrb[0].mxu0 %v1412
      %v2379 = vpop.f32.mrb[0].mxu0
      %v2380 = vadd.f32 0.0, %v2379
      %v2381 = vpop.f32.mrb[0].mxu0
      %2382 = vmatprep.mubr.f32.mxu0 0.0
      %2383 = vmatmul.mubr.f32.gmra.mrb[0].mxu0 %v1414
      %v2384 = vpop.f32.mrb[0].mxu0
      %v2385 = vadd.f32 0.0, %v2384
      %v2386 = vpop.f32.mrb[0].mxu0
      %2387 = vmatprep.mubr.f32.mxu0 0.0
      %2388 = vmatmul.mubr.f32.gmra.mrb[0].mxu0 %v1416
      %v2389 = vpop.f32.mrb[0].mxu0
      %v2390 = vadd.f32 0.0, %v2389
      %v2391 = vpop.f32.mrb[0].mxu0
      %2392 = vmatprep.mubr.f32.mxu0 0.0
      %2393 = vmatmul.mubr.f32.gmra.mrb[0].mxu0 %v1418
      %v2394 = vpop.f32.mrb[0].mxu0
      %v2395 = vadd.f32 0.0, %v2394
      %v2396 = vpop.f32.mrb[0].mxu0
      %2397 = vmatprep.mubr.f32.mxu0 0.0
      %2398 = vmatmul.mubr.f32.gmra.mrb[0].mxu0 %v1420
      %v2399 = vpop.f32.mrb[0].mxu0
      %v2400 = vadd.f32 0.0, %v2399
      %v2401 = vpop.f32.mrb[0].mxu0
      %2402 = vmatprep.mubr.f32.mxu0 0.0
      %2403 = vmatmul.mubr.f32.gmra.mrb[0].mxu0 %v1422
      %v2404 = vpop.f32.mrb[0].mxu0
      %v2405 = vadd.f32 0.0, %v2404
      %v2406 = vpop.f32.mrb[0].mxu0
      %2407 = vmatprep.mubr.f32.mxu0 0.0
      %2408 = vmatmul.mubr.f32.gmra.mrb[0].mxu0 %v1424
      %v2409 = vpop.f32.mrb[0].mxu0
      %v2410 = vadd.f32 0.0, %v2409
      %v2411 = vpop.f32.mrb[0].mxu0
      %2412 = vmatprep.mubr.f32.mxu0 0.0
      %2413 = vmatmul.mubr.f32.gmra.mrb[0].mxu0 %v1426
      %v2414 = vpop.f32.mrb[0].mxu0
      %v2415 = vadd.f32 0.0, %v2414
      %v2416 = vpop.f32.mrb[0].mxu0
      %2417 = vmatprep.mubr.f32.mxu0 0.0
      %2418 = vmatmul.mubr.f32.gmra.mrb[0].mxu0 %v1428
      %v2419 = vpop.f32.mrb[0].mxu0
      %v2420 = vadd.f32 0.0, %v2419
      %v2421 = vpop.f32.mrb[0].mxu0
      %2422 = vmatprep.mubr.f32.mxu0 0.0
      %2423 = vmatmul.mubr.f32.gmra.mrb[0].mxu0 %v1430
      %v2424 = vpop.f32.mrb[0].mxu0
      %v2425 = vadd.f32 0.0, %v2424
      %v2426 = vpop.f32.mrb[0].mxu0
      %2427 = vmatprep.mubr.f32.mxu0 0.0
      %2428 = vmatmul.mubr.f32.gmra.mrb[0].mxu0 %v1432
      %v2429 = vpop.f32.mrb[0].mxu0
      %v2430 = vadd.f32 0.0, %v2429
      %v2431 = vpop.f32.mrb[0].mxu0
      %2432 = vmatprep.mubr.f32.mxu0 0.0
      %2433 = vmatmul.mubr.f32.gmra.mrb[0].mxu0 %v1434
      %v2434 = vpop.f32.mrb[0].mxu0
      %v2435 = vadd.f32 0.0, %v2434
      %v2436 = vpop.f32.mrb[0].mxu0
      %2437 = vmatprep.mubr.f32.mxu0 0.0
      %2438 = vmatmul.mubr.f32.gmra.mrb[0].mxu0 %v1436
      %v2439 = vpop.f32.mrb[0].mxu0
      %v2440 = vadd.f32 0.0, %v2439
      %v2441 = vpop.f32.mrb[0].mxu0
      %2442 = vmatprep.mubr.f32.mxu0 0.0
      %2443 = vmatmul.mubr.f32.gmra.mrb[0].mxu0 %v1438
      %v2444 = vpop.f32.mrb[0].mxu0
      %v2445 = vadd.f32 0.0, %v2444
      %v2446 = vpop.f32.mrb[0].mxu0
      %2447 = vmatprep.mubr.f32.mxu0 0.0
      %2448 = vmatmul.mubr.f32.gmra.mrb[0].mxu0 %v1440
      %v2449 = vpop.f32.mrb[0].mxu0
      %v2450 = vadd.f32 0.0, %v2449
      %v2451 = vpop.f32.mrb[0].mxu0
      %2452 = vmatprep.mubr.f32.mxu0 0.0
      %2453 = vmatmul.mubr.f32.gmra.mrb[0].mxu0 %v1442
      %v2454 = vpop.f32.mrb[0].mxu0
      %v2455 = vadd.f32 0.0, %v2454
      %v2456 = vpop.f32.mrb[0].mxu0
      %2457 = vmatprep.mubr.f32.mxu0 0.0
      %2458 = vmatmul.mubr.f32.gmra.mrb[0].mxu0 %v2239
      %v2459 = vpop.f32.mrb[0].mxu0
      %v2460 = vadd.f32 0.0, %v2459
      %v2461 = vpop.f32.mrb[0].mxu0
      %2462 = vmatprep.mubr.f32.mxu0 0.0
      %2463 = vmatmul.mubr.f32.gmra.mrb[0].mxu0 %v2241
      %v2464 = vpop.f32.mrb[0].mxu0
      %v2465 = vadd.f32 0.0, %v2464
      %v2466 = vpop.f32.mrb[0].mxu0
      %2467 = vdwg.mxu0
      %v2468 = vadd.f32 %v2201, %v2310
      %v2469 = vadd.f32 %v2202, %v2315
      %v2470 = vadd.f32 %v2203, %v2320
      %v2471 = vadd.f32 %v2204, %v2325
      %v2472 = vadd.f32 %v2205, %v2330
      %v2473 = vadd.f32 %v2206, %v2335
      %v2474 = vadd.f32 %v2207, %v2340
      %v2475 = vadd.f32 %v2208, %v2345
      %v2476 = vadd.f32 %v2209, %v2350
      %v2477 = vadd.f32 %v2210, %v2355
      %v2478 = vadd.f32 %v2211, %v2360
      %v2479 = vadd.f32 %v2212, %v2365
      %v2480 = vadd.f32 %v2213, %v2370
      %v2481 = vadd.f32 %v2214, %v2375
      %v2482 = vadd.f32 %v2215, %v2380
      %v2483 = vadd.f32 %v2216, %v2385
      %v2484 = vadd.f32 %v2217, %v2390
      %v2485 = vadd.f32 %v2218, %v2395
      %v2486 = vadd.f32 %v2219, %v2400
      %v2487 = vadd.f32 %v2220, %v2405
      %v2488 = vadd.f32 %v2221, %v2410
      %v2489 = vadd.f32 %v2222, %v2415
      %v2490 = vadd.f32 %v2223, %v2420
      %v2491 = vadd.f32 %v2224, %v2425
      %v2492 = vadd.f32 %v2225, %v2430
      %v2493 = vadd.f32 %v2226, %v2435
      %v2494 = vadd.f32 %v2227, %v2440
      %v2495 = vadd.f32 %v2228, %v2445
      %v2496 = vadd.f32 %v2229, %v2450
      %v2497 = vadd.f32 %v2230, %v2455
      %v2498 = vadd.f32 %v2231, %v2460
      %v2499 = vadd.f32 %v2232, %v2465
      %v2502 = vrot.slane %v629, 7
      %v2503 = vsel %vm664, %v665, %v2502
      %v2504 = vrot.slane %v630, 7
      %v2505 = vsel %vm664, %v2502, %v2504
      %s2506 = scalar_lea.vmem %s3, 48
      %v2507 = vld [vmem:[%s2506] sm:$0xff]
      %v2508 = vsel %vm733, %v2503, 0
      %v2510 = vsel %vm733, %v2505, 0
      %2512 = vmatprep.subr.mxu0 0.0
      %2513 = vmatpush1.msra.mxu0 %v2507
      %2514 = vmatprep.subr.mxu0 0.0
      %2515 = vmatpush1.msra.mxu0 0.0
      %2516 = vmatprep.subr.mxu0 0.0
      %2517 = vmatpush1.msra.mxu0 0.0
      %2518 = vmatprep.subr.mxu0 0.0
      %2519 = vmatpush1.msra.mxu0 0.0
      %2520 = vmatprep.subr.mxu0 0.0
      %2521 = vmatpush1.msra.mxu0 0.0
      %2522 = vmatprep.subr.mxu0 0.0
      %2523 = vmatpush1.msra.mxu0 0.0
      %2524 = vmatprep.subr.mxu0 0.0
      %2525 = vmatpush1.msra.mxu0 0.0
      %2526 = vmatprep.subr.mxu0 0.0
      %2527 = vmatpush1.msra.mxu0 0.0
      %2528 = vmatprep.subr.mxu0 0.0
      %2529 = vmatpush1.msra.mxu0 0.0
      %2530 = vmatprep.subr.mxu0 0.0
      %2531 = vmatpush1.msra.mxu0 0.0
      %2532 = vmatprep.subr.mxu0 0.0
      %2533 = vmatpush1.msra.mxu0 0.0
      %2534 = vmatprep.subr.mxu0 0.0
      %2535 = vmatpush1.msra.mxu0 0.0
      %2536 = vmatprep.subr.mxu0 0.0
      %2537 = vmatpush1.msra.mxu0 0.0
      %2538 = vmatprep.subr.mxu0 0.0
      %2539 = vmatpush1.msra.mxu0 0.0
      %2540 = vmatprep.subr.mxu0 0.0
      %2541 = vmatpush1.msra.mxu0 0.0
      %2542 = vmatprep.subr.mxu0 0.0
      %2543 = vmatpush1.msra.mxu0 0.0
      %2544 = vmatprep.subr.mxu0 0.0
      %2545 = vmatpush1.msra.mxu0 0.0
      %2546 = vmatprep.subr.mxu0 0.0
      %2547 = vmatpush1.msra.mxu0 0.0
      %2548 = vmatprep.subr.mxu0 0.0
      %2549 = vmatpush1.msra.mxu0 0.0
      %2550 = vmatprep.subr.mxu0 0.0
      %2551 = vmatpush1.msra.mxu0 0.0
      %2552 = vmatprep.subr.mxu0 0.0
      %2553 = vmatpush1.msra.mxu0 0.0
      %2554 = vmatprep.subr.mxu0 0.0
      %2555 = vmatpush1.msra.mxu0 0.0
      %2556 = vmatprep.subr.mxu0 0.0
      %2557 = vmatpush1.msra.mxu0 0.0
      %2558 = vmatprep.subr.mxu0 0.0
      %2559 = vmatpush1.msra.mxu0 0.0
      %2560 = vmatprep.subr.mxu0 0.0
      %2561 = vmatpush1.msra.mxu0 0.0
      %2562 = vmatprep.subr.mxu0 0.0
      %2563 = vmatpush1.msra.mxu0 0.0
      %2564 = vmatprep.subr.mxu0 0.0
      %2565 = vmatpush1.msra.mxu0 0.0
      %2566 = vmatprep.subr.mxu0 0.0
      %2567 = vmatpush1.msra.mxu0 0.0
      %2568 = vmatprep.subr.mxu0 0.0
      %2569 = vmatpush1.msra.mxu0 0.0
      %2570 = vmatprep.subr.mxu0 0.0
      %2571 = vmatpush1.msra.mxu0 0.0
      %2572 = vmatprep.subr.mxu0 0.0
      %2573 = vmatpush1.msra.mxu0 0.0
      %2574 = vmatprep.subr.mxu0 0.0
      %2575 = vmatpush1.msra.mxu0 0.0
      %2576 = vmatprep.mubr.f32.mxu0 0.0
      %2577 = vmatmul.mubr.f32.gmra.mrb[0].mxu0 %v1031
      %v2578 = vpop.f32.mrb[0].mxu0
      %v2579 = vadd.f32 0.0, %v2578
      %v2580 = vpop.f32.mrb[0].mxu0
      %2581 = vmatprep.mubr.f32.mxu0 0.0
      %2582 = vmatmul.mubr.f32.gmra.mrb[0].mxu0 %v1033
      %v2583 = vpop.f32.mrb[0].mxu0
      %v2584 = vadd.f32 0.0, %v2583
      %v2585 = vpop.f32.mrb[0].mxu0
      %2586 = vmatprep.mubr.f32.mxu0 0.0
      %2587 = vmatmul.mubr.f32.gmra.mrb[0].mxu0 %v1035
      %v2588 = vpop.f32.mrb[0].mxu0
      %v2589 = vadd.f32 0.0, %v2588
      %v2590 = vpop.f32.mrb[0].mxu0
      %2591 = vmatprep.mubr.f32.mxu0 0.0
      %2592 = vmatmul.mubr.f32.gmra.mrb[0].mxu0 %v1037
      %v2593 = vpop.f32.mrb[0].mxu0
      %v2594 = vadd.f32 0.0, %v2593
      %v2595 = vpop.f32.mrb[0].mxu0
      %2596 = vmatprep.mubr.f32.mxu0 0.0
      %2597 = vmatmul.mubr.f32.gmra.mrb[0].mxu0 %v1039
      %v2598 = vpop.f32.mrb[0].mxu0
      %v2599 = vadd.f32 0.0, %v2598
      %v2600 = vpop.f32.mrb[0].mxu0
      %2601 = vmatprep.mubr.f32.mxu0 0.0
      %2602 = vmatmul.mubr.f32.gmra.mrb[0].mxu0 %v1041
      %v2603 = vpop.f32.mrb[0].mxu0
      %v2604 = vadd.f32 0.0, %v2603
      %v2605 = vpop.f32.mrb[0].mxu0
      %2606 = vmatprep.mubr.f32.mxu0 0.0
      %2607 = vmatmul.mubr.f32.gmra.mrb[0].mxu0 %v1043
      %v2608 = vpop.f32.mrb[0].mxu0
      %v2609 = vadd.f32 0.0, %v2608
      %v2610 = vpop.f32.mrb[0].mxu0
      %2611 = vmatprep.mubr.f32.mxu0 0.0
      %2612 = vmatmul.mubr.f32.gmra.mrb[0].mxu0 %v1045
      %v2613 = vpop.f32.mrb[0].mxu0
      %v2614 = vadd.f32 0.0, %v2613
      %v2615 = vpop.f32.mrb[0].mxu0
      %2616 = vmatprep.mubr.f32.mxu0 0.0
      %2617 = vmatmul.mubr.f32.gmra.mrb[0].mxu0 %v1047
      %v2618 = vpop.f32.mrb[0].mxu0
      %v2619 = vadd.f32 0.0, %v2618
      %v2620 = vpop.f32.mrb[0].mxu0
      %2621 = vmatprep.mubr.f32.mxu0 0.0
      %2622 = vmatmul.mubr.f32.gmra.mrb[0].mxu0 %v1049
      %v2623 = vpop.f32.mrb[0].mxu0
      %v2624 = vadd.f32 0.0, %v2623
      %v2625 = vpop.f32.mrb[0].mxu0
      %2626 = vmatprep.mubr.f32.mxu0 0.0
      %2627 = vmatmul.mubr.f32.gmra.mrb[0].mxu0 %v1051
      %v2628 = vpop.f32.mrb[0].mxu0
      %v2629 = vadd.f32 0.0, %v2628
      %v2630 = vpop.f32.mrb[0].mxu0
      %2631 = vmatprep.mubr.f32.mxu0 0.0
      %2632 = vmatmul.mubr.f32.gmra.mrb[0].mxu0 %v1053
      %v2633 = vpop.f32.mrb[0].mxu0
      %v2634 = vadd.f32 0.0, %v2633
      %v2635 = vpop.f32.mrb[0].mxu0
      %2636 = vmatprep.mubr.f32.mxu0 0.0
      %2637 = vmatmul.mubr.f32.gmra.mrb[0].mxu0 %v1055
      %v2638 = vpop.f32.mrb[0].mxu0
      %v2639 = vadd.f32 0.0, %v2638
      %v2640 = vpop.f32.mrb[0].mxu0
      %2641 = vmatprep.mubr.f32.mxu0 0.0
      %2642 = vmatmul.mubr.f32.gmra.mrb[0].mxu0 %v1057
      %v2643 = vpop.f32.mrb[0].mxu0
      %v2644 = vadd.f32 0.0, %v2643
      %v2645 = vpop.f32.mrb[0].mxu0
      %2646 = vmatprep.mubr.f32.mxu0 0.0
      %2647 = vmatmul.mubr.f32.gmra.mrb[0].mxu0 %v1059
      %v2648 = vpop.f32.mrb[0].mxu0
      %v2649 = vadd.f32 0.0, %v2648
      %v2650 = vpop.f32.mrb[0].mxu0
      %2651 = vmatprep.mubr.f32.mxu0 0.0
      %2652 = vmatmul.mubr.f32.gmra.mrb[0].mxu0 %v1061
      %v2653 = vpop.f32.mrb[0].mxu0
      %v2654 = vadd.f32 0.0, %v2653
      %v2655 = vpop.f32.mrb[0].mxu0
      %2656 = vmatprep.mubr.f32.mxu0 0.0
      %2657 = vmatmul.mubr.f32.gmra.mrb[0].mxu0 %v1063
      %v2658 = vpop.f32.mrb[0].mxu0
      %v2659 = vadd.f32 0.0, %v2658
      %v2660 = vpop.f32.mrb[0].mxu0
      %2661 = vmatprep.mubr.f32.mxu0 0.0
      %2662 = vmatmul.mubr.f32.gmra.mrb[0].mxu0 %v1065
      %v2663 = vpop.f32.mrb[0].mxu0
      %v2664 = vadd.f32 0.0, %v2663
      %v2665 = vpop.f32.mrb[0].mxu0
      %2666 = vmatprep.mubr.f32.mxu0 0.0
      %2667 = vmatmul.mubr.f32.gmra.mrb[0].mxu0 %v1067
      %v2668 = vpop.f32.mrb[0].mxu0
      %v2669 = vadd.f32 0.0, %v2668
      %v2670 = vpop.f32.mrb[0].mxu0
      %2671 = vmatprep.mubr.f32.mxu0 0.0
      %2672 = vmatmul.mubr.f32.gmra.mrb[0].mxu0 %v1069
      %v2673 = vpop.f32.mrb[0].mxu0
      %v2674 = vadd.f32 0.0, %v2673
      %v2675 = vpop.f32.mrb[0].mxu0
      %2676 = vmatprep.mubr.f32.mxu0 0.0
      %2677 = vmatmul.mubr.f32.gmra.mrb[0].mxu0 %v1071
      %v2678 = vpop.f32.mrb[0].mxu0
      %v2679 = vadd.f32 0.0, %v2678
      %v2680 = vpop.f32.mrb[0].mxu0
      %2681 = vmatprep.mubr.f32.mxu0 0.0
      %2682 = vmatmul.mubr.f32.gmra.mrb[0].mxu0 %v1073
      %v2683 = vpop.f32.mrb[0].mxu0
      %v2684 = vadd.f32 0.0, %v2683
      %v2685 = vpop.f32.mrb[0].mxu0
      %2686 = vmatprep.mubr.f32.mxu0 0.0
      %2687 = vmatmul.mubr.f32.gmra.mrb[0].mxu0 %v1075
      %v2688 = vpop.f32.mrb[0].mxu0
      %v2689 = vadd.f32 0.0, %v2688
      %v2690 = vpop.f32.mrb[0].mxu0
      %2691 = vmatprep.mubr.f32.mxu0 0.0
      %2692 = vmatmul.mubr.f32.gmra.mrb[0].mxu0 %v1077
      %v2693 = vpop.f32.mrb[0].mxu0
      %v2694 = vadd.f32 0.0, %v2693
      %v2695 = vpop.f32.mrb[0].mxu0
      %2696 = vmatprep.mubr.f32.mxu0 0.0
      %2697 = vmatmul.mubr.f32.gmra.mrb[0].mxu0 %v1079
      %v2698 = vpop.f32.mrb[0].mxu0
      %v2699 = vadd.f32 0.0, %v2698
      %v2700 = vpop.f32.mrb[0].mxu0
      %2701 = vmatprep.mubr.f32.mxu0 0.0
      %2702 = vmatmul.mubr.f32.gmra.mrb[0].mxu0 %v1081
      %v2703 = vpop.f32.mrb[0].mxu0
      %v2704 = vadd.f32 0.0, %v2703
      %v2705 = vpop.f32.mrb[0].mxu0
      %2706 = vmatprep.mubr.f32.mxu0 0.0
      %2707 = vmatmul.mubr.f32.gmra.mrb[0].mxu0 %v1083
      %v2708 = vpop.f32.mrb[0].mxu0
      %v2709 = vadd.f32 0.0, %v2708
      %v2710 = vpop.f32.mrb[0].mxu0
      %2711 = vmatprep.mubr.f32.mxu0 0.0
      %2712 = vmatmul.mubr.f32.gmra.mrb[0].mxu0 %v1085
      %v2713 = vpop.f32.mrb[0].mxu0
      %v2714 = vadd.f32 0.0, %v2713
      %v2715 = vpop.f32.mrb[0].mxu0
      %2716 = vmatprep.mubr.f32.mxu0 0.0
      %2717 = vmatmul.mubr.f32.gmra.mrb[0].mxu0 %v1709
      %v2718 = vpop.f32.mrb[0].mxu0
      %v2719 = vadd.f32 0.0, %v2718
      %v2720 = vpop.f32.mrb[0].mxu0
      %2721 = vmatprep.mubr.f32.mxu0 0.0
      %2722 = vmatmul.mubr.f32.gmra.mrb[0].mxu0 %v1711
      %v2723 = vpop.f32.mrb[0].mxu0
      %v2724 = vadd.f32 0.0, %v2723
      %v2725 = vpop.f32.mrb[0].mxu0
      %2726 = vmatprep.mubr.f32.mxu0 0.0
      %2727 = vmatmul.mubr.f32.gmra.mrb[0].mxu0 %v2508
      %v2728 = vpop.f32.mrb[0].mxu0
      %v2729 = vadd.f32 0.0, %v2728
      %v2730 = vpop.f32.mrb[0].mxu0
      %2731 = vmatprep.mubr.f32.mxu0 0.0
      %2732 = vmatmul.mubr.f32.gmra.mrb[0].mxu0 %v2510
      %v2733 = vpop.f32.mrb[0].mxu0
      %v2734 = vadd.f32 0.0, %v2733
      %v2735 = vpop.f32.mrb[0].mxu0
      %2736 = vdwg.mxu0
      %v2737 = vadd.f32 %v2468, %v2579
      %v2738 = vadd.f32 %v2469, %v2584
      %v2739 = vadd.f32 %v2470, %v2589
      %v2740 = vadd.f32 %v2471, %v2594
      %v2741 = vadd.f32 %v2472, %v2599
      %v2742 = vadd.f32 %v2473, %v2604
      %v2743 = vadd.f32 %v2474, %v2609
      %v2744 = vadd.f32 %v2475, %v2614
      %v2745 = vadd.f32 %v2476, %v2619
      %v2746 = vadd.f32 %v2477, %v2624
      %v2747 = vadd.f32 %v2478, %v2629
      %v2748 = vadd.f32 %v2479, %v2634
      %v2749 = vadd.f32 %v2480, %v2639
      %v2750 = vadd.f32 %v2481, %v2644
      %v2751 = vadd.f32 %v2482, %v2649
      %v2752 = vadd.f32 %v2483, %v2654
      %v2753 = vadd.f32 %v2484, %v2659
      %v2754 = vadd.f32 %v2485, %v2664
      %v2755 = vadd.f32 %v2486, %v2669
      %v2756 = vadd.f32 %v2487, %v2674
      %v2757 = vadd.f32 %v2488, %v2679
      %v2758 = vadd.f32 %v2489, %v2684
      %v2759 = vadd.f32 %v2490, %v2689
      %v2760 = vadd.f32 %v2491, %v2694
      %v2761 = vadd.f32 %v2492, %v2699
      %v2762 = vadd.f32 %v2493, %v2704
      %v2763 = vadd.f32 %v2494, %v2709
      %v2764 = vadd.f32 %v2495, %v2714
      %v2765 = vadd.f32 %v2496, %v2719
      %v2766 = vadd.f32 %v2497, %v2724
      %v2767 = vadd.f32 %v2498, %v2729
      %v2768 = vadd.f32 %v2499, %v2734
      %s2769 = scalar_lea.vmem %s3, 56
      %v2770 = vld [vmem:[%s2769] sm:$0xff]
      %v2771 = vsel %vm733, %v629, 0
      %v2773 = vsel %vm733, %v630, 0
      %2775 = vmatprep.subr.mxu0 0.0
      %2776 = vmatpush1.msra.mxu0 %v2770
      %2777 = vmatprep.subr.mxu0 0.0
      %2778 = vmatpush1.msra.mxu0 0.0
      %2779 = vmatprep.subr.mxu0 0.0
      %2780 = vmatpush1.msra.mxu0 0.0
      %2781 = vmatprep.subr.mxu0 0.0
      %2782 = vmatpush1.msra.mxu0 0.0
      %2783 = vmatprep.subr.mxu0 0.0
      %2784 = vmatpush1.msra.mxu0 0.0
      %2785 = vmatprep.subr.mxu0 0.0
      %2786 = vmatpush1.msra.mxu0 0.0
      %2787 = vmatprep.subr.mxu0 0.0
      %2788 = vmatpush1.msra.mxu0 0.0
      %2789 = vmatprep.subr.mxu0 0.0
      %2790 = vmatpush1.msra.mxu0 0.0
      %2791 = vmatprep.subr.mxu0 0.0
      %2792 = vmatpush1.msra.mxu0 0.0
      %2793 = vmatprep.subr.mxu0 0.0
      %2794 = vmatpush1.msra.mxu0 0.0
      %2795 = vmatprep.subr.mxu0 0.0
      %2796 = vmatpush1.msra.mxu0 0.0
      %2797 = vmatprep.subr.mxu0 0.0
      %2798 = vmatpush1.msra.mxu0 0.0
      %2799 = vmatprep.subr.mxu0 0.0
      %2800 = vmatpush1.msra.mxu0 0.0
      %2801 = vmatprep.subr.mxu0 0.0
      %2802 = vmatpush1.msra.mxu0 0.0
      %2803 = vmatprep.subr.mxu0 0.0
      %2804 = vmatpush1.msra.mxu0 0.0
      %2805 = vmatprep.subr.mxu0 0.0
      %2806 = vmatpush1.msra.mxu0 0.0
      %2807 = vmatprep.subr.mxu0 0.0
      %2808 = vmatpush1.msra.mxu0 0.0
      %2809 = vmatprep.subr.mxu0 0.0
      %2810 = vmatpush1.msra.mxu0 0.0
      %2811 = vmatprep.subr.mxu0 0.0
      %2812 = vmatpush1.msra.mxu0 0.0
      %2813 = vmatprep.subr.mxu0 0.0
      %2814 = vmatpush1.msra.mxu0 0.0
      %2815 = vmatprep.subr.mxu0 0.0
      %2816 = vmatpush1.msra.mxu0 0.0
      %2817 = vmatprep.subr.mxu0 0.0
      %2818 = vmatpush1.msra.mxu0 0.0
      %2819 = vmatprep.subr.mxu0 0.0
      %2820 = vmatpush1.msra.mxu0 0.0
      %2821 = vmatprep.subr.mxu0 0.0
      %2822 = vmatpush1.msra.mxu0 0.0
      %2823 = vmatprep.subr.mxu0 0.0
      %2824 = vmatpush1.msra.mxu0 0.0
      %2825 = vmatprep.subr.mxu0 0.0
      %2826 = vmatpush1.msra.mxu0 0.0
      %2827 = vmatprep.subr.mxu0 0.0
      %2828 = vmatpush1.msra.mxu0 0.0
      %2829 = vmatprep.subr.mxu0 0.0
      %2830 = vmatpush1.msra.mxu0 0.0
      %2831 = vmatprep.subr.mxu0 0.0
      %2832 = vmatpush1.msra.mxu0 0.0
      %2833 = vmatprep.subr.mxu0 0.0
      %2834 = vmatpush1.msra.mxu0 0.0
      %2835 = vmatprep.subr.mxu0 0.0
      %2836 = vmatpush1.msra.mxu0 0.0
      %2837 = vmatprep.subr.mxu0 0.0
      %2838 = vmatpush1.msra.mxu0 0.0
      %2839 = vmatprep.mubr.f32.mxu0 0.0
      %2840 = vmatmul.mubr.f32.gmra.mrb[0].mxu0 %v742
      %v2841 = vpop.f32.mrb[0].mxu0
      %v2842 = vadd.f32 0.0, %v2841
      %v2843 = vpop.f32.mrb[0].mxu0
      %2844 = vmatprep.mubr.f32.mxu0 0.0
      %2845 = vmatmul.mubr.f32.gmra.mrb[0].mxu0 %v744
      %v2846 = vpop.f32.mrb[0].mxu0
      %v2847 = vadd.f32 0.0, %v2846
      %v2848 = vpop.f32.mrb[0].mxu0
      %2849 = vmatprep.mubr.f32.mxu0 0.0
      %2850 = vmatmul.mubr.f32.gmra.mrb[0].mxu0 %v746
      %v2851 = vpop.f32.mrb[0].mxu0
      %v2852 = vadd.f32 0.0, %v2851
      %v2853 = vpop.f32.mrb[0].mxu0
      %2854 = vmatprep.mubr.f32.mxu0 0.0
      %2855 = vmatmul.mubr.f32.gmra.mrb[0].mxu0 %v748
      %v2856 = vpop.f32.mrb[0].mxu0
      %v2857 = vadd.f32 0.0, %v2856
      %v2858 = vpop.f32.mrb[0].mxu0
      %2859 = vmatprep.mubr.f32.mxu0 0.0
      %2860 = vmatmul.mubr.f32.gmra.mrb[0].mxu0 %v750
      %v2861 = vpop.f32.mrb[0].mxu0
      %v2862 = vadd.f32 0.0, %v2861
      %v2863 = vpop.f32.mrb[0].mxu0
      %2864 = vmatprep.mubr.f32.mxu0 0.0
      %2865 = vmatmul.mubr.f32.gmra.mrb[0].mxu0 %v752
      %v2866 = vpop.f32.mrb[0].mxu0
      %v2867 = vadd.f32 0.0, %v2866
      %v2868 = vpop.f32.mrb[0].mxu0
      %2869 = vmatprep.mubr.f32.mxu0 0.0
      %2870 = vmatmul.mubr.f32.gmra.mrb[0].mxu0 %v754
      %v2871 = vpop.f32.mrb[0].mxu0
      %v2872 = vadd.f32 0.0, %v2871
      %v2873 = vpop.f32.mrb[0].mxu0
      %2874 = vmatprep.mubr.f32.mxu0 0.0
      %2875 = vmatmul.mubr.f32.gmra.mrb[0].mxu0 %v756
      %v2876 = vpop.f32.mrb[0].mxu0
      %v2877 = vadd.f32 0.0, %v2876
      %v2878 = vpop.f32.mrb[0].mxu0
      %2879 = vmatprep.mubr.f32.mxu0 0.0
      %2880 = vmatmul.mubr.f32.gmra.mrb[0].mxu0 %v758
      %v2881 = vpop.f32.mrb[0].mxu0
      %v2882 = vadd.f32 0.0, %v2881
      %v2883 = vpop.f32.mrb[0].mxu0
      %2884 = vmatprep.mubr.f32.mxu0 0.0
      %2885 = vmatmul.mubr.f32.gmra.mrb[0].mxu0 %v760
      %v2886 = vpop.f32.mrb[0].mxu0
      %v2887 = vadd.f32 0.0, %v2886
      %v2888 = vpop.f32.mrb[0].mxu0
      %2889 = vmatprep.mubr.f32.mxu0 0.0
      %2890 = vmatmul.mubr.f32.gmra.mrb[0].mxu0 %v762
      %v2891 = vpop.f32.mrb[0].mxu0
      %v2892 = vadd.f32 0.0, %v2891
      %v2893 = vpop.f32.mrb[0].mxu0
      %2894 = vmatprep.mubr.f32.mxu0 0.0
      %2895 = vmatmul.mubr.f32.gmra.mrb[0].mxu0 %v764
      %v2896 = vpop.f32.mrb[0].mxu0
      %v2897 = vadd.f32 0.0, %v2896
      %v2898 = vpop.f32.mrb[0].mxu0
      %2899 = vmatprep.mubr.f32.mxu0 0.0
      %2900 = vmatmul.mubr.f32.gmra.mrb[0].mxu0 %v766
      %v2901 = vpop.f32.mrb[0].mxu0
      %v2902 = vadd.f32 0.0, %v2901
      %v2903 = vpop.f32.mrb[0].mxu0
      %2904 = vmatprep.mubr.f32.mxu0 0.0
      %2905 = vmatmul.mubr.f32.gmra.mrb[0].mxu0 %v768
      %v2906 = vpop.f32.mrb[0].mxu0
      %v2907 = vadd.f32 0.0, %v2906
      %v2908 = vpop.f32.mrb[0].mxu0
      %2909 = vmatprep.mubr.f32.mxu0 0.0
      %2910 = vmatmul.mubr.f32.gmra.mrb[0].mxu0 %v770
      %v2911 = vpop.f32.mrb[0].mxu0
      %v2912 = vadd.f32 0.0, %v2911
      %v2913 = vpop.f32.mrb[0].mxu0
      %2914 = vmatprep.mubr.f32.mxu0 0.0
      %2915 = vmatmul.mubr.f32.gmra.mrb[0].mxu0 %v772
      %v2916 = vpop.f32.mrb[0].mxu0
      %v2917 = vadd.f32 0.0, %v2916
      %v2918 = vpop.f32.mrb[0].mxu0
      %2919 = vmatprep.mubr.f32.mxu0 0.0
      %2920 = vmatmul.mubr.f32.gmra.mrb[0].mxu0 %v774
      %v2921 = vpop.f32.mrb[0].mxu0
      %v2922 = vadd.f32 0.0, %v2921
      %v2923 = vpop.f32.mrb[0].mxu0
      %2924 = vmatprep.mubr.f32.mxu0 0.0
      %2925 = vmatmul.mubr.f32.gmra.mrb[0].mxu0 %v776
      %v2926 = vpop.f32.mrb[0].mxu0
      %v2927 = vadd.f32 0.0, %v2926
      %v2928 = vpop.f32.mrb[0].mxu0
      %2929 = vmatprep.mubr.f32.mxu0 0.0
      %2930 = vmatmul.mubr.f32.gmra.mrb[0].mxu0 %v778
      %v2931 = vpop.f32.mrb[0].mxu0
      %v2932 = vadd.f32 0.0, %v2931
      %v2933 = vpop.f32.mrb[0].mxu0
      %2934 = vmatprep.mubr.f32.mxu0 0.0
      %2935 = vmatmul.mubr.f32.gmra.mrb[0].mxu0 %v780
      %v2936 = vpop.f32.mrb[0].mxu0
      %v2937 = vadd.f32 0.0, %v2936
      %v2938 = vpop.f32.mrb[0].mxu0
      %2939 = vmatprep.mubr.f32.mxu0 0.0
      %2940 = vmatmul.mubr.f32.gmra.mrb[0].mxu0 %v782
      %v2941 = vpop.f32.mrb[0].mxu0
      %v2942 = vadd.f32 0.0, %v2941
      %v2943 = vpop.f32.mrb[0].mxu0
      %2944 = vmatprep.mubr.f32.mxu0 0.0
      %2945 = vmatmul.mubr.f32.gmra.mrb[0].mxu0 %v784
      %v2946 = vpop.f32.mrb[0].mxu0
      %v2947 = vadd.f32 0.0, %v2946
      %v2948 = vpop.f32.mrb[0].mxu0
      %2949 = vmatprep.mubr.f32.mxu0 0.0
      %2950 = vmatmul.mubr.f32.gmra.mrb[0].mxu0 %v786
      %v2951 = vpop.f32.mrb[0].mxu0
      %v2952 = vadd.f32 0.0, %v2951
      %v2953 = vpop.f32.mrb[0].mxu0
      %2954 = vmatprep.mubr.f32.mxu0 0.0
      %2955 = vmatmul.mubr.f32.gmra.mrb[0].mxu0 %v788
      %v2956 = vpop.f32.mrb[0].mxu0
      %v2957 = vadd.f32 0.0, %v2956
      %v2958 = vpop.f32.mrb[0].mxu0
      %2959 = vmatprep.mubr.f32.mxu0 0.0
      %2960 = vmatmul.mubr.f32.gmra.mrb[0].mxu0 %v790
      %v2961 = vpop.f32.mrb[0].mxu0
      %v2962 = vadd.f32 0.0, %v2961
      %v2963 = vpop.f32.mrb[0].mxu0
      %2964 = vmatprep.mubr.f32.mxu0 0.0
      %2965 = vmatmul.mubr.f32.gmra.mrb[0].mxu0 %v792
      %v2966 = vpop.f32.mrb[0].mxu0
      %v2967 = vadd.f32 0.0, %v2966
      %v2968 = vpop.f32.mrb[0].mxu0
      %2969 = vmatprep.mubr.f32.mxu0 0.0
      %2970 = vmatmul.mubr.f32.gmra.mrb[0].mxu0 %v794
      %v2971 = vpop.f32.mrb[0].mxu0
      %v2972 = vadd.f32 0.0, %v2971
      %v2973 = vpop.f32.mrb[0].mxu0
      %2974 = vmatprep.mubr.f32.mxu0 0.0
      %2975 = vmatmul.mubr.f32.gmra.mrb[0].mxu0 %v796
      %v2976 = vpop.f32.mrb[0].mxu0
      %v2977 = vadd.f32 0.0, %v2976
      %v2978 = vpop.f32.mrb[0].mxu0
      %2979 = vmatprep.mubr.f32.mxu0 0.0
      %2980 = vmatmul.mubr.f32.gmra.mrb[0].mxu0 %v1972
      %v2981 = vpop.f32.mrb[0].mxu0
      %v2982 = vadd.f32 0.0, %v2981
      %v2983 = vpop.f32.mrb[0].mxu0
      %2984 = vmatprep.mubr.f32.mxu0 0.0
      %2985 = vmatmul.mubr.f32.gmra.mrb[0].mxu0 %v1974
      %v2986 = vpop.f32.mrb[0].mxu0
      %v2987 = vadd.f32 0.0, %v2986
      %v2988 = vpop.f32.mrb[0].mxu0
      %2989 = vmatprep.mubr.f32.mxu0 0.0
      %2990 = vmatmul.mubr.f32.gmra.mrb[0].mxu0 %v2771
      %v2991 = vpop.f32.mrb[0].mxu0
      %v2992 = vadd.f32 0.0, %v2991
      %v2993 = vpop.f32.mrb[0].mxu0
      %2994 = vmatprep.mubr.f32.mxu0 0.0
      %2995 = vmatmul.mubr.f32.gmra.mrb[0].mxu0 %v2773
      %v2996 = vpop.f32.mrb[0].mxu0
      %v2997 = vadd.f32 0.0, %v2996
      %v2998 = vpop.f32.mrb[0].mxu0
      %2999 = vdwg.mxu0
      %v3000 = vadd.f32 %v2737, %v2842
      %v3001 = vadd.f32 %v2738, %v2847
      %v3002 = vadd.f32 %v2739, %v2852
      %v3003 = vadd.f32 %v2740, %v2857
      %v3004 = vadd.f32 %v2741, %v2862
      %v3005 = vadd.f32 %v2742, %v2867
      %v3006 = vadd.f32 %v2743, %v2872
      %v3007 = vadd.f32 %v2744, %v2877
      %v3008 = vadd.f32 %v2745, %v2882
      %v3009 = vadd.f32 %v2746, %v2887
      %v3010 = vadd.f32 %v2747, %v2892
      %v3011 = vadd.f32 %v2748, %v2897
      %v3012 = vadd.f32 %v2749, %v2902
      %v3013 = vadd.f32 %v2750, %v2907
      %v3014 = vadd.f32 %v2751, %v2912
      %v3015 = vadd.f32 %v2752, %v2917
      %v3016 = vadd.f32 %v2753, %v2922
      %v3017 = vadd.f32 %v2754, %v2927
      %v3018 = vadd.f32 %v2755, %v2932
      %v3019 = vadd.f32 %v2756, %v2937
      %v3020 = vadd.f32 %v2757, %v2942
      %v3021 = vadd.f32 %v2758, %v2947
      %v3022 = vadd.f32 %v2759, %v2952
      %v3023 = vadd.f32 %v2760, %v2957
      %v3024 = vadd.f32 %v2761, %v2962
      %v3025 = vadd.f32 %v2762, %v2967
      %v3026 = vadd.f32 %v2763, %v2972
      %v3027 = vadd.f32 %v2764, %v2977
      %v3028 = vadd.f32 %v2765, %v2982
      %v3029 = vadd.f32 %v2766, %v2987
      %v3030 = vadd.f32 %v2767, %v2992
      %v3031 = vadd.f32 %v2768, %v2997
      %v3032 = vrot.slane %v629, 1
      %v3033 = vrot.slane %v630, 1
      %v3034 = vsel %vm1312, %v3032, %v3033
      %v3035 = vsel %vm1312, %v3033, %v1316
      %s3036 = scalar_lea.vmem %s3, 64
      %v3037 = vld [vmem:[%s3036] sm:$0xff]
      %v3038 = vsel %vm733, %v3034, 0
      %v3040 = vsel %vm733, %v3035, 0
      %3042 = vmatprep.subr.mxu0 0.0
      %3043 = vmatpush1.msra.mxu0 %v3037
      %3044 = vmatprep.subr.mxu0 0.0
      %3045 = vmatpush1.msra.mxu0 0.0
      %3046 = vmatprep.subr.mxu0 0.0
      %3047 = vmatpush1.msra.mxu0 0.0
      %3048 = vmatprep.subr.mxu0 0.0
      %3049 = vmatpush1.msra.mxu0 0.0
      %3050 = vmatprep.subr.mxu0 0.0
      %3051 = vmatpush1.msra.mxu0 0.0
      %3052 = vmatprep.subr.mxu0 0.0
      %3053 = vmatpush1.msra.mxu0 0.0
      %3054 = vmatprep.subr.mxu0 0.0
      %3055 = vmatpush1.msra.mxu0 0.0
      %3056 = vmatprep.subr.mxu0 0.0
      %3057 = vmatpush1.msra.mxu0 0.0
      %3058 = vmatprep.subr.mxu0 0.0
      %3059 = vmatpush1.msra.mxu0 0.0
      %3060 = vmatprep.subr.mxu0 0.0
      %3061 = vmatpush1.msra.mxu0 0.0
      %3062 = vmatprep.subr.mxu0 0.0
      %3063 = vmatpush1.msra.mxu0 0.0
      %3064 = vmatprep.subr.mxu0 0.0
      %3065 = vmatpush1.msra.mxu0 0.0
      %3066 = vmatprep.subr.mxu0 0.0
      %3067 = vmatpush1.msra.mxu0 0.0
      %3068 = vmatprep.subr.mxu0 0.0
      %3069 = vmatpush1.msra.mxu0 0.0
      %3070 = vmatprep.subr.mxu0 0.0
      %3071 = vmatpush1.msra.mxu0 0.0
      %3072 = vmatprep.subr.mxu0 0.0
      %3073 = vmatpush1.msra.mxu0 0.0
      %3074 = vmatprep.subr.mxu0 0.0
      %3075 = vmatpush1.msra.mxu0 0.0
      %3076 = vmatprep.subr.mxu0 0.0
      %3077 = vmatpush1.msra.mxu0 0.0
      %3078 = vmatprep.subr.mxu0 0.0
      %3079 = vmatpush1.msra.mxu0 0.0
      %3080 = vmatprep.subr.mxu0 0.0
      %3081 = vmatpush1.msra.mxu0 0.0
      %3082 = vmatprep.subr.mxu0 0.0
      %3083 = vmatpush1.msra.mxu0 0.0
      %3084 = vmatprep.subr.mxu0 0.0
      %3085 = vmatpush1.msra.mxu0 0.0
      %3086 = vmatprep.subr.mxu0 0.0
      %3087 = vmatpush1.msra.mxu0 0.0
      %3088 = vmatprep.subr.mxu0 0.0
      %3089 = vmatpush1.msra.mxu0 0.0
      %3090 = vmatprep.subr.mxu0 0.0
      %3091 = vmatpush1.msra.mxu0 0.0
      %3092 = vmatprep.subr.mxu0 0.0
      %3093 = vmatpush1.msra.mxu0 0.0
      %3094 = vmatprep.subr.mxu0 0.0
      %3095 = vmatpush1.msra.mxu0 0.0
      %3096 = vmatprep.subr.mxu0 0.0
      %3097 = vmatpush1.msra.mxu0 0.0
      %3098 = vmatprep.subr.mxu0 0.0
      %3099 = vmatpush1.msra.mxu0 0.0
      %3100 = vmatprep.subr.mxu0 0.0
      %3101 = vmatpush1.msra.mxu0 0.0
      %3102 = vmatprep.subr.mxu0 0.0
      %3103 = vmatpush1.msra.mxu0 0.0
      %3104 = vmatprep.subr.mxu0 0.0
      %3105 = vmatpush1.msra.mxu0 0.0
      %3106 = vmatprep.mubr.f32.mxu0 0.0
      %3107 = vmatmul.mubr.f32.gmra.mrb[0].mxu0 %v1388
      %v3108 = vpop.f32.mrb[0].mxu0
      %v3109 = vadd.f32 0.0, %v3108
      %v3110 = vpop.f32.mrb[0].mxu0
      %3111 = vmatprep.mubr.f32.mxu0 0.0
      %3112 = vmatmul.mubr.f32.gmra.mrb[0].mxu0 %v1390
      %v3113 = vpop.f32.mrb[0].mxu0
      %v3114 = vadd.f32 0.0, %v3113
      %v3115 = vpop.f32.mrb[0].mxu0
      %3116 = vmatprep.mubr.f32.mxu0 0.0
      %3117 = vmatmul.mubr.f32.gmra.mrb[0].mxu0 %v1392
      %v3118 = vpop.f32.mrb[0].mxu0
      %v3119 = vadd.f32 0.0, %v3118
      %v3120 = vpop.f32.mrb[0].mxu0
      %3121 = vmatprep.mubr.f32.mxu0 0.0
      %3122 = vmatmul.mubr.f32.gmra.mrb[0].mxu0 %v1394
      %v3123 = vpop.f32.mrb[0].mxu0
      %v3124 = vadd.f32 0.0, %v3123
      %v3125 = vpop.f32.mrb[0].mxu0
      %3126 = vmatprep.mubr.f32.mxu0 0.0
      %3127 = vmatmul.mubr.f32.gmra.mrb[0].mxu0 %v1396
      %v3128 = vpop.f32.mrb[0].mxu0
      %v3129 = vadd.f32 0.0, %v3128
      %v3130 = vpop.f32.mrb[0].mxu0
      %3131 = vmatprep.mubr.f32.mxu0 0.0
      %3132 = vmatmul.mubr.f32.gmra.mrb[0].mxu0 %v1398
      %v3133 = vpop.f32.mrb[0].mxu0
      %v3134 = vadd.f32 0.0, %v3133
      %v3135 = vpop.f32.mrb[0].mxu0
      %3136 = vmatprep.mubr.f32.mxu0 0.0
      %3137 = vmatmul.mubr.f32.gmra.mrb[0].mxu0 %v1400
      %v3138 = vpop.f32.mrb[0].mxu0
      %v3139 = vadd.f32 0.0, %v3138
      %v3140 = vpop.f32.mrb[0].mxu0
      %3141 = vmatprep.mubr.f32.mxu0 0.0
      %3142 = vmatmul.mubr.f32.gmra.mrb[0].mxu0 %v1402
      %v3143 = vpop.f32.mrb[0].mxu0
      %v3144 = vadd.f32 0.0, %v3143
      %v3145 = vpop.f32.mrb[0].mxu0
      %3146 = vmatprep.mubr.f32.mxu0 0.0
      %3147 = vmatmul.mubr.f32.gmra.mrb[0].mxu0 %v1404
      %v3148 = vpop.f32.mrb[0].mxu0
      %v3149 = vadd.f32 0.0, %v3148
      %v3150 = vpop.f32.mrb[0].mxu0
      %3151 = vmatprep.mubr.f32.mxu0 0.0
      %3152 = vmatmul.mubr.f32.gmra.mrb[0].mxu0 %v1406
      %v3153 = vpop.f32.mrb[0].mxu0
      %v3154 = vadd.f32 0.0, %v3153
      %v3155 = vpop.f32.mrb[0].mxu0
      %3156 = vmatprep.mubr.f32.mxu0 0.0
      %3157 = vmatmul.mubr.f32.gmra.mrb[0].mxu0 %v1408
      %v3158 = vpop.f32.mrb[0].mxu0
      %v3159 = vadd.f32 0.0, %v3158
      %v3160 = vpop.f32.mrb[0].mxu0
      %3161 = vmatprep.mubr.f32.mxu0 0.0
      %3162 = vmatmul.mubr.f32.gmra.mrb[0].mxu0 %v1410
      %v3163 = vpop.f32.mrb[0].mxu0
      %v3164 = vadd.f32 0.0, %v3163
      %v3165 = vpop.f32.mrb[0].mxu0
      %3166 = vmatprep.mubr.f32.mxu0 0.0
      %3167 = vmatmul.mubr.f32.gmra.mrb[0].mxu0 %v1412
      %v3168 = vpop.f32.mrb[0].mxu0
      %v3169 = vadd.f32 0.0, %v3168
      %v3170 = vpop.f32.mrb[0].mxu0
      %3171 = vmatprep.mubr.f32.mxu0 0.0
      %3172 = vmatmul.mubr.f32.gmra.mrb[0].mxu0 %v1414
      %v3173 = vpop.f32.mrb[0].mxu0
      %v3174 = vadd.f32 0.0, %v3173
      %v3175 = vpop.f32.mrb[0].mxu0
      %3176 = vmatprep.mubr.f32.mxu0 0.0
      %3177 = vmatmul.mubr.f32.gmra.mrb[0].mxu0 %v1416
      %v3178 = vpop.f32.mrb[0].mxu0
      %v3179 = vadd.f32 0.0, %v3178
      %v3180 = vpop.f32.mrb[0].mxu0
      %3181 = vmatprep.mubr.f32.mxu0 0.0
      %3182 = vmatmul.mubr.f32.gmra.mrb[0].mxu0 %v1418
      %v3183 = vpop.f32.mrb[0].mxu0
      %v3184 = vadd.f32 0.0, %v3183
      %v3185 = vpop.f32.mrb[0].mxu0
      %3186 = vmatprep.mubr.f32.mxu0 0.0
      %3187 = vmatmul.mubr.f32.gmra.mrb[0].mxu0 %v1420
      %v3188 = vpop.f32.mrb[0].mxu0
      %v3189 = vadd.f32 0.0, %v3188
      %v3190 = vpop.f32.mrb[0].mxu0
      %3191 = vmatprep.mubr.f32.mxu0 0.0
      %3192 = vmatmul.mubr.f32.gmra.mrb[0].mxu0 %v1422
      %v3193 = vpop.f32.mrb[0].mxu0
      %v3194 = vadd.f32 0.0, %v3193
      %v3195 = vpop.f32.mrb[0].mxu0
      %3196 = vmatprep.mubr.f32.mxu0 0.0
      %3197 = vmatmul.mubr.f32.gmra.mrb[0].mxu0 %v1424
      %v3198 = vpop.f32.mrb[0].mxu0
      %v3199 = vadd.f32 0.0, %v3198
      %v3200 = vpop.f32.mrb[0].mxu0
      %3201 = vmatprep.mubr.f32.mxu0 0.0
      %3202 = vmatmul.mubr.f32.gmra.mrb[0].mxu0 %v1426
      %v3203 = vpop.f32.mrb[0].mxu0
      %v3204 = vadd.f32 0.0, %v3203
      %v3205 = vpop.f32.mrb[0].mxu0
      %3206 = vmatprep.mubr.f32.mxu0 0.0
      %3207 = vmatmul.mubr.f32.gmra.mrb[0].mxu0 %v1428
      %v3208 = vpop.f32.mrb[0].mxu0
      %v3209 = vadd.f32 0.0, %v3208
      %v3210 = vpop.f32.mrb[0].mxu0
      %3211 = vmatprep.mubr.f32.mxu0 0.0
      %3212 = vmatmul.mubr.f32.gmra.mrb[0].mxu0 %v1430
      %v3213 = vpop.f32.mrb[0].mxu0
      %v3214 = vadd.f32 0.0, %v3213
      %v3215 = vpop.f32.mrb[0].mxu0
      %3216 = vmatprep.mubr.f32.mxu0 0.0
      %3217 = vmatmul.mubr.f32.gmra.mrb[0].mxu0 %v1432
      %v3218 = vpop.f32.mrb[0].mxu0
      %v3219 = vadd.f32 0.0, %v3218
      %v3220 = vpop.f32.mrb[0].mxu0
      %3221 = vmatprep.mubr.f32.mxu0 0.0
      %3222 = vmatmul.mubr.f32.gmra.mrb[0].mxu0 %v1434
      %v3223 = vpop.f32.mrb[0].mxu0
      %v3224 = vadd.f32 0.0, %v3223
      %v3225 = vpop.f32.mrb[0].mxu0
      %3226 = vmatprep.mubr.f32.mxu0 0.0
      %3227 = vmatmul.mubr.f32.gmra.mrb[0].mxu0 %v1436
      %v3228 = vpop.f32.mrb[0].mxu0
      %v3229 = vadd.f32 0.0, %v3228
      %v3230 = vpop.f32.mrb[0].mxu0
      %3231 = vmatprep.mubr.f32.mxu0 0.0
      %3232 = vmatmul.mubr.f32.gmra.mrb[0].mxu0 %v1438
      %v3233 = vpop.f32.mrb[0].mxu0
      %v3234 = vadd.f32 0.0, %v3233
      %v3235 = vpop.f32.mrb[0].mxu0
      %3236 = vmatprep.mubr.f32.mxu0 0.0
      %3237 = vmatmul.mubr.f32.gmra.mrb[0].mxu0 %v1440
      %v3238 = vpop.f32.mrb[0].mxu0
      %v3239 = vadd.f32 0.0, %v3238
      %v3240 = vpop.f32.mrb[0].mxu0
      %3241 = vmatprep.mubr.f32.mxu0 0.0
      %3242 = vmatmul.mubr.f32.gmra.mrb[0].mxu0 %v1442
      %v3243 = vpop.f32.mrb[0].mxu0
      %v3244 = vadd.f32 0.0, %v3243
      %v3245 = vpop.f32.mrb[0].mxu0
      %3246 = vmatprep.mubr.f32.mxu0 0.0
      %3247 = vmatmul.mubr.f32.gmra.mrb[0].mxu0 %v2239
      %v3248 = vpop.f32.mrb[0].mxu0
      %v3249 = vadd.f32 0.0, %v3248
      %v3250 = vpop.f32.mrb[0].mxu0
      %3251 = vmatprep.mubr.f32.mxu0 0.0
      %3252 = vmatmul.mubr.f32.gmra.mrb[0].mxu0 %v2241
      %v3253 = vpop.f32.mrb[0].mxu0
      %v3254 = vadd.f32 0.0, %v3253
      %v3255 = vpop.f32.mrb[0].mxu0
      %3256 = vmatprep.mubr.f32.mxu0 0.0
      %3257 = vmatmul.mubr.f32.gmra.mrb[0].mxu0 %v3038
      %v3258 = vpop.f32.mrb[0].mxu0
      %v3259 = vadd.f32 0.0, %v3258
      %v3260 = vpop.f32.mrb[0].mxu0
      %3261 = vmatprep.mubr.f32.mxu0 0.0
      %3262 = vmatmul.mubr.f32.gmra.mrb[0].mxu0 %v3040
      %v3263 = vpop.f32.mrb[0].mxu0
      %v3264 = vadd.f32 0.0, %v3263
      %v3265 = vpop.f32.mrb[0].mxu0
      %3266 = vdwg.mxu0
      %v3267 = vadd.f32 %v3000, %v3109
      %v3268 = vadd.f32 %v3001, %v3114
      %v3269 = vadd.f32 %v3002, %v3119
      %v3270 = vadd.f32 %v3003, %v3124
      %v3271 = vadd.f32 %v3004, %v3129
      %v3272 = vadd.f32 %v3005, %v3134
      %v3273 = vadd.f32 %v3006, %v3139
      %v3274 = vadd.f32 %v3007, %v3144
      %v3275 = vadd.f32 %v3008, %v3149
      %v3276 = vadd.f32 %v3009, %v3154
      %v3277 = vadd.f32 %v3010, %v3159
      %v3278 = vadd.f32 %v3011, %v3164
      %v3279 = vadd.f32 %v3012, %v3169
      %v3280 = vadd.f32 %v3013, %v3174
      %v3281 = vadd.f32 %v3014, %v3179
      %v3282 = vadd.f32 %v3015, %v3184
      %v3283 = vadd.f32 %v3016, %v3189
      %v3284 = vadd.f32 %v3017, %v3194
      %v3285 = vadd.f32 %v3018, %v3199
      %v3286 = vadd.f32 %v3019, %v3204
      %v3287 = vadd.f32 %v3020, %v3209
      %v3288 = vadd.f32 %v3021, %v3214
      %v3289 = vadd.f32 %v3022, %v3219
      %v3290 = vadd.f32 %v3023, %v3224
      %v3291 = vadd.f32 %v3024, %v3229
      %v3292 = vadd.f32 %v3025, %v3234
      %v3293 = vadd.f32 %v3026, %v3239
      %v3294 = vadd.f32 %v3027, %v3244
      %v3295 = vadd.f32 %v3028, %v3249
      %v3296 = vadd.f32 %v3029, %v3254
      %v3297 = vadd.f32 %v3030, %v3259
      %v3298 = vadd.f32 %v3031, %v3264
      %3299 = vst.msk [vmem:[%s455] sm:$0xff] %vm733, %v3267
      %3300 = vst.msk [vmem:[%s455 + $0x8] sm:$0xff] %vm733, %v3268
      %3301 = vst.msk [vmem:[%s455 + $0x10] sm:$0xff] %vm733, %v3269
      %3302 = vst.msk [vmem:[%s455 + $0x18] sm:$0xff] %vm733, %v3270
      %3303 = vst.msk [vmem:[%s455 + $0x20] sm:$0xff] %vm733, %v3271
      %3304 = vst.msk [vmem:[%s455 + $0x28] sm:$0xff] %vm733, %v3272
      %3305 = vst.msk [vmem:[%s455 + $0x30] sm:$0xff] %vm733, %v3273
      %3306 = vst.msk [vmem:[%s455 + $0x38] sm:$0xff] %vm733, %v3274
      %3307 = vst.msk [vmem:[%s455 + $0x40] sm:$0xff] %vm733, %v3275
      %3308 = vst.msk [vmem:[%s455 + $0x48] sm:$0xff] %vm733, %v3276
      %3309 = vst.msk [vmem:[%s455 + $0x50] sm:$0xff] %vm733, %v3277
      %3310 = vst.msk [vmem:[%s455 + $0x58] sm:$0xff] %vm733, %v3278
      %3311 = vst.msk [vmem:[%s455 + $0x60] sm:$0xff] %vm733, %v3279
      %3312 = vst.msk [vmem:[%s455 + $0x68] sm:$0xff] %vm733, %v3280
      %3313 = vst.msk [vmem:[%s455 + $0x70] sm:$0xff] %vm733, %v3281
      %3314 = vst.msk [vmem:[%s455 + $0x78] sm:$0xff] %vm733, %v3282
      %3315 = vst.msk [vmem:[%s455 + $0x80] sm:$0xff] %vm733, %v3283
      %3316 = vst.msk [vmem:[%s455 + $0x88] sm:$0xff] %vm733, %v3284
      %3317 = vst.msk [vmem:[%s455 + $0x90] sm:$0xff] %vm733, %v3285
      %3318 = vst.msk [vmem:[%s455 + $0x98] sm:$0xff] %vm733, %v3286
      %3319 = vst.msk [vmem:[%s455 + $0xa0] sm:$0xff] %vm733, %v3287
      %3320 = vst.msk [vmem:[%s455 + $0xa8] sm:$0xff] %vm733, %v3288
      %3321 = vst.msk [vmem:[%s455 + $0xb0] sm:$0xff] %vm733, %v3289
      %3322 = vst.msk [vmem:[%s455 + $0xb8] sm:$0xff] %vm733, %v3290
      %3323 = vst.msk [vmem:[%s455 + $0xc0] sm:$0xff] %vm733, %v3291
      %3324 = vst.msk [vmem:[%s455 + $0xc8] sm:$0xff] %vm733, %v3292
      %3325 = vst.msk [vmem:[%s455 + $0xd0] sm:$0xff] %vm733, %v3293
      %3326 = vst.msk [vmem:[%s455 + $0xd8] sm:$0xff] %vm733, %v3294
      %3327 = vst.msk [vmem:[%s455 + $0xe0] sm:$0xff] %vm733, %v3295
      %3328 = vst.msk [vmem:[%s455 + $0xe8] sm:$0xff] %vm733, %v3296
      %3329 = vst.msk [vmem:[%s455 + $0xf0] sm:$0xff] %vm733, %v3297
      %3330 = vst.msk [vmem:[%s455 + $0xf8] sm:$0xff] %vm733, %v3298
      %v3331 = vsel %vm733, %v3267, 0.0
      %v3332 = vsel %vm733, %v3268, 0.0
      %v3333 = vadd.f32 %v3331, %v3332
      %v3334 = vsel %vm733, %v3269, 0.0
      %v3335 = vadd.f32 %v3333, %v3334
      %v3336 = vsel %vm733, %v3270, 0.0
      %v3337 = vadd.f32 %v3335, %v3336
      %v3338 = vsel %vm733, %v3271, 0.0
      %v3339 = vadd.f32 %v3337, %v3338
      %v3340 = vsel %vm733, %v3272, 0.0
      %v3341 = vadd.f32 %v3339, %v3340
      %v3342 = vsel %vm733, %v3273, 0.0
      %v3343 = vadd.f32 %v3341, %v3342
      %v3344 = vsel %vm733, %v3274, 0.0
      %v3345 = vadd.f32 %v3343, %v3344
      %v3346 = vsel %vm733, %v3275, 0.0
      %v3347 = vadd.f32 %v3345, %v3346
      %v3348 = vsel %vm733, %v3276, 0.0
      %v3349 = vadd.f32 %v3347, %v3348
      %v3350 = vsel %vm733, %v3277, 0.0
      %v3351 = vadd.f32 %v3349, %v3350
      %v3352 = vsel %vm733, %v3278, 0.0
      %v3353 = vadd.f32 %v3351, %v3352
      %v3354 = vsel %vm733, %v3279, 0.0
      %v3355 = vadd.f32 %v3353, %v3354
      %v3356 = vsel %vm733, %v3280, 0.0
      %v3357 = vadd.f32 %v3355, %v3356
      %v3358 = vsel %vm733, %v3281, 0.0
      %v3359 = vadd.f32 %v3357, %v3358
      %v3360 = vsel %vm733, %v3282, 0.0
      %v3361 = vadd.f32 %v3359, %v3360
      %v3362 = vsel %vm733, %v3283, 0.0
      %v3363 = vadd.f32 %v3361, %v3362
      %v3364 = vsel %vm733, %v3284, 0.0
      %v3365 = vadd.f32 %v3363, %v3364
      %v3366 = vsel %vm733, %v3285, 0.0
      %v3367 = vadd.f32 %v3365, %v3366
      %v3368 = vsel %vm733, %v3286, 0.0
      %v3369 = vadd.f32 %v3367, %v3368
      %v3370 = vsel %vm733, %v3287, 0.0
      %v3371 = vadd.f32 %v3369, %v3370
      %v3372 = vsel %vm733, %v3288, 0.0
      %v3373 = vadd.f32 %v3371, %v3372
      %v3374 = vsel %vm733, %v3289, 0.0
      %v3375 = vadd.f32 %v3373, %v3374
      %v3376 = vsel %vm733, %v3290, 0.0
      %v3377 = vadd.f32 %v3375, %v3376
      %v3378 = vsel %vm733, %v3291, 0.0
      %v3379 = vadd.f32 %v3377, %v3378
      %v3380 = vsel %vm733, %v3292, 0.0
      %v3381 = vadd.f32 %v3379, %v3380
      %v3382 = vsel %vm733, %v3293, 0.0
      %v3383 = vadd.f32 %v3381, %v3382
      %v3384 = vsel %vm733, %v3294, 0.0
      %v3385 = vadd.f32 %v3383, %v3384
      %v3386 = vsel %vm733, %v3295, 0.0
      %v3387 = vadd.f32 %v3385, %v3386
      %v3388 = vsel %vm733, %v3296, 0.0
      %v3389 = vadd.f32 %v3387, %v3388
      %v3390 = vsel %vm733, %v3297, 0.0
      %v3391 = vadd.f32 %v3389, %v3390
      %v3392 = vsel %vm733, %v3298, 0.0
      %v3393 = vadd.f32 %v3391, %v3392
      %v3394 = vrot.slane %v3393, 4
      %v3395 = vadd.f32 %v3393, %v3394
      %v3396 = vrot.slane %v3395, 2
      %v3397 = vadd.f32 %v3395, %v3396
      %v3398 = vrot.slane %v3397, 1
      %v3399 = vadd.f32 %v3397, %v3398
      %v3400 = vmul.f32 %v3267, %v3267
      %v3401 = vmul.f32 %v3268, %v3268
      %v3402 = vmul.f32 %v3269, %v3269
      %v3403 = vmul.f32 %v3270, %v3270
      %v3404 = vmul.f32 %v3271, %v3271
      %v3405 = vmul.f32 %v3272, %v3272
      %v3406 = vmul.f32 %v3273, %v3273
      %v3407 = vmul.f32 %v3274, %v3274
      %v3408 = vmul.f32 %v3275, %v3275
      %v3409 = vmul.f32 %v3276, %v3276
      %v3410 = vmul.f32 %v3277, %v3277
      %v3411 = vmul.f32 %v3278, %v3278
      %v3412 = vmul.f32 %v3279, %v3279
      %v3413 = vmul.f32 %v3280, %v3280
      %v3414 = vmul.f32 %v3281, %v3281
      %v3415 = vmul.f32 %v3282, %v3282
      %v3416 = vmul.f32 %v3283, %v3283
      %v3417 = vmul.f32 %v3284, %v3284
      %v3418 = vmul.f32 %v3285, %v3285
      %v3419 = vmul.f32 %v3286, %v3286
      %v3420 = vmul.f32 %v3287, %v3287
      %v3421 = vmul.f32 %v3288, %v3288
      %v3422 = vmul.f32 %v3289, %v3289
      %v3423 = vmul.f32 %v3290, %v3290
      %v3424 = vmul.f32 %v3291, %v3291
      %v3425 = vmul.f32 %v3292, %v3292
      %v3426 = vmul.f32 %v3293, %v3293
      %v3427 = vmul.f32 %v3294, %v3294
      %v3428 = vmul.f32 %v3295, %v3295
      %v3429 = vmul.f32 %v3296, %v3296
      %v3430 = vmul.f32 %v3297, %v3297
      %v3431 = vmul.f32 %v3298, %v3298
      %v3432 = vsel %vm733, %v3400, 0.0
      %v3433 = vsel %vm733, %v3401, 0.0
      %v3434 = vadd.f32 %v3432, %v3433
      %v3435 = vsel %vm733, %v3402, 0.0
      %v3436 = vadd.f32 %v3434, %v3435
      %v3437 = vsel %vm733, %v3403, 0.0
      %v3438 = vadd.f32 %v3436, %v3437
      %v3439 = vsel %vm733, %v3404, 0.0
      %v3440 = vadd.f32 %v3438, %v3439
      %v3441 = vsel %vm733, %v3405, 0.0
      %v3442 = vadd.f32 %v3440, %v3441
      %v3443 = vsel %vm733, %v3406, 0.0
      %v3444 = vadd.f32 %v3442, %v3443
      %v3445 = vsel %vm733, %v3407, 0.0
      %v3446 = vadd.f32 %v3444, %v3445
      %v3447 = vsel %vm733, %v3408, 0.0
      %v3448 = vadd.f32 %v3446, %v3447
      %v3449 = vsel %vm733, %v3409, 0.0
      %v3450 = vadd.f32 %v3448, %v3449
      %v3451 = vsel %vm733, %v3410, 0.0
      %v3452 = vadd.f32 %v3450, %v3451
      %v3453 = vsel %vm733, %v3411, 0.0
      %v3454 = vadd.f32 %v3452, %v3453
      %v3455 = vsel %vm733, %v3412, 0.0
      %v3456 = vadd.f32 %v3454, %v3455
      %v3457 = vsel %vm733, %v3413, 0.0
      %v3458 = vadd.f32 %v3456, %v3457
      %v3459 = vsel %vm733, %v3414, 0.0
      %v3460 = vadd.f32 %v3458, %v3459
      %v3461 = vsel %vm733, %v3415, 0.0
      %v3462 = vadd.f32 %v3460, %v3461
      %v3463 = vsel %vm733, %v3416, 0.0
      %v3464 = vadd.f32 %v3462, %v3463
      %v3465 = vsel %vm733, %v3417, 0.0
      %v3466 = vadd.f32 %v3464, %v3465
      %v3467 = vsel %vm733, %v3418, 0.0
      %v3468 = vadd.f32 %v3466, %v3467
      %v3469 = vsel %vm733, %v3419, 0.0
      %v3470 = vadd.f32 %v3468, %v3469
      %v3471 = vsel %vm733, %v3420, 0.0
      %v3472 = vadd.f32 %v3470, %v3471
      %v3473 = vsel %vm733, %v3421, 0.0
      %v3474 = vadd.f32 %v3472, %v3473
      %v3475 = vsel %vm733, %v3422, 0.0
      %v3476 = vadd.f32 %v3474, %v3475
      %v3477 = vsel %vm733, %v3423, 0.0
      %v3478 = vadd.f32 %v3476, %v3477
      %v3479 = vsel %vm733, %v3424, 0.0
      %v3480 = vadd.f32 %v3478, %v3479
      %v3481 = vsel %vm733, %v3425, 0.0
      %v3482 = vadd.f32 %v3480, %v3481
      %v3483 = vsel %vm733, %v3426, 0.0
      %v3484 = vadd.f32 %v3482, %v3483
      %v3485 = vsel %vm733, %v3427, 0.0
      %v3486 = vadd.f32 %v3484, %v3485
      %v3487 = vsel %vm733, %v3428, 0.0
      %v3488 = vadd.f32 %v3486, %v3487
      %v3489 = vsel %vm733, %v3429, 0.0
      %v3490 = vadd.f32 %v3488, %v3489
      %v3491 = vsel %vm733, %v3430, 0.0
      %v3492 = vadd.f32 %v3490, %v3491
      %v3493 = vsel %vm733, %v3431, 0.0
      %v3494 = vadd.f32 %v3492, %v3493
      %v3495 = vrot.slane %v3494, 4
      %v3496 = vadd.f32 %v3494, %v3495
      %v3497 = vrot.slane %v3496, 2
      %v3498 = vadd.f32 %v3496, %v3497
      %v3499 = vrot.slane %v3498, 1
      %v3500 = vadd.f32 %v3498, %v3499
      %v3501 = vlaneseq
      %v3502 = vshrl.u32 %v3501, 7
      %vm3503 = vcmp.eq.s32.totalorder %v3502, 0
      %v3504 = vsel %vm3503, %v3399, %v3500
      %vm3505 = vcmask 58368
      %3506 = vst.msk [vmem:[%s461] sm:$0x3] %vm3505, %v3504
      %s3507 = smul.u32 16, %s24
      %p3508 = scmp.lt.s32.totalorder %s23, 1
      %s3509 = scalar_select %p3508, %s23, 1
      %p3510 = scmp.lt.s32.totalorder %s3507, 15
      %s3511 = scalar_select %p3510, %s3507, 15
      %s3512 = smul.addr %s3511, 2
      %s3513 = smul.addr %s3509, 32
      %s3514 = sadd.s32 %s3512, %s3513
      %s3515 = smul.addr %s3514, 8
      %s3516 = scalar_lea.vmem %s6, %s3515
      %s3517 = sadd.s32 %s23, %s24
      %p3518 = scmp.lt.s32.totalorder %s3517, 1
      %s3519 = scalar_select %p3518, %s3517, 1
      %s3520 = smul.addr %s3519, 2
      %s3521 = scalar_lea.vmem %s7, %s3520
      // Predicated region
      $region45: #{conv_block1_forward.4} parent=43 // pred_check
        %p3522 = pneg %p214
      $region46: #{conv_block1_forward.4} parent=43 // pred_check_branch
        %3524 = sbr.rel (%p3522) target = $region48
      $region47: #{conv_block1_forward.4} parent=43 // pred_region
        %s3525 = smul.u32 16, %s24
      $region48: #{conv_block1_forward.4} parent=43 // pred_fallthru
        _
      // Predicated region
      $region49: #{conv_block1_forward.4} parent=43 // pred_check
        %p3526 = pneg %p242
      $region50: #{conv_block1_forward.4} parent=43 // pred_check_branch
        %3528 = sbr.rel (%p3526) target = $region52
      $region51: #{conv_block1_forward.4} parent=43 // pred_region
        %s3529 = sadd.s32 %s23, %s24
      $region52: #{conv_block1_forward.4} parent=43 // pred_fallthru
        _
    $region44: #{conv_block1_forward.4} parent=5 // pred_fallthru
      _
    %p3530 = scmp.le.s32.totalorder 2, %s14
    // Predicated region
    $region53: #{conv_block1_forward.4} parent=5 // pred_check
      %p3531 = pneg %p3530
    $region54: #{conv_block1_forward.4} parent=5 // pred_check_branch
      %3533 = sbr.rel (%p3531) target = $region56
    $region55: #{conv_block1_forward.4} parent=5 // pred_region
      %s3534 = ssub.s32 %s14, 2
      // Predicated region
      $region57: #{conv_block1_forward.4} parent=55 // pred_check
        %p3535 = pneg %p220
      $region58: #{conv_block1_forward.4} parent=55 // pred_check_branch
        %3537 = sbr.rel (%p3535) target = $region60
      $region59: #{conv_block1_forward.4} parent=55 // pred_region
        %s3538 = smul.u32 16, %s26
        %p3539 = scmp.lt.s32.totalorder %s25, 1
        %s3540 = scalar_select %p3539, %s25, 1
        %p3541 = scmp.lt.s32.totalorder %s3538, 15
        %s3542 = scalar_select %p3541, %s3538, 15
        %s3543 = smul.addr %s3542, 2
        %s3544 = smul.addr %s3540, 32
        %s3545 = sadd.s32 %s3543, %s3544
        %s3546 = smul.addr %s3545, 8
        %s3547 = scalar_lea.vmem %s6, %s3546
      $region60: #{conv_block1_forward.4} parent=55 // pred_fallthru
        _
      // Predicated region
      $region61: #{conv_block1_forward.4} parent=55 // pred_check
        %p3548 = pneg %p248
      $region62: #{conv_block1_forward.4} parent=55 // pred_check_branch
        %3550 = sbr.rel (%p3548) target = $region64
      $region63: #{conv_block1_forward.4} parent=55 // pred_region
        %s3551 = sadd.s32 %s25, %s26
        %p3552 = scmp.lt.s32.totalorder %s3551, 1
        %s3553 = scalar_select %p3552, %s3551, 1
        %s3554 = smul.addr %s3553, 2
        %s3555 = scalar_lea.vmem %s7, %s3554
      $region64: #{conv_block1_forward.4} parent=55 // pred_fallthru
        _
    $region56: #{conv_block1_forward.4} parent=5 // pred_fallthru
      _
  $region6: #{conv_block1_forward.4} parent=0 // loop_footer
    %s18 = sadd.s32 1, %s14
  $region7: #{conv_block1_forward.4} parent=0 // loop_footer_branch
    %13 = sbr.rel target = $region3
  $region8: #{conv_block1_forward.4} parent=0 // loop_exit
    _

</llo_original>
